<compile_context>
chip_gen: v7x
topology: tpu7x:2x2x1
jax: 0.10.0
libtpu: 0.0.40
codegen_flags: <defaults>
</compile_context>

<pallas_src>
import math

import jax
import jax.numpy as jnp
from jax.experimental import pallas as pl
from jax.experimental.pallas import tpu as pltpu

CHANNELS = 64      # must be divisible by 32 (GroupNorm groups)
NUM_HEADS = 8
GROUPS = 32
EPS = 1e-5         # nn.GroupNorm default eps


def pixels_attention_kernel(x_ref, assign2_ref, assign_t2_ref, hmask_ref,
                            addmask_ref, gn_w_ref, gn_b_ref, wqkv_ref,
                            bqkv_ref, wproj_ref, bproj_ref, o_ref):
    f32 = jnp.float32
    bf16 = jnp.bfloat16

    nb, C, L = x_ref.shape            # images/step, channels, pixels/image
    NL = nb * L
    H = hmask_ref.shape[0]
    G = assign2_ref.shape[1] // 2

    # ---- (nb, C, L) NCHW tile -> pixels-major (nb, L, C): one XLU transpose
    #      per tile; the wrapper does no HBM-level layout change.
    xt = jnp.transpose(x_ref[...].astype(f32), (0, 2, 1))        # (nb, L, C)
    x = xt.reshape(NL, C)

    # ---- GroupNorm(32, C), single-pass stats:
    #      sublane reduce -> (nb, 2C) [sum x | sum x^2]; one dot -> per-group
    #      [E[x] | E[x^2]]; one dot -> per-channel [mean | inv_std]; GN affine
    #      folded into a per-image (scale, shift) pair that is sublane-
    #      broadcast over the L rows (no broadcast-back matmuls).
    inv_n = 1.0 / float(L * (C // G))
    s1 = jnp.sum(xt, axis=1)                                     # (nb, C)
    s2 = jnp.sum(xt * xt, axis=1)                                # (nb, C)
    ch = jnp.concatenate([s1, s2], axis=-1)                      # (nb, 2C)
    g = jnp.dot(ch, assign2_ref[...], preferred_element_type=f32) * inv_n
    g_mean = g[:, :G]                                            # (nb, G)
    g_var = jnp.maximum(g[:, G:] - g_mean * g_mean, 0.0)         # E[x^2]-E[x]^2
    g_inv = jax.lax.rsqrt(g_var + EPS)
    mi = jnp.dot(jnp.concatenate([g_mean, g_inv], axis=-1), assign_t2_ref[...],
                 preferred_element_type=f32)                     # (nb, 2C)
    scale_nc = mi[:, C:] * gn_w_ref[...]                         # (nb, C)
    shift_nc = gn_b_ref[...] - mi[:, :C] * scale_nc              # (nb, C)
    xn = (xt * scale_nc[:, None, :] + shift_nc[:, None, :]).reshape(NL, C)

    # ---- 1x1 qkv conv == (NL, C) @ (C, 3C); attention scale pre-folded into
    #      the q/k weight rows + bias.  bf16 MXU operands, f32 accumulate.
    qkv = jnp.dot(xn.astype(bf16), wqkv_ref[...],
                  preferred_element_type=f32) + bqkv_ref[...]    # (NL, 3C)
    q = qkv[:, 0:C]                                              # (NL, C) f32
    k = qkv[:, C:2 * C].astype(bf16)
    v = qkv[:, 2 * C:3 * C].astype(bf16)

    # ---- Pixel attention: all heads AND all nb images in one pass.
    #      Row (h, b, i) of q_exp is query pixel i of image b masked to head
    #      h's channels, so one full-depth MXU matmul against all images'
    #      keys gives every head's scores stacked on sublanes with full
    #      nb*L-lane rows.  Cross-image pairs get -1e9 before the softmax.
    hm = hmask_ref[...]                                          # (H, C) f32
    q_exp = (jnp.broadcast_to(q[None], (H, NL, C))
             * hm[:, None, :]).astype(bf16).reshape(H * NL, C)
    s = jax.lax.dot_general(q_exp, k, (((1,), (1,)), ((), ())),
                            preferred_element_type=f32)          # (H*NL, NL)
    s3 = s.reshape(H, NL, NL) + addmask_ref[...][None]
    m = jnp.max(s3, axis=-1, keepdims=True)
    e = jnp.exp(s3 - m)
    p = e * pl.reciprocal(jnp.sum(e, axis=-1, keepdims=True), approx=True)
    a_full = jnp.dot(p.reshape(H * NL, NL).astype(bf16), v,
                     preferred_element_type=f32)                 # (H*NL, C)
    # Fold the H head blocks back to (NL, C): channel c keeps its own head's
    # block (all other blocks are masked to zero) -- mask + slab adds (f32,
    # safe on v5e's non-bf16 VPU).
    a = jnp.sum(a_full.reshape(H, NL, C) * hm[:, None, :], axis=0)

    # ---- 1x1 proj conv + residual; back to the (nb, C, L) NCHW tile layout.
    proj = jnp.dot(a.astype(bf16), wproj_ref[...],
                   preferred_element_type=f32) + bproj_ref[...]  # (NL, C)
    out = (x + proj).reshape(nb, L, C)
    o_ref[...] = jnp.transpose(out, (0, 2, 1)).astype(o_ref.dtype)


def pixels_attention(x_nchw, params):
    B, C, Hh, Ww = x_nchw.shape
    assert C % GROUPS == 0 and C % NUM_HEADS == 0
    L = Hh * Ww
    # (8, 128) sublane constraint on the pixels-major slabs.
    assert L % 8 == 0, "H*W must be a multiple of 8 (pad spatial dims if not)"
    H = NUM_HEADS
    hc = C // H

    # NCHW -> (B, C, L) is a free reshape; the pixels-major transpose happens
    # inside the kernel (per tile, XLU), so XLA emits no full-tensor
    # transpose passes around the kernel.
    x_bcl = x_nchw.reshape(B, C, L)

    # Images per grid step: stack small images so the score/softmax rows are
    # lane-dense and per-step pipeline overhead amortizes, but keep >= 2 grid
    # steps (when B >= 2) so both v7x TensorCores get work.
    nb_cap = max(1, min(B, 512 // max(L, 1)))
    divisors = [d for d in range(1, B + 1) if B % d == 0 and d <= nb_cap]
    multi_step = [d for d in divisors if B // d >= 2]
    nb = max(multi_step) if multi_step else max(divisors)
    NL = nb * L

    # Fold the attention scale (applied to BOTH q and k in the module) into
    # the q/k output rows of the qkv weight and bias.
    scale = 1.0 / math.sqrt(math.sqrt(hc))
    scale_vec = jnp.concatenate([jnp.full((2 * C,), scale, jnp.float32),
                                 jnp.ones((C,), jnp.float32)])
    w_qkv = params["w_qkv"].reshape(3 * C, C).astype(jnp.float32) * scale_vec[:, None]
    b_qkv = params["b_qkv"].reshape(3 * C).astype(jnp.float32) * scale_vec

    gn_w = params["gn_w"].reshape(1, C).astype(jnp.float32)
    gn_b = params["gn_b"].reshape(1, C).astype(jnp.float32)
    wqkv_t = w_qkv.T.astype(jnp.bfloat16)                        # (C, 3C) bf16
    bqkv = b_qkv.reshape(1, 3 * C)
    wproj_t = params["w_proj"].reshape(C, C).T.astype(jnp.bfloat16)
    bproj = params["b_proj"].reshape(1, C).astype(jnp.float32)

    # Small constants.  Block-diagonal channel->group matrices reduce /
    # broadcast the [x | x^2] stats in one MXU dot each way.
    cg = C // GROUPS
    assign = (jnp.arange(C)[:, None] // cg ==
              jnp.arange(GROUPS)[None, :]).astype(jnp.float32)   # (C, G)
    assign2 = jnp.zeros((2 * C, 2 * GROUPS), jnp.float32)
    assign2 = assign2.at[:C, :GROUPS].set(assign).at[C:, GROUPS:].set(assign)
    assign_t2 = assign2.T                                        # (2G, 2C)
    hmask = (jnp.arange(H)[:, None] ==
             jnp.arange(C)[None, :] // hc).astype(jnp.float32)   # (H, C)
    img = jnp.arange(NL) // L
    addmask = jnp.where(img[:, None] == img[None, :],
                        0.0, -1e9).astype(jnp.float32)           # (NL, NL)

    # Per-step VMEM estimate (activation slabs + double-buffered x/out blocks
    # + constants).  Always set the scoped limit (v5e default is only 16 MiB)
    # and clamp to 75% of the physical VMEM (v7x: <= 48 MiB of its 64 MiB).
    const_bytes = (assign2.size + assign_t2.size + addmask.size + hmask.size
                   + gn_w.size + gn_b.size + bqkv.size + bproj.size) * 4 \
                  + (wqkv_t.size + wproj_t.size) * 2
    est_bytes = 4 * (4 * nb * C * L            # x / out blocks, double-buffered
                     + 4 * NL * C              # xt / xn / a / proj temporaries
                     + NL * 3 * C              # qkv slab
                     + 3 * H * NL * NL         # scores / exp / probs
                     + H * NL * C) \
                + 2 * (H * NL * C) \
                + 2 * const_bytes
    try:
        vmem_cap = int(pltpu.get_tpu_info().vmem_capacity_bytes)
    except Exception:
        vmem_cap = 64 * 2 ** 20
    vmem_limit = int(min(0.75 * vmem_cap, max(2 * est_bytes, 32 * 2 ** 20)))

    grid = (B // nb,)

    def _const_spec(shape, single_buffer):
        index_map = lambda i: (0,) * len(shape)
        if single_buffer:
            # Constant block index -> the second pipeline buffer is dead VMEM.
            return pl.BlockSpec(shape, index_map, pipeline_mode=pl.Buffered(1))
        return pl.BlockSpec(shape, index_map)

    def _build(single_buffer_consts):
        cs = lambda shp: _const_spec(shp, single_buffer_consts)
        return pl.pallas_call(
            pixels_attention_kernel,
            out_shape=jax.ShapeDtypeStruct((B, C, L), x_nchw.dtype),
            grid_spec=pltpu.PrefetchScalarGridSpec(
                num_scalar_prefetch=0,
                grid=grid,
                in_specs=[
                    pl.BlockSpec((nb, C, L), lambda i: (i, 0, 0)),   # x
                    cs((2 * C, 2 * GROUPS)),                         # assign2
                    cs((2 * GROUPS, 2 * C)),                         # assign_t2
                    cs((H, C)),                                      # hmask
                    cs((NL, NL)),                                    # addmask
                    cs((1, C)),                                      # gn_w
                    cs((1, C)),                                      # gn_b
                    cs((C, 3 * C)),                                  # wqkv_t
                    cs((1, 3 * C)),                                  # bqkv
                    cs((C, C)),                                      # wproj_t
                    cs((1, C)),                                      # bproj
                ],
                out_specs=pl.BlockSpec((nb, C, L), lambda i: (i, 0, 0)),
            ),
            compiler_params=pltpu.CompilerParams(
                dimension_semantics=("parallel",),   # batch axis -> megacore
                vmem_limit_bytes=vmem_limit),
        )

    args = (x_bcl, assign2, assign_t2, hmask, addmask, gn_w, gn_b,
            wqkv_t, bqkv, wproj_t, bproj)
    try:
        out = _build(True)(*args)
    except Exception:
        # Fallback for jax builds where single-buffering (pl.Buffered(1)) on
        # the auto pipeline is unavailable; identical kernel otherwise.
        out = _build(False)(*args)

    return out.reshape(B, C, Hh, Ww)


def reference(x_nchw, params):
    """Pure-JAX f32 reference mirroring the PyTorch forward (NCHW semantics)."""
    B, C, Hh, Ww = x_nchw.shape
    L = Hh * Ww
    x = x_nchw.reshape(B, C, L)
    xg = x.reshape(B, GROUPS, C // GROUPS, L)
    mean = xg.mean(axis=(2, 3), keepdims=True)
    var = ((xg - mean) ** 2).mean(axis=(2, 3), keepdims=True)
    xn = ((xg - mean) / jnp.sqrt(var + EPS)).reshape(B, C, L)
    xn = xn * params["gn_w"].reshape(1, C, 1) + params["gn_b"].reshape(1, C, 1)
    wqkv = params["w_qkv"].reshape(3 * C, C)
    qkv = jnp.einsum('oc,bcl->bol', wqkv, xn) + params["b_qkv"].reshape(1, 3 * C, 1)
    q, k, v = jnp.split(qkv, 3, axis=1)
    hc = C // NUM_HEADS
    scale = 1.0 / math.sqrt(math.sqrt(hc))
    qh = (q * scale).reshape(B * NUM_HEADS, hc, L)
    kh = (k * scale).reshape(B * NUM_HEADS, hc, L)
    vh = v.reshape(B * NUM_HEADS, hc, L)
    w = jax.nn.softmax(jnp.einsum('bct,bcs->bts', qh, kh), axis=-1)
    a = jnp.einsum('bts,bcs->bct', w, vh).reshape(B, C, L)
    wproj = params["w_proj"].reshape(C, C)
    proj = jnp.einsum('oc,bcl->bol', wproj, a) + params["b_proj"].reshape(1, C, 1)
    return (x + proj).reshape(B, C, Hh, Ww)


if __name__ == "__main__":
    B, C, Hh, Ww = 4, CHANNELS, 8, 8
    key = jax.random.PRNGKey(0)
    ks = jax.random.split(key, 7)

    x = jax.random.normal(ks[0], (B, C, Hh, Ww), dtype=jnp.float32)

    # Deterministic parameter init (shapes from the module's __init__).
    # NOTE: the PyTorch module zero-inits proj_out (zero_module); small random
    #       weights are used here so the whole kernel path is exercised.
    params = {
        "gn_w": jax.random.normal(ks[1], (C,), jnp.float32) * 0.1 + 1.0,
        "gn_b": jax.random.normal(ks[2], (C,), jnp.float32) * 0.1,
        "w_qkv": jax.random.normal(ks[3], (3 * C, C, 1, 1), jnp.float32) * 0.05,
        "b_qkv": jax.random.normal(ks[4], (3 * C,), jnp.float32) * 0.05,
        "w_proj": jax.random.normal(ks[5], (C, C, 1, 1), jnp.float32) * 0.05,
        "b_proj": jax.random.normal(ks[6], (C,), jnp.float32) * 0.05,
    }

    out = jax.block_until_ready(pixels_attention(x, params))
    ref = jax.block_until_ready(reference(x, params))

    err = jnp.max(jnp.abs(out - ref))
    assert out.shape == (B, C, Hh, Ww)
    # bf16 MXU operands + approx-reciprocal softmax + single-pass variance =>
    # slightly looser tolerance than the pure-f32 reference.
    assert jnp.allclose(out, ref, atol=2e-2, rtol=2e-2), f"max abs err {err}"
    print("KERNEL_OK")
</pallas_src>

<mosaic_0001>
module attributes {stable_mosaic.version = 11 : i64} {
  func.func @pixels_attention_kernel(%arg0: i32, %arg1: memref<2x64x64xf32, #tpu.memory_space<vmem>>, %arg2: memref<128x64xf32, #tpu.memory_space<vmem>>, %arg3: memref<64x128xf32, #tpu.memory_space<vmem>>, %arg4: memref<8x64xf32, #tpu.memory_space<vmem>>, %arg5: memref<128x128xf32, #tpu.memory_space<vmem>>, %arg6: memref<1x64xf32, #tpu.memory_space<vmem>>, %arg7: memref<1x64xf32, #tpu.memory_space<vmem>>, %arg8: memref<64x192xbf16, #tpu.memory_space<vmem>>, %arg9: memref<1x192xf32, #tpu.memory_space<vmem>>, %arg10: memref<64x64xbf16, #tpu.memory_space<vmem>>, %arg11: memref<1x64xf32, #tpu.memory_space<vmem>>, %arg12: memref<2x64x64xf32, #tpu.memory_space<vmem>>) attributes {dimension_semantics = [#tpu.dimension_semantics<parallel>], iteration_bounds = array<i64: 2>, scalar_prefetch = 0 : i64, scratch_operands = 0 : i64, tpu.core_type = #tpu.core_type<tc>, window_params = [{transform_indices = @transform_0, window_bounds = array<i64: 2, 64, 64>}, {pipeline_mode = #tpu.pipeline_mode<synchronous>, transform_indices = @transform_1, window_bounds = array<i64: 128, 64>}, {pipeline_mode = #tpu.pipeline_mode<synchronous>, transform_indices = @transform_2, window_bounds = array<i64: 64, 128>}, {pipeline_mode = #tpu.pipeline_mode<synchronous>, transform_indices = @transform_3, window_bounds = array<i64: 8, 64>}, {pipeline_mode = #tpu.pipeline_mode<synchronous>, transform_indices = @transform_4, window_bounds = array<i64: 128, 128>}, {pipeline_mode = #tpu.pipeline_mode<synchronous>, transform_indices = @transform_5, window_bounds = array<i64: 1, 64>}, {pipeline_mode = #tpu.pipeline_mode<synchronous>, transform_indices = @transform_6, window_bounds = array<i64: 1, 64>}, {pipeline_mode = #tpu.pipeline_mode<synchronous>, transform_indices = @transform_7, window_bounds = array<i64: 64, 192>}, {pipeline_mode = #tpu.pipeline_mode<synchronous>, transform_indices = @transform_8, window_bounds = array<i64: 1, 192>}, {pipeline_mode = #tpu.pipeline_mode<synchronous>, transform_indices = @transform_9, window_bounds = array<i64: 64, 64>}, {pipeline_mode = #tpu.pipeline_mode<synchronous>, transform_indices = @transform_10, window_bounds = array<i64: 1, 64>}, {transform_indices = @transform_11, window_bounds = array<i64: 2, 64, 64>}]} {
    %c0 = arith.constant 0 : index
    %c0_0 = arith.constant 0 : index
    %c0_1 = arith.constant 0 : index
    %0 = vector.load %arg1[%c0, %c0_0, %c0_1] : memref<2x64x64xf32, #tpu.memory_space<vmem>>, vector<2x64x64xf32>
    %1 = tpu.transpose %0, [0, 2, 1] : vector<2x64x64xf32> -> vector<2x64x64xf32>
    %2 = vector.shape_cast %1 : vector<2x64x64xf32> to vector<128x64xf32>
    %cst = arith.constant dense<0.000000e+00> : vector<2x64xf32>
    %3 = vector.multi_reduction <add>, %1, %cst [1] : vector<2x64x64xf32> to vector<2x64xf32>
    %4 = arith.mulf %1, %1 : vector<2x64x64xf32>
    %cst_2 = arith.constant dense<0.000000e+00> : vector<2x64xf32>
    %5 = vector.multi_reduction <add>, %4, %cst_2 [1] : vector<2x64x64xf32> to vector<2x64xf32>
    %6 = tpu.concatenate %3, %5 in 1 : vector<2x64xf32>, vector<2x64xf32> -> vector<2x128xf32>
    %c0_3 = arith.constant 0 : index
    %c0_4 = arith.constant 0 : index
    %7 = vector.load %arg2[%c0_3, %c0_4] : memref<128x64xf32, #tpu.memory_space<vmem>>, vector<128x64xf32>
    %cst_5 = arith.constant dense<0.000000e+00> : vector<2x64xf32>
    %8 = tpu.matmul %6, %7, %cst_5 {dimension_numbers = #tpu.dot_dimension_numbers<[1], [0], [0], [1], [0, 0, 1, 1], [], []>} : vector<2x128xf32>, vector<128x64xf32>, vector<2x64xf32> -> vector<2x64xf32>
    %cst_6 = arith.constant 7.812500e-03 : f32
    %9 = vector.broadcast %cst_6 : f32 to vector<2x64xf32>
    %10 = arith.mulf %8, %9 : vector<2x64xf32>
    %11 = vector.extract_strided_slice %10 {offsets = [0, 0], sizes = [2, 32], strides = [1, 1]} : vector<2x64xf32> to vector<2x32xf32>
    %12 = vector.extract_strided_slice %10 {offsets = [0, 32], sizes = [2, 32], strides = [1, 1]} : vector<2x64xf32> to vector<2x32xf32>
    %13 = arith.mulf %11, %11 : vector<2x32xf32>
    %14 = arith.subf %12, %13 : vector<2x32xf32>
    %cst_7 = arith.constant 0.000000e+00 : f32
    %15 = vector.broadcast %cst_7 : f32 to vector<2x32xf32>
    %16 = arith.maximumf %14, %15 : vector<2x32xf32>
    %cst_8 = arith.constant 9.99999974E-6 : f32
    %17 = vector.broadcast %cst_8 : f32 to vector<2x32xf32>
    %18 = arith.addf %16, %17 : vector<2x32xf32>
    %19 = math.rsqrt %18 : vector<2x32xf32>
    %20 = tpu.concatenate %11, %19 in 1 : vector<2x32xf32>, vector<2x32xf32> -> vector<2x64xf32>
    %c0_9 = arith.constant 0 : index
    %c0_10 = arith.constant 0 : index
    %21 = vector.load %arg3[%c0_9, %c0_10] : memref<64x128xf32, #tpu.memory_space<vmem>>, vector<64x128xf32>
    %cst_11 = arith.constant dense<0.000000e+00> : vector<2x128xf32>
    %22 = tpu.matmul %20, %21, %cst_11 {dimension_numbers = #tpu.dot_dimension_numbers<[1], [0], [0], [1], [0, 0, 1, 1], [], []>} : vector<2x64xf32>, vector<64x128xf32>, vector<2x128xf32> -> vector<2x128xf32>
    %23 = vector.extract_strided_slice %22 {offsets = [0, 64], sizes = [2, 64], strides = [1, 1]} : vector<2x128xf32> to vector<2x64xf32>
    %c0_12 = arith.constant 0 : index
    %c0_13 = arith.constant 0 : index
    %24 = vector.load %arg6[%c0_12, %c0_13] : memref<1x64xf32, #tpu.memory_space<vmem>>, vector<1x64xf32>
    %25 = vector.broadcast %24 : vector<1x64xf32> to vector<2x64xf32>
    %26 = arith.mulf %23, %25 : vector<2x64xf32>
    %c0_14 = arith.constant 0 : index
    %c0_15 = arith.constant 0 : index
    %27 = vector.load %arg7[%c0_14, %c0_15] : memref<1x64xf32, #tpu.memory_space<vmem>>, vector<1x64xf32>
    %28 = vector.extract_strided_slice %22 {offsets = [0, 0], sizes = [2, 64], strides = [1, 1]} : vector<2x128xf32> to vector<2x64xf32>
    %29 = arith.mulf %28, %26 : vector<2x64xf32>
    %30 = vector.broadcast %27 : vector<1x64xf32> to vector<2x64xf32>
    %31 = arith.subf %30, %29 : vector<2x64xf32>
    %32 = vector.shape_cast %26 : vector<2x64xf32> to vector<2x1x64xf32>
    %33 = vector.broadcast %32 : vector<2x1x64xf32> to vector<2x64x64xf32>
    %34 = arith.mulf %1, %33 : vector<2x64x64xf32>
    %35 = vector.shape_cast %31 : vector<2x64xf32> to vector<2x1x64xf32>
    %36 = vector.broadcast %35 : vector<2x1x64xf32> to vector<2x64x64xf32>
    %37 = arith.addf %34, %36 : vector<2x64x64xf32>
    %38 = vector.shape_cast %37 : vector<2x64x64xf32> to vector<128x64xf32>
    %39 = arith.truncf %38 : vector<128x64xf32> to vector<128x64xbf16>
    %c0_16 = arith.constant 0 : index
    %c0_17 = arith.constant 0 : index
    %40 = vector.load %arg8[%c0_16, %c0_17] : memref<64x192xbf16, #tpu.memory_space<vmem>>, vector<64x192xbf16>
    %cst_18 = arith.constant dense<0.000000e+00> : vector<128x192xf32>
    %41 = tpu.matmul %39, %40, %cst_18 {dimension_numbers = #tpu.dot_dimension_numbers<[1], [0], [0], [1], [0, 0, 1, 1], [], []>} : vector<128x64xbf16>, vector<64x192xbf16>, vector<128x192xf32> -> vector<128x192xf32>
    %c0_19 = arith.constant 0 : index
    %c0_20 = arith.constant 0 : index
    %42 = vector.load %arg9[%c0_19, %c0_20] : memref<1x192xf32, #tpu.memory_space<vmem>>, vector<1x192xf32>
    %43 = vector.broadcast %42 : vector<1x192xf32> to vector<128x192xf32>
    %44 = arith.addf %41, %43 : vector<128x192xf32>
    %45 = vector.extract_strided_slice %44 {offsets = [0, 0], sizes = [128, 64], strides = [1, 1]} : vector<128x192xf32> to vector<128x64xf32>
    %46 = vector.extract_strided_slice %44 {offsets = [0, 64], sizes = [128, 64], strides = [1, 1]} : vector<128x192xf32> to vector<128x64xf32>
    %47 = arith.truncf %46 : vector<128x64xf32> to vector<128x64xbf16>
    %48 = vector.extract_strided_slice %44 {offsets = [0, 128], sizes = [128, 64], strides = [1, 1]} : vector<128x192xf32> to vector<128x64xf32>
    %49 = arith.truncf %48 : vector<128x64xf32> to vector<128x64xbf16>
    %c0_21 = arith.constant 0 : index
    %c0_22 = arith.constant 0 : index
    %50 = vector.load %arg4[%c0_21, %c0_22] : memref<8x64xf32, #tpu.memory_space<vmem>>, vector<8x64xf32>
    %51 = vector.shape_cast %45 : vector<128x64xf32> to vector<1x128x64xf32>
    %52 = vector.shape_cast %51 : vector<1x128x64xf32> to vector<1x128x64xf32>
    %53 = vector.broadcast %52 : vector<1x128x64xf32> to vector<8x128x64xf32>
    %54 = vector.shape_cast %50 : vector<8x64xf32> to vector<8x1x64xf32>
    %55 = vector.broadcast %54 : vector<8x1x64xf32> to vector<8x128x64xf32>
    %56 = arith.mulf %53, %55 : vector<8x128x64xf32>
    %57 = arith.truncf %56 : vector<8x128x64xf32> to vector<8x128x64xbf16>
    %58 = vector.shape_cast %57 : vector<8x128x64xbf16> to vector<1024x64xbf16>
    %cst_23 = arith.constant dense<0.000000e+00> : vector<1024x128xf32>
    %59 = tpu.matmul %58, %47, %cst_23 {dimension_numbers = #tpu.dot_dimension_numbers<[1], [1], [0], [0], [0, 0, 1, 0], [], []>} : vector<1024x64xbf16>, vector<128x64xbf16>, vector<1024x128xf32> -> vector<1024x128xf32>
    %60 = vector.shape_cast %59 : vector<1024x128xf32> to vector<8x128x128xf32>
    %c0_24 = arith.constant 0 : index
    %c0_25 = arith.constant 0 : index
    %61 = vector.load %arg5[%c0_24, %c0_25] : memref<128x128xf32, #tpu.memory_space<vmem>>, vector<128x128xf32>
    %62 = vector.shape_cast %61 : vector<128x128xf32> to vector<1x128x128xf32>
    %63 = vector.broadcast %62 : vector<1x128x128xf32> to vector<8x128x128xf32>
    %64 = arith.addf %60, %63 : vector<8x128x128xf32>
    %cst_26 = arith.constant dense<0xFF800000> : vector<8x128xf32>
    %65 = vector.multi_reduction <maximumf>, %64, %cst_26 [2] : vector<8x128x128xf32> to vector<8x128xf32>
    %66 = vector.shape_cast %65 : vector<8x128xf32> to vector<8x128x1xf32>
    %67 = vector.broadcast %66 : vector<8x128x1xf32> to vector<8x128x128xf32>
    %68 = arith.subf %64, %67 : vector<8x128x128xf32>
    %69 = math.exp %68 : vector<8x128x128xf32>
    %cst_27 = arith.constant dense<0.000000e+00> : vector<8x128xf32>
    %70 = vector.multi_reduction <add>, %69, %cst_27 [2] : vector<8x128x128xf32> to vector<8x128xf32>
    %71 = vector.shape_cast %70 : vector<8x128xf32> to vector<8x128x1xf32>
    %72 = tpu.reciprocal %71 {approx = true} : vector<8x128x1xf32> -> vector<8x128x1xf32>
    %73 = vector.broadcast %72 : vector<8x128x1xf32> to vector<8x128x128xf32>
    %74 = arith.mulf %69, %73 : vector<8x128x128xf32>
    %75 = vector.shape_cast %74 : vector<8x128x128xf32> to vector<1024x128xf32>
    %76 = arith.truncf %75 : vector<1024x128xf32> to vector<1024x128xbf16>
    %cst_28 = arith.constant dense<0.000000e+00> : vector<1024x64xf32>
    %77 = tpu.matmul %76, %49, %cst_28 {dimension_numbers = #tpu.dot_dimension_numbers<[1], [0], [0], [1], [0, 0, 1, 1], [], []>} : vector<1024x128xbf16>, vector<128x64xbf16>, vector<1024x64xf32> -> vector<1024x64xf32>
    %78 = vector.shape_cast %77 : vector<1024x64xf32> to vector<8x128x64xf32>
    %79 = vector.shape_cast %50 : vector<8x64xf32> to vector<8x1x64xf32>
    %80 = vector.broadcast %79 : vector<8x1x64xf32> to vector<8x128x64xf32>
    %81 = arith.mulf %78, %80 : vector<8x128x64xf32>
    %cst_29 = arith.constant dense<0.000000e+00> : vector<128x64xf32>
    %82 = vector.multi_reduction <add>, %81, %cst_29 [0] : vector<8x128x64xf32> to vector<128x64xf32>
    %83 = arith.truncf %82 : vector<128x64xf32> to vector<128x64xbf16>
    %c0_30 = arith.constant 0 : index
    %c0_31 = arith.constant 0 : index
    %84 = vector.load %arg10[%c0_30, %c0_31] : memref<64x64xbf16, #tpu.memory_space<vmem>>, vector<64x64xbf16>
    %cst_32 = arith.constant dense<0.000000e+00> : vector<128x64xf32>
    %85 = tpu.matmul %83, %84, %cst_32 {dimension_numbers = #tpu.dot_dimension_numbers<[1], [0], [0], [1], [0, 0, 1, 1], [], []>} : vector<128x64xbf16>, vector<64x64xbf16>, vector<128x64xf32> -> vector<128x64xf32>
    %c0_33 = arith.constant 0 : index
    %c0_34 = arith.constant 0 : index
    %86 = vector.load %arg11[%c0_33, %c0_34] : memref<1x64xf32, #tpu.memory_space<vmem>>, vector<1x64xf32>
    %87 = vector.broadcast %86 : vector<1x64xf32> to vector<128x64xf32>
    %88 = arith.addf %85, %87 : vector<128x64xf32>
    %89 = arith.addf %2, %88 : vector<128x64xf32>
    %90 = vector.shape_cast %89 : vector<128x64xf32> to vector<2x64x64xf32>
    %91 = tpu.transpose %90, [0, 2, 1] : vector<2x64x64xf32> -> vector<2x64x64xf32>
    %c0_35 = arith.constant 0 : index
    %c0_36 = arith.constant 0 : index
    %c0_37 = arith.constant 0 : index
    %92 = vector.load %arg12[%c0_35, %c0_36, %c0_37] : memref<2x64x64xf32, #tpu.memory_space<vmem>>, vector<2x64x64xf32>
    tpu.vector_store %arg12[%c0_35, %c0_36, %c0_37], %91 {strides = array<i32>} : memref<2x64x64xf32, #tpu.memory_space<vmem>>, vector<2x64x64xf32>,
    return
  }
  func.func @transform_0(%arg0: i32) -> (i32, i32, i32) {
    %c0_i32 = arith.constant 0 : i32
    %c0_i32_0 = arith.constant 0 : i32
    %c0_i32_1 = arith.constant 0 : i32
    return %arg0, %c0_i32, %c0_i32_0 : i32, i32, i32
  }
  func.func @transform_1(%arg0: i32) -> (i32, i32) {
    %c0_i32 = arith.constant 0 : i32
    %c0_i32_0 = arith.constant 0 : i32
    %c0_i32_1 = arith.constant 0 : i32
    return %c0_i32, %c0_i32_0 : i32, i32
  }
  func.func @transform_2(%arg0: i32) -> (i32, i32) {
    %c0_i32 = arith.constant 0 : i32
    %c0_i32_0 = arith.constant 0 : i32
    %c0_i32_1 = arith.constant 0 : i32
    return %c0_i32, %c0_i32_0 : i32, i32
  }
  func.func @transform_3(%arg0: i32) -> (i32, i32) {
    %c0_i32 = arith.constant 0 : i32
    %c0_i32_0 = arith.constant 0 : i32
    %c0_i32_1 = arith.constant 0 : i32
    return %c0_i32, %c0_i32_0 : i32, i32
  }
  func.func @transform_4(%arg0: i32) -> (i32, i32) {
    %c0_i32 = arith.constant 0 : i32
    %c0_i32_0 = arith.constant 0 : i32
    %c0_i32_1 = arith.constant 0 : i32
    return %c0_i32, %c0_i32_0 : i32, i32
  }
  func.func @transform_5(%arg0: i32) -> (i32, i32) {
    %c0_i32 = arith.constant 0 : i32
    %c0_i32_0 = arith.constant 0 : i32
    %c0_i32_1 = arith.constant 0 : i32
    return %c0_i32, %c0_i32_0 : i32, i32
  }
  func.func @transform_6(%arg0: i32) -> (i32, i32) {
    %c0_i32 = arith.constant 0 : i32
    %c0_i32_0 = arith.constant 0 : i32
    %c0_i32_1 = arith.constant 0 : i32
    return %c0_i32, %c0_i32_0 : i32, i32
  }
  func.func @transform_7(%arg0: i32) -> (i32, i32) {
    %c0_i32 = arith.constant 0 : i32
    %c0_i32_0 = arith.constant 0 : i32
    %c0_i32_1 = arith.constant 0 : i32
    return %c0_i32, %c0_i32_0 : i32, i32
  }
  func.func @transform_8(%arg0: i32) -> (i32, i32) {
    %c0_i32 = arith.constant 0 : i32
    %c0_i32_0 = arith.constant 0 : i32
    %c0_i32_1 = arith.constant 0 : i32
    return %c0_i32, %c0_i32_0 : i32, i32
  }
  func.func @transform_9(%arg0: i32) -> (i32, i32) {
    %c0_i32 = arith.constant 0 : i32
    %c0_i32_0 = arith.constant 0 : i32
    %c0_i32_1 = arith.constant 0 : i32
    return %c0_i32, %c0_i32_0 : i32, i32
  }
  func.func @transform_10(%arg0: i32) -> (i32, i32) {
    %c0_i32 = arith.constant 0 : i32
    %c0_i32_0 = arith.constant 0 : i32
    %c0_i32_1 = arith.constant 0 : i32
    return %c0_i32, %c0_i32_0 : i32, i32
  }
  func.func @transform_11(%arg0: i32) -> (i32, i32, i32) {
    %c0_i32 = arith.constant 0 : i32
    %c0_i32_0 = arith.constant 0 : i32
    %c0_i32_1 = arith.constant 0 : i32
    return %arg0, %c0_i32, %c0_i32_0 : i32, i32, i32
  }
}

module attributes {stable_mosaic.version = 11 : i64} {
  func.func @pixels_attention_kernel(%arg0: i32, %arg1: memref<2x64x64xf32, #tpu.memory_space<vmem>>, %arg2: memref<128x64xf32, #tpu.memory_space<vmem>>, %arg3: memref<64x128xf32, #tpu.memory_space<vmem>>, %arg4: memref<8x64xf32, #tpu.memory_space<vmem>>, %arg5: memref<128x128xf32, #tpu.memory_space<vmem>>, %arg6: memref<1x64xf32, #tpu.memory_space<vmem>>, %arg7: memref<1x64xf32, #tpu.memory_space<vmem>>, %arg8: memref<64x192xbf16, #tpu.memory_space<vmem>>, %arg9: memref<1x192xf32, #tpu.memory_space<vmem>>, %arg10: memref<64x64xbf16, #tpu.memory_space<vmem>>, %arg11: memref<1x64xf32, #tpu.memory_space<vmem>>, %arg12: memref<2x64x64xf32, #tpu.memory_space<vmem>>) attributes {dimension_semantics = [#tpu.dimension_semantics<parallel>], iteration_bounds = array<i64: 2>, scalar_prefetch = 0 : i64, scratch_operands = 0 : i64, tpu.core_type = #tpu.core_type<tc>, window_params = [{transform_indices = @transform_0, window_bounds = array<i64: 2, 64, 64>}, {pipeline_mode = #tpu.pipeline_mode<synchronous>, transform_indices = @transform_1, window_bounds = array<i64: 128, 64>}, {pipeline_mode = #tpu.pipeline_mode<synchronous>, transform_indices = @transform_2, window_bounds = array<i64: 64, 128>}, {pipeline_mode = #tpu.pipeline_mode<synchronous>, transform_indices = @transform_3, window_bounds = array<i64: 8, 64>}, {pipeline_mode = #tpu.pipeline_mode<synchronous>, transform_indices = @transform_4, window_bounds = array<i64: 128, 128>}, {pipeline_mode = #tpu.pipeline_mode<synchronous>, transform_indices = @transform_5, window_bounds = array<i64: 1, 64>}, {pipeline_mode = #tpu.pipeline_mode<synchronous>, transform_indices = @transform_6, window_bounds = array<i64: 1, 64>}, {pipeline_mode = #tpu.pipeline_mode<synchronous>, transform_indices = @transform_7, window_bounds = array<i64: 64, 192>}, {pipeline_mode = #tpu.pipeline_mode<synchronous>, transform_indices = @transform_8, window_bounds = array<i64: 1, 192>}, {pipeline_mode = #tpu.pipeline_mode<synchronous>, transform_indices = @transform_9, window_bounds = array<i64: 64, 64>}, {pipeline_mode = #tpu.pipeline_mode<synchronous>, transform_indices = @transform_10, window_bounds = array<i64: 1, 64>}, {transform_indices = @transform_11, window_bounds = array<i64: 2, 64, 64>}]} {
    %c0 = arith.constant 0 : index
    %c0_0 = arith.constant 0 : index
    %c0_1 = arith.constant 0 : index
    %0 = vector.load %arg1[%c0, %c0_0, %c0_1] : memref<2x64x64xf32, #tpu.memory_space<vmem>>, vector<2x64x64xf32>
    %1 = tpu.transpose %0, [0, 2, 1] : vector<2x64x64xf32> -> vector<2x64x64xf32>
    %2 = vector.shape_cast %1 : vector<2x64x64xf32> to vector<128x64xf32>
    %cst = arith.constant dense<0.000000e+00> : vector<2x64xf32>
    %3 = vector.multi_reduction <add>, %1, %cst [1] : vector<2x64x64xf32> to vector<2x64xf32>
    %4 = arith.mulf %1, %1 : vector<2x64x64xf32>
    %cst_2 = arith.constant dense<0.000000e+00> : vector<2x64xf32>
    %5 = vector.multi_reduction <add>, %4, %cst_2 [1] : vector<2x64x64xf32> to vector<2x64xf32>
    %6 = tpu.concatenate %3, %5 in 1 : vector<2x64xf32>, vector<2x64xf32> -> vector<2x128xf32>
    %c0_3 = arith.constant 0 : index
    %c0_4 = arith.constant 0 : index
    %7 = vector.load %arg2[%c0_3, %c0_4] : memref<128x64xf32, #tpu.memory_space<vmem>>, vector<128x64xf32>
    %cst_5 = arith.constant dense<0.000000e+00> : vector<2x64xf32>
    %8 = tpu.matmul %6, %7, %cst_5 {dimension_numbers = #tpu.dot_dimension_numbers<[1], [0], [0], [1], [0, 0, 1, 1], [], []>} : vector<2x128xf32>, vector<128x64xf32>, vector<2x64xf32> -> vector<2x64xf32>
    %cst_6 = arith.constant 7.812500e-03 : f32
    %9 = vector.broadcast %cst_6 : f32 to vector<2x64xf32>
    %10 = arith.mulf %8, %9 : vector<2x64xf32>
    %11 = vector.extract_strided_slice %10 {offsets = [0, 0], sizes = [2, 32], strides = [1, 1]} : vector<2x64xf32> to vector<2x32xf32>
    %12 = vector.extract_strided_slice %10 {offsets = [0, 32], sizes = [2, 32], strides = [1, 1]} : vector<2x64xf32> to vector<2x32xf32>
    %13 = arith.mulf %11, %11 : vector<2x32xf32>
    %14 = arith.subf %12, %13 : vector<2x32xf32>
    %cst_7 = arith.constant 0.000000e+00 : f32
    %15 = vector.broadcast %cst_7 : f32 to vector<2x32xf32>
    %16 = arith.maximumf %14, %15 : vector<2x32xf32>
    %cst_8 = arith.constant 9.99999974E-6 : f32
    %17 = vector.broadcast %cst_8 : f32 to vector<2x32xf32>
    %18 = arith.addf %16, %17 : vector<2x32xf32>
    %19 = math.rsqrt %18 : vector<2x32xf32>
    %20 = tpu.concatenate %11, %19 in 1 : vector<2x32xf32>, vector<2x32xf32> -> vector<2x64xf32>
    %c0_9 = arith.constant 0 : index
    %c0_10 = arith.constant 0 : index
    %21 = vector.load %arg3[%c0_9, %c0_10] : memref<64x128xf32, #tpu.memory_space<vmem>>, vector<64x128xf32>
    %cst_11 = arith.constant dense<0.000000e+00> : vector<2x128xf32>
    %22 = tpu.matmul %20, %21, %cst_11 {dimension_numbers = #tpu.dot_dimension_numbers<[1], [0], [0], [1], [0, 0, 1, 1], [], []>} : vector<2x64xf32>, vector<64x128xf32>, vector<2x128xf32> -> vector<2x128xf32>
    %23 = vector.extract_strided_slice %22 {offsets = [0, 64], sizes = [2, 64], strides = [1, 1]} : vector<2x128xf32> to vector<2x64xf32>
    %c0_12 = arith.constant 0 : index
    %c0_13 = arith.constant 0 : index
    %24 = vector.load %arg6[%c0_12, %c0_13] : memref<1x64xf32, #tpu.memory_space<vmem>>, vector<1x64xf32>
    %25 = vector.broadcast %24 : vector<1x64xf32> to vector<2x64xf32>
    %26 = arith.mulf %23, %25 : vector<2x64xf32>
    %c0_14 = arith.constant 0 : index
    %c0_15 = arith.constant 0 : index
    %27 = vector.load %arg7[%c0_14, %c0_15] : memref<1x64xf32, #tpu.memory_space<vmem>>, vector<1x64xf32>
    %28 = vector.extract_strided_slice %22 {offsets = [0, 0], sizes = [2, 64], strides = [1, 1]} : vector<2x128xf32> to vector<2x64xf32>
    %29 = arith.mulf %28, %26 : vector<2x64xf32>
    %30 = vector.broadcast %27 : vector<1x64xf32> to vector<2x64xf32>
    %31 = arith.subf %30, %29 : vector<2x64xf32>
    %32 = vector.shape_cast %26 : vector<2x64xf32> to vector<2x1x64xf32>
    %33 = vector.broadcast %32 : vector<2x1x64xf32> to vector<2x64x64xf32>
    %34 = arith.mulf %1, %33 : vector<2x64x64xf32>
    %35 = vector.shape_cast %31 : vector<2x64xf32> to vector<2x1x64xf32>
    %36 = vector.broadcast %35 : vector<2x1x64xf32> to vector<2x64x64xf32>
    %37 = arith.addf %34, %36 : vector<2x64x64xf32>
    %38 = vector.shape_cast %37 : vector<2x64x64xf32> to vector<128x64xf32>
    %39 = arith.truncf %38 : vector<128x64xf32> to vector<128x64xbf16>
    %c0_16 = arith.constant 0 : index
    %c0_17 = arith.constant 0 : index
    %40 = vector.load %arg8[%c0_16, %c0_17] : memref<64x192xbf16, #tpu.memory_space<vmem>>, vector<64x192xbf16>
    %cst_18 = arith.constant dense<0.000000e+00> : vector<128x192xf32>
    %41 = tpu.matmul %39, %40, %cst_18 {dimension_numbers = #tpu.dot_dimension_numbers<[1], [0], [0], [1], [0, 0, 1, 1], [], []>} : vector<128x64xbf16>, vector<64x192xbf16>, vector<128x192xf32> -> vector<128x192xf32>
    %c0_19 = arith.constant 0 : index
    %c0_20 = arith.constant 0 : index
    %42 = vector.load %arg9[%c0_19, %c0_20] : memref<1x192xf32, #tpu.memory_space<vmem>>, vector<1x192xf32>
    %43 = vector.broadcast %42 : vector<1x192xf32> to vector<128x192xf32>
    %44 = arith.addf %41, %43 : vector<128x192xf32>
    %45 = vector.extract_strided_slice %44 {offsets = [0, 0], sizes = [128, 64], strides = [1, 1]} : vector<128x192xf32> to vector<128x64xf32>
    %46 = vector.extract_strided_slice %44 {offsets = [0, 64], sizes = [128, 64], strides = [1, 1]} : vector<128x192xf32> to vector<128x64xf32>
    %47 = arith.truncf %46 : vector<128x64xf32> to vector<128x64xbf16>
    %48 = vector.extract_strided_slice %44 {offsets = [0, 128], sizes = [128, 64], strides = [1, 1]} : vector<128x192xf32> to vector<128x64xf32>
    %49 = arith.truncf %48 : vector<128x64xf32> to vector<128x64xbf16>
    %c0_21 = arith.constant 0 : index
    %c0_22 = arith.constant 0 : index
    %50 = vector.load %arg4[%c0_21, %c0_22] : memref<8x64xf32, #tpu.memory_space<vmem>>, vector<8x64xf32>
    %51 = vector.shape_cast %45 : vector<128x64xf32> to vector<1x128x64xf32>
    %52 = vector.shape_cast %51 : vector<1x128x64xf32> to vector<1x128x64xf32>
    %53 = vector.broadcast %52 : vector<1x128x64xf32> to vector<8x128x64xf32>
    %54 = vector.shape_cast %50 : vector<8x64xf32> to vector<8x1x64xf32>
    %55 = vector.broadcast %54 : vector<8x1x64xf32> to vector<8x128x64xf32>
    %56 = arith.mulf %53, %55 : vector<8x128x64xf32>
    %57 = arith.truncf %56 : vector<8x128x64xf32> to vector<8x128x64xbf16>
    %58 = vector.shape_cast %57 : vector<8x128x64xbf16> to vector<1024x64xbf16>
    %cst_23 = arith.constant dense<0.000000e+00> : vector<1024x128xf32>
    %59 = tpu.matmul %58, %47, %cst_23 {dimension_numbers = #tpu.dot_dimension_numbers<[1], [1], [0], [0], [0, 0, 1, 0], [], []>} : vector<1024x64xbf16>, vector<128x64xbf16>, vector<1024x128xf32> -> vector<1024x128xf32>
    %60 = vector.shape_cast %59 : vector<1024x128xf32> to vector<8x128x128xf32>
    %c0_24 = arith.constant 0 : index
    %c0_25 = arith.constant 0 : index
    %61 = vector.load %arg5[%c0_24, %c0_25] : memref<128x128xf32, #tpu.memory_space<vmem>>, vector<128x128xf32>
    %62 = vector.shape_cast %61 : vector<128x128xf32> to vector<1x128x128xf32>
    %63 = vector.broadcast %62 : vector<1x128x128xf32> to vector<8x128x128xf32>
    %64 = arith.addf %60, %63 : vector<8x128x128xf32>
    %cst_26 = arith.constant dense<0xFF800000> : vector<8x128xf32>
    %65 = vector.multi_reduction <maximumf>, %64, %cst_26 [2] : vector<8x128x128xf32> to vector<8x128xf32>
    %66 = vector.shape_cast %65 : vector<8x128xf32> to vector<8x128x1xf32>
    %67 = vector.broadcast %66 : vector<8x128x1xf32> to vector<8x128x128xf32>
    %68 = arith.subf %64, %67 : vector<8x128x128xf32>
    %69 = math.exp %68 : vector<8x128x128xf32>
    %cst_27 = arith.constant dense<0.000000e+00> : vector<8x128xf32>
    %70 = vector.multi_reduction <add>, %69, %cst_27 [2] : vector<8x128x128xf32> to vector<8x128xf32>
    %71 = vector.shape_cast %70 : vector<8x128xf32> to vector<8x128x1xf32>
    %72 = tpu.reciprocal %71 {approx = true} : vector<8x128x1xf32> -> vector<8x128x1xf32>
    %73 = vector.broadcast %72 : vector<8x128x1xf32> to vector<8x128x128xf32>
    %74 = arith.mulf %69, %73 : vector<8x128x128xf32>
    %75 = vector.shape_cast %74 : vector<8x128x128xf32> to vector<1024x128xf32>
    %76 = arith.truncf %75 : vector<1024x128xf32> to vector<1024x128xbf16>
    %cst_28 = arith.constant dense<0.000000e+00> : vector<1024x64xf32>
    %77 = tpu.matmul %76, %49, %cst_28 {dimension_numbers = #tpu.dot_dimension_numbers<[1], [0], [0], [1], [0, 0, 1, 1], [], []>} : vector<1024x128xbf16>, vector<128x64xbf16>, vector<1024x64xf32> -> vector<1024x64xf32>
    %78 = vector.shape_cast %77 : vector<1024x64xf32> to vector<8x128x64xf32>
    %79 = vector.shape_cast %50 : vector<8x64xf32> to vector<8x1x64xf32>
    %80 = vector.broadcast %79 : vector<8x1x64xf32> to vector<8x128x64xf32>
    %81 = arith.mulf %78, %80 : vector<8x128x64xf32>
    %cst_29 = arith.constant dense<0.000000e+00> : vector<128x64xf32>
    %82 = vector.multi_reduction <add>, %81, %cst_29 [0] : vector<8x128x64xf32> to vector<128x64xf32>
    %83 = arith.truncf %82 : vector<128x64xf32> to vector<128x64xbf16>
    %c0_30 = arith.constant 0 : index
    %c0_31 = arith.constant 0 : index
    %84 = vector.load %arg10[%c0_30, %c0_31] : memref<64x64xbf16, #tpu.memory_space<vmem>>, vector<64x64xbf16>
    %cst_32 = arith.constant dense<0.000000e+00> : vector<128x64xf32>
    %85 = tpu.matmul %83, %84, %cst_32 {dimension_numbers = #tpu.dot_dimension_numbers<[1], [0], [0], [1], [0, 0, 1, 1], [], []>} : vector<128x64xbf16>, vector<64x64xbf16>, vector<128x64xf32> -> vector<128x64xf32>
    %c0_33 = arith.constant 0 : index
    %c0_34 = arith.constant 0 : index
    %86 = vector.load %arg11[%c0_33, %c0_34] : memref<1x64xf32, #tpu.memory_space<vmem>>, vector<1x64xf32>
    %87 = vector.broadcast %86 : vector<1x64xf32> to vector<128x64xf32>
    %88 = arith.addf %85, %87 : vector<128x64xf32>
    %89 = arith.addf %2, %88 : vector<128x64xf32>
    %90 = vector.shape_cast %89 : vector<128x64xf32> to vector<2x64x64xf32>
    %91 = tpu.transpose %90, [0, 2, 1] : vector<2x64x64xf32> -> vector<2x64x64xf32>
    %c0_35 = arith.constant 0 : index
    %c0_36 = arith.constant 0 : index
    %c0_37 = arith.constant 0 : index
    %92 = vector.load %arg12[%c0_35, %c0_36, %c0_37] : memref<2x64x64xf32, #tpu.memory_space<vmem>>, vector<2x64x64xf32>
    tpu.vector_store %arg12[%c0_35, %c0_36, %c0_37], %91 {strides = array<i32>} : memref<2x64x64xf32, #tpu.memory_space<vmem>>, vector<2x64x64xf32>,
    return
  }
  func.func @transform_0(%arg0: i32) -> (i32, i32, i32) {
    %c0_i32 = arith.constant 0 : i32
    %c0_i32_0 = arith.constant 0 : i32
    %c0_i32_1 = arith.constant 0 : i32
    return %arg0, %c0_i32, %c0_i32_0 : i32, i32, i32
  }
  func.func @transform_1(%arg0: i32) -> (i32, i32) {
    %c0_i32 = arith.constant 0 : i32
    %c0_i32_0 = arith.constant 0 : i32
    %c0_i32_1 = arith.constant 0 : i32
    return %c0_i32, %c0_i32_0 : i32, i32
  }
  func.func @transform_2(%arg0: i32) -> (i32, i32) {
    %c0_i32 = arith.constant 0 : i32
    %c0_i32_0 = arith.constant 0 : i32
    %c0_i32_1 = arith.constant 0 : i32
    return %c0_i32, %c0_i32_0 : i32, i32
  }
  func.func @transform_3(%arg0: i32) -> (i32, i32) {
    %c0_i32 = arith.constant 0 : i32
    %c0_i32_0 = arith.constant 0 : i32
    %c0_i32_1 = arith.constant 0 : i32
    return %c0_i32, %c0_i32_0 : i32, i32
  }
  func.func @transform_4(%arg0: i32) -> (i32, i32) {
    %c0_i32 = arith.constant 0 : i32
    %c0_i32_0 = arith.constant 0 : i32
    %c0_i32_1 = arith.constant 0 : i32
    return %c0_i32, %c0_i32_0 : i32, i32
  }
  func.func @transform_5(%arg0: i32) -> (i32, i32) {
    %c0_i32 = arith.constant 0 : i32
    %c0_i32_0 = arith.constant 0 : i32
    %c0_i32_1 = arith.constant 0 : i32
    return %c0_i32, %c0_i32_0 : i32, i32
  }
  func.func @transform_6(%arg0: i32) -> (i32, i32) {
    %c0_i32 = arith.constant 0 : i32
    %c0_i32_0 = arith.constant 0 : i32
    %c0_i32_1 = arith.constant 0 : i32
    return %c0_i32, %c0_i32_0 : i32, i32
  }
  func.func @transform_7(%arg0: i32) -> (i32, i32) {
    %c0_i32 = arith.constant 0 : i32
    %c0_i32_0 = arith.constant 0 : i32
    %c0_i32_1 = arith.constant 0 : i32
    return %c0_i32, %c0_i32_0 : i32, i32
  }
  func.func @transform_8(%arg0: i32) -> (i32, i32) {
    %c0_i32 = arith.constant 0 : i32
    %c0_i32_0 = arith.constant 0 : i32
    %c0_i32_1 = arith.constant 0 : i32
    return %c0_i32, %c0_i32_0 : i32, i32
  }
  func.func @transform_9(%arg0: i32) -> (i32, i32) {
    %c0_i32 = arith.constant 0 : i32
    %c0_i32_0 = arith.constant 0 : i32
    %c0_i32_1 = arith.constant 0 : i32
    return %c0_i32, %c0_i32_0 : i32, i32
  }
  func.func @transform_10(%arg0: i32) -> (i32, i32) {
    %c0_i32 = arith.constant 0 : i32
    %c0_i32_0 = arith.constant 0 : i32
    %c0_i32_1 = arith.constant 0 : i32
    return %c0_i32, %c0_i32_0 : i32, i32
  }
  func.func @transform_11(%arg0: i32) -> (i32, i32, i32) {
    %c0_i32 = arith.constant 0 : i32
    %c0_i32_0 = arith.constant 0 : i32
    %c0_i32_1 = arith.constant 0 : i32
    return %arg0, %c0_i32, %c0_i32_0 : i32, i32, i32
  }
}

</mosaic_0001>

<llo_original>
// kernel: tpu_custom_call.1
$region0: #{tpu_custom_call.1}
  #allocation0 [shape = 'u32[]', space=smem, size = 0x4, offset = 0x4, fixed_abs, tag = 'smem constant byte address 0x4 - core index']
  #allocation1 [shape = 'u32[144,128]{1,0:T(1,128)}', space=vmem, size = 0x12000, scoped, tag = 'internal scratch']
  %s0 = inlined_call_operand.hbm [shape: f32[4,64,64], index: 0, kind: input, shape index: {}]
  %s1 = inlined_call_operand.vmem [shape: f32[128,64], index: 1, kind: input, shape index: {}]
  %s2 = inlined_call_operand.vmem [shape: f32[64,128], index: 2, kind: input, shape index: {}]
  %s3 = inlined_call_operand.hbm [shape: f32[8,64], index: 3, kind: input, shape index: {}]
  %s4 = inlined_call_operand.vmem [shape: f32[128,128], index: 4, kind: input, shape index: {}]
  %s5 = inlined_call_operand.hbm [shape: f32[1,64], index: 5, kind: input, shape index: {}]
  %s6 = inlined_call_operand.hbm [shape: f32[1,64], index: 6, kind: input, shape index: {}]
  %s7 = inlined_call_operand.hbm [shape: bf16[64,192], index: 7, kind: input, shape index: {}]
  %s8 = inlined_call_operand.vmem [shape: f32[1,192], index: 8, kind: input, shape index: {}]
  %s9 = inlined_call_operand.vmem [shape: bf16[64,64], index: 9, kind: input, shape index: {}]
  %s10 = inlined_call_operand.vmem [shape: f32[1,64], index: 10, kind: input, shape index: {}]
  %s11 = inlined_call_operand.hbm [shape: f32[4,64,64], index: 11, kind: output, shape index: {}]
  %s12 = sld [smem:[#allocation0]]
  $region97: #{tpu_custom_call.1} parent=0
    _
  %s14 = ssub.s32 1, %s12
  %s15 = scalar_select 0, %s14, %s12
  $region1: #{tpu_custom_call.1} parent=0
    #allocation2 [shape = 'u8[131072]{0}', space=vmem, size = 0x20000, scoped, tag = 'input window, operand 0']
    #allocation3 [shape = 's32[2]{0}', space=sflag, size = 0x8, scoped, tag = 'scoped memory for tpu_custom_call.1']
    #allocation4 [shape = 's32[2]{0}', space=sflag, size = 0x8, scoped, tag = 'scoped memory for tpu_custom_call.1']
    #allocation5 [shape = 'u8[4096]{0}', space=vmem, size = 0x1000, scoped, tag = 'input window, operand 3, single buffered']
    #allocation6 [shape = 's32[1]{0}', space=sflag, size = 0x4, scoped, tag = 'scoped memory for tpu_custom_call.1']
    #allocation7 [shape = 'u8[512]{0}', space=vmem, size = 0x400, scoped, tag = 'input window, operand 5, single buffered']
    #allocation8 [shape = 'u8[512]{0}', space=vmem, size = 0x400, scoped, tag = 'input window, operand 6, single buffered']
    #allocation9 [shape = 's32[1]{0}', space=sflag, size = 0x4, scoped, tag = 'scoped memory for tpu_custom_call.1']
    #allocation10 [shape = 'u8[32768]{0}', space=vmem, size = 0x8000, scoped, tag = 'input window, operand 7, single buffered']
    #allocation11 [shape = 'u8[131072]{0}', space=vmem, size = 0x20000, scoped, tag = 'output window, operand 0']
    %16 = vsyncpa [#allocation3], 0
    %s17 = scalar_lea.sflag [#allocation3], 1
    %18 = vsyncpa %s17, 0
    %19 = vsyncpa [#allocation6], 0
    %20 = vsyncpa [#allocation9], 0
    %21 = vsyncpa [#allocation4], 0
    %s22 = scalar_lea.sflag [#allocation4], 1
    %23 = vsyncpa %s22, 0
    loop: start=0, step=1, limit=4
    $region2: #{tpu_custom_call.1} parent=1 // loop_pre_header
      _
    $region3: #{tpu_custom_call.1} parent=1 // loop_header
      %s25 = sphi 0, %s29
      %p26 = scmp.ge.s32.totalorder %s25, 4
      %s35 = sphi 0, %s37
      %s38 = sphi 0, %s35
      %s39 = sphi 0, %s38
      %s55 = sphi 0, %s39
      %s59 = sphi 0, %s59
      %s61 = sphi 0, %s59
      %s62 = sphi 0, %s61
      %s76 = sphi 0, %s62
      %s80 = sphi 0, %s80
      %s82 = sphi 0, %s80
      %s83 = sphi 0, %s82
      %s97 = sphi 0, %s83
      %s101 = sphi 0, %s101
      %s103 = sphi 0, %s101
      %s104 = sphi 0, %s103
      %s118 = sphi 0, %s104
      %s122 = sphi 0, %s122
      %s124 = sphi 0, %s122
      %s125 = sphi 0, %s124
      %s139 = sphi 0, %s125
      %s143 = sphi 0, %s143
      %s145 = sphi 0, %s143
      %s146 = sphi 0, %s145
      %s160 = sphi 0, %s146
      %s164 = sphi 0, %s164
      %s166 = sphi 0, %s164
      %s167 = sphi 0, %s166
      %s181 = sphi 0, %s167
      %s185 = sphi 0, %s185
      %s187 = sphi 0, %s185
      %s188 = sphi 0, %s187
      %s202 = sphi 0, %s188
      %s206 = sphi 0, %s206
      %s208 = sphi 0, %s206
      %s209 = sphi 0, %s208
      %s223 = sphi 0, %s209
      %s227 = sphi 0, %s227
      %s229 = sphi 0, %s227
      %s230 = sphi 0, %s229
      %s244 = sphi 0, %s230
      %s248 = sphi 0, %s248
      %s250 = sphi 0, %s248
      %s251 = sphi 0, %s250
      %s265 = sphi 0, %s251
      %s271 = sphi 0, %s273
      %s274 = sphi 0, %s271
      %s275 = sphi 0, %s274
      %s291 = sphi 0, %s275
    $region4: #{tpu_custom_call.1} parent=1 // loop_header_branch
      %28 = sbr.rel (%p26) target = $region8
    $region5: #{tpu_custom_call.1} parent=1 // loop_body
      %s30 = ssub.s32 %s25, 1
      %s31 = ssub.s32 %s25, 2
      %s32 = sadd.s32 %s25, 1
      %s33 = ssub.s32 %s25, %s32
      %p34 = scmp.eq.s32.totalorder %s33, 0
      %s36 = sadd.s32 %s35, 1
      %s37 = scalar_select %p34, %s35, %s36
      %p40 = pneg %p34
      %p41 = scmp.eq.s32.totalorder %s25, 1
      %p42 = por %p40, %p41
      %p43 = scmp.ne.s32.totalorder %s35, %s38
      %p44 = scmp.eq.s32.totalorder %s25, 0
      %p45 = por %p43, %p44
      %p46 = scmp.ne.s32.totalorder %s35, %s38
      %p47 = scmp.eq.s32.totalorder %s30, 1
      %p48 = por %p46, %p47
      %p49 = scmp.ne.s32.totalorder %s38, %s39
      %p50 = scmp.eq.s32.totalorder %s30, 0
      %p51 = por %p49, %p50
      %p52 = scmp.ne.s32.totalorder %s38, %s39
      %p53 = scmp.eq.s32.totalorder %s31, 1
      %p54 = por %p52, %p53
      %p56 = scmp.ne.s32.totalorder %s39, %s55
      %p57 = scmp.eq.s32.totalorder %s31, 0
      %p58 = por %p56, %p57
      %s60 = sadd.s32 %s59, 1
      %p63 = scmp.eq.s32.totalorder %s25, 1
      %p64 = scmp.ne.s32.totalorder %s59, %s61
      %p65 = scmp.eq.s32.totalorder %s25, 0
      %p66 = por %p64, %p65
      %p67 = scmp.ne.s32.totalorder %s59, %s61
      %p68 = scmp.eq.s32.totalorder %s30, 1
      %p69 = por %p67, %p68
      %p70 = scmp.ne.s32.totalorder %s61, %s62
      %p71 = scmp.eq.s32.totalorder %s30, 0
      %p72 = por %p70, %p71
      %p73 = scmp.ne.s32.totalorder %s61, %s62
      %p74 = scmp.eq.s32.totalorder %s31, 1
      %p75 = por %p73, %p74
      %p77 = scmp.ne.s32.totalorder %s62, %s76
      %p78 = scmp.eq.s32.totalorder %s31, 0
      %p79 = por %p77, %p78
      %s81 = sadd.s32 %s80, 1
      %p84 = scmp.eq.s32.totalorder %s25, 1
      %p85 = scmp.ne.s32.totalorder %s80, %s82
      %p86 = scmp.eq.s32.totalorder %s25, 0
      %p87 = por %p85, %p86
      %p88 = scmp.ne.s32.totalorder %s80, %s82
      %p89 = scmp.eq.s32.totalorder %s30, 1
      %p90 = por %p88, %p89
      %p91 = scmp.ne.s32.totalorder %s82, %s83
      %p92 = scmp.eq.s32.totalorder %s30, 0
      %p93 = por %p91, %p92
      %p94 = scmp.ne.s32.totalorder %s82, %s83
      %p95 = scmp.eq.s32.totalorder %s31, 1
      %p96 = por %p94, %p95
      %p98 = scmp.ne.s32.totalorder %s83, %s97
      %p99 = scmp.eq.s32.totalorder %s31, 0
      %p100 = por %p98, %p99
      %s102 = sadd.s32 %s101, 1
      %p105 = scmp.eq.s32.totalorder %s25, 1
      %p106 = scmp.ne.s32.totalorder %s101, %s103
      %p107 = scmp.eq.s32.totalorder %s25, 0
      %p108 = por %p106, %p107
      %p109 = scmp.ne.s32.totalorder %s101, %s103
      %p110 = scmp.eq.s32.totalorder %s30, 1
      %p111 = por %p109, %p110
      %p112 = scmp.ne.s32.totalorder %s103, %s104
      %p113 = scmp.eq.s32.totalorder %s30, 0
      %p114 = por %p112, %p113
      %p115 = scmp.ne.s32.totalorder %s103, %s104
      %p116 = scmp.eq.s32.totalorder %s31, 1
      %p117 = por %p115, %p116
      %p119 = scmp.ne.s32.totalorder %s104, %s118
      %p120 = scmp.eq.s32.totalorder %s31, 0
      %p121 = por %p119, %p120
      %s123 = sadd.s32 %s122, 1
      %p126 = scmp.eq.s32.totalorder %s25, 1
      %p127 = scmp.ne.s32.totalorder %s122, %s124
      %p128 = scmp.eq.s32.totalorder %s25, 0
      %p129 = por %p127, %p128
      %p130 = scmp.ne.s32.totalorder %s122, %s124
      %p131 = scmp.eq.s32.totalorder %s30, 1
      %p132 = por %p130, %p131
      %p133 = scmp.ne.s32.totalorder %s124, %s125
      %p134 = scmp.eq.s32.totalorder %s30, 0
      %p135 = por %p133, %p134
      %p136 = scmp.ne.s32.totalorder %s124, %s125
      %p137 = scmp.eq.s32.totalorder %s31, 1
      %p138 = por %p136, %p137
      %p140 = scmp.ne.s32.totalorder %s125, %s139
      %p141 = scmp.eq.s32.totalorder %s31, 0
      %p142 = por %p140, %p141
      %s144 = sadd.s32 %s143, 1
      %p147 = scmp.eq.s32.totalorder %s25, 1
      %p148 = scmp.ne.s32.totalorder %s143, %s145
      %p149 = scmp.eq.s32.totalorder %s25, 0
      %p150 = por %p148, %p149
      %p151 = scmp.ne.s32.totalorder %s143, %s145
      %p152 = scmp.eq.s32.totalorder %s30, 1
      %p153 = por %p151, %p152
      %p154 = scmp.ne.s32.totalorder %s145, %s146
      %p155 = scmp.eq.s32.totalorder %s30, 0
      %p156 = por %p154, %p155
      %p157 = scmp.ne.s32.totalorder %s145, %s146
      %p158 = scmp.eq.s32.totalorder %s31, 1
      %p159 = por %p157, %p158
      %p161 = scmp.ne.s32.totalorder %s146, %s160
      %p162 = scmp.eq.s32.totalorder %s31, 0
      %p163 = por %p161, %p162
      %s165 = sadd.s32 %s164, 1
      %p168 = scmp.eq.s32.totalorder %s25, 1
      %p169 = scmp.ne.s32.totalorder %s164, %s166
      %p170 = scmp.eq.s32.totalorder %s25, 0
      %p171 = por %p169, %p170
      %p172 = scmp.ne.s32.totalorder %s164, %s166
      %p173 = scmp.eq.s32.totalorder %s30, 1
      %p174 = por %p172, %p173
      %p175 = scmp.ne.s32.totalorder %s166, %s167
      %p176 = scmp.eq.s32.totalorder %s30, 0
      %p177 = por %p175, %p176
      %p178 = scmp.ne.s32.totalorder %s166, %s167
      %p179 = scmp.eq.s32.totalorder %s31, 1
      %p180 = por %p178, %p179
      %p182 = scmp.ne.s32.totalorder %s167, %s181
      %p183 = scmp.eq.s32.totalorder %s31, 0
      %p184 = por %p182, %p183
      %s186 = sadd.s32 %s185, 1
      %p189 = scmp.eq.s32.totalorder %s25, 1
      %p190 = scmp.ne.s32.totalorder %s185, %s187
      %p191 = scmp.eq.s32.totalorder %s25, 0
      %p192 = por %p190, %p191
      %p193 = scmp.ne.s32.totalorder %s185, %s187
      %p194 = scmp.eq.s32.totalorder %s30, 1
      %p195 = por %p193, %p194
      %p196 = scmp.ne.s32.totalorder %s187, %s188
      %p197 = scmp.eq.s32.totalorder %s30, 0
      %p198 = por %p196, %p197
      %p199 = scmp.ne.s32.totalorder %s187, %s188
      %p200 = scmp.eq.s32.totalorder %s31, 1
      %p201 = por %p199, %p200
      %p203 = scmp.ne.s32.totalorder %s188, %s202
      %p204 = scmp.eq.s32.totalorder %s31, 0
      %p205 = por %p203, %p204
      %s207 = sadd.s32 %s206, 1
      %p210 = scmp.eq.s32.totalorder %s25, 1
      %p211 = scmp.ne.s32.totalorder %s206, %s208
      %p212 = scmp.eq.s32.totalorder %s25, 0
      %p213 = por %p211, %p212
      %p214 = scmp.ne.s32.totalorder %s206, %s208
      %p215 = scmp.eq.s32.totalorder %s30, 1
      %p216 = por %p214, %p215
      %p217 = scmp.ne.s32.totalorder %s208, %s209
      %p218 = scmp.eq.s32.totalorder %s30, 0
      %p219 = por %p217, %p218
      %p220 = scmp.ne.s32.totalorder %s208, %s209
      %p221 = scmp.eq.s32.totalorder %s31, 1
      %p222 = por %p220, %p221
      %p224 = scmp.ne.s32.totalorder %s209, %s223
      %p225 = scmp.eq.s32.totalorder %s31, 0
      %p226 = por %p224, %p225
      %s228 = sadd.s32 %s227, 1
      %p231 = scmp.eq.s32.totalorder %s25, 1
      %p232 = scmp.ne.s32.totalorder %s227, %s229
      %p233 = scmp.eq.s32.totalorder %s25, 0
      %p234 = por %p232, %p233
      %p235 = scmp.ne.s32.totalorder %s227, %s229
      %p236 = scmp.eq.s32.totalorder %s30, 1
      %p237 = por %p235, %p236
      %p238 = scmp.ne.s32.totalorder %s229, %s230
      %p239 = scmp.eq.s32.totalorder %s30, 0
      %p240 = por %p238, %p239
      %p241 = scmp.ne.s32.totalorder %s229, %s230
      %p242 = scmp.eq.s32.totalorder %s31, 1
      %p243 = por %p241, %p242
      %p245 = scmp.ne.s32.totalorder %s230, %s244
      %p246 = scmp.eq.s32.totalorder %s31, 0
      %p247 = por %p245, %p246
      %s249 = sadd.s32 %s248, 1
      %p252 = scmp.eq.s32.totalorder %s25, 1
      %p253 = scmp.ne.s32.totalorder %s248, %s250
      %p254 = scmp.eq.s32.totalorder %s25, 0
      %p255 = por %p253, %p254
      %p256 = scmp.ne.s32.totalorder %s248, %s250
      %p257 = scmp.eq.s32.totalorder %s30, 1
      %p258 = por %p256, %p257
      %p259 = scmp.ne.s32.totalorder %s250, %s251
      %p260 = scmp.eq.s32.totalorder %s30, 0
      %p261 = por %p259, %p260
      %p262 = scmp.ne.s32.totalorder %s250, %s251
      %p263 = scmp.eq.s32.totalorder %s31, 1
      %p264 = por %p262, %p263
      %p266 = scmp.ne.s32.totalorder %s251, %s265
      %p267 = scmp.eq.s32.totalorder %s31, 0
      %p268 = por %p266, %p267
      %s269 = ssub.s32 %s25, %s32
      %p270 = scmp.eq.s32.totalorder %s269, 0
      %s272 = sadd.s32 %s271, 1
      %s273 = scalar_select %p270, %s271, %s272
      %p276 = pneg %p270
      %p277 = scmp.eq.s32.totalorder %s25, 1
      %p278 = por %p276, %p277
      %p279 = scmp.ne.s32.totalorder %s271, %s274
      %p280 = scmp.eq.s32.totalorder %s25, 0
      %p281 = por %p279, %p280
      %p282 = scmp.ne.s32.totalorder %s271, %s274
      %p283 = scmp.eq.s32.totalorder %s30, 1
      %p284 = por %p282, %p283
      %p285 = scmp.ne.s32.totalorder %s274, %s275
      %p286 = scmp.eq.s32.totalorder %s30, 0
      %p287 = por %p285, %p286
      %p288 = scmp.ne.s32.totalorder %s274, %s275
      %p289 = scmp.eq.s32.totalorder %s31, 1
      %p290 = por %p288, %p289
      %p292 = scmp.ne.s32.totalorder %s275, %s291
      %p293 = scmp.eq.s32.totalorder %s31, 0
      %p294 = por %p292, %p293
      %p295 = scmp.le.s32.totalorder 1, %s25
      %p296 = scmp.lt.s32.totalorder %s25, 3
      %p297 = pnand %p295, %p296
      %p298 = pneg %p297
      // Predicated region
      $region9: #{tpu_custom_call.1} parent=5 // pred_check
        _
      $region10: #{tpu_custom_call.1} parent=5 // pred_check_branch
        %300 = sbr.rel (%p297) target = $region12
      $region11: #{tpu_custom_call.1} parent=5 // pred_region
        %s301 = ssub.s32 %s25, 1
        // Predicated region
        $region13: #{tpu_custom_call.1} parent=11 // pred_check
          %p302 = pneg %p72
        $region14: #{tpu_custom_call.1} parent=11 // pred_check_branch
          %304 = sbr.rel (%p302) target = $region16
        $region15: #{tpu_custom_call.1} parent=11 // pred_region
          _
        $region16: #{tpu_custom_call.1} parent=11 // pred_fallthru
          _
        // Predicated region
        $region17: #{tpu_custom_call.1} parent=11 // pred_check
          %p305 = pneg %p93
        $region18: #{tpu_custom_call.1} parent=11 // pred_check_branch
          %307 = sbr.rel (%p305) target = $region20
        $region19: #{tpu_custom_call.1} parent=11 // pred_region
          _
        $region20: #{tpu_custom_call.1} parent=11 // pred_fallthru
          _
        // Predicated region
        $region21: #{tpu_custom_call.1} parent=11 // pred_check
          %p308 = pneg %p114
        $region22: #{tpu_custom_call.1} parent=11 // pred_check_branch
          %310 = sbr.rel (%p308) target = $region24
        $region23: #{tpu_custom_call.1} parent=11 // pred_region
          %s312 = ssub.s32 128, 128
          %313 = vsyncadd [#allocation6], %s312
          %s315 = sshll.u32 [#allocation5], 4
          %s316 = int_to_ptr.vmem [resolvable:$true] %s315
          %318 = dma.hbm_to_vmem [thread:$0]  %s3, 128, %s316, [#allocation6]
        $region24: #{tpu_custom_call.1} parent=11 // pred_fallthru
          _
        // Predicated region
        $region25: #{tpu_custom_call.1} parent=11 // pred_check
          %p319 = pneg %p135
        $region26: #{tpu_custom_call.1} parent=11 // pred_check_branch
          %321 = sbr.rel (%p319) target = $region28
        $region27: #{tpu_custom_call.1} parent=11 // pred_region
          _
        $region28: #{tpu_custom_call.1} parent=11 // pred_fallthru
          _
        // Predicated region
        $region29: #{tpu_custom_call.1} parent=11 // pred_check
          %p322 = pneg %p156
        $region30: #{tpu_custom_call.1} parent=11 // pred_check_branch
          %324 = sbr.rel (%p322) target = $region32
        $region31: #{tpu_custom_call.1} parent=11 // pred_region
          %s326 = ssub.s32 16, 16
          %327 = vsyncadd [#allocation6], %s326
          %s329 = sshll.u32 [#allocation7], 4
          %s330 = int_to_ptr.vmem [resolvable:$true] %s329
          %332 = dma.hbm_to_vmem [thread:$0]  %s5, 16, %s330, [#allocation6]
        $region32: #{tpu_custom_call.1} parent=11 // pred_fallthru
          _
        // Predicated region
        $region33: #{tpu_custom_call.1} parent=11 // pred_check
          %p333 = pneg %p177
        $region34: #{tpu_custom_call.1} parent=11 // pred_check_branch
          %335 = sbr.rel (%p333) target = $region36
        $region35: #{tpu_custom_call.1} parent=11 // pred_region
          %s337 = ssub.s32 16, 16
          %338 = vsyncadd [#allocation9], %s337
          %s340 = sshll.u32 [#allocation8], 4
          %s341 = int_to_ptr.vmem [resolvable:$true] %s340
          %343 = dma.hbm_to_vmem [thread:$0]  %s6, 16, %s341, [#allocation9]
        $region36: #{tpu_custom_call.1} parent=11 // pred_fallthru
          _
        // Predicated region
        $region37: #{tpu_custom_call.1} parent=11 // pred_check
          %p344 = pneg %p198
        $region38: #{tpu_custom_call.1} parent=11 // pred_check_branch
          %346 = sbr.rel (%p344) target = $region40
        $region39: #{tpu_custom_call.1} parent=11 // pred_region
          %s348 = ssub.s32 1024, 1024
          %349 = vsyncadd [#allocation9], %s348
          %s350 = sshll.u32 [#allocation10], 4
          %s351 = int_to_ptr.vmem [resolvable:$true] %s350
          %356 = dma.hbm_to_vmem [thread:$0]  %s7, 1024, %s351, [#allocation9], 128, 128, 8
        $region40: #{tpu_custom_call.1} parent=11 // pred_fallthru
          _
        // Predicated region
        $region41: #{tpu_custom_call.1} parent=11 // pred_check
          %p357 = pneg %p219
        $region42: #{tpu_custom_call.1} parent=11 // pred_check_branch
          %359 = sbr.rel (%p357) target = $region44
        $region43: #{tpu_custom_call.1} parent=11 // pred_region
          _
        $region44: #{tpu_custom_call.1} parent=11 // pred_fallthru
          _
        // Predicated region
        $region45: #{tpu_custom_call.1} parent=11 // pred_check
          %p360 = pneg %p240
        $region46: #{tpu_custom_call.1} parent=11 // pred_check_branch
          %362 = sbr.rel (%p360) target = $region48
        $region47: #{tpu_custom_call.1} parent=11 // pred_region
          _
        $region48: #{tpu_custom_call.1} parent=11 // pred_fallthru
          _
        // Predicated region
        $region49: #{tpu_custom_call.1} parent=11 // pred_check
          %p363 = pneg %p261
        $region50: #{tpu_custom_call.1} parent=11 // pred_check_branch
          %365 = sbr.rel (%p363) target = $region52
        $region51: #{tpu_custom_call.1} parent=11 // pred_region
          _
        $region52: #{tpu_custom_call.1} parent=11 // pred_fallthru
          _
      $region12: #{tpu_custom_call.1} parent=5 // pred_fallthru
        _
      %p366 = scmp.lt.s32.totalorder %s25, 2
      // Predicated region
      $region53: #{tpu_custom_call.1} parent=5 // pred_check
        %p367 = pneg %p366
      $region54: #{tpu_custom_call.1} parent=5 // pred_check_branch
        %369 = sbr.rel (%p367) target = $region56
      $region55: #{tpu_custom_call.1} parent=5 // pred_region
        // Predicated region
        $region57: #{tpu_custom_call.1} parent=55 // pred_check
          %p370 = pneg %p45
        $region58: #{tpu_custom_call.1} parent=55 // pred_check_branch
          %372 = sbr.rel (%p370) target = $region60
        $region59: #{tpu_custom_call.1} parent=55 // pred_region
          %s373 = sand.u32 %s35, 1
          %s374 = scalar_lea.sflag [#allocation3], %s373
          %s375 = sand.u32 %s35, 1
          %s376 = smul.addr %s375, 128
          %s377 = scalar_lea.vmem [#allocation2], %s376
          %s378 = smul.u32 2, %s25
          %s380 = ssub.s32 2048, 2048
          %381 = vsyncadd %s374, %s380
          %s382 = smul.addr %s378, 8
          %s383 = smul.addr %s382, 128
          %s384 = scalar_lea.hbm %s0, %s383
          %s385 = sshll.u32 %s377, 4
          %s386 = int_to_ptr.vmem [resolvable:$true] %s385
          %391 = dma.hbm_to_vmem [thread:$0]  %s384, 2048, %s386, %s374, 128, 128, 8
        $region60: #{tpu_custom_call.1} parent=55 // pred_fallthru
          _
      $region56: #{tpu_custom_call.1} parent=5 // pred_fallthru
        _
      %p392 = scmp.le.s32.totalorder 1, %s25
      %p393 = scmp.lt.s32.totalorder %s25, 3
      %p394 = pnand %p392, %p393
      %p395 = pneg %p394
      // Predicated region
      $region61: #{tpu_custom_call.1} parent=5 // pred_check
        _
      $region62: #{tpu_custom_call.1} parent=5 // pred_check_branch
        %397 = sbr.rel (%p394) target = $region64
      $region63: #{tpu_custom_call.1} parent=5 // pred_region
        %s398 = ssub.s32 %s25, 1
        %s399 = sand.u32 %s38, 1
        %s400 = scalar_lea.sflag [#allocation3], %s399
        %s401 = sand.u32 %s38, 1
        %s402 = smul.addr %s401, 128
        %s403 = scalar_lea.vmem [#allocation2], %s402
        // Predicated region
        $region65: #{tpu_custom_call.1} parent=63 // pred_check
          %p404 = pneg %p51
        $region66: #{tpu_custom_call.1} parent=63 // pred_check_branch
          %406 = sbr.rel (%p404) target = $region68
        $region67: #{tpu_custom_call.1} parent=63 // pred_region
          %407 = dma.done %s400, 2048
        $region68: #{tpu_custom_call.1} parent=63 // pred_fallthru
          _
        // Predicated region
        $region69: #{tpu_custom_call.1} parent=63 // pred_check
          %p408 = pneg %p114
        $region70: #{tpu_custom_call.1} parent=63 // pred_check_branch
          %410 = sbr.rel (%p408) target = $region72
        $region71: #{tpu_custom_call.1} parent=63 // pred_region
          %411 = dma.done [#allocation6], 128
        $region72: #{tpu_custom_call.1} parent=63 // pred_fallthru
          _
        // Predicated region
        $region73: #{tpu_custom_call.1} parent=63 // pred_check
          %p412 = pneg %p156
        $region74: #{tpu_custom_call.1} parent=63 // pred_check_branch
          %414 = sbr.rel (%p412) target = $region76
        $region75: #{tpu_custom_call.1} parent=63 // pred_region
          %415 = dma.done [#allocation6], 16
        $region76: #{tpu_custom_call.1} parent=63 // pred_fallthru
          _
        // Predicated region
        $region77: #{tpu_custom_call.1} parent=63 // pred_check
          %p416 = pneg %p177
        $region78: #{tpu_custom_call.1} parent=63 // pred_check_branch
          %418 = sbr.rel (%p416) target = $region80
        $region79: #{tpu_custom_call.1} parent=63 // pred_region
          %419 = dma.done [#allocation9], 16
        $region80: #{tpu_custom_call.1} parent=63 // pred_fallthru
          _
        // Predicated region
        $region81: #{tpu_custom_call.1} parent=63 // pred_check
          %p420 = pneg %p198
        $region82: #{tpu_custom_call.1} parent=63 // pred_check_branch
          %422 = sbr.rel (%p420) target = $region84
        $region83: #{tpu_custom_call.1} parent=63 // pred_region
          %423 = dma.done [#allocation9], 1024
        $region84: #{tpu_custom_call.1} parent=63 // pred_fallthru
          _
        %s424 = sand.u32 %s38, 1
        %s425 = scalar_lea.sflag [#allocation3], %s424
        %s426 = sand.u32 %s38, 1
        %s427 = smul.addr %s426, 128
        %s428 = scalar_lea.vmem [#allocation2], %s427
        %p429 = pneg %p51
        %p430 = pneg %p48
        %p431 = pneg %p72
        %p432 = pneg %p69
        %p433 = pneg %p93
        %p434 = pneg %p90
        %p435 = pneg %p114
        %p436 = pneg %p111
        %p437 = pneg %p135
        %p438 = pneg %p132
        %p439 = pneg %p156
        %p440 = pneg %p153
        %p441 = pneg %p177
        %p442 = pneg %p174
        %p443 = pneg %p198
        %p444 = pneg %p195
        %p445 = pneg %p219
        %p446 = pneg %p216
        %p447 = pneg %p240
        %p448 = pneg %p237
        %p449 = pneg %p261
        %p450 = pneg %p258
        %p451 = pneg %p287
        %p452 = pneg %p284
        %s453 = sand.u32 %s274, 1
        %s454 = scalar_lea.sflag [#allocation4], %s453
        %s455 = sand.u32 %s274, 1
        %s456 = smul.addr %s455, 128
        %s457 = scalar_lea.vmem [#allocation11], %s456
        %s458 = smul.u32 2, %s30
        %s459 = smul.u32 2, %s30
        %v461 = vld [vmem:[%s403] sm:$0xff]
        %v462 = vld [vmem:[%s403 + $0x8] sm:$0xff]
        %v463 = vld [vmem:[%s403 + $0x10] sm:$0xff]
        %v464 = vld [vmem:[%s403 + $0x18] sm:$0xff]
        %v465 = vld [vmem:[%s403 + $0x20] sm:$0xff]
        %v466 = vld [vmem:[%s403 + $0x28] sm:$0xff]
        %v467 = vld [vmem:[%s403 + $0x30] sm:$0xff]
        %v468 = vld [vmem:[%s403 + $0x38] sm:$0xff]
        %v469 = vld [vmem:[%s403 + $0x40] sm:$0xff]
        %v470 = vld [vmem:[%s403 + $0x48] sm:$0xff]
        %v471 = vld [vmem:[%s403 + $0x50] sm:$0xff]
        %v472 = vld [vmem:[%s403 + $0x58] sm:$0xff]
        %v473 = vld [vmem:[%s403 + $0x60] sm:$0xff]
        %v474 = vld [vmem:[%s403 + $0x68] sm:$0xff]
        %v475 = vld [vmem:[%s403 + $0x70] sm:$0xff]
        %v476 = vld [vmem:[%s403 + $0x78] sm:$0xff]
        %477 = vxpose.xlu0.b32.start [1/16] %v461, 128
        %478 = vxpose.xlu0.b32.cont [2/16] %v462, 128
        %479 = vxpose.xlu0.b32.cont [3/16] %v463, 128
        %480 = vxpose.xlu0.b32.cont [4/16] %v464, 128
        %481 = vxpose.xlu0.b32.cont [5/16] %v465, 128
        %482 = vxpose.xlu0.b32.cont [6/16] %v466, 128
        %483 = vxpose.xlu0.b32.cont [7/16] %v467, 128
        %484 = vxpose.xlu0.b32.cont [8/16] %v468, 128
        %485 = vxpose.xlu0.b32.cont [9/16] 0.0, 128
        %486 = vxpose.xlu0.b32.cont [10/16] 0.0, 128
        %487 = vxpose.xlu0.b32.cont [11/16] 0.0, 128
        %488 = vxpose.xlu0.b32.cont [12/16] 0.0, 128
        %489 = vxpose.xlu0.b32.cont [13/16] 0.0, 128
        %490 = vxpose.xlu0.b32.cont [14/16] 0.0, 128
        %491 = vxpose.xlu0.b32.cont [15/16] 0.0, 128
        %492 = vxpose.xlu0.b32.end [16/16] 0.0, 128
        %v493 = vpop.trf.xlu0
        %v494 = vpop.trf.xlu0
        %v495 = vpop.trf.xlu0
        %v496 = vpop.trf.xlu0
        %v497 = vpop.trf.xlu0
        %v498 = vpop.trf.xlu0
        %v499 = vpop.trf.xlu0
        %v500 = vpop.trf.xlu0
        %v501 = vpop.trf.xlu0
        %v502 = vpop.trf.xlu0
        %v503 = vpop.trf.xlu0
        %v504 = vpop.trf.xlu0
        %v505 = vpop.trf.xlu0
        %v506 = vpop.trf.xlu0
        %v507 = vpop.trf.xlu0
        %v508 = vpop.trf.xlu0
        %509 = vxpose.xlu0.b32.start [1/16] %v469, 128
        %510 = vxpose.xlu0.b32.cont [2/16] %v470, 128
        %511 = vxpose.xlu0.b32.cont [3/16] %v471, 128
        %512 = vxpose.xlu0.b32.cont [4/16] %v472, 128
        %513 = vxpose.xlu0.b32.cont [5/16] %v473, 128
        %514 = vxpose.xlu0.b32.cont [6/16] %v474, 128
        %515 = vxpose.xlu0.b32.cont [7/16] %v475, 128
        %516 = vxpose.xlu0.b32.cont [8/16] %v476, 128
        %517 = vxpose.xlu0.b32.cont [9/16] 0.0, 128
        %518 = vxpose.xlu0.b32.cont [10/16] 0.0, 128
        %519 = vxpose.xlu0.b32.cont [11/16] 0.0, 128
        %520 = vxpose.xlu0.b32.cont [12/16] 0.0, 128
        %521 = vxpose.xlu0.b32.cont [13/16] 0.0, 128
        %522 = vxpose.xlu0.b32.cont [14/16] 0.0, 128
        %523 = vxpose.xlu0.b32.cont [15/16] 0.0, 128
        %524 = vxpose.xlu0.b32.end [16/16] 0.0, 128
        %v525 = vpop.trf.xlu0
        %v526 = vpop.trf.xlu0
        %v527 = vpop.trf.xlu0
        %v528 = vpop.trf.xlu0
        %v529 = vpop.trf.xlu0
        %v530 = vpop.trf.xlu0
        %v531 = vpop.trf.xlu0
        %v532 = vpop.trf.xlu0
        %v533 = vpop.trf.xlu0
        %v534 = vpop.trf.xlu0
        %v535 = vpop.trf.xlu0
        %v536 = vpop.trf.xlu0
        %v537 = vpop.trf.xlu0
        %v538 = vpop.trf.xlu0
        %v539 = vpop.trf.xlu0
        %v540 = vpop.trf.xlu0
        %vm541 = vcmask 523264
        %v542 = vsel %vm541, %v493, 0.0
        %v543 = vsel %vm541, %v494, 0.0
        %v544 = vadd.f32 %v542, %v543
        %v545 = vsel %vm541, %v495, 0.0
        %v546 = vadd.f32 %v544, %v545
        %v547 = vsel %vm541, %v496, 0.0
        %v548 = vadd.f32 %v546, %v547
        %v549 = vsel %vm541, %v497, 0.0
        %v550 = vadd.f32 %v548, %v549
        %v551 = vsel %vm541, %v498, 0.0
        %v552 = vadd.f32 %v550, %v551
        %v553 = vsel %vm541, %v499, 0.0
        %v554 = vadd.f32 %v552, %v553
        %v555 = vsel %vm541, %v500, 0.0
        %v556 = vadd.f32 %v554, %v555
        %v557 = vrot.slane %v556, 4
        %v558 = vadd.f32 %v556, %v557
        %v559 = vrot.slane %v558, 2
        %v560 = vadd.f32 %v558, %v559
        %v561 = vrot.slane %v560, 1
        %v562 = vadd.f32 %v560, %v561
        %v563 = vsel %vm541, %v525, 0.0
        %v564 = vsel %vm541, %v526, 0.0
        %v565 = vadd.f32 %v563, %v564
        %v566 = vsel %vm541, %v527, 0.0
        %v567 = vadd.f32 %v565, %v566
        %v568 = vsel %vm541, %v528, 0.0
        %v569 = vadd.f32 %v567, %v568
        %v570 = vsel %vm541, %v529, 0.0
        %v571 = vadd.f32 %v569, %v570
        %v572 = vsel %vm541, %v530, 0.0
        %v573 = vadd.f32 %v571, %v572
        %v574 = vsel %vm541, %v531, 0.0
        %v575 = vadd.f32 %v573, %v574
        %v576 = vsel %vm541, %v532, 0.0
        %v577 = vadd.f32 %v575, %v576
        %v578 = vrot.slane %v577, 4
        %v579 = vadd.f32 %v577, %v578
        %v580 = vrot.slane %v579, 2
        %v581 = vadd.f32 %v579, %v580
        %v582 = vrot.slane %v581, 1
        %v583 = vadd.f32 %v581, %v582
        %v584 = vmul.f32 %v493, %v493
        %v585 = vmul.f32 %v494, %v494
        %v586 = vmul.f32 %v495, %v495
        %v587 = vmul.f32 %v496, %v496
        %v588 = vmul.f32 %v497, %v497
        %v589 = vmul.f32 %v498, %v498
        %v590 = vmul.f32 %v499, %v499
        %v591 = vmul.f32 %v500, %v500
        %v592 = vmul.f32 %v525, %v525
        %v593 = vmul.f32 %v526, %v526
        %v594 = vmul.f32 %v527, %v527
        %v595 = vmul.f32 %v528, %v528
        %v596 = vmul.f32 %v529, %v529
        %v597 = vmul.f32 %v530, %v530
        %v598 = vmul.f32 %v531, %v531
        %v599 = vmul.f32 %v532, %v532
        %v600 = vsel %vm541, %v584, 0.0
        %v601 = vsel %vm541, %v585, 0.0
        %v602 = vadd.f32 %v600, %v601
        %v603 = vsel %vm541, %v586, 0.0
        %v604 = vadd.f32 %v602, %v603
        %v605 = vsel %vm541, %v587, 0.0
        %v606 = vadd.f32 %v604, %v605
        %v607 = vsel %vm541, %v588, 0.0
        %v608 = vadd.f32 %v606, %v607
        %v609 = vsel %vm541, %v589, 0.0
        %v610 = vadd.f32 %v608, %v609
        %v611 = vsel %vm541, %v590, 0.0
        %v612 = vadd.f32 %v610, %v611
        %v613 = vsel %vm541, %v591, 0.0
        %v614 = vadd.f32 %v612, %v613
        %v615 = vrot.slane %v614, 4
        %v616 = vadd.f32 %v614, %v615
        %v617 = vrot.slane %v616, 2
        %v618 = vadd.f32 %v616, %v617
        %v619 = vrot.slane %v618, 1
        %v620 = vadd.f32 %v618, %v619
        %v621 = vsel %vm541, %v592, 0.0
        %v622 = vsel %vm541, %v593, 0.0
        %v623 = vadd.f32 %v621, %v622
        %v624 = vsel %vm541, %v594, 0.0
        %v625 = vadd.f32 %v623, %v624
        %v626 = vsel %vm541, %v595, 0.0
        %v627 = vadd.f32 %v625, %v626
        %v628 = vsel %vm541, %v596, 0.0
        %v629 = vadd.f32 %v627, %v628
        %v630 = vsel %vm541, %v597, 0.0
        %v631 = vadd.f32 %v629, %v630
        %v632 = vsel %vm541, %v598, 0.0
        %v633 = vadd.f32 %v631, %v632
        %v634 = vsel %vm541, %v599, 0.0
        %v635 = vadd.f32 %v633, %v634
        %v636 = vrot.slane %v635, 4
        %v637 = vadd.f32 %v635, %v636
        %v638 = vrot.slane %v637, 2
        %v639 = vadd.f32 %v637, %v638
        %v640 = vrot.slane %v639, 1
        %v641 = vadd.f32 %v639, %v640
        %vm644 = vcmask 1041409
        %v645 = vsel %vm644, %v583, %v562
        %v649 = vsel %vm644, %v641, %v620
        %650 = vrot.lane.b32.xlu0 %v649, 64
        %v651 = vpop.permute.xlu0 %650
        %v653 = vsel %vm541, %v645, %v651
        %v654 = vld [vmem:[%s1] sm:$0xff]
        %v655 = vld [vmem:[%s1 + $0x8] sm:$0xff]
        %v656 = vld [vmem:[%s1 + $0x10] sm:$0xff]
        %v657 = vld [vmem:[%s1 + $0x18] sm:$0xff]
        %v658 = vld [vmem:[%s1 + $0x20] sm:$0xff]
        %v659 = vld [vmem:[%s1 + $0x28] sm:$0xff]
        %v660 = vld [vmem:[%s1 + $0x30] sm:$0xff]
        %v661 = vld [vmem:[%s1 + $0x38] sm:$0xff]
        %v662 = vld [vmem:[%s1 + $0x40] sm:$0xff]
        %v663 = vld [vmem:[%s1 + $0x48] sm:$0xff]
        %v664 = vld [vmem:[%s1 + $0x50] sm:$0xff]
        %v665 = vld [vmem:[%s1 + $0x58] sm:$0xff]
        %v666 = vld [vmem:[%s1 + $0x60] sm:$0xff]
        %v667 = vld [vmem:[%s1 + $0x68] sm:$0xff]
        %v668 = vld [vmem:[%s1 + $0x70] sm:$0xff]
        %v669 = vld [vmem:[%s1 + $0x78] sm:$0xff]
        %670 = vmatprep.subr.mxu0 0.0
        %671 = vmatpush1.msra.mxu0 %v654
        %672 = vmatprep.subr.mxu0 0.0
        %673 = vmatpush1.msra.mxu0 %v655
        %674 = vmatprep.subr.mxu0 0.0
        %675 = vmatpush1.msra.mxu0 %v656
        %676 = vmatprep.subr.mxu0 0.0
        %677 = vmatpush1.msra.mxu0 %v657
        %678 = vmatprep.subr.mxu0 0.0
        %679 = vmatpush1.msra.mxu0 %v658
        %680 = vmatprep.subr.mxu0 0.0
        %681 = vmatpush1.msra.mxu0 %v659
        %682 = vmatprep.subr.mxu0 0.0
        %683 = vmatpush1.msra.mxu0 %v660
        %684 = vmatprep.subr.mxu0 0.0
        %685 = vmatpush1.msra.mxu0 %v661
        %686 = vmatprep.subr.mxu0 0.0
        %687 = vmatpush1.msra.mxu0 %v662
        %688 = vmatprep.subr.mxu0 0.0
        %689 = vmatpush1.msra.mxu0 %v663
        %690 = vmatprep.subr.mxu0 0.0
        %691 = vmatpush1.msra.mxu0 %v664
        %692 = vmatprep.subr.mxu0 0.0
        %693 = vmatpush1.msra.mxu0 %v665
        %694 = vmatprep.subr.mxu0 0.0
        %695 = vmatpush1.msra.mxu0 %v666
        %696 = vmatprep.subr.mxu0 0.0
        %697 = vmatpush1.msra.mxu0 %v667
        %698 = vmatprep.subr.mxu0 0.0
        %699 = vmatpush1.msra.mxu0 %v668
        %700 = vmatprep.subr.mxu0 0.0
        %701 = vmatpush1.msra.mxu0 %v669
        %702 = vmatprep.subr.mxu0 0.0
        %703 = vmatpush1.msra.mxu0 0.0
        %704 = vmatprep.subr.mxu0 0.0
        %705 = vmatpush1.msra.mxu0 0.0
        %706 = vmatprep.subr.mxu0 0.0
        %707 = vmatpush1.msra.mxu0 0.0
        %708 = vmatprep.subr.mxu0 0.0
        %709 = vmatpush1.msra.mxu0 0.0
        %710 = vmatprep.subr.mxu0 0.0
        %711 = vmatpush1.msra.mxu0 0.0
        %712 = vmatprep.subr.mxu0 0.0
        %713 = vmatpush1.msra.mxu0 0.0
        %714 = vmatprep.subr.mxu0 0.0
        %715 = vmatpush1.msra.mxu0 0.0
        %716 = vmatprep.subr.mxu0 0.0
        %717 = vmatpush1.msra.mxu0 0.0
        %718 = vmatprep.subr.mxu0 0.0
        %719 = vmatpush1.msra.mxu0 0.0
        %720 = vmatprep.subr.mxu0 0.0
        %721 = vmatpush1.msra.mxu0 0.0
        %722 = vmatprep.subr.mxu0 0.0
        %723 = vmatpush1.msra.mxu0 0.0
        %724 = vmatprep.subr.mxu0 0.0
        %725 = vmatpush1.msra.mxu0 0.0
        %726 = vmatprep.subr.mxu0 0.0
        %727 = vmatpush1.msra.mxu0 0.0
        %728 = vmatprep.subr.mxu0 0.0
        %729 = vmatpush1.msra.mxu0 0.0
        %730 = vmatprep.subr.mxu0 0.0
        %731 = vmatpush1.msra.mxu0 0.0
        %732 = vmatprep.subr.mxu0 0.0
        %733 = vmatpush1.msra.mxu0 0.0
        %734 = vmatprep.mubr.f32.mxu0 0.0
        %735 = vmatmul.mubr.f32.gmra.mrb[0].mxu0 %v653
        %v736 = vpop.f32.mrb[0].mxu0
        %v737 = vadd.f32 0.0, %v736
        %v738 = vpop.f32.mrb[0].mxu0
        %739 = vdwg.mxu0
        %v740 = vmul.f32 %v737, 0.0078125
        %v741 = vmul.f32 %v740, %v740
        %743 = vrot.lane.b32.xlu0 %v741, 32
        %v744 = vpop.permute.xlu0 %743
        %v746 = vsub.f32 %v740, %v744
        %v747 = vmax.f32 %v746, 0.0
        %v748 = vadd.f32 %v747, 1e-05
        %v749 = vrsqrt.pop %v748
        %vm750 = vcmask 261120
        %v751 = vsel %vm750, %v740, %v749
        %v752 = vld [vmem:[%s2] sm:$0xff]
        %v753 = vld [vmem:[%s2 + $0x8] sm:$0xff]
        %v754 = vld [vmem:[%s2 + $0x10] sm:$0xff]
        %v755 = vld [vmem:[%s2 + $0x18] sm:$0xff]
        %v756 = vld [vmem:[%s2 + $0x20] sm:$0xff]
        %v757 = vld [vmem:[%s2 + $0x28] sm:$0xff]
        %v758 = vld [vmem:[%s2 + $0x30] sm:$0xff]
        %v759 = vld [vmem:[%s2 + $0x38] sm:$0xff]
        %v761 = vsel %vm541, %v751, 0
        %763 = vmatprep.subr.mxu0 0.0
        %764 = vmatpush1.msra.mxu0 %v752
        %765 = vmatprep.subr.mxu0 0.0
        %766 = vmatpush1.msra.mxu0 %v753
        %767 = vmatprep.subr.mxu0 0.0
        %768 = vmatpush1.msra.mxu0 %v754
        %769 = vmatprep.subr.mxu0 0.0
        %770 = vmatpush1.msra.mxu0 %v755
        %771 = vmatprep.subr.mxu0 0.0
        %772 = vmatpush1.msra.mxu0 %v756
        %773 = vmatprep.subr.mxu0 0.0
        %774 = vmatpush1.msra.mxu0 %v757
        %775 = vmatprep.subr.mxu0 0.0
        %776 = vmatpush1.msra.mxu0 %v758
        %777 = vmatprep.subr.mxu0 0.0
        %778 = vmatpush1.msra.mxu0 %v759
        %779 = vmatprep.subr.mxu0 0.0
        %780 = vmatpush1.msra.mxu0 0.0
        %781 = vmatprep.subr.mxu0 0.0
        %782 = vmatpush1.msra.mxu0 0.0
        %783 = vmatprep.subr.mxu0 0.0
        %784 = vmatpush1.msra.mxu0 0.0
        %785 = vmatprep.subr.mxu0 0.0
        %786 = vmatpush1.msra.mxu0 0.0
        %787 = vmatprep.subr.mxu0 0.0
        %788 = vmatpush1.msra.mxu0 0.0
        %789 = vmatprep.subr.mxu0 0.0
        %790 = vmatpush1.msra.mxu0 0.0
        %791 = vmatprep.subr.mxu0 0.0
        %792 = vmatpush1.msra.mxu0 0.0
        %793 = vmatprep.subr.mxu0 0.0
        %794 = vmatpush1.msra.mxu0 0.0
        %795 = vmatprep.subr.mxu0 0.0
        %796 = vmatpush1.msra.mxu0 0.0
        %797 = vmatprep.subr.mxu0 0.0
        %798 = vmatpush1.msra.mxu0 0.0
        %799 = vmatprep.subr.mxu0 0.0
        %800 = vmatpush1.msra.mxu0 0.0
        %801 = vmatprep.subr.mxu0 0.0
        %802 = vmatpush1.msra.mxu0 0.0
        %803 = vmatprep.subr.mxu0 0.0
        %804 = vmatpush1.msra.mxu0 0.0
        %805 = vmatprep.subr.mxu0 0.0
        %806 = vmatpush1.msra.mxu0 0.0
        %807 = vmatprep.subr.mxu0 0.0
        %808 = vmatpush1.msra.mxu0 0.0
        %809 = vmatprep.subr.mxu0 0.0
        %810 = vmatpush1.msra.mxu0 0.0
        %811 = vmatprep.subr.mxu0 0.0
        %812 = vmatpush1.msra.mxu0 0.0
        %813 = vmatprep.subr.mxu0 0.0
        %814 = vmatpush1.msra.mxu0 0.0
        %815 = vmatprep.subr.mxu0 0.0
        %816 = vmatpush1.msra.mxu0 0.0
        %817 = vmatprep.subr.mxu0 0.0
        %818 = vmatpush1.msra.mxu0 0.0
        %819 = vmatprep.subr.mxu0 0.0
        %820 = vmatpush1.msra.mxu0 0.0
        %821 = vmatprep.subr.mxu0 0.0
        %822 = vmatpush1.msra.mxu0 0.0
        %823 = vmatprep.subr.mxu0 0.0
        %824 = vmatpush1.msra.mxu0 0.0
        %825 = vmatprep.subr.mxu0 0.0
        %826 = vmatpush1.msra.mxu0 0.0
        %827 = vmatprep.mubr.f32.mxu0 0.0
        %828 = vmatmul.mubr.f32.gmra.mrb[0].mxu0 %v761
        %v829 = vpop.f32.mrb[0].mxu0
        %v830 = vadd.f32 0.0, %v829
        %v831 = vpop.f32.mrb[0].mxu0
        %832 = vdwg.mxu0
        %v833 = vld [vmem:[#allocation7] sm:$0x1]
        %v835 = vlaneseq
        %v836 = vshrl.u32 %v835, 7
        %v837 = vsub.s32 0, %v836
        %v838 = vrot.slane %v833, %v837
        %839 = vrot.lane.b32.xlu0 %v838, 64
        %v840 = vpop.permute.xlu0 %839
        %v842 = vmul.f32 %v830, %v840
        %v843 = vld [vmem:[#allocation8] sm:$0x1]
        %845 = vrot.lane.b32.xlu0 %v842, 64
        %v846 = vpop.permute.xlu0 %845
        %v848 = vmul.f32 %v830, %v846
        %v850 = vlaneseq
        %v851 = vshrl.u32 %v850, 7
        %v852 = vsub.s32 0, %v851
        %v853 = vrot.slane %v843, %v852
        %v855 = vsub.f32 %v853, %v848
        %v857 = vunpack.c.l.s4 1966171168
        %v858 = vunpack.c.0.s8 %v857
        %v859 = vlaneseq
        %v860 = vshrl.u32 %v859, 7
        %v861 = vsub.s32 %v858, %v860
        %v862 = vrot.slane %v842, %v861
        %v863 = vcombine.high %v862, %v862
        %v865 = vunpack.c.l.s4 1966171168
        %v866 = vunpack.c.0.s8 %v865
        %v867 = vlaneseq
        %v868 = vshrl.u32 %v867, 7
        %v869 = vsub.s32 %v866, %v868
        %v870 = vrot.slane %v862, %v869
        %v872 = vunpack.c.l.s4 1966171168
        %v873 = vunpack.c.0.s8 %v872
        %v874 = vlaneseq
        %v875 = vshrl.u32 %v874, 7
        %v876 = vsub.s32 %v873, %v875
        %v877 = vrot.slane %v863, %v876
        %v878 = vlaneseq
        %v879 = vshrl.u32 %v878, 7
        %v880 = vsub.s32 0, %v879
        %v881 = vrot.slane %v870, %v880
        %v882 = vlaneseq
        %v883 = vshrl.u32 %v882, 7
        %v884 = vsub.s32 0, %v883
        %v885 = vrot.slane %v877, %v884
        %886 = vrot.lane.b32.xlu0 %v881, 64
        %v887 = vpop.permute.xlu0 %886
        %888 = vrot.lane.b32.xlu0 %v885, 64
        %v889 = vpop.permute.xlu0 %888
        %v892 = vmul.f32 %v493, %v887
        %v893 = vmul.f32 %v494, %v887
        %v894 = vmul.f32 %v495, %v887
        %v895 = vmul.f32 %v496, %v887
        %v896 = vmul.f32 %v497, %v887
        %v897 = vmul.f32 %v498, %v887
        %v898 = vmul.f32 %v499, %v887
        %v899 = vmul.f32 %v500, %v887
        %v900 = vmul.f32 %v525, %v889
        %v901 = vmul.f32 %v526, %v889
        %v902 = vmul.f32 %v527, %v889
        %v903 = vmul.f32 %v528, %v889
        %v904 = vmul.f32 %v529, %v889
        %v905 = vmul.f32 %v530, %v889
        %v906 = vmul.f32 %v531, %v889
        %v907 = vmul.f32 %v532, %v889
        %v910 = vunpack.c.l.s4 1966171168
        %v911 = vunpack.c.0.s8 %v910
        %v912 = vlaneseq
        %v913 = vshrl.u32 %v912, 7
        %v914 = vsub.s32 %v911, %v913
        %v915 = vrot.slane %v855, %v914
        %v916 = vcombine.high %v915, %v915
        %v918 = vunpack.c.l.s4 1966171168
        %v919 = vunpack.c.0.s8 %v918
        %v920 = vlaneseq
        %v921 = vshrl.u32 %v920, 7
        %v922 = vsub.s32 %v919, %v921
        %v923 = vrot.slane %v915, %v922
        %v925 = vunpack.c.l.s4 1966171168
        %v926 = vunpack.c.0.s8 %v925
        %v927 = vlaneseq
        %v928 = vshrl.u32 %v927, 7
        %v929 = vsub.s32 %v926, %v928
        %v930 = vrot.slane %v916, %v929
        %v931 = vlaneseq
        %v932 = vshrl.u32 %v931, 7
        %v933 = vsub.s32 0, %v932
        %v934 = vrot.slane %v923, %v933
        %v935 = vlaneseq
        %v936 = vshrl.u32 %v935, 7
        %v937 = vsub.s32 0, %v936
        %v938 = vrot.slane %v930, %v937
        %v941 = vadd.f32 %v892, %v934
        %v942 = vadd.f32 %v893, %v934
        %v943 = vadd.f32 %v894, %v934
        %v944 = vadd.f32 %v895, %v934
        %v945 = vadd.f32 %v896, %v934
        %v946 = vadd.f32 %v897, %v934
        %v947 = vadd.f32 %v898, %v934
        %v948 = vadd.f32 %v899, %v934
        %v949 = vadd.f32 %v900, %v938
        %v950 = vadd.f32 %v901, %v938
        %v951 = vadd.f32 %v902, %v938
        %v952 = vadd.f32 %v903, %v938
        %v953 = vadd.f32 %v904, %v938
        %v954 = vadd.f32 %v905, %v938
        %v955 = vadd.f32 %v906, %v938
        %v956 = vadd.f32 %v907, %v938
        %v957 = vpack.c.bf16 %v942, %v941
        %v958 = vpack.c.bf16 %v944, %v943
        %v959 = vpack.c.bf16 %v946, %v945
        %v960 = vpack.c.bf16 %v948, %v947
        %v961 = vpack.c.bf16 %v950, %v949
        %v962 = vpack.c.bf16 %v952, %v951
        %v963 = vpack.c.bf16 %v954, %v953
        %v964 = vpack.c.bf16 %v956, %v955
        %v965 = vld [vmem:[#allocation10] sm:$0xff]
        %v966 = vld [vmem:[#allocation10 + $0x8] sm:$0xff]
        %v967 = vld [vmem:[#allocation10 + $0x10] sm:$0xff]
        %v968 = vld [vmem:[#allocation10 + $0x18] sm:$0xff]
        %v969 = vld [vmem:[#allocation10 + $0x20] sm:$0xff]
        %v970 = vld [vmem:[#allocation10 + $0x28] sm:$0xff]
        %v971 = vld [vmem:[#allocation10 + $0x30] sm:$0xff]
        %v972 = vld [vmem:[#allocation10 + $0x38] sm:$0xff]
        %v973 = vld [vmem:[%s8] sm:$0x3]
        %v975 = vlaneseq
        %v976 = vshrl.u32 %v975, 7
        %v977 = vsub.s32 0, %v976
        %v978 = vrot.slane %v973, %v977
        %v979 = vlaneseq
        %v980 = vshrl.u32 %v979, 7
        %v981 = vsub.s32 1, %v980
        %v982 = vrot.slane %v973, %v981
        %v993 = vunpack.c.l.b16 %v965
        %v994 = vunpack.c.h.b16 %v965
        %v995 = vunpack.c.l.b16 %v966
        %v996 = vunpack.c.h.b16 %v966
        %v997 = vunpack.c.l.b16 %v967
        %v998 = vunpack.c.h.b16 %v967
        %v999 = vunpack.c.l.b16 %v968
        %v1000 = vunpack.c.h.b16 %v968
        %v1001 = vunpack.c.l.b16 %v969
        %v1002 = vunpack.c.h.b16 %v969
        %v1003 = vunpack.c.l.b16 %v970
        %v1004 = vunpack.c.h.b16 %v970
        %v1005 = vunpack.c.l.b16 %v971
        %v1006 = vunpack.c.h.b16 %v971
        %v1007 = vunpack.c.l.b16 %v972
        %v1008 = vunpack.c.h.b16 %v972
        %v1009 = vpack.c.b16 %v995, %v993
        %v1010 = vpack.c.b16 %v996, %v994
        %v1011 = vpack.c.b16 %v999, %v997
        %v1012 = vpack.c.b16 %v1000, %v998
        %v1013 = vpack.c.b16 %v1003, %v1001
        %v1014 = vpack.c.b16 %v1004, %v1002
        %v1015 = vpack.c.b16 %v1007, %v1005
        %v1016 = vpack.c.b16 %v1008, %v1006
        %v1026 = vsel %vm541, %v957, 0
        %v1029 = vsel %vm541, %v958, 0
        %v1032 = vsel %vm541, %v959, 0
        %v1035 = vsel %vm541, %v960, 0
        %v1038 = vsel %vm541, %v961, 0
        %v1041 = vsel %vm541, %v962, 0
        %v1044 = vsel %vm541, %v963, 0
        %v1047 = vsel %vm541, %v964, 0
        %1049 = vmatprep.subr.bf16.mxu0 %v1010
        %1050 = vmatpush1.bf16.msra.mxu0 %v1009
        %1051 = vmatprep.subr.bf16.mxu0 %v1012
        %1052 = vmatpush1.bf16.msra.mxu0 %v1011
        %1053 = vmatprep.subr.bf16.mxu0 %v1014
        %1054 = vmatpush1.bf16.msra.mxu0 %v1013
        %1055 = vmatprep.subr.bf16.mxu0 %v1016
        %1056 = vmatpush1.bf16.msra.mxu0 %v1015
        %1057 = vmatprep.subr.bf16.mxu0 0
        %1058 = vmatpush1.bf16.msra.mxu0 0
        %1059 = vmatprep.subr.bf16.mxu0 0
        %1060 = vmatpush1.bf16.msra.mxu0 0
        %1061 = vmatprep.subr.bf16.mxu0 0
        %1062 = vmatpush1.bf16.msra.mxu0 0
        %1063 = vmatprep.subr.bf16.mxu0 0
        %1064 = vmatpush1.bf16.msra.mxu0 0
        %1065 = vmatprep.subr.bf16.mxu0 0
        %1066 = vmatpush1.bf16.msra.mxu0 0
        %1067 = vmatprep.subr.bf16.mxu0 0
        %1068 = vmatpush1.bf16.msra.mxu0 0
        %1069 = vmatprep.subr.bf16.mxu0 0
        %1070 = vmatpush1.bf16.msra.mxu0 0
        %1071 = vmatprep.subr.bf16.mxu0 0
        %1072 = vmatpush1.bf16.msra.mxu0 0
        %1073 = vmatprep.subr.bf16.mxu0 0
        %1074 = vmatpush1.bf16.msra.mxu0 0
        %1075 = vmatprep.subr.bf16.mxu0 0
        %1076 = vmatpush1.bf16.msra.mxu0 0
        %1077 = vmatprep.subr.bf16.mxu0 0
        %1078 = vmatpush1.bf16.msra.mxu0 0
        %1079 = vmatprep.subr.bf16.mxu0 0
        %1080 = vmatpush1.bf16.msra.mxu0 0
        %1081 = vmatprep.mubr.bf16.mxu0 0
        %1082 = vmatmul.mubr.bf16.gmra.mrb[0].mxu0 %v1026
        %v1083 = vpop.f32.mrb[0].mxu0
        %v1084 = vadd.f32 %v978, %v1083
        %v1085 = vpop.f32.mrb[0].mxu0
        %v1086 = vadd.f32 %v982, %v1085
        %v1087 = vpop.f32.mrb[0].mxu0
        %v1088 = vadd.f32 %v978, %v1087
        %v1089 = vpop.f32.mrb[0].mxu0
        %v1090 = vadd.f32 %v982, %v1089
        %1091 = vmatprep.mubr.bf16.mxu0 0
        %1092 = vmatmul.mubr.bf16.gmra.mrb[0].mxu0 %v1029
        %v1093 = vpop.f32.mrb[0].mxu0
        %v1094 = vadd.f32 %v978, %v1093
        %v1095 = vpop.f32.mrb[0].mxu0
        %v1096 = vadd.f32 %v982, %v1095
        %v1097 = vpop.f32.mrb[0].mxu0
        %v1098 = vadd.f32 %v978, %v1097
        %v1099 = vpop.f32.mrb[0].mxu0
        %v1100 = vadd.f32 %v982, %v1099
        %1101 = vmatprep.mubr.bf16.mxu0 0
        %1102 = vmatmul.mubr.bf16.gmra.mrb[0].mxu0 %v1032
        %v1103 = vpop.f32.mrb[0].mxu0
        %v1104 = vadd.f32 %v978, %v1103
        %v1105 = vpop.f32.mrb[0].mxu0
        %v1106 = vadd.f32 %v982, %v1105
        %v1107 = vpop.f32.mrb[0].mxu0
        %v1108 = vadd.f32 %v978, %v1107
        %v1109 = vpop.f32.mrb[0].mxu0
        %v1110 = vadd.f32 %v982, %v1109
        %1111 = vmatprep.mubr.bf16.mxu0 0
        %1112 = vmatmul.mubr.bf16.gmra.mrb[0].mxu0 %v1035
        %v1113 = vpop.f32.mrb[0].mxu0
        %v1114 = vadd.f32 %v978, %v1113
        %v1115 = vpop.f32.mrb[0].mxu0
        %v1116 = vadd.f32 %v982, %v1115
        %v1117 = vpop.f32.mrb[0].mxu0
        %v1118 = vadd.f32 %v978, %v1117
        %v1119 = vpop.f32.mrb[0].mxu0
        %v1120 = vadd.f32 %v982, %v1119
        %1121 = vmatprep.mubr.bf16.mxu0 0
        %1122 = vmatmul.mubr.bf16.gmra.mrb[0].mxu0 %v1038
        %v1123 = vpop.f32.mrb[0].mxu0
        %v1124 = vadd.f32 %v978, %v1123
        %v1125 = vpop.f32.mrb[0].mxu0
        %v1126 = vadd.f32 %v982, %v1125
        %v1127 = vpop.f32.mrb[0].mxu0
        %v1128 = vadd.f32 %v978, %v1127
        %v1129 = vpop.f32.mrb[0].mxu0
        %v1130 = vadd.f32 %v982, %v1129
        %1131 = vmatprep.mubr.bf16.mxu0 0
        %1132 = vmatmul.mubr.bf16.gmra.mrb[0].mxu0 %v1041
        %v1133 = vpop.f32.mrb[0].mxu0
        %v1134 = vadd.f32 %v978, %v1133
        %v1135 = vpop.f32.mrb[0].mxu0
        %v1136 = vadd.f32 %v982, %v1135
        %v1137 = vpop.f32.mrb[0].mxu0
        %v1138 = vadd.f32 %v978, %v1137
        %v1139 = vpop.f32.mrb[0].mxu0
        %v1140 = vadd.f32 %v982, %v1139
        %1141 = vmatprep.mubr.bf16.mxu0 0
        %1142 = vmatmul.mubr.bf16.gmra.mrb[0].mxu0 %v1044
        %v1143 = vpop.f32.mrb[0].mxu0
        %v1144 = vadd.f32 %v978, %v1143
        %v1145 = vpop.f32.mrb[0].mxu0
        %v1146 = vadd.f32 %v982, %v1145
        %v1147 = vpop.f32.mrb[0].mxu0
        %v1148 = vadd.f32 %v978, %v1147
        %v1149 = vpop.f32.mrb[0].mxu0
        %v1150 = vadd.f32 %v982, %v1149
        %1151 = vmatprep.mubr.bf16.mxu0 0
        %1152 = vmatmul.mubr.bf16.gmra.mrb[0].mxu0 %v1047
        %v1153 = vpop.f32.mrb[0].mxu0
        %v1154 = vadd.f32 %v978, %v1153
        %v1155 = vpop.f32.mrb[0].mxu0
        %v1156 = vadd.f32 %v982, %v1155
        %v1157 = vpop.f32.mrb[0].mxu0
        %v1158 = vadd.f32 %v978, %v1157
        %v1159 = vpop.f32.mrb[0].mxu0
        %v1160 = vadd.f32 %v982, %v1159
        %1161 = vdwg.mxu0
        %v1162 = vpack.c.bf16 %v1088, %v1084
        %v1163 = vpack.c.bf16 %v1098, %v1094
        %v1164 = vpack.c.bf16 %v1108, %v1104
        %v1165 = vpack.c.bf16 %v1118, %v1114
        %v1166 = vpack.c.bf16 %v1128, %v1124
        %v1167 = vpack.c.bf16 %v1138, %v1134
        %v1168 = vpack.c.bf16 %v1148, %v1144
        %v1169 = vpack.c.bf16 %v1158, %v1154
        %v1170 = vpack.c.bf16 %v1090, %v1086
        %v1171 = vpack.c.bf16 %v1100, %v1096
        %v1172 = vpack.c.bf16 %v1110, %v1106
        %v1173 = vpack.c.bf16 %v1120, %v1116
        %v1174 = vpack.c.bf16 %v1130, %v1126
        %v1175 = vpack.c.bf16 %v1140, %v1136
        %v1176 = vpack.c.bf16 %v1150, %v1146
        %v1177 = vpack.c.bf16 %v1160, %v1156
        %v1178 = vld [vmem:[#allocation5] sm:$0xff]
        %v1180 = vcombine.high %v1178, %v1178
        %v1182 = vunpack.c.l.s4 1966171168
        %v1183 = vunpack.c.0.s8 %v1182
        %v1184 = vlaneseq
        %v1185 = vshrl.u32 %v1184, 7
        %v1186 = vsub.s32 %v1183, %v1185
        %v1187 = vrot.slane %v1178, %v1186
        %v1189 = vunpack.c.l.s4 1966171168
        %v1190 = vunpack.c.0.s8 %v1189
        %v1191 = vlaneseq
        %v1192 = vshrl.u32 %v1191, 7
        %v1193 = vsub.s32 %v1190, %v1192
        %v1194 = vrot.slane %v1180, %v1193
        %v1195 = vcombine.high %v1187, %v1187
        %v1196 = vcombine.high %v1194, %v1194
        %v1198 = vunpack.c.l.s4 1966171168
        %v1199 = vunpack.c.0.s8 %v1198
        %v1200 = vlaneseq
        %v1201 = vshrl.u32 %v1200, 7
        %v1202 = vsub.s32 %v1199, %v1201
        %v1203 = vrot.slane %v1187, %v1202
        %v1205 = vunpack.c.l.s4 1966171168
        %v1206 = vunpack.c.0.s8 %v1205
        %v1207 = vlaneseq
        %v1208 = vshrl.u32 %v1207, 7
        %v1209 = vsub.s32 %v1206, %v1208
        %v1210 = vrot.slane %v1194, %v1209
        %v1212 = vunpack.c.l.s4 1966171168
        %v1213 = vunpack.c.0.s8 %v1212
        %v1214 = vlaneseq
        %v1215 = vshrl.u32 %v1214, 7
        %v1216 = vsub.s32 %v1213, %v1215
        %v1217 = vrot.slane %v1195, %v1216
        %v1219 = vunpack.c.l.s4 1966171168
        %v1220 = vunpack.c.0.s8 %v1219
        %v1221 = vlaneseq
        %v1222 = vshrl.u32 %v1221, 7
        %v1223 = vsub.s32 %v1220, %v1222
        %v1224 = vrot.slane %v1196, %v1223
        %v1225 = vcombine.high %v1203, %v1203
        %v1226 = vcombine.high %v1210, %v1210
        %v1227 = vcombine.high %v1217, %v1217
        %v1228 = vcombine.high %v1224, %v1224
        %v1229 = vlaneseq
        %v1230 = vshrl.u32 %v1229, 7
        %v1231 = vsub.s32 0, %v1230
        %v1232 = vrot.slane %v1203, %v1231
        %v1233 = vlaneseq
        %v1234 = vshrl.u32 %v1233, 7
        %v1235 = vsub.s32 0, %v1234
        %v1236 = vrot.slane %v1217, %v1235
        %v1237 = vlaneseq
        %v1238 = vshrl.u32 %v1237, 7
        %v1239 = vsub.s32 0, %v1238
        %v1240 = vrot.slane %v1225, %v1239
        %v1241 = vlaneseq
        %v1242 = vshrl.u32 %v1241, 7
        %v1243 = vsub.s32 0, %v1242
        %v1244 = vrot.slane %v1227, %v1243
        %v1245 = vlaneseq
        %v1246 = vshrl.u32 %v1245, 7
        %v1247 = vsub.s32 0, %v1246
        %v1248 = vrot.slane %v1210, %v1247
        %v1249 = vlaneseq
        %v1250 = vshrl.u32 %v1249, 7
        %v1251 = vsub.s32 0, %v1250
        %v1252 = vrot.slane %v1224, %v1251
        %v1253 = vlaneseq
        %v1254 = vshrl.u32 %v1253, 7
        %v1255 = vsub.s32 0, %v1254
        %v1256 = vrot.slane %v1226, %v1255
        %v1257 = vlaneseq
        %v1258 = vshrl.u32 %v1257, 7
        %v1259 = vsub.s32 0, %v1258
        %v1260 = vrot.slane %v1228, %v1259
        %v1269 = vmul.f32 %v1084, %v1232
        %v1270 = vmul.f32 %v1088, %v1232
        %v1271 = vmul.f32 %v1094, %v1232
        %v1272 = vmul.f32 %v1098, %v1232
        %v1273 = vmul.f32 %v1104, %v1232
        %v1274 = vmul.f32 %v1108, %v1232
        %v1275 = vmul.f32 %v1114, %v1232
        %v1276 = vmul.f32 %v1118, %v1232
        %v1277 = vmul.f32 %v1124, %v1232
        %v1278 = vmul.f32 %v1128, %v1232
        %v1279 = vmul.f32 %v1134, %v1232
        %v1280 = vmul.f32 %v1138, %v1232
        %v1281 = vmul.f32 %v1144, %v1232
        %v1282 = vmul.f32 %v1148, %v1232
        %v1283 = vmul.f32 %v1154, %v1232
        %v1284 = vmul.f32 %v1158, %v1232
        %v1285 = vmul.f32 %v1084, %v1236
        %v1286 = vmul.f32 %v1088, %v1236
        %v1287 = vmul.f32 %v1094, %v1236
        %v1288 = vmul.f32 %v1098, %v1236
        %v1289 = vmul.f32 %v1104, %v1236
        %v1290 = vmul.f32 %v1108, %v1236
        %v1291 = vmul.f32 %v1114, %v1236
        %v1292 = vmul.f32 %v1118, %v1236
        %v1293 = vmul.f32 %v1124, %v1236
        %v1294 = vmul.f32 %v1128, %v1236
        %v1295 = vmul.f32 %v1134, %v1236
        %v1296 = vmul.f32 %v1138, %v1236
        %v1297 = vmul.f32 %v1144, %v1236
        %v1298 = vmul.f32 %v1148, %v1236
        %v1299 = vmul.f32 %v1154, %v1236
        %v1300 = vmul.f32 %v1158, %v1236
        %v1301 = vmul.f32 %v1084, %v1240
        %v1302 = vmul.f32 %v1088, %v1240
        %v1303 = vmul.f32 %v1094, %v1240
        %v1304 = vmul.f32 %v1098, %v1240
        %v1305 = vmul.f32 %v1104, %v1240
        %v1306 = vmul.f32 %v1108, %v1240
        %v1307 = vmul.f32 %v1114, %v1240
        %v1308 = vmul.f32 %v1118, %v1240
        %v1309 = vmul.f32 %v1124, %v1240
        %v1310 = vmul.f32 %v1128, %v1240
        %v1311 = vmul.f32 %v1134, %v1240
        %v1312 = vmul.f32 %v1138, %v1240
        %v1313 = vmul.f32 %v1144, %v1240
        %v1314 = vmul.f32 %v1148, %v1240
        %v1315 = vmul.f32 %v1154, %v1240
        %v1316 = vmul.f32 %v1158, %v1240
        %v1317 = vmul.f32 %v1084, %v1244
        %v1318 = vmul.f32 %v1088, %v1244
        %v1319 = vmul.f32 %v1094, %v1244
        %v1320 = vmul.f32 %v1098, %v1244
        %v1321 = vmul.f32 %v1104, %v1244
        %v1322 = vmul.f32 %v1108, %v1244
        %v1323 = vmul.f32 %v1114, %v1244
        %v1324 = vmul.f32 %v1118, %v1244
        %v1325 = vmul.f32 %v1124, %v1244
        %v1326 = vmul.f32 %v1128, %v1244
        %v1327 = vmul.f32 %v1134, %v1244
        %v1328 = vmul.f32 %v1138, %v1244
        %v1329 = vmul.f32 %v1144, %v1244
        %v1330 = vmul.f32 %v1148, %v1244
        %v1331 = vmul.f32 %v1154, %v1244
        %v1332 = vmul.f32 %v1158, %v1244
        %v1333 = vmul.f32 %v1084, %v1248
        %v1334 = vmul.f32 %v1088, %v1248
        %v1335 = vmul.f32 %v1094, %v1248
        %v1336 = vmul.f32 %v1098, %v1248
        %v1337 = vmul.f32 %v1104, %v1248
        %v1338 = vmul.f32 %v1108, %v1248
        %v1339 = vmul.f32 %v1114, %v1248
        %v1340 = vmul.f32 %v1118, %v1248
        %v1341 = vmul.f32 %v1124, %v1248
        %v1342 = vmul.f32 %v1128, %v1248
        %v1343 = vmul.f32 %v1134, %v1248
        %v1344 = vmul.f32 %v1138, %v1248
        %v1345 = vmul.f32 %v1144, %v1248
        %v1346 = vmul.f32 %v1148, %v1248
        %v1347 = vmul.f32 %v1154, %v1248
        %v1348 = vmul.f32 %v1158, %v1248
        %v1349 = vmul.f32 %v1084, %v1252
        %v1350 = vmul.f32 %v1088, %v1252
        %v1351 = vmul.f32 %v1094, %v1252
        %v1352 = vmul.f32 %v1098, %v1252
        %v1353 = vmul.f32 %v1104, %v1252
        %v1354 = vmul.f32 %v1108, %v1252
        %v1355 = vmul.f32 %v1114, %v1252
        %v1356 = vmul.f32 %v1118, %v1252
        %v1357 = vmul.f32 %v1124, %v1252
        %v1358 = vmul.f32 %v1128, %v1252
        %v1359 = vmul.f32 %v1134, %v1252
        %v1360 = vmul.f32 %v1138, %v1252
        %v1361 = vmul.f32 %v1144, %v1252
        %v1362 = vmul.f32 %v1148, %v1252
        %v1363 = vmul.f32 %v1154, %v1252
        %v1364 = vmul.f32 %v1158, %v1252
        %v1365 = vmul.f32 %v1084, %v1256
        %v1366 = vmul.f32 %v1088, %v1256
        %v1367 = vmul.f32 %v1094, %v1256
        %v1368 = vmul.f32 %v1098, %v1256
        %v1369 = vmul.f32 %v1104, %v1256
        %v1370 = vmul.f32 %v1108, %v1256
        %v1371 = vmul.f32 %v1114, %v1256
        %v1372 = vmul.f32 %v1118, %v1256
        %v1373 = vmul.f32 %v1124, %v1256
        %v1374 = vmul.f32 %v1128, %v1256
        %v1375 = vmul.f32 %v1134, %v1256
        %v1376 = vmul.f32 %v1138, %v1256
        %v1377 = vmul.f32 %v1144, %v1256
        %v1378 = vmul.f32 %v1148, %v1256
        %v1379 = vmul.f32 %v1154, %v1256
        %v1380 = vmul.f32 %v1158, %v1256
        %v1381 = vmul.f32 %v1084, %v1260
        %v1382 = vmul.f32 %v1088, %v1260
        %v1383 = vmul.f32 %v1094, %v1260
        %v1384 = vmul.f32 %v1098, %v1260
        %v1385 = vmul.f32 %v1104, %v1260
        %v1386 = vmul.f32 %v1108, %v1260
        %v1387 = vmul.f32 %v1114, %v1260
        %v1388 = vmul.f32 %v1118, %v1260
        %v1389 = vmul.f32 %v1124, %v1260
        %v1390 = vmul.f32 %v1128, %v1260
        %v1391 = vmul.f32 %v1134, %v1260
        %v1392 = vmul.f32 %v1138, %v1260
        %v1393 = vmul.f32 %v1144, %v1260
        %v1394 = vmul.f32 %v1148, %v1260
        %v1395 = vmul.f32 %v1154, %v1260
        %v1396 = vmul.f32 %v1158, %v1260
        %v1397 = vpack.c.bf16 %v1270, %v1269
        %v1398 = vpack.c.bf16 %v1272, %v1271
        %v1399 = vpack.c.bf16 %v1274, %v1273
        %v1400 = vpack.c.bf16 %v1276, %v1275
        %v1401 = vpack.c.bf16 %v1278, %v1277
        %v1402 = vpack.c.bf16 %v1280, %v1279
        %v1403 = vpack.c.bf16 %v1282, %v1281
        %v1404 = vpack.c.bf16 %v1284, %v1283
        %v1405 = vpack.c.bf16 %v1286, %v1285
        %v1406 = vpack.c.bf16 %v1288, %v1287
        %v1407 = vpack.c.bf16 %v1290, %v1289
        %v1408 = vpack.c.bf16 %v1292, %v1291
        %v1409 = vpack.c.bf16 %v1294, %v1293
        %v1410 = vpack.c.bf16 %v1296, %v1295
        %v1411 = vpack.c.bf16 %v1298, %v1297
        %v1412 = vpack.c.bf16 %v1300, %v1299
        %v1413 = vpack.c.bf16 %v1302, %v1301
        %v1414 = vpack.c.bf16 %v1304, %v1303
        %v1415 = vpack.c.bf16 %v1306, %v1305
        %v1416 = vpack.c.bf16 %v1308, %v1307
        %v1417 = vpack.c.bf16 %v1310, %v1309
        %v1418 = vpack.c.bf16 %v1312, %v1311
        %v1419 = vpack.c.bf16 %v1314, %v1313
        %v1420 = vpack.c.bf16 %v1316, %v1315
        %v1421 = vpack.c.bf16 %v1318, %v1317
        %v1422 = vpack.c.bf16 %v1320, %v1319
        %v1423 = vpack.c.bf16 %v1322, %v1321
        %v1424 = vpack.c.bf16 %v1324, %v1323
        %v1425 = vpack.c.bf16 %v1326, %v1325
        %v1426 = vpack.c.bf16 %v1328, %v1327
        %v1427 = vpack.c.bf16 %v1330, %v1329
        %v1428 = vpack.c.bf16 %v1332, %v1331
        %v1429 = vpack.c.bf16 %v1334, %v1333
        %v1430 = vpack.c.bf16 %v1336, %v1335
        %v1431 = vpack.c.bf16 %v1338, %v1337
        %v1432 = vpack.c.bf16 %v1340, %v1339
        %v1433 = vpack.c.bf16 %v1342, %v1341
        %v1434 = vpack.c.bf16 %v1344, %v1343
        %v1435 = vpack.c.bf16 %v1346, %v1345
        %v1436 = vpack.c.bf16 %v1348, %v1347
        %v1437 = vpack.c.bf16 %v1350, %v1349
        %v1438 = vpack.c.bf16 %v1352, %v1351
        %v1439 = vpack.c.bf16 %v1354, %v1353
        %v1440 = vpack.c.bf16 %v1356, %v1355
        %v1441 = vpack.c.bf16 %v1358, %v1357
        %v1442 = vpack.c.bf16 %v1360, %v1359
        %v1443 = vpack.c.bf16 %v1362, %v1361
        %v1444 = vpack.c.bf16 %v1364, %v1363
        %v1445 = vpack.c.bf16 %v1366, %v1365
        %v1446 = vpack.c.bf16 %v1368, %v1367
        %v1447 = vpack.c.bf16 %v1370, %v1369
        %v1448 = vpack.c.bf16 %v1372, %v1371
        %v1449 = vpack.c.bf16 %v1374, %v1373
        %v1450 = vpack.c.bf16 %v1376, %v1375
        %v1451 = vpack.c.bf16 %v1378, %v1377
        %v1452 = vpack.c.bf16 %v1380, %v1379
        %v1453 = vpack.c.bf16 %v1382, %v1381
        %v1454 = vpack.c.bf16 %v1384, %v1383
        %v1455 = vpack.c.bf16 %v1386, %v1385
        %v1456 = vpack.c.bf16 %v1388, %v1387
        %v1457 = vpack.c.bf16 %v1390, %v1389
        %v1458 = vpack.c.bf16 %v1392, %v1391
        %v1459 = vpack.c.bf16 %v1394, %v1393
        %v1460 = vpack.c.bf16 %v1396, %v1395
        %1469 = vrot.lane.b32.xlu0 %v1162, 64
        %v1470 = vpop.permute.xlu0 %1469
        %1471 = vrot.lane.b32.xlu0 %v1163, 64
        %v1472 = vpop.permute.xlu0 %1471
        %1473 = vrot.lane.b32.xlu0 %v1164, 64
        %v1474 = vpop.permute.xlu0 %1473
        %1475 = vrot.lane.b32.xlu0 %v1165, 64
        %v1476 = vpop.permute.xlu0 %1475
        %1477 = vrot.lane.b32.xlu0 %v1166, 64
        %v1478 = vpop.permute.xlu0 %1477
        %1479 = vrot.lane.b32.xlu0 %v1167, 64
        %v1480 = vpop.permute.xlu0 %1479
        %1481 = vrot.lane.b32.xlu0 %v1168, 64
        %v1482 = vpop.permute.xlu0 %1481
        %1483 = vrot.lane.b32.xlu0 %v1169, 64
        %v1484 = vpop.permute.xlu0 %1483
        %v1486 = vsel %vm541, %v1397, 0
        %v1489 = vsel %vm541, %v1398, 0
        %v1492 = vsel %vm541, %v1399, 0
        %v1495 = vsel %vm541, %v1400, 0
        %v1498 = vsel %vm541, %v1401, 0
        %v1501 = vsel %vm541, %v1402, 0
        %v1504 = vsel %vm541, %v1403, 0
        %v1507 = vsel %vm541, %v1404, 0
        %v1510 = vsel %vm541, %v1405, 0
        %v1513 = vsel %vm541, %v1406, 0
        %v1516 = vsel %vm541, %v1407, 0
        %v1519 = vsel %vm541, %v1408, 0
        %v1522 = vsel %vm541, %v1409, 0
        %v1525 = vsel %vm541, %v1410, 0
        %v1528 = vsel %vm541, %v1411, 0
        %v1531 = vsel %vm541, %v1412, 0
        %v1534 = vsel %vm541, %v1413, 0
        %v1537 = vsel %vm541, %v1414, 0
        %v1540 = vsel %vm541, %v1415, 0
        %v1543 = vsel %vm541, %v1416, 0
        %v1546 = vsel %vm541, %v1417, 0
        %v1549 = vsel %vm541, %v1418, 0
        %v1552 = vsel %vm541, %v1419, 0
        %v1555 = vsel %vm541, %v1420, 0
        %v1558 = vsel %vm541, %v1421, 0
        %v1561 = vsel %vm541, %v1422, 0
        %v1564 = vsel %vm541, %v1423, 0
        %v1567 = vsel %vm541, %v1424, 0
        %v1570 = vsel %vm541, %v1425, 0
        %v1573 = vsel %vm541, %v1426, 0
        %v1576 = vsel %vm541, %v1427, 0
        %v1579 = vsel %vm541, %v1428, 0
        %v1582 = vsel %vm541, %v1429, 0
        %v1585 = vsel %vm541, %v1430, 0
        %v1588 = vsel %vm541, %v1431, 0
        %v1591 = vsel %vm541, %v1432, 0
        %v1594 = vsel %vm541, %v1433, 0
        %v1597 = vsel %vm541, %v1434, 0
        %v1600 = vsel %vm541, %v1435, 0
        %v1603 = vsel %vm541, %v1436, 0
        %v1606 = vsel %vm541, %v1437, 0
        %v1609 = vsel %vm541, %v1438, 0
        %v1612 = vsel %vm541, %v1439, 0
        %v1615 = vsel %vm541, %v1440, 0
        %v1618 = vsel %vm541, %v1441, 0
        %v1621 = vsel %vm541, %v1442, 0
        %v1624 = vsel %vm541, %v1443, 0
        %v1627 = vsel %vm541, %v1444, 0
        %v1630 = vsel %vm541, %v1445, 0
        %v1633 = vsel %vm541, %v1446, 0
        %v1636 = vsel %vm541, %v1447, 0
        %v1639 = vsel %vm541, %v1448, 0
        %v1642 = vsel %vm541, %v1449, 0
        %v1645 = vsel %vm541, %v1450, 0
        %v1648 = vsel %vm541, %v1451, 0
        %v1651 = vsel %vm541, %v1452, 0
        %v1654 = vsel %vm541, %v1453, 0
        %v1657 = vsel %vm541, %v1454, 0
        %v1660 = vsel %vm541, %v1455, 0
        %v1663 = vsel %vm541, %v1456, 0
        %v1666 = vsel %vm541, %v1457, 0
        %v1669 = vsel %vm541, %v1458, 0
        %v1672 = vsel %vm541, %v1459, 0
        %v1675 = vsel %vm541, %v1460, 0
        %v1678 = vsel %vm541, %v1470, 0
        %v1681 = vsel %vm541, %v1472, 0
        %v1684 = vsel %vm541, %v1474, 0
        %v1687 = vsel %vm541, %v1476, 0
        %v1690 = vsel %vm541, %v1478, 0
        %v1693 = vsel %vm541, %v1480, 0
        %v1696 = vsel %vm541, %v1482, 0
        %v1699 = vsel %vm541, %v1484, 0
        %1701 = vmatprep.subr.bf16.mxu0 0
        %1702 = vmatpush1.bf16.xpose.msra.mxu0 %v1678
        %1703 = vmatprep.subr.bf16.mxu0 0
        %1704 = vmatpush1.bf16.xpose.msra.mxu0 %v1681
        %1705 = vmatprep.subr.bf16.mxu0 0
        %1706 = vmatpush1.bf16.xpose.msra.mxu0 %v1684
        %1707 = vmatprep.subr.bf16.mxu0 0
        %1708 = vmatpush1.bf16.xpose.msra.mxu0 %v1687
        %1709 = vmatprep.subr.bf16.mxu0 0
        %1710 = vmatpush1.bf16.xpose.msra.mxu0 %v1690
        %1711 = vmatprep.subr.bf16.mxu0 0
        %1712 = vmatpush1.bf16.xpose.msra.mxu0 %v1693
        %1713 = vmatprep.subr.bf16.mxu0 0
        %1714 = vmatpush1.bf16.xpose.msra.mxu0 %v1696
        %1715 = vmatprep.subr.bf16.mxu0 0
        %1716 = vmatpush1.bf16.xpose.msra.mxu0 %v1699
        %1717 = vmatprep.subr.bf16.mxu0 0
        %1718 = vmatpush1.bf16.xpose.msra.mxu0 0
        %1719 = vmatprep.subr.bf16.mxu0 0
        %1720 = vmatpush1.bf16.xpose.msra.mxu0 0
        %1721 = vmatprep.subr.bf16.mxu0 0
        %1722 = vmatpush1.bf16.xpose.msra.mxu0 0
        %1723 = vmatprep.subr.bf16.mxu0 0
        %1724 = vmatpush1.bf16.xpose.msra.mxu0 0
        %1725 = vmatprep.subr.bf16.mxu0 0
        %1726 = vmatpush1.bf16.xpose.msra.mxu0 0
        %1727 = vmatprep.subr.bf16.mxu0 0
        %1728 = vmatpush1.bf16.xpose.msra.mxu0 0
        %1729 = vmatprep.subr.bf16.mxu0 0
        %1730 = vmatpush1.bf16.xpose.msra.mxu0 0
        %1731 = vmatprep.subr.bf16.mxu0 0
        %1732 = vmatpush1.bf16.xpose.msra.mxu0 0
        %1733 = vmatprep.mubr.bf16.mxu0 0
        %1734 = vmatmul.mubr.bf16.gmra.mrb[0].mxu0 %v1486
        %v1735 = vpop.f32.mrb[0].mxu0
        %v1736 = vadd.f32 0.0, %v1735
        %v1737 = vpop.f32.mrb[0].mxu0
        %v1738 = vpop.f32.mrb[0].mxu0
        %v1739 = vadd.f32 0.0, %v1738
        %v1740 = vpop.f32.mrb[0].mxu0
        %1741 = vmatprep.mubr.bf16.mxu0 0
        %1742 = vmatmul.mubr.bf16.gmra.mrb[0].mxu0 %v1489
        %v1743 = vpop.f32.mrb[0].mxu0
        %v1744 = vadd.f32 0.0, %v1743
        %v1745 = vpop.f32.mrb[0].mxu0
        %v1746 = vpop.f32.mrb[0].mxu0
        %v1747 = vadd.f32 0.0, %v1746
        %v1748 = vpop.f32.mrb[0].mxu0
        %1749 = vmatprep.mubr.bf16.mxu0 0
        %1750 = vmatmul.mubr.bf16.gmra.mrb[0].mxu0 %v1492
        %v1751 = vpop.f32.mrb[0].mxu0
        %v1752 = vadd.f32 0.0, %v1751
        %v1753 = vpop.f32.mrb[0].mxu0
        %v1754 = vpop.f32.mrb[0].mxu0
        %v1755 = vadd.f32 0.0, %v1754
        %v1756 = vpop.f32.mrb[0].mxu0
        %1757 = vmatprep.mubr.bf16.mxu0 0
        %1758 = vmatmul.mubr.bf16.gmra.mrb[0].mxu0 %v1495
        %v1759 = vpop.f32.mrb[0].mxu0
        %v1760 = vadd.f32 0.0, %v1759
        %v1761 = vpop.f32.mrb[0].mxu0
        %v1762 = vpop.f32.mrb[0].mxu0
        %v1763 = vadd.f32 0.0, %v1762
        %v1764 = vpop.f32.mrb[0].mxu0
        %1765 = vmatprep.mubr.bf16.mxu0 0
        %1766 = vmatmul.mubr.bf16.gmra.mrb[0].mxu0 %v1498
        %v1767 = vpop.f32.mrb[0].mxu0
        %v1768 = vadd.f32 0.0, %v1767
        %v1769 = vpop.f32.mrb[0].mxu0
        %v1770 = vpop.f32.mrb[0].mxu0
        %v1771 = vadd.f32 0.0, %v1770
        %v1772 = vpop.f32.mrb[0].mxu0
        %1773 = vmatprep.mubr.bf16.mxu0 0
        %1774 = vmatmul.mubr.bf16.gmra.mrb[0].mxu0 %v1501
        %v1775 = vpop.f32.mrb[0].mxu0
        %v1776 = vadd.f32 0.0, %v1775
        %v1777 = vpop.f32.mrb[0].mxu0
        %v1778 = vpop.f32.mrb[0].mxu0
        %v1779 = vadd.f32 0.0, %v1778
        %v1780 = vpop.f32.mrb[0].mxu0
        %1781 = vmatprep.mubr.bf16.mxu0 0
        %1782 = vmatmul.mubr.bf16.gmra.mrb[0].mxu0 %v1504
        %v1783 = vpop.f32.mrb[0].mxu0
        %v1784 = vadd.f32 0.0, %v1783
        %v1785 = vpop.f32.mrb[0].mxu0
        %v1786 = vpop.f32.mrb[0].mxu0
        %v1787 = vadd.f32 0.0, %v1786
        %v1788 = vpop.f32.mrb[0].mxu0
        %1789 = vmatprep.mubr.bf16.mxu0 0
        %1790 = vmatmul.mubr.bf16.gmra.mrb[0].mxu0 %v1507
        %v1791 = vpop.f32.mrb[0].mxu0
        %v1792 = vadd.f32 0.0, %v1791
        %v1793 = vpop.f32.mrb[0].mxu0
        %v1794 = vpop.f32.mrb[0].mxu0
        %v1795 = vadd.f32 0.0, %v1794
        %v1796 = vpop.f32.mrb[0].mxu0
        %1797 = vmatprep.mubr.bf16.mxu0 0
        %1798 = vmatmul.mubr.bf16.gmra.mrb[0].mxu0 %v1510
        %v1799 = vpop.f32.mrb[0].mxu0
        %v1800 = vadd.f32 0.0, %v1799
        %v1801 = vpop.f32.mrb[0].mxu0
        %v1802 = vpop.f32.mrb[0].mxu0
        %v1803 = vadd.f32 0.0, %v1802
        %v1804 = vpop.f32.mrb[0].mxu0
        %1805 = vmatprep.mubr.bf16.mxu0 0
        %1806 = vmatmul.mubr.bf16.gmra.mrb[0].mxu0 %v1513
        %v1807 = vpop.f32.mrb[0].mxu0
        %v1808 = vadd.f32 0.0, %v1807
        %v1809 = vpop.f32.mrb[0].mxu0
        %v1810 = vpop.f32.mrb[0].mxu0
        %v1811 = vadd.f32 0.0, %v1810
        %v1812 = vpop.f32.mrb[0].mxu0
        %1813 = vmatprep.mubr.bf16.mxu0 0
        %1814 = vmatmul.mubr.bf16.gmra.mrb[0].mxu0 %v1516
        %v1815 = vpop.f32.mrb[0].mxu0
        %v1816 = vadd.f32 0.0, %v1815
        %v1817 = vpop.f32.mrb[0].mxu0
        %v1818 = vpop.f32.mrb[0].mxu0
        %v1819 = vadd.f32 0.0, %v1818
        %v1820 = vpop.f32.mrb[0].mxu0
        %1821 = vmatprep.mubr.bf16.mxu0 0
        %1822 = vmatmul.mubr.bf16.gmra.mrb[0].mxu0 %v1519
        %v1823 = vpop.f32.mrb[0].mxu0
        %v1824 = vadd.f32 0.0, %v1823
        %v1825 = vpop.f32.mrb[0].mxu0
        %v1826 = vpop.f32.mrb[0].mxu0
        %v1827 = vadd.f32 0.0, %v1826
        %v1828 = vpop.f32.mrb[0].mxu0
        %1829 = vmatprep.mubr.bf16.mxu0 0
        %1830 = vmatmul.mubr.bf16.gmra.mrb[0].mxu0 %v1522
        %v1831 = vpop.f32.mrb[0].mxu0
        %v1832 = vadd.f32 0.0, %v1831
        %v1833 = vpop.f32.mrb[0].mxu0
        %v1834 = vpop.f32.mrb[0].mxu0
        %v1835 = vadd.f32 0.0, %v1834
        %v1836 = vpop.f32.mrb[0].mxu0
        %1837 = vmatprep.mubr.bf16.mxu0 0
        %1838 = vmatmul.mubr.bf16.gmra.mrb[0].mxu0 %v1525
        %v1839 = vpop.f32.mrb[0].mxu0
        %v1840 = vadd.f32 0.0, %v1839
        %v1841 = vpop.f32.mrb[0].mxu0
        %v1842 = vpop.f32.mrb[0].mxu0
        %v1843 = vadd.f32 0.0, %v1842
        %v1844 = vpop.f32.mrb[0].mxu0
        %1845 = vmatprep.mubr.bf16.mxu0 0
        %1846 = vmatmul.mubr.bf16.gmra.mrb[0].mxu0 %v1528
        %v1847 = vpop.f32.mrb[0].mxu0
        %v1848 = vadd.f32 0.0, %v1847
        %v1849 = vpop.f32.mrb[0].mxu0
        %v1850 = vpop.f32.mrb[0].mxu0
        %v1851 = vadd.f32 0.0, %v1850
        %v1852 = vpop.f32.mrb[0].mxu0
        %1853 = vmatprep.mubr.bf16.mxu0 0
        %1854 = vmatmul.mubr.bf16.gmra.mrb[0].mxu0 %v1531
        %v1855 = vpop.f32.mrb[0].mxu0
        %v1856 = vadd.f32 0.0, %v1855
        %v1857 = vpop.f32.mrb[0].mxu0
        %v1858 = vpop.f32.mrb[0].mxu0
        %v1859 = vadd.f32 0.0, %v1858
        %v1860 = vpop.f32.mrb[0].mxu0
        %1861 = vmatprep.mubr.bf16.mxu0 0
        %1862 = vmatmul.mubr.bf16.gmra.mrb[0].mxu0 %v1534
        %v1863 = vpop.f32.mrb[0].mxu0
        %v1864 = vadd.f32 0.0, %v1863
        %v1865 = vpop.f32.mrb[0].mxu0
        %v1866 = vpop.f32.mrb[0].mxu0
        %v1867 = vadd.f32 0.0, %v1866
        %v1868 = vpop.f32.mrb[0].mxu0
        %1869 = vmatprep.mubr.bf16.mxu0 0
        %1870 = vmatmul.mubr.bf16.gmra.mrb[0].mxu0 %v1537
        %v1871 = vpop.f32.mrb[0].mxu0
        %v1872 = vadd.f32 0.0, %v1871
        %v1873 = vpop.f32.mrb[0].mxu0
        %v1874 = vpop.f32.mrb[0].mxu0
        %v1875 = vadd.f32 0.0, %v1874
        %v1876 = vpop.f32.mrb[0].mxu0
        %1877 = vmatprep.mubr.bf16.mxu0 0
        %1878 = vmatmul.mubr.bf16.gmra.mrb[0].mxu0 %v1540
        %v1879 = vpop.f32.mrb[0].mxu0
        %v1880 = vadd.f32 0.0, %v1879
        %v1881 = vpop.f32.mrb[0].mxu0
        %v1882 = vpop.f32.mrb[0].mxu0
        %v1883 = vadd.f32 0.0, %v1882
        %v1884 = vpop.f32.mrb[0].mxu0
        %1885 = vmatprep.mubr.bf16.mxu0 0
        %1886 = vmatmul.mubr.bf16.gmra.mrb[0].mxu0 %v1543
        %v1887 = vpop.f32.mrb[0].mxu0
        %v1888 = vadd.f32 0.0, %v1887
        %v1889 = vpop.f32.mrb[0].mxu0
        %v1890 = vpop.f32.mrb[0].mxu0
        %v1891 = vadd.f32 0.0, %v1890
        %v1892 = vpop.f32.mrb[0].mxu0
        %1893 = vmatprep.mubr.bf16.mxu0 0
        %1894 = vmatmul.mubr.bf16.gmra.mrb[0].mxu0 %v1546
        %v1895 = vpop.f32.mrb[0].mxu0
        %v1896 = vadd.f32 0.0, %v1895
        %v1897 = vpop.f32.mrb[0].mxu0
        %v1898 = vpop.f32.mrb[0].mxu0
        %v1899 = vadd.f32 0.0, %v1898
        %v1900 = vpop.f32.mrb[0].mxu0
        %1901 = vmatprep.mubr.bf16.mxu0 0
        %1902 = vmatmul.mubr.bf16.gmra.mrb[0].mxu0 %v1549
        %v1903 = vpop.f32.mrb[0].mxu0
        %v1904 = vadd.f32 0.0, %v1903
        %v1905 = vpop.f32.mrb[0].mxu0
        %v1906 = vpop.f32.mrb[0].mxu0
        %v1907 = vadd.f32 0.0, %v1906
        %v1908 = vpop.f32.mrb[0].mxu0
        %1909 = vmatprep.mubr.bf16.mxu0 0
        %1910 = vmatmul.mubr.bf16.gmra.mrb[0].mxu0 %v1552
        %v1911 = vpop.f32.mrb[0].mxu0
        %v1912 = vadd.f32 0.0, %v1911
        %v1913 = vpop.f32.mrb[0].mxu0
        %v1914 = vpop.f32.mrb[0].mxu0
        %v1915 = vadd.f32 0.0, %v1914
        %v1916 = vpop.f32.mrb[0].mxu0
        %1917 = vmatprep.mubr.bf16.mxu0 0
        %1918 = vmatmul.mubr.bf16.gmra.mrb[0].mxu0 %v1555
        %v1919 = vpop.f32.mrb[0].mxu0
        %v1920 = vadd.f32 0.0, %v1919
        %v1921 = vpop.f32.mrb[0].mxu0
        %v1922 = vpop.f32.mrb[0].mxu0
        %v1923 = vadd.f32 0.0, %v1922
        %v1924 = vpop.f32.mrb[0].mxu0
        %1925 = vmatprep.mubr.bf16.mxu0 0
        %1926 = vmatmul.mubr.bf16.gmra.mrb[0].mxu0 %v1558
        %v1927 = vpop.f32.mrb[0].mxu0
        %v1928 = vadd.f32 0.0, %v1927
        %v1929 = vpop.f32.mrb[0].mxu0
        %v1930 = vpop.f32.mrb[0].mxu0
        %v1931 = vadd.f32 0.0, %v1930
        %v1932 = vpop.f32.mrb[0].mxu0
        %1933 = vmatprep.mubr.bf16.mxu0 0
        %1934 = vmatmul.mubr.bf16.gmra.mrb[0].mxu0 %v1561
        %v1935 = vpop.f32.mrb[0].mxu0
        %v1936 = vadd.f32 0.0, %v1935
        %v1937 = vpop.f32.mrb[0].mxu0
        %v1938 = vpop.f32.mrb[0].mxu0
        %v1939 = vadd.f32 0.0, %v1938
        %v1940 = vpop.f32.mrb[0].mxu0
        %1941 = vmatprep.mubr.bf16.mxu0 0
        %1942 = vmatmul.mubr.bf16.gmra.mrb[0].mxu0 %v1564
        %v1943 = vpop.f32.mrb[0].mxu0
        %v1944 = vadd.f32 0.0, %v1943
        %v1945 = vpop.f32.mrb[0].mxu0
        %v1946 = vpop.f32.mrb[0].mxu0
        %v1947 = vadd.f32 0.0, %v1946
        %v1948 = vpop.f32.mrb[0].mxu0
        %1949 = vmatprep.mubr.bf16.mxu0 0
        %1950 = vmatmul.mubr.bf16.gmra.mrb[0].mxu0 %v1567
        %v1951 = vpop.f32.mrb[0].mxu0
        %v1952 = vadd.f32 0.0, %v1951
        %v1953 = vpop.f32.mrb[0].mxu0
        %v1954 = vpop.f32.mrb[0].mxu0
        %v1955 = vadd.f32 0.0, %v1954
        %v1956 = vpop.f32.mrb[0].mxu0
        %1957 = vmatprep.mubr.bf16.mxu0 0
        %1958 = vmatmul.mubr.bf16.gmra.mrb[0].mxu0 %v1570
        %v1959 = vpop.f32.mrb[0].mxu0
        %v1960 = vadd.f32 0.0, %v1959
        %v1961 = vpop.f32.mrb[0].mxu0
        %v1962 = vpop.f32.mrb[0].mxu0
        %v1963 = vadd.f32 0.0, %v1962
        %v1964 = vpop.f32.mrb[0].mxu0
        %1965 = vmatprep.mubr.bf16.mxu0 0
        %1966 = vmatmul.mubr.bf16.gmra.mrb[0].mxu0 %v1573
        %v1967 = vpop.f32.mrb[0].mxu0
        %v1968 = vadd.f32 0.0, %v1967
        %v1969 = vpop.f32.mrb[0].mxu0
        %v1970 = vpop.f32.mrb[0].mxu0
        %v1971 = vadd.f32 0.0, %v1970
        %v1972 = vpop.f32.mrb[0].mxu0
        %1973 = vmatprep.mubr.bf16.mxu0 0
        %1974 = vmatmul.mubr.bf16.gmra.mrb[0].mxu0 %v1576
        %v1975 = vpop.f32.mrb[0].mxu0
        %v1976 = vadd.f32 0.0, %v1975
        %v1977 = vpop.f32.mrb[0].mxu0
        %v1978 = vpop.f32.mrb[0].mxu0
        %v1979 = vadd.f32 0.0, %v1978
        %v1980 = vpop.f32.mrb[0].mxu0
        %1981 = vmatprep.mubr.bf16.mxu0 0
        %1982 = vmatmul.mubr.bf16.gmra.mrb[0].mxu0 %v1579
        %v1983 = vpop.f32.mrb[0].mxu0
        %v1984 = vadd.f32 0.0, %v1983
        %v1985 = vpop.f32.mrb[0].mxu0
        %v1986 = vpop.f32.mrb[0].mxu0
        %v1987 = vadd.f32 0.0, %v1986
        %v1988 = vpop.f32.mrb[0].mxu0
        %1989 = vmatprep.mubr.bf16.mxu0 0
        %1990 = vmatmul.mubr.bf16.gmra.mrb[0].mxu0 %v1582
        %v1991 = vpop.f32.mrb[0].mxu0
        %v1992 = vadd.f32 0.0, %v1991
        %v1993 = vpop.f32.mrb[0].mxu0
        %v1994 = vpop.f32.mrb[0].mxu0
        %v1995 = vadd.f32 0.0, %v1994
        %v1996 = vpop.f32.mrb[0].mxu0
        %1997 = vmatprep.mubr.bf16.mxu0 0
        %1998 = vmatmul.mubr.bf16.gmra.mrb[0].mxu0 %v1585
        %v1999 = vpop.f32.mrb[0].mxu0
        %v2000 = vadd.f32 0.0, %v1999
        %v2001 = vpop.f32.mrb[0].mxu0
        %v2002 = vpop.f32.mrb[0].mxu0
        %v2003 = vadd.f32 0.0, %v2002
        %v2004 = vpop.f32.mrb[0].mxu0
        %2005 = vmatprep.mubr.bf16.mxu0 0
        %2006 = vmatmul.mubr.bf16.gmra.mrb[0].mxu0 %v1588
        %v2007 = vpop.f32.mrb[0].mxu0
        %v2008 = vadd.f32 0.0, %v2007
        %v2009 = vpop.f32.mrb[0].mxu0
        %v2010 = vpop.f32.mrb[0].mxu0
        %v2011 = vadd.f32 0.0, %v2010
        %v2012 = vpop.f32.mrb[0].mxu0
        %2013 = vmatprep.mubr.bf16.mxu0 0
        %2014 = vmatmul.mubr.bf16.gmra.mrb[0].mxu0 %v1591
        %v2015 = vpop.f32.mrb[0].mxu0
        %v2016 = vadd.f32 0.0, %v2015
        %v2017 = vpop.f32.mrb[0].mxu0
        %v2018 = vpop.f32.mrb[0].mxu0
        %v2019 = vadd.f32 0.0, %v2018
        %v2020 = vpop.f32.mrb[0].mxu0
        %2021 = vmatprep.mubr.bf16.mxu0 0
        %2022 = vmatmul.mubr.bf16.gmra.mrb[0].mxu0 %v1594
        %v2023 = vpop.f32.mrb[0].mxu0
        %v2024 = vadd.f32 0.0, %v2023
        %v2025 = vpop.f32.mrb[0].mxu0
        %v2026 = vpop.f32.mrb[0].mxu0
        %v2027 = vadd.f32 0.0, %v2026
        %v2028 = vpop.f32.mrb[0].mxu0
        %2029 = vmatprep.mubr.bf16.mxu0 0
        %2030 = vmatmul.mubr.bf16.gmra.mrb[0].mxu0 %v1597
        %v2031 = vpop.f32.mrb[0].mxu0
        %v2032 = vadd.f32 0.0, %v2031
        %v2033 = vpop.f32.mrb[0].mxu0
        %v2034 = vpop.f32.mrb[0].mxu0
        %v2035 = vadd.f32 0.0, %v2034
        %v2036 = vpop.f32.mrb[0].mxu0
        %2037 = vmatprep.mubr.bf16.mxu0 0
        %2038 = vmatmul.mubr.bf16.gmra.mrb[0].mxu0 %v1600
        %v2039 = vpop.f32.mrb[0].mxu0
        %v2040 = vadd.f32 0.0, %v2039
        %v2041 = vpop.f32.mrb[0].mxu0
        %v2042 = vpop.f32.mrb[0].mxu0
        %v2043 = vadd.f32 0.0, %v2042
        %v2044 = vpop.f32.mrb[0].mxu0
        %2045 = vmatprep.mubr.bf16.mxu0 0
        %2046 = vmatmul.mubr.bf16.gmra.mrb[0].mxu0 %v1603
        %v2047 = vpop.f32.mrb[0].mxu0
        %v2048 = vadd.f32 0.0, %v2047
        %v2049 = vpop.f32.mrb[0].mxu0
        %v2050 = vpop.f32.mrb[0].mxu0
        %v2051 = vadd.f32 0.0, %v2050
        %v2052 = vpop.f32.mrb[0].mxu0
        %2053 = vmatprep.mubr.bf16.mxu0 0
        %2054 = vmatmul.mubr.bf16.gmra.mrb[0].mxu0 %v1606
        %v2055 = vpop.f32.mrb[0].mxu0
        %v2056 = vadd.f32 0.0, %v2055
        %v2057 = vpop.f32.mrb[0].mxu0
        %v2058 = vpop.f32.mrb[0].mxu0
        %v2059 = vadd.f32 0.0, %v2058
        %v2060 = vpop.f32.mrb[0].mxu0
        %2061 = vmatprep.mubr.bf16.mxu0 0
        %2062 = vmatmul.mubr.bf16.gmra.mrb[0].mxu0 %v1609
        %v2063 = vpop.f32.mrb[0].mxu0
        %v2064 = vadd.f32 0.0, %v2063
        %v2065 = vpop.f32.mrb[0].mxu0
        %v2066 = vpop.f32.mrb[0].mxu0
        %v2067 = vadd.f32 0.0, %v2066
        %v2068 = vpop.f32.mrb[0].mxu0
        %2069 = vmatprep.mubr.bf16.mxu0 0
        %2070 = vmatmul.mubr.bf16.gmra.mrb[0].mxu0 %v1612
        %v2071 = vpop.f32.mrb[0].mxu0
        %v2072 = vadd.f32 0.0, %v2071
        %v2073 = vpop.f32.mrb[0].mxu0
        %v2074 = vpop.f32.mrb[0].mxu0
        %v2075 = vadd.f32 0.0, %v2074
        %v2076 = vpop.f32.mrb[0].mxu0
        %2077 = vmatprep.mubr.bf16.mxu0 0
        %2078 = vmatmul.mubr.bf16.gmra.mrb[0].mxu0 %v1615
        %v2079 = vpop.f32.mrb[0].mxu0
        %v2080 = vadd.f32 0.0, %v2079
        %v2081 = vpop.f32.mrb[0].mxu0
        %v2082 = vpop.f32.mrb[0].mxu0
        %v2083 = vadd.f32 0.0, %v2082
        %v2084 = vpop.f32.mrb[0].mxu0
        %2085 = vmatprep.mubr.bf16.mxu0 0
        %2086 = vmatmul.mubr.bf16.gmra.mrb[0].mxu0 %v1618
        %v2087 = vpop.f32.mrb[0].mxu0
        %v2088 = vadd.f32 0.0, %v2087
        %v2089 = vpop.f32.mrb[0].mxu0
        %v2090 = vpop.f32.mrb[0].mxu0
        %v2091 = vadd.f32 0.0, %v2090
        %v2092 = vpop.f32.mrb[0].mxu0
        %2093 = vmatprep.mubr.bf16.mxu0 0
        %2094 = vmatmul.mubr.bf16.gmra.mrb[0].mxu0 %v1621
        %v2095 = vpop.f32.mrb[0].mxu0
        %v2096 = vadd.f32 0.0, %v2095
        %v2097 = vpop.f32.mrb[0].mxu0
        %v2098 = vpop.f32.mrb[0].mxu0
        %v2099 = vadd.f32 0.0, %v2098
        %v2100 = vpop.f32.mrb[0].mxu0
        %2101 = vmatprep.mubr.bf16.mxu0 0
        %2102 = vmatmul.mubr.bf16.gmra.mrb[0].mxu0 %v1624
        %v2103 = vpop.f32.mrb[0].mxu0
        %v2104 = vadd.f32 0.0, %v2103
        %v2105 = vpop.f32.mrb[0].mxu0
        %v2106 = vpop.f32.mrb[0].mxu0
        %v2107 = vadd.f32 0.0, %v2106
        %v2108 = vpop.f32.mrb[0].mxu0
        %2109 = vmatprep.mubr.bf16.mxu0 0
        %2110 = vmatmul.mubr.bf16.gmra.mrb[0].mxu0 %v1627
        %v2111 = vpop.f32.mrb[0].mxu0
        %v2112 = vadd.f32 0.0, %v2111
        %v2113 = vpop.f32.mrb[0].mxu0
        %v2114 = vpop.f32.mrb[0].mxu0
        %v2115 = vadd.f32 0.0, %v2114
        %v2116 = vpop.f32.mrb[0].mxu0
        %2117 = vmatprep.mubr.bf16.mxu0 0
        %2118 = vmatmul.mubr.bf16.gmra.mrb[0].mxu0 %v1630
        %v2119 = vpop.f32.mrb[0].mxu0
        %v2120 = vadd.f32 0.0, %v2119
        %v2121 = vpop.f32.mrb[0].mxu0
        %v2122 = vpop.f32.mrb[0].mxu0
        %v2123 = vadd.f32 0.0, %v2122
        %v2124 = vpop.f32.mrb[0].mxu0
        %2125 = vmatprep.mubr.bf16.mxu0 0
        %2126 = vmatmul.mubr.bf16.gmra.mrb[0].mxu0 %v1633
        %v2127 = vpop.f32.mrb[0].mxu0
        %v2128 = vadd.f32 0.0, %v2127
        %v2129 = vpop.f32.mrb[0].mxu0
        %v2130 = vpop.f32.mrb[0].mxu0
        %v2131 = vadd.f32 0.0, %v2130
        %v2132 = vpop.f32.mrb[0].mxu0
        %2133 = vmatprep.mubr.bf16.mxu0 0
        %2134 = vmatmul.mubr.bf16.gmra.mrb[0].mxu0 %v1636
        %v2135 = vpop.f32.mrb[0].mxu0
        %v2136 = vadd.f32 0.0, %v2135
        %v2137 = vpop.f32.mrb[0].mxu0
        %v2138 = vpop.f32.mrb[0].mxu0
        %v2139 = vadd.f32 0.0, %v2138
        %v2140 = vpop.f32.mrb[0].mxu0
        %2141 = vmatprep.mubr.bf16.mxu0 0
        %2142 = vmatmul.mubr.bf16.gmra.mrb[0].mxu0 %v1639
        %v2143 = vpop.f32.mrb[0].mxu0
        %v2144 = vadd.f32 0.0, %v2143
        %v2145 = vpop.f32.mrb[0].mxu0
        %v2146 = vpop.f32.mrb[0].mxu0
        %v2147 = vadd.f32 0.0, %v2146
        %v2148 = vpop.f32.mrb[0].mxu0
        %2149 = vmatprep.mubr.bf16.mxu0 0
        %2150 = vmatmul.mubr.bf16.gmra.mrb[0].mxu0 %v1642
        %v2151 = vpop.f32.mrb[0].mxu0
        %v2152 = vadd.f32 0.0, %v2151
        %v2153 = vpop.f32.mrb[0].mxu0
        %v2154 = vpop.f32.mrb[0].mxu0
        %v2155 = vadd.f32 0.0, %v2154
        %v2156 = vpop.f32.mrb[0].mxu0
        %2157 = vmatprep.mubr.bf16.mxu0 0
        %2158 = vmatmul.mubr.bf16.gmra.mrb[0].mxu0 %v1645
        %v2159 = vpop.f32.mrb[0].mxu0
        %v2160 = vadd.f32 0.0, %v2159
        %v2161 = vpop.f32.mrb[0].mxu0
        %v2162 = vpop.f32.mrb[0].mxu0
        %v2163 = vadd.f32 0.0, %v2162
        %v2164 = vpop.f32.mrb[0].mxu0
        %2165 = vmatprep.mubr.bf16.mxu0 0
        %2166 = vmatmul.mubr.bf16.gmra.mrb[0].mxu0 %v1648
        %v2167 = vpop.f32.mrb[0].mxu0
        %v2168 = vadd.f32 0.0, %v2167
        %v2169 = vpop.f32.mrb[0].mxu0
        %v2170 = vpop.f32.mrb[0].mxu0
        %v2171 = vadd.f32 0.0, %v2170
        %v2172 = vpop.f32.mrb[0].mxu0
        %2173 = vmatprep.mubr.bf16.mxu0 0
        %2174 = vmatmul.mubr.bf16.gmra.mrb[0].mxu0 %v1651
        %v2175 = vpop.f32.mrb[0].mxu0
        %v2176 = vadd.f32 0.0, %v2175
        %v2177 = vpop.f32.mrb[0].mxu0
        %v2178 = vpop.f32.mrb[0].mxu0
        %v2179 = vadd.f32 0.0, %v2178
        %v2180 = vpop.f32.mrb[0].mxu0
        %2181 = vmatprep.mubr.bf16.mxu0 0
        %2182 = vmatmul.mubr.bf16.gmra.mrb[0].mxu0 %v1654
        %v2183 = vpop.f32.mrb[0].mxu0
        %v2184 = vadd.f32 0.0, %v2183
        %v2185 = vpop.f32.mrb[0].mxu0
        %v2186 = vpop.f32.mrb[0].mxu0
        %v2187 = vadd.f32 0.0, %v2186
        %v2188 = vpop.f32.mrb[0].mxu0
        %2189 = vmatprep.mubr.bf16.mxu0 0
        %2190 = vmatmul.mubr.bf16.gmra.mrb[0].mxu0 %v1657
        %v2191 = vpop.f32.mrb[0].mxu0
        %v2192 = vadd.f32 0.0, %v2191
        %v2193 = vpop.f32.mrb[0].mxu0
        %v2194 = vpop.f32.mrb[0].mxu0
        %v2195 = vadd.f32 0.0, %v2194
        %v2196 = vpop.f32.mrb[0].mxu0
        %2197 = vmatprep.mubr.bf16.mxu0 0
        %2198 = vmatmul.mubr.bf16.gmra.mrb[0].mxu0 %v1660
        %v2199 = vpop.f32.mrb[0].mxu0
        %v2200 = vadd.f32 0.0, %v2199
        %v2201 = vpop.f32.mrb[0].mxu0
        %v2202 = vpop.f32.mrb[0].mxu0
        %v2203 = vadd.f32 0.0, %v2202
        %v2204 = vpop.f32.mrb[0].mxu0
        %2205 = vmatprep.mubr.bf16.mxu0 0
        %2206 = vmatmul.mubr.bf16.gmra.mrb[0].mxu0 %v1663
        %v2207 = vpop.f32.mrb[0].mxu0
        %v2208 = vadd.f32 0.0, %v2207
        %v2209 = vpop.f32.mrb[0].mxu0
        %v2210 = vpop.f32.mrb[0].mxu0
        %v2211 = vadd.f32 0.0, %v2210
        %v2212 = vpop.f32.mrb[0].mxu0
        %2213 = vmatprep.mubr.bf16.mxu0 0
        %2214 = vmatmul.mubr.bf16.gmra.mrb[0].mxu0 %v1666
        %v2215 = vpop.f32.mrb[0].mxu0
        %v2216 = vadd.f32 0.0, %v2215
        %v2217 = vpop.f32.mrb[0].mxu0
        %v2218 = vpop.f32.mrb[0].mxu0
        %v2219 = vadd.f32 0.0, %v2218
        %v2220 = vpop.f32.mrb[0].mxu0
        %2221 = vmatprep.mubr.bf16.mxu0 0
        %2222 = vmatmul.mubr.bf16.gmra.mrb[0].mxu0 %v1669
        %v2223 = vpop.f32.mrb[0].mxu0
        %v2224 = vadd.f32 0.0, %v2223
        %v2225 = vpop.f32.mrb[0].mxu0
        %v2226 = vpop.f32.mrb[0].mxu0
        %v2227 = vadd.f32 0.0, %v2226
        %v2228 = vpop.f32.mrb[0].mxu0
        %2229 = vmatprep.mubr.bf16.mxu0 0
        %2230 = vmatmul.mubr.bf16.gmra.mrb[0].mxu0 %v1672
        %v2231 = vpop.f32.mrb[0].mxu0
        %v2232 = vadd.f32 0.0, %v2231
        %v2233 = vpop.f32.mrb[0].mxu0
        %v2234 = vpop.f32.mrb[0].mxu0
        %v2235 = vadd.f32 0.0, %v2234
        %v2236 = vpop.f32.mrb[0].mxu0
        %2237 = vmatprep.mubr.bf16.mxu0 0
        %2238 = vmatmul.mubr.bf16.gmra.mrb[0].mxu0 %v1675
        %v2239 = vpop.f32.mrb[0].mxu0
        %v2240 = vadd.f32 0.0, %v2239
        %v2241 = vpop.f32.mrb[0].mxu0
        %v2242 = vpop.f32.mrb[0].mxu0
        %v2243 = vadd.f32 0.0, %v2242
        %v2244 = vpop.f32.mrb[0].mxu0
        %2245 = vdwg.mxu0
        %v2246 = vld [vmem:[%s4] sm:$0xff]
        %v2247 = vld [vmem:[%s4 + $0x8] sm:$0xff]
        %v2248 = vld [vmem:[%s4 + $0x10] sm:$0xff]
        %v2249 = vld [vmem:[%s4 + $0x18] sm:$0xff]
        %v2250 = vld [vmem:[%s4 + $0x20] sm:$0xff]
        %v2251 = vld [vmem:[%s4 + $0x28] sm:$0xff]
        %v2252 = vld [vmem:[%s4 + $0x30] sm:$0xff]
        %v2253 = vld [vmem:[%s4 + $0x38] sm:$0xff]
        %v2254 = vld [vmem:[%s4 + $0x40] sm:$0xff]
        %v2255 = vld [vmem:[%s4 + $0x48] sm:$0xff]
        %v2256 = vld [vmem:[%s4 + $0x50] sm:$0xff]
        %v2257 = vld [vmem:[%s4 + $0x58] sm:$0xff]
        %v2258 = vld [vmem:[%s4 + $0x60] sm:$0xff]
        %v2259 = vld [vmem:[%s4 + $0x68] sm:$0xff]
        %v2260 = vld [vmem:[%s4 + $0x70] sm:$0xff]
        %v2261 = vld [vmem:[%s4 + $0x78] sm:$0xff]
        %v2262 = vadd.f32 %v1736, %v2246
        %v2263 = vadd.f32 %v1739, %v2247
        %v2264 = vadd.f32 %v1744, %v2248
        %v2265 = vadd.f32 %v1747, %v2249
        %v2266 = vadd.f32 %v1752, %v2250
        %v2267 = vadd.f32 %v1755, %v2251
        %v2268 = vadd.f32 %v1760, %v2252
        %v2269 = vadd.f32 %v1763, %v2253
        %v2270 = vadd.f32 %v1768, %v2254
        %v2271 = vadd.f32 %v1771, %v2255
        %v2272 = vadd.f32 %v1776, %v2256
        %v2273 = vadd.f32 %v1779, %v2257
        %v2274 = vadd.f32 %v1784, %v2258
        %v2275 = vadd.f32 %v1787, %v2259
        %v2276 = vadd.f32 %v1792, %v2260
        %v2277 = vadd.f32 %v1795, %v2261
        %v2278 = vadd.f32 %v1800, %v2246
        %v2279 = vadd.f32 %v1803, %v2247
        %v2280 = vadd.f32 %v1808, %v2248
        %v2281 = vadd.f32 %v1811, %v2249
        %v2282 = vadd.f32 %v1816, %v2250
        %v2283 = vadd.f32 %v1819, %v2251
        %v2284 = vadd.f32 %v1824, %v2252
        %v2285 = vadd.f32 %v1827, %v2253
        %v2286 = vadd.f32 %v1832, %v2254
        %v2287 = vadd.f32 %v1835, %v2255
        %v2288 = vadd.f32 %v1840, %v2256
        %v2289 = vadd.f32 %v1843, %v2257
        %v2290 = vadd.f32 %v1848, %v2258
        %v2291 = vadd.f32 %v1851, %v2259
        %v2292 = vadd.f32 %v1856, %v2260
        %v2293 = vadd.f32 %v1859, %v2261
        %v2294 = vadd.f32 %v1864, %v2246
        %v2295 = vadd.f32 %v1867, %v2247
        %v2296 = vadd.f32 %v1872, %v2248
        %v2297 = vadd.f32 %v1875, %v2249
        %v2298 = vadd.f32 %v1880, %v2250
        %v2299 = vadd.f32 %v1883, %v2251
        %v2300 = vadd.f32 %v1888, %v2252
        %v2301 = vadd.f32 %v1891, %v2253
        %v2302 = vadd.f32 %v1896, %v2254
        %v2303 = vadd.f32 %v1899, %v2255
        %v2304 = vadd.f32 %v1904, %v2256
        %v2305 = vadd.f32 %v1907, %v2257
        %v2306 = vadd.f32 %v1912, %v2258
        %v2307 = vadd.f32 %v1915, %v2259
        %v2308 = vadd.f32 %v1920, %v2260
        %v2309 = vadd.f32 %v1923, %v2261
        %v2310 = vadd.f32 %v1928, %v2246
        %v2311 = vadd.f32 %v1931, %v2247
        %v2312 = vadd.f32 %v1936, %v2248
        %v2313 = vadd.f32 %v1939, %v2249
        %v2314 = vadd.f32 %v1944, %v2250
        %v2315 = vadd.f32 %v1947, %v2251
        %v2316 = vadd.f32 %v1952, %v2252
        %v2317 = vadd.f32 %v1955, %v2253
        %v2318 = vadd.f32 %v1960, %v2254
        %v2319 = vadd.f32 %v1963, %v2255
        %v2320 = vadd.f32 %v1968, %v2256
        %v2321 = vadd.f32 %v1971, %v2257
        %v2322 = vadd.f32 %v1976, %v2258
        %v2323 = vadd.f32 %v1979, %v2259
        %v2324 = vadd.f32 %v1984, %v2260
        %v2325 = vadd.f32 %v1987, %v2261
        %v2326 = vadd.f32 %v1992, %v2246
        %v2327 = vadd.f32 %v1995, %v2247
        %v2328 = vadd.f32 %v2000, %v2248
        %v2329 = vadd.f32 %v2003, %v2249
        %v2330 = vadd.f32 %v2008, %v2250
        %v2331 = vadd.f32 %v2011, %v2251
        %v2332 = vadd.f32 %v2016, %v2252
        %v2333 = vadd.f32 %v2019, %v2253
        %v2334 = vadd.f32 %v2024, %v2254
        %v2335 = vadd.f32 %v2027, %v2255
        %v2336 = vadd.f32 %v2032, %v2256
        %v2337 = vadd.f32 %v2035, %v2257
        %v2338 = vadd.f32 %v2040, %v2258
        %v2339 = vadd.f32 %v2043, %v2259
        %v2340 = vadd.f32 %v2048, %v2260
        %v2341 = vadd.f32 %v2051, %v2261
        %v2342 = vadd.f32 %v2056, %v2246
        %v2343 = vadd.f32 %v2059, %v2247
        %v2344 = vadd.f32 %v2064, %v2248
        %v2345 = vadd.f32 %v2067, %v2249
        %v2346 = vadd.f32 %v2072, %v2250
        %v2347 = vadd.f32 %v2075, %v2251
        %v2348 = vadd.f32 %v2080, %v2252
        %v2349 = vadd.f32 %v2083, %v2253
        %v2350 = vadd.f32 %v2088, %v2254
        %v2351 = vadd.f32 %v2091, %v2255
        %v2352 = vadd.f32 %v2096, %v2256
        %v2353 = vadd.f32 %v2099, %v2257
        %v2354 = vadd.f32 %v2104, %v2258
        %v2355 = vadd.f32 %v2107, %v2259
        %v2356 = vadd.f32 %v2112, %v2260
        %v2357 = vadd.f32 %v2115, %v2261
        %v2358 = vadd.f32 %v2120, %v2246
        %v2359 = vadd.f32 %v2123, %v2247
        %v2360 = vadd.f32 %v2128, %v2248
        %v2361 = vadd.f32 %v2131, %v2249
        %v2362 = vadd.f32 %v2136, %v2250
        %v2363 = vadd.f32 %v2139, %v2251
        %v2364 = vadd.f32 %v2144, %v2252
        %v2365 = vadd.f32 %v2147, %v2253
        %v2366 = vadd.f32 %v2152, %v2254
        %v2367 = vadd.f32 %v2155, %v2255
        %v2368 = vadd.f32 %v2160, %v2256
        %v2369 = vadd.f32 %v2163, %v2257
        %v2370 = vadd.f32 %v2168, %v2258
        %v2371 = vadd.f32 %v2171, %v2259
        %v2372 = vadd.f32 %v2176, %v2260
        %v2373 = vadd.f32 %v2179, %v2261
        %v2374 = vadd.f32 %v2184, %v2246
        %v2375 = vadd.f32 %v2187, %v2247
        %v2376 = vadd.f32 %v2192, %v2248
        %v2377 = vadd.f32 %v2195, %v2249
        %v2378 = vadd.f32 %v2200, %v2250
        %v2379 = vadd.f32 %v2203, %v2251
        %v2380 = vadd.f32 %v2208, %v2252
        %v2381 = vadd.f32 %v2211, %v2253
        %v2382 = vadd.f32 %v2216, %v2254
        %v2383 = vadd.f32 %v2219, %v2255
        %v2384 = vadd.f32 %v2224, %v2256
        %v2385 = vadd.f32 %v2227, %v2257
        %v2386 = vadd.f32 %v2232, %v2258
        %v2387 = vadd.f32 %v2235, %v2259
        %v2388 = vadd.f32 %v2240, %v2260
        %v2389 = vadd.f32 %v2243, %v2261
        %2390 = vmax.xlane.f32.xlu0 %v2262
        %v2391 = vpop.xlane.xlu0 %2390
        %2392 = vmax.xlane.f32.xlu0 %v2263
        %v2393 = vpop.xlane.xlu0 %2392
        %2394 = vmax.xlane.f32.xlu0 %v2264
        %v2395 = vpop.xlane.xlu0 %2394
        %2396 = vmax.xlane.f32.xlu0 %v2265
        %v2397 = vpop.xlane.xlu0 %2396
        %2398 = vmax.xlane.f32.xlu0 %v2266
        %v2399 = vpop.xlane.xlu0 %2398
        %2400 = vmax.xlane.f32.xlu0 %v2267
        %v2401 = vpop.xlane.xlu0 %2400
        %2402 = vmax.xlane.f32.xlu0 %v2268
        %v2403 = vpop.xlane.xlu0 %2402
        %2404 = vmax.xlane.f32.xlu0 %v2269
        %v2405 = vpop.xlane.xlu0 %2404
        %2406 = vmax.xlane.f32.xlu0 %v2270
        %v2407 = vpop.xlane.xlu0 %2406
        %2408 = vmax.xlane.f32.xlu0 %v2271
        %v2409 = vpop.xlane.xlu0 %2408
        %2410 = vmax.xlane.f32.xlu0 %v2272
        %v2411 = vpop.xlane.xlu0 %2410
        %2412 = vmax.xlane.f32.xlu0 %v2273
        %v2413 = vpop.xlane.xlu0 %2412
        %2414 = vmax.xlane.f32.xlu0 %v2274
        %v2415 = vpop.xlane.xlu0 %2414
        %2416 = vmax.xlane.f32.xlu0 %v2275
        %v2417 = vpop.xlane.xlu0 %2416
        %2418 = vmax.xlane.f32.xlu0 %v2276
        %v2419 = vpop.xlane.xlu0 %2418
        %2420 = vmax.xlane.f32.xlu0 %v2277
        %v2421 = vpop.xlane.xlu0 %2420
        %2422 = vmax.xlane.f32.xlu0 %v2278
        %v2423 = vpop.xlane.xlu0 %2422
        %2424 = vmax.xlane.f32.xlu0 %v2279
        %v2425 = vpop.xlane.xlu0 %2424
        %2426 = vmax.xlane.f32.xlu0 %v2280
        %v2427 = vpop.xlane.xlu0 %2426
        %2428 = vmax.xlane.f32.xlu0 %v2281
        %v2429 = vpop.xlane.xlu0 %2428
        %2430 = vmax.xlane.f32.xlu0 %v2282
        %v2431 = vpop.xlane.xlu0 %2430
        %2432 = vmax.xlane.f32.xlu0 %v2283
        %v2433 = vpop.xlane.xlu0 %2432
        %2434 = vmax.xlane.f32.xlu0 %v2284
        %v2435 = vpop.xlane.xlu0 %2434
        %2436 = vmax.xlane.f32.xlu0 %v2285
        %v2437 = vpop.xlane.xlu0 %2436
        %2438 = vmax.xlane.f32.xlu0 %v2286
        %v2439 = vpop.xlane.xlu0 %2438
        %2440 = vmax.xlane.f32.xlu0 %v2287
        %v2441 = vpop.xlane.xlu0 %2440
        %2442 = vmax.xlane.f32.xlu0 %v2288
        %v2443 = vpop.xlane.xlu0 %2442
        %2444 = vmax.xlane.f32.xlu0 %v2289
        %v2445 = vpop.xlane.xlu0 %2444
        %2446 = vmax.xlane.f32.xlu0 %v2290
        %v2447 = vpop.xlane.xlu0 %2446
        %2448 = vmax.xlane.f32.xlu0 %v2291
        %v2449 = vpop.xlane.xlu0 %2448
        %2450 = vmax.xlane.f32.xlu0 %v2292
        %v2451 = vpop.xlane.xlu0 %2450
        %2452 = vmax.xlane.f32.xlu0 %v2293
        %v2453 = vpop.xlane.xlu0 %2452
        %2454 = vmax.xlane.f32.xlu0 %v2294
        %v2455 = vpop.xlane.xlu0 %2454
        %2456 = vmax.xlane.f32.xlu0 %v2295
        %v2457 = vpop.xlane.xlu0 %2456
        %2458 = vmax.xlane.f32.xlu0 %v2296
        %v2459 = vpop.xlane.xlu0 %2458
        %2460 = vmax.xlane.f32.xlu0 %v2297
        %v2461 = vpop.xlane.xlu0 %2460
        %2462 = vmax.xlane.f32.xlu0 %v2298
        %v2463 = vpop.xlane.xlu0 %2462
        %2464 = vmax.xlane.f32.xlu0 %v2299
        %v2465 = vpop.xlane.xlu0 %2464
        %2466 = vmax.xlane.f32.xlu0 %v2300
        %v2467 = vpop.xlane.xlu0 %2466
        %2468 = vmax.xlane.f32.xlu0 %v2301
        %v2469 = vpop.xlane.xlu0 %2468
        %2470 = vmax.xlane.f32.xlu0 %v2302
        %v2471 = vpop.xlane.xlu0 %2470
        %2472 = vmax.xlane.f32.xlu0 %v2303
        %v2473 = vpop.xlane.xlu0 %2472
        %2474 = vmax.xlane.f32.xlu0 %v2304
        %v2475 = vpop.xlane.xlu0 %2474
        %2476 = vmax.xlane.f32.xlu0 %v2305
        %v2477 = vpop.xlane.xlu0 %2476
        %2478 = vmax.xlane.f32.xlu0 %v2306
        %v2479 = vpop.xlane.xlu0 %2478
        %2480 = vmax.xlane.f32.xlu0 %v2307
        %v2481 = vpop.xlane.xlu0 %2480
        %2482 = vmax.xlane.f32.xlu0 %v2308
        %v2483 = vpop.xlane.xlu0 %2482
        %2484 = vmax.xlane.f32.xlu0 %v2309
        %v2485 = vpop.xlane.xlu0 %2484
        %2486 = vmax.xlane.f32.xlu0 %v2310
        %v2487 = vpop.xlane.xlu0 %2486
        %2488 = vmax.xlane.f32.xlu0 %v2311
        %v2489 = vpop.xlane.xlu0 %2488
        %2490 = vmax.xlane.f32.xlu0 %v2312
        %v2491 = vpop.xlane.xlu0 %2490
        %2492 = vmax.xlane.f32.xlu0 %v2313
        %v2493 = vpop.xlane.xlu0 %2492
        %2494 = vmax.xlane.f32.xlu0 %v2314
        %v2495 = vpop.xlane.xlu0 %2494
        %2496 = vmax.xlane.f32.xlu0 %v2315
        %v2497 = vpop.xlane.xlu0 %2496
        %2498 = vmax.xlane.f32.xlu0 %v2316
        %v2499 = vpop.xlane.xlu0 %2498
        %2500 = vmax.xlane.f32.xlu0 %v2317
        %v2501 = vpop.xlane.xlu0 %2500
        %2502 = vmax.xlane.f32.xlu0 %v2318
        %v2503 = vpop.xlane.xlu0 %2502
        %2504 = vmax.xlane.f32.xlu0 %v2319
        %v2505 = vpop.xlane.xlu0 %2504
        %2506 = vmax.xlane.f32.xlu0 %v2320
        %v2507 = vpop.xlane.xlu0 %2506
        %2508 = vmax.xlane.f32.xlu0 %v2321
        %v2509 = vpop.xlane.xlu0 %2508
        %2510 = vmax.xlane.f32.xlu0 %v2322
        %v2511 = vpop.xlane.xlu0 %2510
        %2512 = vmax.xlane.f32.xlu0 %v2323
        %v2513 = vpop.xlane.xlu0 %2512
        %2514 = vmax.xlane.f32.xlu0 %v2324
        %v2515 = vpop.xlane.xlu0 %2514
        %2516 = vmax.xlane.f32.xlu0 %v2325
        %v2517 = vpop.xlane.xlu0 %2516
        %2518 = vmax.xlane.f32.xlu0 %v2326
        %v2519 = vpop.xlane.xlu0 %2518
        %2520 = vmax.xlane.f32.xlu0 %v2327
        %v2521 = vpop.xlane.xlu0 %2520
        %2522 = vmax.xlane.f32.xlu0 %v2328
        %v2523 = vpop.xlane.xlu0 %2522
        %2524 = vmax.xlane.f32.xlu0 %v2329
        %v2525 = vpop.xlane.xlu0 %2524
        %2526 = vmax.xlane.f32.xlu0 %v2330
        %v2527 = vpop.xlane.xlu0 %2526
        %2528 = vmax.xlane.f32.xlu0 %v2331
        %v2529 = vpop.xlane.xlu0 %2528
        %2530 = vmax.xlane.f32.xlu0 %v2332
        %v2531 = vpop.xlane.xlu0 %2530
        %2532 = vmax.xlane.f32.xlu0 %v2333
        %v2533 = vpop.xlane.xlu0 %2532
        %2534 = vmax.xlane.f32.xlu0 %v2334
        %v2535 = vpop.xlane.xlu0 %2534
        %2536 = vmax.xlane.f32.xlu0 %v2335
        %v2537 = vpop.xlane.xlu0 %2536
        %2538 = vmax.xlane.f32.xlu0 %v2336
        %v2539 = vpop.xlane.xlu0 %2538
        %2540 = vmax.xlane.f32.xlu0 %v2337
        %v2541 = vpop.xlane.xlu0 %2540
        %2542 = vmax.xlane.f32.xlu0 %v2338
        %v2543 = vpop.xlane.xlu0 %2542
        %2544 = vmax.xlane.f32.xlu0 %v2339
        %v2545 = vpop.xlane.xlu0 %2544
        %2546 = vmax.xlane.f32.xlu0 %v2340
        %v2547 = vpop.xlane.xlu0 %2546
        %2548 = vmax.xlane.f32.xlu0 %v2341
        %v2549 = vpop.xlane.xlu0 %2548
        %2550 = vmax.xlane.f32.xlu0 %v2342
        %v2551 = vpop.xlane.xlu0 %2550
        %2552 = vmax.xlane.f32.xlu0 %v2343
        %v2553 = vpop.xlane.xlu0 %2552
        %2554 = vmax.xlane.f32.xlu0 %v2344
        %v2555 = vpop.xlane.xlu0 %2554
        %2556 = vmax.xlane.f32.xlu0 %v2345
        %v2557 = vpop.xlane.xlu0 %2556
        %2558 = vmax.xlane.f32.xlu0 %v2346
        %v2559 = vpop.xlane.xlu0 %2558
        %2560 = vmax.xlane.f32.xlu0 %v2347
        %v2561 = vpop.xlane.xlu0 %2560
        %2562 = vmax.xlane.f32.xlu0 %v2348
        %v2563 = vpop.xlane.xlu0 %2562
        %2564 = vmax.xlane.f32.xlu0 %v2349
        %v2565 = vpop.xlane.xlu0 %2564
        %2566 = vmax.xlane.f32.xlu0 %v2350
        %v2567 = vpop.xlane.xlu0 %2566
        %2568 = vmax.xlane.f32.xlu0 %v2351
        %v2569 = vpop.xlane.xlu0 %2568
        %2570 = vmax.xlane.f32.xlu0 %v2352
        %v2571 = vpop.xlane.xlu0 %2570
        %2572 = vmax.xlane.f32.xlu0 %v2353
        %v2573 = vpop.xlane.xlu0 %2572
        %2574 = vmax.xlane.f32.xlu0 %v2354
        %v2575 = vpop.xlane.xlu0 %2574
        %2576 = vmax.xlane.f32.xlu0 %v2355
        %v2577 = vpop.xlane.xlu0 %2576
        %2578 = vmax.xlane.f32.xlu0 %v2356
        %v2579 = vpop.xlane.xlu0 %2578
        %2580 = vmax.xlane.f32.xlu0 %v2357
        %v2581 = vpop.xlane.xlu0 %2580
        %2582 = vmax.xlane.f32.xlu0 %v2358
        %v2583 = vpop.xlane.xlu0 %2582
        %2584 = vmax.xlane.f32.xlu0 %v2359
        %v2585 = vpop.xlane.xlu0 %2584
        %2586 = vmax.xlane.f32.xlu0 %v2360
        %v2587 = vpop.xlane.xlu0 %2586
        %2588 = vmax.xlane.f32.xlu0 %v2361
        %v2589 = vpop.xlane.xlu0 %2588
        %2590 = vmax.xlane.f32.xlu0 %v2362
        %v2591 = vpop.xlane.xlu0 %2590
        %2592 = vmax.xlane.f32.xlu0 %v2363
        %v2593 = vpop.xlane.xlu0 %2592
        %2594 = vmax.xlane.f32.xlu0 %v2364
        %v2595 = vpop.xlane.xlu0 %2594
        %2596 = vmax.xlane.f32.xlu0 %v2365
        %v2597 = vpop.xlane.xlu0 %2596
        %2598 = vmax.xlane.f32.xlu0 %v2366
        %v2599 = vpop.xlane.xlu0 %2598
        %2600 = vmax.xlane.f32.xlu0 %v2367
        %v2601 = vpop.xlane.xlu0 %2600
        %2602 = vmax.xlane.f32.xlu0 %v2368
        %v2603 = vpop.xlane.xlu0 %2602
        %2604 = vmax.xlane.f32.xlu0 %v2369
        %v2605 = vpop.xlane.xlu0 %2604
        %2606 = vmax.xlane.f32.xlu0 %v2370
        %v2607 = vpop.xlane.xlu0 %2606
        %2608 = vmax.xlane.f32.xlu0 %v2371
        %v2609 = vpop.xlane.xlu0 %2608
        %2610 = vmax.xlane.f32.xlu0 %v2372
        %v2611 = vpop.xlane.xlu0 %2610
        %2612 = vmax.xlane.f32.xlu0 %v2373
        %v2613 = vpop.xlane.xlu0 %2612
        %2614 = vmax.xlane.f32.xlu0 %v2374
        %v2615 = vpop.xlane.xlu0 %2614
        %2616 = vmax.xlane.f32.xlu0 %v2375
        %v2617 = vpop.xlane.xlu0 %2616
        %2618 = vmax.xlane.f32.xlu0 %v2376
        %v2619 = vpop.xlane.xlu0 %2618
        %2620 = vmax.xlane.f32.xlu0 %v2377
        %v2621 = vpop.xlane.xlu0 %2620
        %2622 = vmax.xlane.f32.xlu0 %v2378
        %v2623 = vpop.xlane.xlu0 %2622
        %2624 = vmax.xlane.f32.xlu0 %v2379
        %v2625 = vpop.xlane.xlu0 %2624
        %2626 = vmax.xlane.f32.xlu0 %v2380
        %v2627 = vpop.xlane.xlu0 %2626
        %2628 = vmax.xlane.f32.xlu0 %v2381
        %v2629 = vpop.xlane.xlu0 %2628
        %2630 = vmax.xlane.f32.xlu0 %v2382
        %v2631 = vpop.xlane.xlu0 %2630
        %2632 = vmax.xlane.f32.xlu0 %v2383
        %v2633 = vpop.xlane.xlu0 %2632
        %2634 = vmax.xlane.f32.xlu0 %v2384
        %v2635 = vpop.xlane.xlu0 %2634
        %2636 = vmax.xlane.f32.xlu0 %v2385
        %v2637 = vpop.xlane.xlu0 %2636
        %2638 = vmax.xlane.f32.xlu0 %v2386
        %v2639 = vpop.xlane.xlu0 %2638
        %2640 = vmax.xlane.f32.xlu0 %v2387
        %v2641 = vpop.xlane.xlu0 %2640
        %2642 = vmax.xlane.f32.xlu0 %v2388
        %v2643 = vpop.xlane.xlu0 %2642
        %2644 = vmax.xlane.f32.xlu0 %v2389
        %v2645 = vpop.xlane.xlu0 %2644
        %v2646 = vsub.f32 %v2262, %v2391
        %v2647 = vsub.f32 %v2263, %v2393
        %v2648 = vsub.f32 %v2264, %v2395
        %v2649 = vsub.f32 %v2265, %v2397
        %v2650 = vsub.f32 %v2266, %v2399
        %v2651 = vsub.f32 %v2267, %v2401
        %v2652 = vsub.f32 %v2268, %v2403
        %v2653 = vsub.f32 %v2269, %v2405
        %v2654 = vsub.f32 %v2270, %v2407
        %v2655 = vsub.f32 %v2271, %v2409
        %v2656 = vsub.f32 %v2272, %v2411
        %v2657 = vsub.f32 %v2273, %v2413
        %v2658 = vsub.f32 %v2274, %v2415
        %v2659 = vsub.f32 %v2275, %v2417
        %v2660 = vsub.f32 %v2276, %v2419
        %v2661 = vsub.f32 %v2277, %v2421
        %v2662 = vsub.f32 %v2278, %v2423
        %v2663 = vsub.f32 %v2279, %v2425
        %v2664 = vsub.f32 %v2280, %v2427
        %v2665 = vsub.f32 %v2281, %v2429
        %v2666 = vsub.f32 %v2282, %v2431
        %v2667 = vsub.f32 %v2283, %v2433
        %v2668 = vsub.f32 %v2284, %v2435
        %v2669 = vsub.f32 %v2285, %v2437
        %v2670 = vsub.f32 %v2286, %v2439
        %v2671 = vsub.f32 %v2287, %v2441
        %v2672 = vsub.f32 %v2288, %v2443
        %v2673 = vsub.f32 %v2289, %v2445
        %v2674 = vsub.f32 %v2290, %v2447
        %v2675 = vsub.f32 %v2291, %v2449
        %v2676 = vsub.f32 %v2292, %v2451
        %v2677 = vsub.f32 %v2293, %v2453
        %v2678 = vsub.f32 %v2294, %v2455
        %v2679 = vsub.f32 %v2295, %v2457
        %v2680 = vsub.f32 %v2296, %v2459
        %v2681 = vsub.f32 %v2297, %v2461
        %v2682 = vsub.f32 %v2298, %v2463
        %v2683 = vsub.f32 %v2299, %v2465
        %v2684 = vsub.f32 %v2300, %v2467
        %v2685 = vsub.f32 %v2301, %v2469
        %v2686 = vsub.f32 %v2302, %v2471
        %v2687 = vsub.f32 %v2303, %v2473
        %v2688 = vsub.f32 %v2304, %v2475
        %v2689 = vsub.f32 %v2305, %v2477
        %v2690 = vsub.f32 %v2306, %v2479
        %v2691 = vsub.f32 %v2307, %v2481
        %v2692 = vsub.f32 %v2308, %v2483
        %v2693 = vsub.f32 %v2309, %v2485
        %v2694 = vsub.f32 %v2310, %v2487
        %v2695 = vsub.f32 %v2311, %v2489
        %v2696 = vsub.f32 %v2312, %v2491
        %v2697 = vsub.f32 %v2313, %v2493
        %v2698 = vsub.f32 %v2314, %v2495
        %v2699 = vsub.f32 %v2315, %v2497
        %v2700 = vsub.f32 %v2316, %v2499
        %v2701 = vsub.f32 %v2317, %v2501
        %v2702 = vsub.f32 %v2318, %v2503
        %v2703 = vsub.f32 %v2319, %v2505
        %v2704 = vsub.f32 %v2320, %v2507
        %v2705 = vsub.f32 %v2321, %v2509
        %v2706 = vsub.f32 %v2322, %v2511
        %v2707 = vsub.f32 %v2323, %v2513
        %v2708 = vsub.f32 %v2324, %v2515
        %v2709 = vsub.f32 %v2325, %v2517
        %v2710 = vsub.f32 %v2326, %v2519
        %v2711 = vsub.f32 %v2327, %v2521
        %v2712 = vsub.f32 %v2328, %v2523
        %v2713 = vsub.f32 %v2329, %v2525
        %v2714 = vsub.f32 %v2330, %v2527
        %v2715 = vsub.f32 %v2331, %v2529
        %v2716 = vsub.f32 %v2332, %v2531
        %v2717 = vsub.f32 %v2333, %v2533
        %v2718 = vsub.f32 %v2334, %v2535
        %v2719 = vsub.f32 %v2335, %v2537
        %v2720 = vsub.f32 %v2336, %v2539
        %v2721 = vsub.f32 %v2337, %v2541
        %v2722 = vsub.f32 %v2338, %v2543
        %v2723 = vsub.f32 %v2339, %v2545
        %v2724 = vsub.f32 %v2340, %v2547
        %v2725 = vsub.f32 %v2341, %v2549
        %v2726 = vsub.f32 %v2342, %v2551
        %v2727 = vsub.f32 %v2343, %v2553
        %v2728 = vsub.f32 %v2344, %v2555
        %v2729 = vsub.f32 %v2345, %v2557
        %v2730 = vsub.f32 %v2346, %v2559
        %v2731 = vsub.f32 %v2347, %v2561
        %v2732 = vsub.f32 %v2348, %v2563
        %v2733 = vsub.f32 %v2349, %v2565
        %v2734 = vsub.f32 %v2350, %v2567
        %v2735 = vsub.f32 %v2351, %v2569
        %v2736 = vsub.f32 %v2352, %v2571
        %v2737 = vsub.f32 %v2353, %v2573
        %v2738 = vsub.f32 %v2354, %v2575
        %v2739 = vsub.f32 %v2355, %v2577
        %v2740 = vsub.f32 %v2356, %v2579
        %v2741 = vsub.f32 %v2357, %v2581
        %v2742 = vsub.f32 %v2358, %v2583
        %v2743 = vsub.f32 %v2359, %v2585
        %v2744 = vsub.f32 %v2360, %v2587
        %v2745 = vsub.f32 %v2361, %v2589
        %v2746 = vsub.f32 %v2362, %v2591
        %v2747 = vsub.f32 %v2363, %v2593
        %v2748 = vsub.f32 %v2364, %v2595
        %v2749 = vsub.f32 %v2365, %v2597
        %v2750 = vsub.f32 %v2366, %v2599
        %v2751 = vsub.f32 %v2367, %v2601
        %v2752 = vsub.f32 %v2368, %v2603
        %v2753 = vsub.f32 %v2369, %v2605
        %v2754 = vsub.f32 %v2370, %v2607
        %v2755 = vsub.f32 %v2371, %v2609
        %v2756 = vsub.f32 %v2372, %v2611
        %v2757 = vsub.f32 %v2373, %v2613
        %v2758 = vsub.f32 %v2374, %v2615
        %v2759 = vsub.f32 %v2375, %v2617
        %v2760 = vsub.f32 %v2376, %v2619
        %v2761 = vsub.f32 %v2377, %v2621
        %v2762 = vsub.f32 %v2378, %v2623
        %v2763 = vsub.f32 %v2379, %v2625
        %v2764 = vsub.f32 %v2380, %v2627
        %v2765 = vsub.f32 %v2381, %v2629
        %v2766 = vsub.f32 %v2382, %v2631
        %v2767 = vsub.f32 %v2383, %v2633
        %v2768 = vsub.f32 %v2384, %v2635
        %v2769 = vsub.f32 %v2385, %v2637
        %v2770 = vsub.f32 %v2386, %v2639
        %v2771 = vsub.f32 %v2387, %v2641
        %v2772 = vsub.f32 %v2388, %v2643
        %v2773 = vsub.f32 %v2389, %v2645
        %v2774 = vmul.f32 %v2646, 1.442695
        %v2775 = vpow.pop %v2774
        %v2776 = vmul.f32 %v2647, 1.442695
        %v2777 = vpow.pop %v2776
        %v2778 = vmul.f32 %v2648, 1.442695
        %v2779 = vpow.pop %v2778
        %v2780 = vmul.f32 %v2649, 1.442695
        %v2781 = vpow.pop %v2780
        %v2782 = vmul.f32 %v2650, 1.442695
        %v2783 = vpow.pop %v2782
        %v2784 = vmul.f32 %v2651, 1.442695
        %v2785 = vpow.pop %v2784
        %v2786 = vmul.f32 %v2652, 1.442695
        %v2787 = vpow.pop %v2786
        %v2788 = vmul.f32 %v2653, 1.442695
        %v2789 = vpow.pop %v2788
        %v2790 = vmul.f32 %v2654, 1.442695
        %v2791 = vpow.pop %v2790
        %v2792 = vmul.f32 %v2655, 1.442695
        %v2793 = vpow.pop %v2792
        %v2794 = vmul.f32 %v2656, 1.442695
        %v2795 = vpow.pop %v2794
        %v2796 = vmul.f32 %v2657, 1.442695
        %v2797 = vpow.pop %v2796
        %v2798 = vmul.f32 %v2658, 1.442695
        %v2799 = vpow.pop %v2798
        %v2800 = vmul.f32 %v2659, 1.442695
        %v2801 = vpow.pop %v2800
        %v2802 = vmul.f32 %v2660, 1.442695
        %v2803 = vpow.pop %v2802
        %v2804 = vmul.f32 %v2661, 1.442695
        %v2805 = vpow.pop %v2804
        %v2806 = vmul.f32 %v2662, 1.442695
        %v2807 = vpow.pop %v2806
        %v2808 = vmul.f32 %v2663, 1.442695
        %v2809 = vpow.pop %v2808
        %v2810 = vmul.f32 %v2664, 1.442695
        %v2811 = vpow.pop %v2810
        %v2812 = vmul.f32 %v2665, 1.442695
        %v2813 = vpow.pop %v2812
        %v2814 = vmul.f32 %v2666, 1.442695
        %v2815 = vpow.pop %v2814
        %v2816 = vmul.f32 %v2667, 1.442695
        %v2817 = vpow.pop %v2816
        %v2818 = vmul.f32 %v2668, 1.442695
        %v2819 = vpow.pop %v2818
        %v2820 = vmul.f32 %v2669, 1.442695
        %v2821 = vpow.pop %v2820
        %v2822 = vmul.f32 %v2670, 1.442695
        %v2823 = vpow.pop %v2822
        %v2824 = vmul.f32 %v2671, 1.442695
        %v2825 = vpow.pop %v2824
        %v2826 = vmul.f32 %v2672, 1.442695
        %v2827 = vpow.pop %v2826
        %v2828 = vmul.f32 %v2673, 1.442695
        %v2829 = vpow.pop %v2828
        %v2830 = vmul.f32 %v2674, 1.442695
        %v2831 = vpow.pop %v2830
        %v2832 = vmul.f32 %v2675, 1.442695
        %v2833 = vpow.pop %v2832
        %v2834 = vmul.f32 %v2676, 1.442695
        %v2835 = vpow.pop %v2834
        %v2836 = vmul.f32 %v2677, 1.442695
        %v2837 = vpow.pop %v2836
        %v2838 = vmul.f32 %v2678, 1.442695
        %v2839 = vpow.pop %v2838
        %v2840 = vmul.f32 %v2679, 1.442695
        %v2841 = vpow.pop %v2840
        %v2842 = vmul.f32 %v2680, 1.442695
        %v2843 = vpow.pop %v2842
        %v2844 = vmul.f32 %v2681, 1.442695
        %v2845 = vpow.pop %v2844
        %v2846 = vmul.f32 %v2682, 1.442695
        %v2847 = vpow.pop %v2846
        %v2848 = vmul.f32 %v2683, 1.442695
        %v2849 = vpow.pop %v2848
        %v2850 = vmul.f32 %v2684, 1.442695
        %v2851 = vpow.pop %v2850
        %v2852 = vmul.f32 %v2685, 1.442695
        %v2853 = vpow.pop %v2852
        %v2854 = vmul.f32 %v2686, 1.442695
        %v2855 = vpow.pop %v2854
        %v2856 = vmul.f32 %v2687, 1.442695
        %v2857 = vpow.pop %v2856
        %v2858 = vmul.f32 %v2688, 1.442695
        %v2859 = vpow.pop %v2858
        %v2860 = vmul.f32 %v2689, 1.442695
        %v2861 = vpow.pop %v2860
        %v2862 = vmul.f32 %v2690, 1.442695
        %v2863 = vpow.pop %v2862
        %v2864 = vmul.f32 %v2691, 1.442695
        %v2865 = vpow.pop %v2864
        %v2866 = vmul.f32 %v2692, 1.442695
        %v2867 = vpow.pop %v2866
        %v2868 = vmul.f32 %v2693, 1.442695
        %v2869 = vpow.pop %v2868
        %v2870 = vmul.f32 %v2694, 1.442695
        %v2871 = vpow.pop %v2870
        %v2872 = vmul.f32 %v2695, 1.442695
        %v2873 = vpow.pop %v2872
        %v2874 = vmul.f32 %v2696, 1.442695
        %v2875 = vpow.pop %v2874
        %v2876 = vmul.f32 %v2697, 1.442695
        %v2877 = vpow.pop %v2876
        %v2878 = vmul.f32 %v2698, 1.442695
        %v2879 = vpow.pop %v2878
        %v2880 = vmul.f32 %v2699, 1.442695
        %v2881 = vpow.pop %v2880
        %v2882 = vmul.f32 %v2700, 1.442695
        %v2883 = vpow.pop %v2882
        %v2884 = vmul.f32 %v2701, 1.442695
        %v2885 = vpow.pop %v2884
        %v2886 = vmul.f32 %v2702, 1.442695
        %v2887 = vpow.pop %v2886
        %v2888 = vmul.f32 %v2703, 1.442695
        %v2889 = vpow.pop %v2888
        %v2890 = vmul.f32 %v2704, 1.442695
        %v2891 = vpow.pop %v2890
        %v2892 = vmul.f32 %v2705, 1.442695
        %v2893 = vpow.pop %v2892
        %v2894 = vmul.f32 %v2706, 1.442695
        %v2895 = vpow.pop %v2894
        %v2896 = vmul.f32 %v2707, 1.442695
        %v2897 = vpow.pop %v2896
        %v2898 = vmul.f32 %v2708, 1.442695
        %v2899 = vpow.pop %v2898
        %v2900 = vmul.f32 %v2709, 1.442695
        %v2901 = vpow.pop %v2900
        %v2902 = vmul.f32 %v2710, 1.442695
        %v2903 = vpow.pop %v2902
        %v2904 = vmul.f32 %v2711, 1.442695
        %v2905 = vpow.pop %v2904
        %v2906 = vmul.f32 %v2712, 1.442695
        %v2907 = vpow.pop %v2906
        %v2908 = vmul.f32 %v2713, 1.442695
        %v2909 = vpow.pop %v2908
        %v2910 = vmul.f32 %v2714, 1.442695
        %v2911 = vpow.pop %v2910
        %v2912 = vmul.f32 %v2715, 1.442695
        %v2913 = vpow.pop %v2912
        %v2914 = vmul.f32 %v2716, 1.442695
        %v2915 = vpow.pop %v2914
        %v2916 = vmul.f32 %v2717, 1.442695
        %v2917 = vpow.pop %v2916
        %v2918 = vmul.f32 %v2718, 1.442695
        %v2919 = vpow.pop %v2918
        %v2920 = vmul.f32 %v2719, 1.442695
        %v2921 = vpow.pop %v2920
        %v2922 = vmul.f32 %v2720, 1.442695
        %v2923 = vpow.pop %v2922
        %v2924 = vmul.f32 %v2721, 1.442695
        %v2925 = vpow.pop %v2924
        %v2926 = vmul.f32 %v2722, 1.442695
        %v2927 = vpow.pop %v2926
        %v2928 = vmul.f32 %v2723, 1.442695
        %v2929 = vpow.pop %v2928
        %v2930 = vmul.f32 %v2724, 1.442695
        %v2931 = vpow.pop %v2930
        %v2932 = vmul.f32 %v2725, 1.442695
        %v2933 = vpow.pop %v2932
        %v2934 = vmul.f32 %v2726, 1.442695
        %v2935 = vpow.pop %v2934
        %v2936 = vmul.f32 %v2727, 1.442695
        %v2937 = vpow.pop %v2936
        %v2938 = vmul.f32 %v2728, 1.442695
        %v2939 = vpow.pop %v2938
        %v2940 = vmul.f32 %v2729, 1.442695
        %v2941 = vpow.pop %v2940
        %v2942 = vmul.f32 %v2730, 1.442695
        %v2943 = vpow.pop %v2942
        %v2944 = vmul.f32 %v2731, 1.442695
        %v2945 = vpow.pop %v2944
        %v2946 = vmul.f32 %v2732, 1.442695
        %v2947 = vpow.pop %v2946
        %v2948 = vmul.f32 %v2733, 1.442695
        %v2949 = vpow.pop %v2948
        %v2950 = vmul.f32 %v2734, 1.442695
        %v2951 = vpow.pop %v2950
        %v2952 = vmul.f32 %v2735, 1.442695
        %v2953 = vpow.pop %v2952
        %v2954 = vmul.f32 %v2736, 1.442695
        %v2955 = vpow.pop %v2954
        %v2956 = vmul.f32 %v2737, 1.442695
        %v2957 = vpow.pop %v2956
        %v2958 = vmul.f32 %v2738, 1.442695
        %v2959 = vpow.pop %v2958
        %v2960 = vmul.f32 %v2739, 1.442695
        %v2961 = vpow.pop %v2960
        %v2962 = vmul.f32 %v2740, 1.442695
        %v2963 = vpow.pop %v2962
        %v2964 = vmul.f32 %v2741, 1.442695
        %v2965 = vpow.pop %v2964
        %v2966 = vmul.f32 %v2742, 1.442695
        %v2967 = vpow.pop %v2966
        %v2968 = vmul.f32 %v2743, 1.442695
        %v2969 = vpow.pop %v2968
        %v2970 = vmul.f32 %v2744, 1.442695
        %v2971 = vpow.pop %v2970
        %v2972 = vmul.f32 %v2745, 1.442695
        %v2973 = vpow.pop %v2972
        %v2974 = vmul.f32 %v2746, 1.442695
        %v2975 = vpow.pop %v2974
        %v2976 = vmul.f32 %v2747, 1.442695
        %v2977 = vpow.pop %v2976
        %v2978 = vmul.f32 %v2748, 1.442695
        %v2979 = vpow.pop %v2978
        %v2980 = vmul.f32 %v2749, 1.442695
        %v2981 = vpow.pop %v2980
        %v2982 = vmul.f32 %v2750, 1.442695
        %v2983 = vpow.pop %v2982
        %v2984 = vmul.f32 %v2751, 1.442695
        %v2985 = vpow.pop %v2984
        %v2986 = vmul.f32 %v2752, 1.442695
        %v2987 = vpow.pop %v2986
        %v2988 = vmul.f32 %v2753, 1.442695
        %v2989 = vpow.pop %v2988
        %v2990 = vmul.f32 %v2754, 1.442695
        %v2991 = vpow.pop %v2990
        %v2992 = vmul.f32 %v2755, 1.442695
        %v2993 = vpow.pop %v2992
        %v2994 = vmul.f32 %v2756, 1.442695
        %v2995 = vpow.pop %v2994
        %v2996 = vmul.f32 %v2757, 1.442695
        %v2997 = vpow.pop %v2996
        %v2998 = vmul.f32 %v2758, 1.442695
        %v2999 = vpow.pop %v2998
        %v3000 = vmul.f32 %v2759, 1.442695
        %v3001 = vpow.pop %v3000
        %v3002 = vmul.f32 %v2760, 1.442695
        %v3003 = vpow.pop %v3002
        %v3004 = vmul.f32 %v2761, 1.442695
        %v3005 = vpow.pop %v3004
        %v3006 = vmul.f32 %v2762, 1.442695
        %v3007 = vpow.pop %v3006
        %v3008 = vmul.f32 %v2763, 1.442695
        %v3009 = vpow.pop %v3008
        %v3010 = vmul.f32 %v2764, 1.442695
        %v3011 = vpow.pop %v3010
        %v3012 = vmul.f32 %v2765, 1.442695
        %v3013 = vpow.pop %v3012
        %v3014 = vmul.f32 %v2766, 1.442695
        %v3015 = vpow.pop %v3014
        %v3016 = vmul.f32 %v2767, 1.442695
        %v3017 = vpow.pop %v3016
        %v3018 = vmul.f32 %v2768, 1.442695
        %v3019 = vpow.pop %v3018
        %v3020 = vmul.f32 %v2769, 1.442695
        %v3021 = vpow.pop %v3020
        %v3022 = vmul.f32 %v2770, 1.442695
        %v3023 = vpow.pop %v3022
        %v3024 = vmul.f32 %v2771, 1.442695
        %v3025 = vpow.pop %v3024
        %v3026 = vmul.f32 %v2772, 1.442695
        %v3027 = vpow.pop %v3026
        %v3028 = vmul.f32 %v2773, 1.442695
        %v3029 = vpow.pop %v3028
        %3030 = vadd.xlane.f32.xlu0 %v2775
        %v3031 = vpop.xlane.xlu0 %3030
        %3032 = vadd.xlane.f32.xlu0 %v2777
        %v3033 = vpop.xlane.xlu0 %3032
        %3034 = vadd.xlane.f32.xlu0 %v2779
        %v3035 = vpop.xlane.xlu0 %3034
        %3036 = vadd.xlane.f32.xlu0 %v2781
        %v3037 = vpop.xlane.xlu0 %3036
        %3038 = vadd.xlane.f32.xlu0 %v2783
        %v3039 = vpop.xlane.xlu0 %3038
        %3040 = vadd.xlane.f32.xlu0 %v2785
        %v3041 = vpop.xlane.xlu0 %3040
        %3042 = vadd.xlane.f32.xlu0 %v2787
        %v3043 = vpop.xlane.xlu0 %3042
        %3044 = vadd.xlane.f32.xlu0 %v2789
        %v3045 = vpop.xlane.xlu0 %3044
        %3046 = vadd.xlane.f32.xlu0 %v2791
        %v3047 = vpop.xlane.xlu0 %3046
        %3048 = vadd.xlane.f32.xlu0 %v2793
        %v3049 = vpop.xlane.xlu0 %3048
        %3050 = vadd.xlane.f32.xlu0 %v2795
        %v3051 = vpop.xlane.xlu0 %3050
        %3052 = vadd.xlane.f32.xlu0 %v2797
        %v3053 = vpop.xlane.xlu0 %3052
        %3054 = vadd.xlane.f32.xlu0 %v2799
        %v3055 = vpop.xlane.xlu0 %3054
        %3056 = vadd.xlane.f32.xlu0 %v2801
        %v3057 = vpop.xlane.xlu0 %3056
        %3058 = vadd.xlane.f32.xlu0 %v2803
        %v3059 = vpop.xlane.xlu0 %3058
        %3060 = vadd.xlane.f32.xlu0 %v2805
        %v3061 = vpop.xlane.xlu0 %3060
        %3062 = vadd.xlane.f32.xlu0 %v2807
        %v3063 = vpop.xlane.xlu0 %3062
        %3064 = vadd.xlane.f32.xlu0 %v2809
        %v3065 = vpop.xlane.xlu0 %3064
        %3066 = vadd.xlane.f32.xlu0 %v2811
        %v3067 = vpop.xlane.xlu0 %3066
        %3068 = vadd.xlane.f32.xlu0 %v2813
        %v3069 = vpop.xlane.xlu0 %3068
        %3070 = vadd.xlane.f32.xlu0 %v2815
        %v3071 = vpop.xlane.xlu0 %3070
        %3072 = vadd.xlane.f32.xlu0 %v2817
        %v3073 = vpop.xlane.xlu0 %3072
        %3074 = vadd.xlane.f32.xlu0 %v2819
        %v3075 = vpop.xlane.xlu0 %3074
        %3076 = vadd.xlane.f32.xlu0 %v2821
        %v3077 = vpop.xlane.xlu0 %3076
        %3078 = vadd.xlane.f32.xlu0 %v2823
        %v3079 = vpop.xlane.xlu0 %3078
        %3080 = vadd.xlane.f32.xlu0 %v2825
        %v3081 = vpop.xlane.xlu0 %3080
        %3082 = vadd.xlane.f32.xlu0 %v2827
        %v3083 = vpop.xlane.xlu0 %3082
        %3084 = vadd.xlane.f32.xlu0 %v2829
        %v3085 = vpop.xlane.xlu0 %3084
        %3086 = vadd.xlane.f32.xlu0 %v2831
        %v3087 = vpop.xlane.xlu0 %3086
        %3088 = vadd.xlane.f32.xlu0 %v2833
        %v3089 = vpop.xlane.xlu0 %3088
        %3090 = vadd.xlane.f32.xlu0 %v2835
        %v3091 = vpop.xlane.xlu0 %3090
        %3092 = vadd.xlane.f32.xlu0 %v2837
        %v3093 = vpop.xlane.xlu0 %3092
        %3094 = vadd.xlane.f32.xlu0 %v2839
        %v3095 = vpop.xlane.xlu0 %3094
        %3096 = vadd.xlane.f32.xlu0 %v2841
        %v3097 = vpop.xlane.xlu0 %3096
        %3098 = vadd.xlane.f32.xlu0 %v2843
        %v3099 = vpop.xlane.xlu0 %3098
        %3100 = vadd.xlane.f32.xlu0 %v2845
        %v3101 = vpop.xlane.xlu0 %3100
        %3102 = vadd.xlane.f32.xlu0 %v2847
        %v3103 = vpop.xlane.xlu0 %3102
        %3104 = vadd.xlane.f32.xlu0 %v2849
        %v3105 = vpop.xlane.xlu0 %3104
        %3106 = vadd.xlane.f32.xlu0 %v2851
        %v3107 = vpop.xlane.xlu0 %3106
        %3108 = vadd.xlane.f32.xlu0 %v2853
        %v3109 = vpop.xlane.xlu0 %3108
        %3110 = vadd.xlane.f32.xlu0 %v2855
        %v3111 = vpop.xlane.xlu0 %3110
        %3112 = vadd.xlane.f32.xlu0 %v2857
        %v3113 = vpop.xlane.xlu0 %3112
        %3114 = vadd.xlane.f32.xlu0 %v2859
        %v3115 = vpop.xlane.xlu0 %3114
        %3116 = vadd.xlane.f32.xlu0 %v2861
        %v3117 = vpop.xlane.xlu0 %3116
        %3118 = vadd.xlane.f32.xlu0 %v2863
        %v3119 = vpop.xlane.xlu0 %3118
        %3120 = vadd.xlane.f32.xlu0 %v2865
        %v3121 = vpop.xlane.xlu0 %3120
        %3122 = vadd.xlane.f32.xlu0 %v2867
        %v3123 = vpop.xlane.xlu0 %3122
        %3124 = vadd.xlane.f32.xlu0 %v2869
        %v3125 = vpop.xlane.xlu0 %3124
        %3126 = vadd.xlane.f32.xlu0 %v2871
        %v3127 = vpop.xlane.xlu0 %3126
        %3128 = vadd.xlane.f32.xlu0 %v2873
        %v3129 = vpop.xlane.xlu0 %3128
        %3130 = vadd.xlane.f32.xlu0 %v2875
        %v3131 = vpop.xlane.xlu0 %3130
        %3132 = vadd.xlane.f32.xlu0 %v2877
        %v3133 = vpop.xlane.xlu0 %3132
        %3134 = vadd.xlane.f32.xlu0 %v2879
        %v3135 = vpop.xlane.xlu0 %3134
        %3136 = vadd.xlane.f32.xlu0 %v2881
        %v3137 = vpop.xlane.xlu0 %3136
        %3138 = vadd.xlane.f32.xlu0 %v2883
        %v3139 = vpop.xlane.xlu0 %3138
        %3140 = vadd.xlane.f32.xlu0 %v2885
        %v3141 = vpop.xlane.xlu0 %3140
        %3142 = vadd.xlane.f32.xlu0 %v2887
        %v3143 = vpop.xlane.xlu0 %3142
        %3144 = vadd.xlane.f32.xlu0 %v2889
        %v3145 = vpop.xlane.xlu0 %3144
        %3146 = vadd.xlane.f32.xlu0 %v2891
        %v3147 = vpop.xlane.xlu0 %3146
        %3148 = vadd.xlane.f32.xlu0 %v2893
        %v3149 = vpop.xlane.xlu0 %3148
        %3150 = vadd.xlane.f32.xlu0 %v2895
        %v3151 = vpop.xlane.xlu0 %3150
        %3152 = vadd.xlane.f32.xlu0 %v2897
        %v3153 = vpop.xlane.xlu0 %3152
        %3154 = vadd.xlane.f32.xlu0 %v2899
        %v3155 = vpop.xlane.xlu0 %3154
        %3156 = vadd.xlane.f32.xlu0 %v2901
        %v3157 = vpop.xlane.xlu0 %3156
        %3158 = vadd.xlane.f32.xlu0 %v2903
        %v3159 = vpop.xlane.xlu0 %3158
        %3160 = vadd.xlane.f32.xlu0 %v2905
        %v3161 = vpop.xlane.xlu0 %3160
        %3162 = vadd.xlane.f32.xlu0 %v2907
        %v3163 = vpop.xlane.xlu0 %3162
        %3164 = vadd.xlane.f32.xlu0 %v2909
        %v3165 = vpop.xlane.xlu0 %3164
        %3166 = vadd.xlane.f32.xlu0 %v2911
        %v3167 = vpop.xlane.xlu0 %3166
        %3168 = vadd.xlane.f32.xlu0 %v2913
        %v3169 = vpop.xlane.xlu0 %3168
        %3170 = vadd.xlane.f32.xlu0 %v2915
        %v3171 = vpop.xlane.xlu0 %3170
        %3172 = vadd.xlane.f32.xlu0 %v2917
        %v3173 = vpop.xlane.xlu0 %3172
        %3174 = vadd.xlane.f32.xlu0 %v2919
        %v3175 = vpop.xlane.xlu0 %3174
        %3176 = vadd.xlane.f32.xlu0 %v2921
        %v3177 = vpop.xlane.xlu0 %3176
        %3178 = vadd.xlane.f32.xlu0 %v2923
        %v3179 = vpop.xlane.xlu0 %3178
        %3180 = vadd.xlane.f32.xlu0 %v2925
        %v3181 = vpop.xlane.xlu0 %3180
        %3182 = vadd.xlane.f32.xlu0 %v2927
        %v3183 = vpop.xlane.xlu0 %3182
        %3184 = vadd.xlane.f32.xlu0 %v2929
        %v3185 = vpop.xlane.xlu0 %3184
        %3186 = vadd.xlane.f32.xlu0 %v2931
        %v3187 = vpop.xlane.xlu0 %3186
        %3188 = vadd.xlane.f32.xlu0 %v2933
        %v3189 = vpop.xlane.xlu0 %3188
        %3190 = vadd.xlane.f32.xlu0 %v2935
        %v3191 = vpop.xlane.xlu0 %3190
        %3192 = vadd.xlane.f32.xlu0 %v2937
        %v3193 = vpop.xlane.xlu0 %3192
        %3194 = vadd.xlane.f32.xlu0 %v2939
        %v3195 = vpop.xlane.xlu0 %3194
        %3196 = vadd.xlane.f32.xlu0 %v2941
        %v3197 = vpop.xlane.xlu0 %3196
        %3198 = vadd.xlane.f32.xlu0 %v2943
        %v3199 = vpop.xlane.xlu0 %3198
        %3200 = vadd.xlane.f32.xlu0 %v2945
        %v3201 = vpop.xlane.xlu0 %3200
        %3202 = vadd.xlane.f32.xlu0 %v2947
        %v3203 = vpop.xlane.xlu0 %3202
        %3204 = vadd.xlane.f32.xlu0 %v2949
        %v3205 = vpop.xlane.xlu0 %3204
        %3206 = vadd.xlane.f32.xlu0 %v2951
        %v3207 = vpop.xlane.xlu0 %3206
        %3208 = vadd.xlane.f32.xlu0 %v2953
        %v3209 = vpop.xlane.xlu0 %3208
        %3210 = vadd.xlane.f32.xlu0 %v2955
        %v3211 = vpop.xlane.xlu0 %3210
        %3212 = vadd.xlane.f32.xlu0 %v2957
        %v3213 = vpop.xlane.xlu0 %3212
        %3214 = vadd.xlane.f32.xlu0 %v2959
        %v3215 = vpop.xlane.xlu0 %3214
        %3216 = vadd.xlane.f32.xlu0 %v2961
        %v3217 = vpop.xlane.xlu0 %3216
        %3218 = vadd.xlane.f32.xlu0 %v2963
        %v3219 = vpop.xlane.xlu0 %3218
        %3220 = vadd.xlane.f32.xlu0 %v2965
        %v3221 = vpop.xlane.xlu0 %3220
        %3222 = vadd.xlane.f32.xlu0 %v2967
        %v3223 = vpop.xlane.xlu0 %3222
        %3224 = vadd.xlane.f32.xlu0 %v2969
        %v3225 = vpop.xlane.xlu0 %3224
        %3226 = vadd.xlane.f32.xlu0 %v2971
        %v3227 = vpop.xlane.xlu0 %3226
        %3228 = vadd.xlane.f32.xlu0 %v2973
        %v3229 = vpop.xlane.xlu0 %3228
        %3230 = vadd.xlane.f32.xlu0 %v2975
        %v3231 = vpop.xlane.xlu0 %3230
        %3232 = vadd.xlane.f32.xlu0 %v2977
        %v3233 = vpop.xlane.xlu0 %3232
        %3234 = vadd.xlane.f32.xlu0 %v2979
        %v3235 = vpop.xlane.xlu0 %3234
        %3236 = vadd.xlane.f32.xlu0 %v2981
        %v3237 = vpop.xlane.xlu0 %3236
        %3238 = vadd.xlane.f32.xlu0 %v2983
        %v3239 = vpop.xlane.xlu0 %3238
        %3240 = vadd.xlane.f32.xlu0 %v2985
        %v3241 = vpop.xlane.xlu0 %3240
        %3242 = vadd.xlane.f32.xlu0 %v2987
        %v3243 = vpop.xlane.xlu0 %3242
        %3244 = vadd.xlane.f32.xlu0 %v2989
        %v3245 = vpop.xlane.xlu0 %3244
        %3246 = vadd.xlane.f32.xlu0 %v2991
        %v3247 = vpop.xlane.xlu0 %3246
        %3248 = vadd.xlane.f32.xlu0 %v2993
        %v3249 = vpop.xlane.xlu0 %3248
        %3250 = vadd.xlane.f32.xlu0 %v2995
        %v3251 = vpop.xlane.xlu0 %3250
        %3252 = vadd.xlane.f32.xlu0 %v2997
        %v3253 = vpop.xlane.xlu0 %3252
        %3254 = vadd.xlane.f32.xlu0 %v2999
        %v3255 = vpop.xlane.xlu0 %3254
        %3256 = vadd.xlane.f32.xlu0 %v3001
        %v3257 = vpop.xlane.xlu0 %3256
        %3258 = vadd.xlane.f32.xlu0 %v3003
        %v3259 = vpop.xlane.xlu0 %3258
        %3260 = vadd.xlane.f32.xlu0 %v3005
        %v3261 = vpop.xlane.xlu0 %3260
        %3262 = vadd.xlane.f32.xlu0 %v3007
        %v3263 = vpop.xlane.xlu0 %3262
        %3264 = vadd.xlane.f32.xlu0 %v3009
        %v3265 = vpop.xlane.xlu0 %3264
        %3266 = vadd.xlane.f32.xlu0 %v3011
        %v3267 = vpop.xlane.xlu0 %3266
        %3268 = vadd.xlane.f32.xlu0 %v3013
        %v3269 = vpop.xlane.xlu0 %3268
        %3270 = vadd.xlane.f32.xlu0 %v3015
        %v3271 = vpop.xlane.xlu0 %3270
        %3272 = vadd.xlane.f32.xlu0 %v3017
        %v3273 = vpop.xlane.xlu0 %3272
        %3274 = vadd.xlane.f32.xlu0 %v3019
        %v3275 = vpop.xlane.xlu0 %3274
        %3276 = vadd.xlane.f32.xlu0 %v3021
        %v3277 = vpop.xlane.xlu0 %3276
        %3278 = vadd.xlane.f32.xlu0 %v3023
        %v3279 = vpop.xlane.xlu0 %3278
        %3280 = vadd.xlane.f32.xlu0 %v3025
        %v3281 = vpop.xlane.xlu0 %3280
        %3282 = vadd.xlane.f32.xlu0 %v3027
        %v3283 = vpop.xlane.xlu0 %3282
        %3284 = vadd.xlane.f32.xlu0 %v3029
        %v3285 = vpop.xlane.xlu0 %3284
        %v3286 = vrcp.pop %v3031
        %v3287 = vrcp.pop %v3033
        %v3288 = vrcp.pop %v3035
        %v3289 = vrcp.pop %v3037
        %v3290 = vrcp.pop %v3039
        %v3291 = vrcp.pop %v3041
        %v3292 = vrcp.pop %v3043
        %v3293 = vrcp.pop %v3045
        %v3294 = vrcp.pop %v3047
        %v3295 = vrcp.pop %v3049
        %v3296 = vrcp.pop %v3051
        %v3297 = vrcp.pop %v3053
        %v3298 = vrcp.pop %v3055
        %v3299 = vrcp.pop %v3057
        %v3300 = vrcp.pop %v3059
        %v3301 = vrcp.pop %v3061
        %v3302 = vrcp.pop %v3063
        %v3303 = vrcp.pop %v3065
        %v3304 = vrcp.pop %v3067
        %v3305 = vrcp.pop %v3069
        %v3306 = vrcp.pop %v3071
        %v3307 = vrcp.pop %v3073
        %v3308 = vrcp.pop %v3075
        %v3309 = vrcp.pop %v3077
        %v3310 = vrcp.pop %v3079
        %v3311 = vrcp.pop %v3081
        %v3312 = vrcp.pop %v3083
        %v3313 = vrcp.pop %v3085
        %v3314 = vrcp.pop %v3087
        %v3315 = vrcp.pop %v3089
        %v3316 = vrcp.pop %v3091
        %v3317 = vrcp.pop %v3093
        %v3318 = vrcp.pop %v3095
        %v3319 = vrcp.pop %v3097
        %v3320 = vrcp.pop %v3099
        %v3321 = vrcp.pop %v3101
        %v3322 = vrcp.pop %v3103
        %v3323 = vrcp.pop %v3105
        %v3324 = vrcp.pop %v3107
        %v3325 = vrcp.pop %v3109
        %v3326 = vrcp.pop %v3111
        %v3327 = vrcp.pop %v3113
        %v3328 = vrcp.pop %v3115
        %v3329 = vrcp.pop %v3117
        %v3330 = vrcp.pop %v3119
        %v3331 = vrcp.pop %v3121
        %v3332 = vrcp.pop %v3123
        %v3333 = vrcp.pop %v3125
        %v3334 = vrcp.pop %v3127
        %v3335 = vrcp.pop %v3129
        %v3336 = vrcp.pop %v3131
        %v3337 = vrcp.pop %v3133
        %v3338 = vrcp.pop %v3135
        %v3339 = vrcp.pop %v3137
        %v3340 = vrcp.pop %v3139
        %v3341 = vrcp.pop %v3141
        %v3342 = vrcp.pop %v3143
        %v3343 = vrcp.pop %v3145
        %v3344 = vrcp.pop %v3147
        %v3345 = vrcp.pop %v3149
        %v3346 = vrcp.pop %v3151
        %v3347 = vrcp.pop %v3153
        %v3348 = vrcp.pop %v3155
        %v3349 = vrcp.pop %v3157
        %v3350 = vrcp.pop %v3159
        %v3351 = vrcp.pop %v3161
        %v3352 = vrcp.pop %v3163
        %v3353 = vrcp.pop %v3165
        %v3354 = vrcp.pop %v3167
        %v3355 = vrcp.pop %v3169
        %v3356 = vrcp.pop %v3171
        %v3357 = vrcp.pop %v3173
        %v3358 = vrcp.pop %v3175
        %v3359 = vrcp.pop %v3177
        %v3360 = vrcp.pop %v3179
        %v3361 = vrcp.pop %v3181
        %v3362 = vrcp.pop %v3183
        %v3363 = vrcp.pop %v3185
        %v3364 = vrcp.pop %v3187
        %v3365 = vrcp.pop %v3189
        %v3366 = vrcp.pop %v3191
        %v3367 = vrcp.pop %v3193
        %v3368 = vrcp.pop %v3195
        %v3369 = vrcp.pop %v3197
        %v3370 = vrcp.pop %v3199
        %v3371 = vrcp.pop %v3201
        %v3372 = vrcp.pop %v3203
        %v3373 = vrcp.pop %v3205
        %v3374 = vrcp.pop %v3207
        %v3375 = vrcp.pop %v3209
        %v3376 = vrcp.pop %v3211
        %v3377 = vrcp.pop %v3213
        %v3378 = vrcp.pop %v3215
        %v3379 = vrcp.pop %v3217
        %v3380 = vrcp.pop %v3219
        %v3381 = vrcp.pop %v3221
        %v3382 = vrcp.pop %v3223
        %v3383 = vrcp.pop %v3225
        %v3384 = vrcp.pop %v3227
        %v3385 = vrcp.pop %v3229
        %v3386 = vrcp.pop %v3231
        %v3387 = vrcp.pop %v3233
        %v3388 = vrcp.pop %v3235
        %v3389 = vrcp.pop %v3237
        %v3390 = vrcp.pop %v3239
        %v3391 = vrcp.pop %v3241
        %v3392 = vrcp.pop %v3243
        %v3393 = vrcp.pop %v3245
        %v3394 = vrcp.pop %v3247
        %v3395 = vrcp.pop %v3249
        %v3396 = vrcp.pop %v3251
        %v3397 = vrcp.pop %v3253
        %v3398 = vrcp.pop %v3255
        %v3399 = vrcp.pop %v3257
        %v3400 = vrcp.pop %v3259
        %v3401 = vrcp.pop %v3261
        %v3402 = vrcp.pop %v3263
        %v3403 = vrcp.pop %v3265
        %v3404 = vrcp.pop %v3267
        %v3405 = vrcp.pop %v3269
        %v3406 = vrcp.pop %v3271
        %v3407 = vrcp.pop %v3273
        %v3408 = vrcp.pop %v3275
        %v3409 = vrcp.pop %v3277
        %v3410 = vrcp.pop %v3279
        %v3411 = vrcp.pop %v3281
        %v3412 = vrcp.pop %v3283
        %v3413 = vrcp.pop %v3285
        %v3414 = vmul.f32 %v2775, %v3286
        %v3415 = vmul.f32 %v2777, %v3287
        %v3416 = vmul.f32 %v2779, %v3288
        %v3417 = vmul.f32 %v2781, %v3289
        %v3418 = vmul.f32 %v2783, %v3290
        %v3419 = vmul.f32 %v2785, %v3291
        %v3420 = vmul.f32 %v2787, %v3292
        %v3421 = vmul.f32 %v2789, %v3293
        %v3422 = vmul.f32 %v2791, %v3294
        %v3423 = vmul.f32 %v2793, %v3295
        %v3424 = vmul.f32 %v2795, %v3296
        %v3425 = vmul.f32 %v2797, %v3297
        %v3426 = vmul.f32 %v2799, %v3298
        %v3427 = vmul.f32 %v2801, %v3299
        %v3428 = vmul.f32 %v2803, %v3300
        %v3429 = vmul.f32 %v2805, %v3301
        %v3430 = vmul.f32 %v2807, %v3302
        %v3431 = vmul.f32 %v2809, %v3303
        %v3432 = vmul.f32 %v2811, %v3304
        %v3433 = vmul.f32 %v2813, %v3305
        %v3434 = vmul.f32 %v2815, %v3306
        %v3435 = vmul.f32 %v2817, %v3307
        %v3436 = vmul.f32 %v2819, %v3308
        %v3437 = vmul.f32 %v2821, %v3309
        %v3438 = vmul.f32 %v2823, %v3310
        %v3439 = vmul.f32 %v2825, %v3311
        %v3440 = vmul.f32 %v2827, %v3312
        %v3441 = vmul.f32 %v2829, %v3313
        %v3442 = vmul.f32 %v2831, %v3314
        %v3443 = vmul.f32 %v2833, %v3315
        %v3444 = vmul.f32 %v2835, %v3316
        %v3445 = vmul.f32 %v2837, %v3317
        %v3446 = vmul.f32 %v2839, %v3318
        %v3447 = vmul.f32 %v2841, %v3319
        %v3448 = vmul.f32 %v2843, %v3320
        %v3449 = vmul.f32 %v2845, %v3321
        %v3450 = vmul.f32 %v2847, %v3322
        %v3451 = vmul.f32 %v2849, %v3323
        %v3452 = vmul.f32 %v2851, %v3324
        %v3453 = vmul.f32 %v2853, %v3325
        %v3454 = vmul.f32 %v2855, %v3326
        %v3455 = vmul.f32 %v2857, %v3327
        %v3456 = vmul.f32 %v2859, %v3328
        %v3457 = vmul.f32 %v2861, %v3329
        %v3458 = vmul.f32 %v2863, %v3330
        %v3459 = vmul.f32 %v2865, %v3331
        %v3460 = vmul.f32 %v2867, %v3332
        %v3461 = vmul.f32 %v2869, %v3333
        %v3462 = vmul.f32 %v2871, %v3334
        %v3463 = vmul.f32 %v2873, %v3335
        %v3464 = vmul.f32 %v2875, %v3336
        %v3465 = vmul.f32 %v2877, %v3337
        %v3466 = vmul.f32 %v2879, %v3338
        %v3467 = vmul.f32 %v2881, %v3339
        %v3468 = vmul.f32 %v2883, %v3340
        %v3469 = vmul.f32 %v2885, %v3341
        %v3470 = vmul.f32 %v2887, %v3342
        %v3471 = vmul.f32 %v2889, %v3343
        %v3472 = vmul.f32 %v2891, %v3344
        %v3473 = vmul.f32 %v2893, %v3345
        %v3474 = vmul.f32 %v2895, %v3346
        %v3475 = vmul.f32 %v2897, %v3347
        %v3476 = vmul.f32 %v2899, %v3348
        %v3477 = vmul.f32 %v2901, %v3349
        %v3478 = vmul.f32 %v2903, %v3350
        %v3479 = vmul.f32 %v2905, %v3351
        %v3480 = vmul.f32 %v2907, %v3352
        %v3481 = vmul.f32 %v2909, %v3353
        %v3482 = vmul.f32 %v2911, %v3354
        %v3483 = vmul.f32 %v2913, %v3355
        %v3484 = vmul.f32 %v2915, %v3356
        %v3485 = vmul.f32 %v2917, %v3357
        %v3486 = vmul.f32 %v2919, %v3358
        %v3487 = vmul.f32 %v2921, %v3359
        %v3488 = vmul.f32 %v2923, %v3360
        %v3489 = vmul.f32 %v2925, %v3361
        %v3490 = vmul.f32 %v2927, %v3362
        %v3491 = vmul.f32 %v2929, %v3363
        %v3492 = vmul.f32 %v2931, %v3364
        %v3493 = vmul.f32 %v2933, %v3365
        %v3494 = vmul.f32 %v2935, %v3366
        %v3495 = vmul.f32 %v2937, %v3367
        %v3496 = vmul.f32 %v2939, %v3368
        %v3497 = vmul.f32 %v2941, %v3369
        %v3498 = vmul.f32 %v2943, %v3370
        %v3499 = vmul.f32 %v2945, %v3371
        %v3500 = vmul.f32 %v2947, %v3372
        %v3501 = vmul.f32 %v2949, %v3373
        %v3502 = vmul.f32 %v2951, %v3374
        %v3503 = vmul.f32 %v2953, %v3375
        %v3504 = vmul.f32 %v2955, %v3376
        %v3505 = vmul.f32 %v2957, %v3377
        %v3506 = vmul.f32 %v2959, %v3378
        %v3507 = vmul.f32 %v2961, %v3379
        %v3508 = vmul.f32 %v2963, %v3380
        %v3509 = vmul.f32 %v2965, %v3381
        %v3510 = vmul.f32 %v2967, %v3382
        %v3511 = vmul.f32 %v2969, %v3383
        %v3512 = vmul.f32 %v2971, %v3384
        %v3513 = vmul.f32 %v2973, %v3385
        %v3514 = vmul.f32 %v2975, %v3386
        %v3515 = vmul.f32 %v2977, %v3387
        %v3516 = vmul.f32 %v2979, %v3388
        %v3517 = vmul.f32 %v2981, %v3389
        %v3518 = vmul.f32 %v2983, %v3390
        %v3519 = vmul.f32 %v2985, %v3391
        %v3520 = vmul.f32 %v2987, %v3392
        %v3521 = vmul.f32 %v2989, %v3393
        %v3522 = vmul.f32 %v2991, %v3394
        %v3523 = vmul.f32 %v2993, %v3395
        %v3524 = vmul.f32 %v2995, %v3396
        %v3525 = vmul.f32 %v2997, %v3397
        %v3526 = vmul.f32 %v2999, %v3398
        %v3527 = vmul.f32 %v3001, %v3399
        %v3528 = vmul.f32 %v3003, %v3400
        %v3529 = vmul.f32 %v3005, %v3401
        %v3530 = vmul.f32 %v3007, %v3402
        %v3531 = vmul.f32 %v3009, %v3403
        %v3532 = vmul.f32 %v3011, %v3404
        %v3533 = vmul.f32 %v3013, %v3405
        %v3534 = vmul.f32 %v3015, %v3406
        %v3535 = vmul.f32 %v3017, %v3407
        %v3536 = vmul.f32 %v3019, %v3408
        %v3537 = vmul.f32 %v3021, %v3409
        %v3538 = vmul.f32 %v3023, %v3410
        %v3539 = vmul.f32 %v3025, %v3411
        %v3540 = vmul.f32 %v3027, %v3412
        %v3541 = vmul.f32 %v3029, %v3413
        %v3542 = vpack.c.bf16 %v3415, %v3414
        %v3543 = vpack.c.bf16 %v3417, %v3416
        %v3544 = vpack.c.bf16 %v3419, %v3418
        %v3545 = vpack.c.bf16 %v3421, %v3420
        %v3546 = vpack.c.bf16 %v3423, %v3422
        %v3547 = vpack.c.bf16 %v3425, %v3424
        %v3548 = vpack.c.bf16 %v3427, %v3426
        %v3549 = vpack.c.bf16 %v3429, %v3428
        %v3550 = vpack.c.bf16 %v3431, %v3430
        %v3551 = vpack.c.bf16 %v3433, %v3432
        %v3552 = vpack.c.bf16 %v3435, %v3434
        %v3553 = vpack.c.bf16 %v3437, %v3436
        %v3554 = vpack.c.bf16 %v3439, %v3438
        %v3555 = vpack.c.bf16 %v3441, %v3440
        %v3556 = vpack.c.bf16 %v3443, %v3442
        %v3557 = vpack.c.bf16 %v3445, %v3444
        %v3558 = vpack.c.bf16 %v3447, %v3446
        %v3559 = vpack.c.bf16 %v3449, %v3448
        %v3560 = vpack.c.bf16 %v3451, %v3450
        %v3561 = vpack.c.bf16 %v3453, %v3452
        %v3562 = vpack.c.bf16 %v3455, %v3454
        %v3563 = vpack.c.bf16 %v3457, %v3456
        %v3564 = vpack.c.bf16 %v3459, %v3458
        %v3565 = vpack.c.bf16 %v3461, %v3460
        %v3566 = vpack.c.bf16 %v3463, %v3462
        %v3567 = vpack.c.bf16 %v3465, %v3464
        %v3568 = vpack.c.bf16 %v3467, %v3466
        %v3569 = vpack.c.bf16 %v3469, %v3468
        %v3570 = vpack.c.bf16 %v3471, %v3470
        %v3571 = vpack.c.bf16 %v3473, %v3472
        %v3572 = vpack.c.bf16 %v3475, %v3474
        %v3573 = vpack.c.bf16 %v3477, %v3476
        %v3574 = vpack.c.bf16 %v3479, %v3478
        %v3575 = vpack.c.bf16 %v3481, %v3480
        %v3576 = vpack.c.bf16 %v3483, %v3482
        %v3577 = vpack.c.bf16 %v3485, %v3484
        %v3578 = vpack.c.bf16 %v3487, %v3486
        %v3579 = vpack.c.bf16 %v3489, %v3488
        %v3580 = vpack.c.bf16 %v3491, %v3490
        %v3581 = vpack.c.bf16 %v3493, %v3492
        %v3582 = vpack.c.bf16 %v3495, %v3494
        %v3583 = vpack.c.bf16 %v3497, %v3496
        %v3584 = vpack.c.bf16 %v3499, %v3498
        %v3585 = vpack.c.bf16 %v3501, %v3500
        %v3586 = vpack.c.bf16 %v3503, %v3502
        %v3587 = vpack.c.bf16 %v3505, %v3504
        %v3588 = vpack.c.bf16 %v3507, %v3506
        %v3589 = vpack.c.bf16 %v3509, %v3508
        %v3590 = vpack.c.bf16 %v3511, %v3510
        %v3591 = vpack.c.bf16 %v3513, %v3512
        %v3592 = vpack.c.bf16 %v3515, %v3514
        %v3593 = vpack.c.bf16 %v3517, %v3516
        %v3594 = vpack.c.bf16 %v3519, %v3518
        %v3595 = vpack.c.bf16 %v3521, %v3520
        %v3596 = vpack.c.bf16 %v3523, %v3522
        %v3597 = vpack.c.bf16 %v3525, %v3524
        %v3598 = vpack.c.bf16 %v3527, %v3526
        %v3599 = vpack.c.bf16 %v3529, %v3528
        %v3600 = vpack.c.bf16 %v3531, %v3530
        %v3601 = vpack.c.bf16 %v3533, %v3532
        %v3602 = vpack.c.bf16 %v3535, %v3534
        %v3603 = vpack.c.bf16 %v3537, %v3536
        %v3604 = vpack.c.bf16 %v3539, %v3538
        %v3605 = vpack.c.bf16 %v3541, %v3540
        %3606 = vmatprep.subr.bf16.mxu0 0
        %3607 = vmatpush1.bf16.msra.mxu0 %v1170
        %3608 = vmatprep.subr.bf16.mxu0 0
        %3609 = vmatpush1.bf16.msra.mxu0 %v1171
        %3610 = vmatprep.subr.bf16.mxu0 0
        %3611 = vmatpush1.bf16.msra.mxu0 %v1172
        %3612 = vmatprep.subr.bf16.mxu0 0
        %3613 = vmatpush1.bf16.msra.mxu0 %v1173
        %3614 = vmatprep.subr.bf16.mxu0 0
        %3615 = vmatpush1.bf16.msra.mxu0 %v1174
        %3616 = vmatprep.subr.bf16.mxu0 0
        %3617 = vmatpush1.bf16.msra.mxu0 %v1175
        %3618 = vmatprep.subr.bf16.mxu0 0
        %3619 = vmatpush1.bf16.msra.mxu0 %v1176
        %3620 = vmatprep.subr.bf16.mxu0 0
        %3621 = vmatpush1.bf16.msra.mxu0 %v1177
        %3622 = vmatprep.subr.bf16.mxu0 0
        %3623 = vmatpush1.bf16.msra.mxu0 0
        %3624 = vmatprep.subr.bf16.mxu0 0
        %3625 = vmatpush1.bf16.msra.mxu0 0
        %3626 = vmatprep.subr.bf16.mxu0 0
        %3627 = vmatpush1.bf16.msra.mxu0 0
        %3628 = vmatprep.subr.bf16.mxu0 0
        %3629 = vmatpush1.bf16.msra.mxu0 0
        %3630 = vmatprep.subr.bf16.mxu0 0
        %3631 = vmatpush1.bf16.msra.mxu0 0
        %3632 = vmatprep.subr.bf16.mxu0 0
        %3633 = vmatpush1.bf16.msra.mxu0 0
        %3634 = vmatprep.subr.bf16.mxu0 0
        %3635 = vmatpush1.bf16.msra.mxu0 0
        %3636 = vmatprep.subr.bf16.mxu0 0
        %3637 = vmatpush1.bf16.msra.mxu0 0
        %3638 = vmatprep.mubr.bf16.mxu0 0
        %3639 = vmatmul.mubr.bf16.gmra.mrb[0].mxu0 %v3542
        %v3640 = vpop.f32.mrb[0].mxu0
        %v3641 = vadd.f32 0.0, %v3640
        %v3642 = vpop.f32.mrb[0].mxu0
        %v3643 = vpop.f32.mrb[0].mxu0
        %v3644 = vadd.f32 0.0, %v3643
        %v3645 = vpop.f32.mrb[0].mxu0
        %3646 = vmatprep.mubr.bf16.mxu0 0
        %3647 = vmatmul.mubr.bf16.gmra.mrb[0].mxu0 %v3543
        %v3648 = vpop.f32.mrb[0].mxu0
        %v3649 = vadd.f32 0.0, %v3648
        %v3650 = vpop.f32.mrb[0].mxu0
        %v3651 = vpop.f32.mrb[0].mxu0
        %v3652 = vadd.f32 0.0, %v3651
        %v3653 = vpop.f32.mrb[0].mxu0
        %3654 = vmatprep.mubr.bf16.mxu0 0
        %3655 = vmatmul.mubr.bf16.gmra.mrb[0].mxu0 %v3544
        %v3656 = vpop.f32.mrb[0].mxu0
        %v3657 = vadd.f32 0.0, %v3656
        %v3658 = vpop.f32.mrb[0].mxu0
        %v3659 = vpop.f32.mrb[0].mxu0
        %v3660 = vadd.f32 0.0, %v3659
        %v3661 = vpop.f32.mrb[0].mxu0
        %3662 = vmatprep.mubr.bf16.mxu0 0
        %3663 = vmatmul.mubr.bf16.gmra.mrb[0].mxu0 %v3545
        %v3664 = vpop.f32.mrb[0].mxu0
        %v3665 = vadd.f32 0.0, %v3664
        %v3666 = vpop.f32.mrb[0].mxu0
        %v3667 = vpop.f32.mrb[0].mxu0
        %v3668 = vadd.f32 0.0, %v3667
        %v3669 = vpop.f32.mrb[0].mxu0
        %3670 = vmatprep.mubr.bf16.mxu0 0
        %3671 = vmatmul.mubr.bf16.gmra.mrb[0].mxu0 %v3546
        %v3672 = vpop.f32.mrb[0].mxu0
        %v3673 = vadd.f32 0.0, %v3672
        %v3674 = vpop.f32.mrb[0].mxu0
        %v3675 = vpop.f32.mrb[0].mxu0
        %v3676 = vadd.f32 0.0, %v3675
        %v3677 = vpop.f32.mrb[0].mxu0
        %3678 = vmatprep.mubr.bf16.mxu0 0
        %3679 = vmatmul.mubr.bf16.gmra.mrb[0].mxu0 %v3547
        %v3680 = vpop.f32.mrb[0].mxu0
        %v3681 = vadd.f32 0.0, %v3680
        %v3682 = vpop.f32.mrb[0].mxu0
        %v3683 = vpop.f32.mrb[0].mxu0
        %v3684 = vadd.f32 0.0, %v3683
        %v3685 = vpop.f32.mrb[0].mxu0
        %3686 = vmatprep.mubr.bf16.mxu0 0
        %3687 = vmatmul.mubr.bf16.gmra.mrb[0].mxu0 %v3548
        %v3688 = vpop.f32.mrb[0].mxu0
        %v3689 = vadd.f32 0.0, %v3688
        %v3690 = vpop.f32.mrb[0].mxu0
        %v3691 = vpop.f32.mrb[0].mxu0
        %v3692 = vadd.f32 0.0, %v3691
        %v3693 = vpop.f32.mrb[0].mxu0
        %3694 = vmatprep.mubr.bf16.mxu0 0
        %3695 = vmatmul.mubr.bf16.gmra.mrb[0].mxu0 %v3549
        %v3696 = vpop.f32.mrb[0].mxu0
        %v3697 = vadd.f32 0.0, %v3696
        %v3698 = vpop.f32.mrb[0].mxu0
        %v3699 = vpop.f32.mrb[0].mxu0
        %v3700 = vadd.f32 0.0, %v3699
        %v3701 = vpop.f32.mrb[0].mxu0
        %3702 = vmatprep.mubr.bf16.mxu0 0
        %3703 = vmatmul.mubr.bf16.gmra.mrb[0].mxu0 %v3550
        %v3704 = vpop.f32.mrb[0].mxu0
        %v3705 = vadd.f32 0.0, %v3704
        %v3706 = vpop.f32.mrb[0].mxu0
        %v3707 = vpop.f32.mrb[0].mxu0
        %v3708 = vadd.f32 0.0, %v3707
        %v3709 = vpop.f32.mrb[0].mxu0
        %3710 = vmatprep.mubr.bf16.mxu0 0
        %3711 = vmatmul.mubr.bf16.gmra.mrb[0].mxu0 %v3551
        %v3712 = vpop.f32.mrb[0].mxu0
        %v3713 = vadd.f32 0.0, %v3712
        %v3714 = vpop.f32.mrb[0].mxu0
        %v3715 = vpop.f32.mrb[0].mxu0
        %v3716 = vadd.f32 0.0, %v3715
        %v3717 = vpop.f32.mrb[0].mxu0
        %3718 = vmatprep.mubr.bf16.mxu0 0
        %3719 = vmatmul.mubr.bf16.gmra.mrb[0].mxu0 %v3552
        %v3720 = vpop.f32.mrb[0].mxu0
        %v3721 = vadd.f32 0.0, %v3720
        %v3722 = vpop.f32.mrb[0].mxu0
        %v3723 = vpop.f32.mrb[0].mxu0
        %v3724 = vadd.f32 0.0, %v3723
        %v3725 = vpop.f32.mrb[0].mxu0
        %3726 = vmatprep.mubr.bf16.mxu0 0
        %3727 = vmatmul.mubr.bf16.gmra.mrb[0].mxu0 %v3553
        %v3728 = vpop.f32.mrb[0].mxu0
        %v3729 = vadd.f32 0.0, %v3728
        %v3730 = vpop.f32.mrb[0].mxu0
        %v3731 = vpop.f32.mrb[0].mxu0
        %v3732 = vadd.f32 0.0, %v3731
        %v3733 = vpop.f32.mrb[0].mxu0
        %3734 = vmatprep.mubr.bf16.mxu0 0
        %3735 = vmatmul.mubr.bf16.gmra.mrb[0].mxu0 %v3554
        %v3736 = vpop.f32.mrb[0].mxu0
        %v3737 = vadd.f32 0.0, %v3736
        %v3738 = vpop.f32.mrb[0].mxu0
        %v3739 = vpop.f32.mrb[0].mxu0
        %v3740 = vadd.f32 0.0, %v3739
        %v3741 = vpop.f32.mrb[0].mxu0
        %3742 = vmatprep.mubr.bf16.mxu0 0
        %3743 = vmatmul.mubr.bf16.gmra.mrb[0].mxu0 %v3555
        %v3744 = vpop.f32.mrb[0].mxu0
        %v3745 = vadd.f32 0.0, %v3744
        %v3746 = vpop.f32.mrb[0].mxu0
        %v3747 = vpop.f32.mrb[0].mxu0
        %v3748 = vadd.f32 0.0, %v3747
        %v3749 = vpop.f32.mrb[0].mxu0
        %3750 = vmatprep.mubr.bf16.mxu0 0
        %3751 = vmatmul.mubr.bf16.gmra.mrb[0].mxu0 %v3556
        %v3752 = vpop.f32.mrb[0].mxu0
        %v3753 = vadd.f32 0.0, %v3752
        %v3754 = vpop.f32.mrb[0].mxu0
        %v3755 = vpop.f32.mrb[0].mxu0
        %v3756 = vadd.f32 0.0, %v3755
        %v3757 = vpop.f32.mrb[0].mxu0
        %3758 = vmatprep.mubr.bf16.mxu0 0
        %3759 = vmatmul.mubr.bf16.gmra.mrb[0].mxu0 %v3557
        %v3760 = vpop.f32.mrb[0].mxu0
        %v3761 = vadd.f32 0.0, %v3760
        %v3762 = vpop.f32.mrb[0].mxu0
        %v3763 = vpop.f32.mrb[0].mxu0
        %v3764 = vadd.f32 0.0, %v3763
        %v3765 = vpop.f32.mrb[0].mxu0
        %3766 = vmatprep.mubr.bf16.mxu0 0
        %3767 = vmatmul.mubr.bf16.gmra.mrb[0].mxu0 %v3558
        %v3768 = vpop.f32.mrb[0].mxu0
        %v3769 = vadd.f32 0.0, %v3768
        %v3770 = vpop.f32.mrb[0].mxu0
        %v3771 = vpop.f32.mrb[0].mxu0
        %v3772 = vadd.f32 0.0, %v3771
        %v3773 = vpop.f32.mrb[0].mxu0
        %3774 = vmatprep.mubr.bf16.mxu0 0
        %3775 = vmatmul.mubr.bf16.gmra.mrb[0].mxu0 %v3559
        %v3776 = vpop.f32.mrb[0].mxu0
        %v3777 = vadd.f32 0.0, %v3776
        %v3778 = vpop.f32.mrb[0].mxu0
        %v3779 = vpop.f32.mrb[0].mxu0
        %v3780 = vadd.f32 0.0, %v3779
        %v3781 = vpop.f32.mrb[0].mxu0
        %3782 = vmatprep.mubr.bf16.mxu0 0
        %3783 = vmatmul.mubr.bf16.gmra.mrb[0].mxu0 %v3560
        %v3784 = vpop.f32.mrb[0].mxu0
        %v3785 = vadd.f32 0.0, %v3784
        %v3786 = vpop.f32.mrb[0].mxu0
        %v3787 = vpop.f32.mrb[0].mxu0
        %v3788 = vadd.f32 0.0, %v3787
        %v3789 = vpop.f32.mrb[0].mxu0
        %3790 = vmatprep.mubr.bf16.mxu0 0
        %3791 = vmatmul.mubr.bf16.gmra.mrb[0].mxu0 %v3561
        %v3792 = vpop.f32.mrb[0].mxu0
        %v3793 = vadd.f32 0.0, %v3792
        %v3794 = vpop.f32.mrb[0].mxu0
        %v3795 = vpop.f32.mrb[0].mxu0
        %v3796 = vadd.f32 0.0, %v3795
        %v3797 = vpop.f32.mrb[0].mxu0
        %3798 = vmatprep.mubr.bf16.mxu0 0
        %3799 = vmatmul.mubr.bf16.gmra.mrb[0].mxu0 %v3562
        %v3800 = vpop.f32.mrb[0].mxu0
        %v3801 = vadd.f32 0.0, %v3800
        %v3802 = vpop.f32.mrb[0].mxu0
        %v3803 = vpop.f32.mrb[0].mxu0
        %v3804 = vadd.f32 0.0, %v3803
        %v3805 = vpop.f32.mrb[0].mxu0
        %3806 = vmatprep.mubr.bf16.mxu0 0
        %3807 = vmatmul.mubr.bf16.gmra.mrb[0].mxu0 %v3563
        %v3808 = vpop.f32.mrb[0].mxu0
        %v3809 = vadd.f32 0.0, %v3808
        %v3810 = vpop.f32.mrb[0].mxu0
        %v3811 = vpop.f32.mrb[0].mxu0
        %v3812 = vadd.f32 0.0, %v3811
        %v3813 = vpop.f32.mrb[0].mxu0
        %3814 = vmatprep.mubr.bf16.mxu0 0
        %3815 = vmatmul.mubr.bf16.gmra.mrb[0].mxu0 %v3564
        %v3816 = vpop.f32.mrb[0].mxu0
        %v3817 = vadd.f32 0.0, %v3816
        %v3818 = vpop.f32.mrb[0].mxu0
        %v3819 = vpop.f32.mrb[0].mxu0
        %v3820 = vadd.f32 0.0, %v3819
        %v3821 = vpop.f32.mrb[0].mxu0
        %3822 = vmatprep.mubr.bf16.mxu0 0
        %3823 = vmatmul.mubr.bf16.gmra.mrb[0].mxu0 %v3565
        %v3824 = vpop.f32.mrb[0].mxu0
        %v3825 = vadd.f32 0.0, %v3824
        %v3826 = vpop.f32.mrb[0].mxu0
        %v3827 = vpop.f32.mrb[0].mxu0
        %v3828 = vadd.f32 0.0, %v3827
        %v3829 = vpop.f32.mrb[0].mxu0
        %3830 = vmatprep.mubr.bf16.mxu0 0
        %3831 = vmatmul.mubr.bf16.gmra.mrb[0].mxu0 %v3566
        %v3832 = vpop.f32.mrb[0].mxu0
        %v3833 = vadd.f32 0.0, %v3832
        %v3834 = vpop.f32.mrb[0].mxu0
        %v3835 = vpop.f32.mrb[0].mxu0
        %v3836 = vadd.f32 0.0, %v3835
        %v3837 = vpop.f32.mrb[0].mxu0
        %3838 = vmatprep.mubr.bf16.mxu0 0
        %3839 = vmatmul.mubr.bf16.gmra.mrb[0].mxu0 %v3567
        %v3840 = vpop.f32.mrb[0].mxu0
        %v3841 = vadd.f32 0.0, %v3840
        %v3842 = vpop.f32.mrb[0].mxu0
        %v3843 = vpop.f32.mrb[0].mxu0
        %v3844 = vadd.f32 0.0, %v3843
        %v3845 = vpop.f32.mrb[0].mxu0
        %3846 = vmatprep.mubr.bf16.mxu0 0
        %3847 = vmatmul.mubr.bf16.gmra.mrb[0].mxu0 %v3568
        %v3848 = vpop.f32.mrb[0].mxu0
        %v3849 = vadd.f32 0.0, %v3848
        %v3850 = vpop.f32.mrb[0].mxu0
        %v3851 = vpop.f32.mrb[0].mxu0
        %v3852 = vadd.f32 0.0, %v3851
        %v3853 = vpop.f32.mrb[0].mxu0
        %3854 = vmatprep.mubr.bf16.mxu0 0
        %3855 = vmatmul.mubr.bf16.gmra.mrb[0].mxu0 %v3569
        %v3856 = vpop.f32.mrb[0].mxu0
        %v3857 = vadd.f32 0.0, %v3856
        %v3858 = vpop.f32.mrb[0].mxu0
        %v3859 = vpop.f32.mrb[0].mxu0
        %v3860 = vadd.f32 0.0, %v3859
        %v3861 = vpop.f32.mrb[0].mxu0
        %3862 = vmatprep.mubr.bf16.mxu0 0
        %3863 = vmatmul.mubr.bf16.gmra.mrb[0].mxu0 %v3570
        %v3864 = vpop.f32.mrb[0].mxu0
        %v3865 = vadd.f32 0.0, %v3864
        %v3866 = vpop.f32.mrb[0].mxu0
        %v3867 = vpop.f32.mrb[0].mxu0
        %v3868 = vadd.f32 0.0, %v3867
        %v3869 = vpop.f32.mrb[0].mxu0
        %3870 = vmatprep.mubr.bf16.mxu0 0
        %3871 = vmatmul.mubr.bf16.gmra.mrb[0].mxu0 %v3571
        %v3872 = vpop.f32.mrb[0].mxu0
        %v3873 = vadd.f32 0.0, %v3872
        %v3874 = vpop.f32.mrb[0].mxu0
        %v3875 = vpop.f32.mrb[0].mxu0
        %v3876 = vadd.f32 0.0, %v3875
        %v3877 = vpop.f32.mrb[0].mxu0
        %3878 = vmatprep.mubr.bf16.mxu0 0
        %3879 = vmatmul.mubr.bf16.gmra.mrb[0].mxu0 %v3572
        %v3880 = vpop.f32.mrb[0].mxu0
        %v3881 = vadd.f32 0.0, %v3880
        %v3882 = vpop.f32.mrb[0].mxu0
        %v3883 = vpop.f32.mrb[0].mxu0
        %v3884 = vadd.f32 0.0, %v3883
        %v3885 = vpop.f32.mrb[0].mxu0
        %3886 = vmatprep.mubr.bf16.mxu0 0
        %3887 = vmatmul.mubr.bf16.gmra.mrb[0].mxu0 %v3573
        %v3888 = vpop.f32.mrb[0].mxu0
        %v3889 = vadd.f32 0.0, %v3888
        %v3890 = vpop.f32.mrb[0].mxu0
        %v3891 = vpop.f32.mrb[0].mxu0
        %v3892 = vadd.f32 0.0, %v3891
        %v3893 = vpop.f32.mrb[0].mxu0
        %3894 = vmatprep.mubr.bf16.mxu0 0
        %3895 = vmatmul.mubr.bf16.gmra.mrb[0].mxu0 %v3574
        %v3896 = vpop.f32.mrb[0].mxu0
        %v3897 = vadd.f32 0.0, %v3896
        %v3898 = vpop.f32.mrb[0].mxu0
        %v3899 = vpop.f32.mrb[0].mxu0
        %v3900 = vadd.f32 0.0, %v3899
        %v3901 = vpop.f32.mrb[0].mxu0
        %3902 = vmatprep.mubr.bf16.mxu0 0
        %3903 = vmatmul.mubr.bf16.gmra.mrb[0].mxu0 %v3575
        %v3904 = vpop.f32.mrb[0].mxu0
        %v3905 = vadd.f32 0.0, %v3904
        %v3906 = vpop.f32.mrb[0].mxu0
        %v3907 = vpop.f32.mrb[0].mxu0
        %v3908 = vadd.f32 0.0, %v3907
        %v3909 = vpop.f32.mrb[0].mxu0
        %3910 = vmatprep.mubr.bf16.mxu0 0
        %3911 = vmatmul.mubr.bf16.gmra.mrb[0].mxu0 %v3576
        %v3912 = vpop.f32.mrb[0].mxu0
        %v3913 = vadd.f32 0.0, %v3912
        %v3914 = vpop.f32.mrb[0].mxu0
        %v3915 = vpop.f32.mrb[0].mxu0
        %v3916 = vadd.f32 0.0, %v3915
        %v3917 = vpop.f32.mrb[0].mxu0
        %3918 = vmatprep.mubr.bf16.mxu0 0
        %3919 = vmatmul.mubr.bf16.gmra.mrb[0].mxu0 %v3577
        %v3920 = vpop.f32.mrb[0].mxu0
        %v3921 = vadd.f32 0.0, %v3920
        %v3922 = vpop.f32.mrb[0].mxu0
        %v3923 = vpop.f32.mrb[0].mxu0
        %v3924 = vadd.f32 0.0, %v3923
        %v3925 = vpop.f32.mrb[0].mxu0
        %3926 = vmatprep.mubr.bf16.mxu0 0
        %3927 = vmatmul.mubr.bf16.gmra.mrb[0].mxu0 %v3578
        %v3928 = vpop.f32.mrb[0].mxu0
        %v3929 = vadd.f32 0.0, %v3928
        %v3930 = vpop.f32.mrb[0].mxu0
        %v3931 = vpop.f32.mrb[0].mxu0
        %v3932 = vadd.f32 0.0, %v3931
        %v3933 = vpop.f32.mrb[0].mxu0
        %3934 = vmatprep.mubr.bf16.mxu0 0
        %3935 = vmatmul.mubr.bf16.gmra.mrb[0].mxu0 %v3579
        %v3936 = vpop.f32.mrb[0].mxu0
        %v3937 = vadd.f32 0.0, %v3936
        %v3938 = vpop.f32.mrb[0].mxu0
        %v3939 = vpop.f32.mrb[0].mxu0
        %v3940 = vadd.f32 0.0, %v3939
        %v3941 = vpop.f32.mrb[0].mxu0
        %3942 = vmatprep.mubr.bf16.mxu0 0
        %3943 = vmatmul.mubr.bf16.gmra.mrb[0].mxu0 %v3580
        %v3944 = vpop.f32.mrb[0].mxu0
        %v3945 = vadd.f32 0.0, %v3944
        %v3946 = vpop.f32.mrb[0].mxu0
        %v3947 = vpop.f32.mrb[0].mxu0
        %v3948 = vadd.f32 0.0, %v3947
        %v3949 = vpop.f32.mrb[0].mxu0
        %3950 = vmatprep.mubr.bf16.mxu0 0
        %3951 = vmatmul.mubr.bf16.gmra.mrb[0].mxu0 %v3581
        %v3952 = vpop.f32.mrb[0].mxu0
        %v3953 = vadd.f32 0.0, %v3952
        %v3954 = vpop.f32.mrb[0].mxu0
        %v3955 = vpop.f32.mrb[0].mxu0
        %v3956 = vadd.f32 0.0, %v3955
        %v3957 = vpop.f32.mrb[0].mxu0
        %3958 = vmatprep.mubr.bf16.mxu0 0
        %3959 = vmatmul.mubr.bf16.gmra.mrb[0].mxu0 %v3582
        %v3960 = vpop.f32.mrb[0].mxu0
        %v3961 = vadd.f32 0.0, %v3960
        %v3962 = vpop.f32.mrb[0].mxu0
        %v3963 = vpop.f32.mrb[0].mxu0
        %v3964 = vadd.f32 0.0, %v3963
        %v3965 = vpop.f32.mrb[0].mxu0
        %3966 = vmatprep.mubr.bf16.mxu0 0
        %3967 = vmatmul.mubr.bf16.gmra.mrb[0].mxu0 %v3583
        %v3968 = vpop.f32.mrb[0].mxu0
        %v3969 = vadd.f32 0.0, %v3968
        %v3970 = vpop.f32.mrb[0].mxu0
        %v3971 = vpop.f32.mrb[0].mxu0
        %v3972 = vadd.f32 0.0, %v3971
        %v3973 = vpop.f32.mrb[0].mxu0
        %3974 = vmatprep.mubr.bf16.mxu0 0
        %3975 = vmatmul.mubr.bf16.gmra.mrb[0].mxu0 %v3584
        %v3976 = vpop.f32.mrb[0].mxu0
        %v3977 = vadd.f32 0.0, %v3976
        %v3978 = vpop.f32.mrb[0].mxu0
        %v3979 = vpop.f32.mrb[0].mxu0
        %v3980 = vadd.f32 0.0, %v3979
        %v3981 = vpop.f32.mrb[0].mxu0
        %3982 = vmatprep.mubr.bf16.mxu0 0
        %3983 = vmatmul.mubr.bf16.gmra.mrb[0].mxu0 %v3585
        %v3984 = vpop.f32.mrb[0].mxu0
        %v3985 = vadd.f32 0.0, %v3984
        %v3986 = vpop.f32.mrb[0].mxu0
        %v3987 = vpop.f32.mrb[0].mxu0
        %v3988 = vadd.f32 0.0, %v3987
        %v3989 = vpop.f32.mrb[0].mxu0
        %3990 = vmatprep.mubr.bf16.mxu0 0
        %3991 = vmatmul.mubr.bf16.gmra.mrb[0].mxu0 %v3586
        %v3992 = vpop.f32.mrb[0].mxu0
        %v3993 = vadd.f32 0.0, %v3992
        %v3994 = vpop.f32.mrb[0].mxu0
        %v3995 = vpop.f32.mrb[0].mxu0
        %v3996 = vadd.f32 0.0, %v3995
        %v3997 = vpop.f32.mrb[0].mxu0
        %3998 = vmatprep.mubr.bf16.mxu0 0
        %3999 = vmatmul.mubr.bf16.gmra.mrb[0].mxu0 %v3587
        %v4000 = vpop.f32.mrb[0].mxu0
        %v4001 = vadd.f32 0.0, %v4000
        %v4002 = vpop.f32.mrb[0].mxu0
        %v4003 = vpop.f32.mrb[0].mxu0
        %v4004 = vadd.f32 0.0, %v4003
        %v4005 = vpop.f32.mrb[0].mxu0
        %4006 = vmatprep.mubr.bf16.mxu0 0
        %4007 = vmatmul.mubr.bf16.gmra.mrb[0].mxu0 %v3588
        %v4008 = vpop.f32.mrb[0].mxu0
        %v4009 = vadd.f32 0.0, %v4008
        %v4010 = vpop.f32.mrb[0].mxu0
        %v4011 = vpop.f32.mrb[0].mxu0
        %v4012 = vadd.f32 0.0, %v4011
        %v4013 = vpop.f32.mrb[0].mxu0
        %4014 = vmatprep.mubr.bf16.mxu0 0
        %4015 = vmatmul.mubr.bf16.gmra.mrb[0].mxu0 %v3589
        %v4016 = vpop.f32.mrb[0].mxu0
        %v4017 = vadd.f32 0.0, %v4016
        %v4018 = vpop.f32.mrb[0].mxu0
        %v4019 = vpop.f32.mrb[0].mxu0
        %v4020 = vadd.f32 0.0, %v4019
        %v4021 = vpop.f32.mrb[0].mxu0
        %4022 = vmatprep.mubr.bf16.mxu0 0
        %4023 = vmatmul.mubr.bf16.gmra.mrb[0].mxu0 %v3590
        %v4024 = vpop.f32.mrb[0].mxu0
        %v4025 = vadd.f32 0.0, %v4024
        %v4026 = vpop.f32.mrb[0].mxu0
        %v4027 = vpop.f32.mrb[0].mxu0
        %v4028 = vadd.f32 0.0, %v4027
        %v4029 = vpop.f32.mrb[0].mxu0
        %4030 = vmatprep.mubr.bf16.mxu0 0
        %4031 = vmatmul.mubr.bf16.gmra.mrb[0].mxu0 %v3591
        %v4032 = vpop.f32.mrb[0].mxu0
        %v4033 = vadd.f32 0.0, %v4032
        %v4034 = vpop.f32.mrb[0].mxu0
        %v4035 = vpop.f32.mrb[0].mxu0
        %v4036 = vadd.f32 0.0, %v4035
        %v4037 = vpop.f32.mrb[0].mxu0
        %4038 = vmatprep.mubr.bf16.mxu0 0
        %4039 = vmatmul.mubr.bf16.gmra.mrb[0].mxu0 %v3592
        %v4040 = vpop.f32.mrb[0].mxu0
        %v4041 = vadd.f32 0.0, %v4040
        %v4042 = vpop.f32.mrb[0].mxu0
        %v4043 = vpop.f32.mrb[0].mxu0
        %v4044 = vadd.f32 0.0, %v4043
        %v4045 = vpop.f32.mrb[0].mxu0
        %4046 = vmatprep.mubr.bf16.mxu0 0
        %4047 = vmatmul.mubr.bf16.gmra.mrb[0].mxu0 %v3593
        %v4048 = vpop.f32.mrb[0].mxu0
        %v4049 = vadd.f32 0.0, %v4048
        %v4050 = vpop.f32.mrb[0].mxu0
        %v4051 = vpop.f32.mrb[0].mxu0
        %v4052 = vadd.f32 0.0, %v4051
        %v4053 = vpop.f32.mrb[0].mxu0
        %4054 = vmatprep.mubr.bf16.mxu0 0
        %4055 = vmatmul.mubr.bf16.gmra.mrb[0].mxu0 %v3594
        %v4056 = vpop.f32.mrb[0].mxu0
        %v4057 = vadd.f32 0.0, %v4056
        %v4058 = vpop.f32.mrb[0].mxu0
        %v4059 = vpop.f32.mrb[0].mxu0
        %v4060 = vadd.f32 0.0, %v4059
        %v4061 = vpop.f32.mrb[0].mxu0
        %4062 = vmatprep.mubr.bf16.mxu0 0
        %4063 = vmatmul.mubr.bf16.gmra.mrb[0].mxu0 %v3595
        %v4064 = vpop.f32.mrb[0].mxu0
        %v4065 = vadd.f32 0.0, %v4064
        %v4066 = vpop.f32.mrb[0].mxu0
        %v4067 = vpop.f32.mrb[0].mxu0
        %v4068 = vadd.f32 0.0, %v4067
        %v4069 = vpop.f32.mrb[0].mxu0
        %4070 = vmatprep.mubr.bf16.mxu0 0
        %4071 = vmatmul.mubr.bf16.gmra.mrb[0].mxu0 %v3596
        %v4072 = vpop.f32.mrb[0].mxu0
        %v4073 = vadd.f32 0.0, %v4072
        %v4074 = vpop.f32.mrb[0].mxu0
        %v4075 = vpop.f32.mrb[0].mxu0
        %v4076 = vadd.f32 0.0, %v4075
        %v4077 = vpop.f32.mrb[0].mxu0
        %4078 = vmatprep.mubr.bf16.mxu0 0
        %4079 = vmatmul.mubr.bf16.gmra.mrb[0].mxu0 %v3597
        %v4080 = vpop.f32.mrb[0].mxu0
        %v4081 = vadd.f32 0.0, %v4080
        %v4082 = vpop.f32.mrb[0].mxu0
        %v4083 = vpop.f32.mrb[0].mxu0
        %v4084 = vadd.f32 0.0, %v4083
        %v4085 = vpop.f32.mrb[0].mxu0
        %4086 = vmatprep.mubr.bf16.mxu0 0
        %4087 = vmatmul.mubr.bf16.gmra.mrb[0].mxu0 %v3598
        %v4088 = vpop.f32.mrb[0].mxu0
        %v4089 = vadd.f32 0.0, %v4088
        %v4090 = vpop.f32.mrb[0].mxu0
        %v4091 = vpop.f32.mrb[0].mxu0
        %v4092 = vadd.f32 0.0, %v4091
        %v4093 = vpop.f32.mrb[0].mxu0
        %4094 = vmatprep.mubr.bf16.mxu0 0
        %4095 = vmatmul.mubr.bf16.gmra.mrb[0].mxu0 %v3599
        %v4096 = vpop.f32.mrb[0].mxu0
        %v4097 = vadd.f32 0.0, %v4096
        %v4098 = vpop.f32.mrb[0].mxu0
        %v4099 = vpop.f32.mrb[0].mxu0
        %v4100 = vadd.f32 0.0, %v4099
        %v4101 = vpop.f32.mrb[0].mxu0
        %4102 = vmatprep.mubr.bf16.mxu0 0
        %4103 = vmatmul.mubr.bf16.gmra.mrb[0].mxu0 %v3600
        %v4104 = vpop.f32.mrb[0].mxu0
        %v4105 = vadd.f32 0.0, %v4104
        %v4106 = vpop.f32.mrb[0].mxu0
        %v4107 = vpop.f32.mrb[0].mxu0
        %v4108 = vadd.f32 0.0, %v4107
        %v4109 = vpop.f32.mrb[0].mxu0
        %4110 = vmatprep.mubr.bf16.mxu0 0
        %4111 = vmatmul.mubr.bf16.gmra.mrb[0].mxu0 %v3601
        %v4112 = vpop.f32.mrb[0].mxu0
        %v4113 = vadd.f32 0.0, %v4112
        %v4114 = vpop.f32.mrb[0].mxu0
        %v4115 = vpop.f32.mrb[0].mxu0
        %v4116 = vadd.f32 0.0, %v4115
        %v4117 = vpop.f32.mrb[0].mxu0
        %4118 = vmatprep.mubr.bf16.mxu0 0
        %4119 = vmatmul.mubr.bf16.gmra.mrb[0].mxu0 %v3602
        %v4120 = vpop.f32.mrb[0].mxu0
        %v4121 = vadd.f32 0.0, %v4120
        %v4122 = vpop.f32.mrb[0].mxu0
        %v4123 = vpop.f32.mrb[0].mxu0
        %v4124 = vadd.f32 0.0, %v4123
        %v4125 = vpop.f32.mrb[0].mxu0
        %4126 = vmatprep.mubr.bf16.mxu0 0
        %4127 = vmatmul.mubr.bf16.gmra.mrb[0].mxu0 %v3603
        %v4128 = vpop.f32.mrb[0].mxu0
        %v4129 = vadd.f32 0.0, %v4128
        %v4130 = vpop.f32.mrb[0].mxu0
        %v4131 = vpop.f32.mrb[0].mxu0
        %v4132 = vadd.f32 0.0, %v4131
        %v4133 = vpop.f32.mrb[0].mxu0
        %4134 = vmatprep.mubr.bf16.mxu0 0
        %4135 = vmatmul.mubr.bf16.gmra.mrb[0].mxu0 %v3604
        %v4136 = vpop.f32.mrb[0].mxu0
        %v4137 = vadd.f32 0.0, %v4136
        %v4138 = vpop.f32.mrb[0].mxu0
        %v4139 = vpop.f32.mrb[0].mxu0
        %v4140 = vadd.f32 0.0, %v4139
        %v4141 = vpop.f32.mrb[0].mxu0
        %4142 = vmatprep.mubr.bf16.mxu0 0
        %4143 = vmatmul.mubr.bf16.gmra.mrb[0].mxu0 %v3605
        %v4144 = vpop.f32.mrb[0].mxu0
        %v4145 = vadd.f32 0.0, %v4144
        %v4146 = vpop.f32.mrb[0].mxu0
        %v4147 = vpop.f32.mrb[0].mxu0
        %v4148 = vadd.f32 0.0, %v4147
        %v4149 = vpop.f32.mrb[0].mxu0
        %4150 = vdwg.mxu0
        %v4151 = vmul.f32 %v3641, %v1232
        %v4152 = vmul.f32 %v3644, %v1232
        %v4153 = vmul.f32 %v3649, %v1232
        %v4154 = vmul.f32 %v3652, %v1232
        %v4155 = vmul.f32 %v3657, %v1232
        %v4156 = vmul.f32 %v3660, %v1232
        %v4157 = vmul.f32 %v3665, %v1232
        %v4158 = vmul.f32 %v3668, %v1232
        %v4159 = vmul.f32 %v3673, %v1232
        %v4160 = vmul.f32 %v3676, %v1232
        %v4161 = vmul.f32 %v3681, %v1232
        %v4162 = vmul.f32 %v3684, %v1232
        %v4163 = vmul.f32 %v3689, %v1232
        %v4164 = vmul.f32 %v3692, %v1232
        %v4165 = vmul.f32 %v3697, %v1232
        %v4166 = vmul.f32 %v3700, %v1232
        %v4167 = vmul.f32 %v3705, %v1236
        %v4168 = vmul.f32 %v3708, %v1236
        %v4169 = vmul.f32 %v3713, %v1236
        %v4170 = vmul.f32 %v3716, %v1236
        %v4171 = vmul.f32 %v3721, %v1236
        %v4172 = vmul.f32 %v3724, %v1236
        %v4173 = vmul.f32 %v3729, %v1236
        %v4174 = vmul.f32 %v3732, %v1236
        %v4175 = vmul.f32 %v3737, %v1236
        %v4176 = vmul.f32 %v3740, %v1236
        %v4177 = vmul.f32 %v3745, %v1236
        %v4178 = vmul.f32 %v3748, %v1236
        %v4179 = vmul.f32 %v3753, %v1236
        %v4180 = vmul.f32 %v3756, %v1236
        %v4181 = vmul.f32 %v3761, %v1236
        %v4182 = vmul.f32 %v3764, %v1236
        %v4183 = vmul.f32 %v3769, %v1240
        %v4184 = vmul.f32 %v3772, %v1240
        %v4185 = vmul.f32 %v3777, %v1240
        %v4186 = vmul.f32 %v3780, %v1240
        %v4187 = vmul.f32 %v3785, %v1240
        %v4188 = vmul.f32 %v3788, %v1240
        %v4189 = vmul.f32 %v3793, %v1240
        %v4190 = vmul.f32 %v3796, %v1240
        %v4191 = vmul.f32 %v3801, %v1240
        %v4192 = vmul.f32 %v3804, %v1240
        %v4193 = vmul.f32 %v3809, %v1240
        %v4194 = vmul.f32 %v3812, %v1240
        %v4195 = vmul.f32 %v3817, %v1240
        %v4196 = vmul.f32 %v3820, %v1240
        %v4197 = vmul.f32 %v3825, %v1240
        %v4198 = vmul.f32 %v3828, %v1240
        %v4199 = vmul.f32 %v3833, %v1244
        %v4200 = vmul.f32 %v3836, %v1244
        %v4201 = vmul.f32 %v3841, %v1244
        %v4202 = vmul.f32 %v3844, %v1244
        %v4203 = vmul.f32 %v3849, %v1244
        %v4204 = vmul.f32 %v3852, %v1244
        %v4205 = vmul.f32 %v3857, %v1244
        %v4206 = vmul.f32 %v3860, %v1244
        %v4207 = vmul.f32 %v3865, %v1244
        %v4208 = vmul.f32 %v3868, %v1244
        %v4209 = vmul.f32 %v3873, %v1244
        %v4210 = vmul.f32 %v3876, %v1244
        %v4211 = vmul.f32 %v3881, %v1244
        %v4212 = vmul.f32 %v3884, %v1244
        %v4213 = vmul.f32 %v3889, %v1244
        %v4214 = vmul.f32 %v3892, %v1244
        %v4215 = vmul.f32 %v3897, %v1248
        %v4216 = vmul.f32 %v3900, %v1248
        %v4217 = vmul.f32 %v3905, %v1248
        %v4218 = vmul.f32 %v3908, %v1248
        %v4219 = vmul.f32 %v3913, %v1248
        %v4220 = vmul.f32 %v3916, %v1248
        %v4221 = vmul.f32 %v3921, %v1248
        %v4222 = vmul.f32 %v3924, %v1248
        %v4223 = vmul.f32 %v3929, %v1248
        %v4224 = vmul.f32 %v3932, %v1248
        %v4225 = vmul.f32 %v3937, %v1248
        %v4226 = vmul.f32 %v3940, %v1248
        %v4227 = vmul.f32 %v3945, %v1248
        %v4228 = vmul.f32 %v3948, %v1248
        %v4229 = vmul.f32 %v3953, %v1248
        %v4230 = vmul.f32 %v3956, %v1248
        %v4231 = vmul.f32 %v3961, %v1252
        %v4232 = vmul.f32 %v3964, %v1252
        %v4233 = vmul.f32 %v3969, %v1252
        %v4234 = vmul.f32 %v3972, %v1252
        %v4235 = vmul.f32 %v3977, %v1252
        %v4236 = vmul.f32 %v3980, %v1252
        %v4237 = vmul.f32 %v3985, %v1252
        %v4238 = vmul.f32 %v3988, %v1252
        %v4239 = vmul.f32 %v3993, %v1252
        %v4240 = vmul.f32 %v3996, %v1252
        %v4241 = vmul.f32 %v4001, %v1252
        %v4242 = vmul.f32 %v4004, %v1252
        %v4243 = vmul.f32 %v4009, %v1252
        %v4244 = vmul.f32 %v4012, %v1252
        %v4245 = vmul.f32 %v4017, %v1252
        %v4246 = vmul.f32 %v4020, %v1252
        %v4247 = vmul.f32 %v4025, %v1256
        %v4248 = vmul.f32 %v4028, %v1256
        %v4249 = vmul.f32 %v4033, %v1256
        %v4250 = vmul.f32 %v4036, %v1256
        %v4251 = vmul.f32 %v4041, %v1256
        %v4252 = vmul.f32 %v4044, %v1256
        %v4253 = vmul.f32 %v4049, %v1256
        %v4254 = vmul.f32 %v4052, %v1256
        %v4255 = vmul.f32 %v4057, %v1256
        %v4256 = vmul.f32 %v4060, %v1256
        %v4257 = vmul.f32 %v4065, %v1256
        %v4258 = vmul.f32 %v4068, %v1256
        %v4259 = vmul.f32 %v4073, %v1256
        %v4260 = vmul.f32 %v4076, %v1256
        %v4261 = vmul.f32 %v4081, %v1256
        %v4262 = vmul.f32 %v4084, %v1256
        %v4263 = vmul.f32 %v4089, %v1260
        %v4264 = vmul.f32 %v4092, %v1260
        %v4265 = vmul.f32 %v4097, %v1260
        %v4266 = vmul.f32 %v4100, %v1260
        %v4267 = vmul.f32 %v4105, %v1260
        %v4268 = vmul.f32 %v4108, %v1260
        %v4269 = vmul.f32 %v4113, %v1260
        %v4270 = vmul.f32 %v4116, %v1260
        %v4271 = vmul.f32 %v4121, %v1260
        %v4272 = vmul.f32 %v4124, %v1260
        %v4273 = vmul.f32 %v4129, %v1260
        %v4274 = vmul.f32 %v4132, %v1260
        %v4275 = vmul.f32 %v4137, %v1260
        %v4276 = vmul.f32 %v4140, %v1260
        %v4277 = vmul.f32 %v4145, %v1260
        %v4278 = vmul.f32 %v4148, %v1260
        %v4279 = vsel %vm541, %v4151, 0.0
        %v4280 = vsel %vm541, %v4167, 0.0
        %v4281 = vadd.f32 %v4279, %v4280
        %v4282 = vsel %vm541, %v4183, 0.0
        %v4283 = vadd.f32 %v4281, %v4282
        %v4284 = vsel %vm541, %v4199, 0.0
        %v4285 = vadd.f32 %v4283, %v4284
        %v4286 = vsel %vm541, %v4215, 0.0
        %v4287 = vadd.f32 %v4285, %v4286
        %v4288 = vsel %vm541, %v4231, 0.0
        %v4289 = vadd.f32 %v4287, %v4288
        %v4290 = vsel %vm541, %v4247, 0.0
        %v4291 = vadd.f32 %v4289, %v4290
        %v4292 = vsel %vm541, %v4263, 0.0
        %v4293 = vadd.f32 %v4291, %v4292
        %v4294 = vsel %vm541, %v4152, 0.0
        %v4295 = vsel %vm541, %v4168, 0.0
        %v4296 = vadd.f32 %v4294, %v4295
        %v4297 = vsel %vm541, %v4184, 0.0
        %v4298 = vadd.f32 %v4296, %v4297
        %v4299 = vsel %vm541, %v4200, 0.0
        %v4300 = vadd.f32 %v4298, %v4299
        %v4301 = vsel %vm541, %v4216, 0.0
        %v4302 = vadd.f32 %v4300, %v4301
        %v4303 = vsel %vm541, %v4232, 0.0
        %v4304 = vadd.f32 %v4302, %v4303
        %v4305 = vsel %vm541, %v4248, 0.0
        %v4306 = vadd.f32 %v4304, %v4305
        %v4307 = vsel %vm541, %v4264, 0.0
        %v4308 = vadd.f32 %v4306, %v4307
        %v4309 = vsel %vm541, %v4153, 0.0
        %v4310 = vsel %vm541, %v4169, 0.0
        %v4311 = vadd.f32 %v4309, %v4310
        %v4312 = vsel %vm541, %v4185, 0.0
        %v4313 = vadd.f32 %v4311, %v4312
        %v4314 = vsel %vm541, %v4201, 0.0
        %v4315 = vadd.f32 %v4313, %v4314
        %v4316 = vsel %vm541, %v4217, 0.0
        %v4317 = vadd.f32 %v4315, %v4316
        %v4318 = vsel %vm541, %v4233, 0.0
        %v4319 = vadd.f32 %v4317, %v4318
        %v4320 = vsel %vm541, %v4249, 0.0
        %v4321 = vadd.f32 %v4319, %v4320
        %v4322 = vsel %vm541, %v4265, 0.0
        %v4323 = vadd.f32 %v4321, %v4322
        %v4324 = vsel %vm541, %v4154, 0.0
        %v4325 = vsel %vm541, %v4170, 0.0
        %v4326 = vadd.f32 %v4324, %v4325
        %v4327 = vsel %vm541, %v4186, 0.0
        %v4328 = vadd.f32 %v4326, %v4327
        %v4329 = vsel %vm541, %v4202, 0.0
        %v4330 = vadd.f32 %v4328, %v4329
        %v4331 = vsel %vm541, %v4218, 0.0
        %v4332 = vadd.f32 %v4330, %v4331
        %v4333 = vsel %vm541, %v4234, 0.0
        %v4334 = vadd.f32 %v4332, %v4333
        %v4335 = vsel %vm541, %v4250, 0.0
        %v4336 = vadd.f32 %v4334, %v4335
        %v4337 = vsel %vm541, %v4266, 0.0
        %v4338 = vadd.f32 %v4336, %v4337
        %v4339 = vsel %vm541, %v4155, 0.0
        %v4340 = vsel %vm541, %v4171, 0.0
        %v4341 = vadd.f32 %v4339, %v4340
        %v4342 = vsel %vm541, %v4187, 0.0
        %v4343 = vadd.f32 %v4341, %v4342
        %v4344 = vsel %vm541, %v4203, 0.0
        %v4345 = vadd.f32 %v4343, %v4344
        %v4346 = vsel %vm541, %v4219, 0.0
        %v4347 = vadd.f32 %v4345, %v4346
        %v4348 = vsel %vm541, %v4235, 0.0
        %v4349 = vadd.f32 %v4347, %v4348
        %v4350 = vsel %vm541, %v4251, 0.0
        %v4351 = vadd.f32 %v4349, %v4350
        %v4352 = vsel %vm541, %v4267, 0.0
        %v4353 = vadd.f32 %v4351, %v4352
        %v4354 = vsel %vm541, %v4156, 0.0
        %v4355 = vsel %vm541, %v4172, 0.0
        %v4356 = vadd.f32 %v4354, %v4355
        %v4357 = vsel %vm541, %v4188, 0.0
        %v4358 = vadd.f32 %v4356, %v4357
        %v4359 = vsel %vm541, %v4204, 0.0
        %v4360 = vadd.f32 %v4358, %v4359
        %v4361 = vsel %vm541, %v4220, 0.0
        %v4362 = vadd.f32 %v4360, %v4361
        %v4363 = vsel %vm541, %v4236, 0.0
        %v4364 = vadd.f32 %v4362, %v4363
        %v4365 = vsel %vm541, %v4252, 0.0
        %v4366 = vadd.f32 %v4364, %v4365
        %v4367 = vsel %vm541, %v4268, 0.0
        %v4368 = vadd.f32 %v4366, %v4367
        %v4369 = vsel %vm541, %v4157, 0.0
        %v4370 = vsel %vm541, %v4173, 0.0
        %v4371 = vadd.f32 %v4369, %v4370
        %v4372 = vsel %vm541, %v4189, 0.0
        %v4373 = vadd.f32 %v4371, %v4372
        %v4374 = vsel %vm541, %v4205, 0.0
        %v4375 = vadd.f32 %v4373, %v4374
        %v4376 = vsel %vm541, %v4221, 0.0
        %v4377 = vadd.f32 %v4375, %v4376
        %v4378 = vsel %vm541, %v4237, 0.0
        %v4379 = vadd.f32 %v4377, %v4378
        %v4380 = vsel %vm541, %v4253, 0.0
        %v4381 = vadd.f32 %v4379, %v4380
        %v4382 = vsel %vm541, %v4269, 0.0
        %v4383 = vadd.f32 %v4381, %v4382
        %v4384 = vsel %vm541, %v4158, 0.0
        %v4385 = vsel %vm541, %v4174, 0.0
        %v4386 = vadd.f32 %v4384, %v4385
        %v4387 = vsel %vm541, %v4190, 0.0
        %v4388 = vadd.f32 %v4386, %v4387
        %v4389 = vsel %vm541, %v4206, 0.0
        %v4390 = vadd.f32 %v4388, %v4389
        %v4391 = vsel %vm541, %v4222, 0.0
        %v4392 = vadd.f32 %v4390, %v4391
        %v4393 = vsel %vm541, %v4238, 0.0
        %v4394 = vadd.f32 %v4392, %v4393
        %v4395 = vsel %vm541, %v4254, 0.0
        %v4396 = vadd.f32 %v4394, %v4395
        %v4397 = vsel %vm541, %v4270, 0.0
        %v4398 = vadd.f32 %v4396, %v4397
        %v4399 = vsel %vm541, %v4159, 0.0
        %v4400 = vsel %vm541, %v4175, 0.0
        %v4401 = vadd.f32 %v4399, %v4400
        %v4402 = vsel %vm541, %v4191, 0.0
        %v4403 = vadd.f32 %v4401, %v4402
        %v4404 = vsel %vm541, %v4207, 0.0
        %v4405 = vadd.f32 %v4403, %v4404
        %v4406 = vsel %vm541, %v4223, 0.0
        %v4407 = vadd.f32 %v4405, %v4406
        %v4408 = vsel %vm541, %v4239, 0.0
        %v4409 = vadd.f32 %v4407, %v4408
        %v4410 = vsel %vm541, %v4255, 0.0
        %v4411 = vadd.f32 %v4409, %v4410
        %v4412 = vsel %vm541, %v4271, 0.0
        %v4413 = vadd.f32 %v4411, %v4412
        %v4414 = vsel %vm541, %v4160, 0.0
        %v4415 = vsel %vm541, %v4176, 0.0
        %v4416 = vadd.f32 %v4414, %v4415
        %v4417 = vsel %vm541, %v4192, 0.0
        %v4418 = vadd.f32 %v4416, %v4417
        %v4419 = vsel %vm541, %v4208, 0.0
        %v4420 = vadd.f32 %v4418, %v4419
        %v4421 = vsel %vm541, %v4224, 0.0
        %v4422 = vadd.f32 %v4420, %v4421
        %v4423 = vsel %vm541, %v4240, 0.0
        %v4424 = vadd.f32 %v4422, %v4423
        %v4425 = vsel %vm541, %v4256, 0.0
        %v4426 = vadd.f32 %v4424, %v4425
        %v4427 = vsel %vm541, %v4272, 0.0
        %v4428 = vadd.f32 %v4426, %v4427
        %v4429 = vsel %vm541, %v4161, 0.0
        %v4430 = vsel %vm541, %v4177, 0.0
        %v4431 = vadd.f32 %v4429, %v4430
        %v4432 = vsel %vm541, %v4193, 0.0
        %v4433 = vadd.f32 %v4431, %v4432
        %v4434 = vsel %vm541, %v4209, 0.0
        %v4435 = vadd.f32 %v4433, %v4434
        %v4436 = vsel %vm541, %v4225, 0.0
        %v4437 = vadd.f32 %v4435, %v4436
        %v4438 = vsel %vm541, %v4241, 0.0
        %v4439 = vadd.f32 %v4437, %v4438
        %v4440 = vsel %vm541, %v4257, 0.0
        %v4441 = vadd.f32 %v4439, %v4440
        %v4442 = vsel %vm541, %v4273, 0.0
        %v4443 = vadd.f32 %v4441, %v4442
        %v4444 = vsel %vm541, %v4162, 0.0
        %v4445 = vsel %vm541, %v4178, 0.0
        %v4446 = vadd.f32 %v4444, %v4445
        %v4447 = vsel %vm541, %v4194, 0.0
        %v4448 = vadd.f32 %v4446, %v4447
        %v4449 = vsel %vm541, %v4210, 0.0
        %v4450 = vadd.f32 %v4448, %v4449
        %v4451 = vsel %vm541, %v4226, 0.0
        %v4452 = vadd.f32 %v4450, %v4451
        %v4453 = vsel %vm541, %v4242, 0.0
        %v4454 = vadd.f32 %v4452, %v4453
        %v4455 = vsel %vm541, %v4258, 0.0
        %v4456 = vadd.f32 %v4454, %v4455
        %v4457 = vsel %vm541, %v4274, 0.0
        %v4458 = vadd.f32 %v4456, %v4457
        %v4459 = vsel %vm541, %v4163, 0.0
        %v4460 = vsel %vm541, %v4179, 0.0
        %v4461 = vadd.f32 %v4459, %v4460
        %v4462 = vsel %vm541, %v4195, 0.0
        %v4463 = vadd.f32 %v4461, %v4462
        %v4464 = vsel %vm541, %v4211, 0.0
        %v4465 = vadd.f32 %v4463, %v4464
        %v4466 = vsel %vm541, %v4227, 0.0
        %v4467 = vadd.f32 %v4465, %v4466
        %v4468 = vsel %vm541, %v4243, 0.0
        %v4469 = vadd.f32 %v4467, %v4468
        %v4470 = vsel %vm541, %v4259, 0.0
        %v4471 = vadd.f32 %v4469, %v4470
        %v4472 = vsel %vm541, %v4275, 0.0
        %v4473 = vadd.f32 %v4471, %v4472
        %v4474 = vsel %vm541, %v4164, 0.0
        %v4475 = vsel %vm541, %v4180, 0.0
        %v4476 = vadd.f32 %v4474, %v4475
        %v4477 = vsel %vm541, %v4196, 0.0
        %v4478 = vadd.f32 %v4476, %v4477
        %v4479 = vsel %vm541, %v4212, 0.0
        %v4480 = vadd.f32 %v4478, %v4479
        %v4481 = vsel %vm541, %v4228, 0.0
        %v4482 = vadd.f32 %v4480, %v4481
        %v4483 = vsel %vm541, %v4244, 0.0
        %v4484 = vadd.f32 %v4482, %v4483
        %v4485 = vsel %vm541, %v4260, 0.0
        %v4486 = vadd.f32 %v4484, %v4485
        %v4487 = vsel %vm541, %v4276, 0.0
        %v4488 = vadd.f32 %v4486, %v4487
        %v4489 = vsel %vm541, %v4165, 0.0
        %v4490 = vsel %vm541, %v4181, 0.0
        %v4491 = vadd.f32 %v4489, %v4490
        %v4492 = vsel %vm541, %v4197, 0.0
        %v4493 = vadd.f32 %v4491, %v4492
        %v4494 = vsel %vm541, %v4213, 0.0
        %v4495 = vadd.f32 %v4493, %v4494
        %v4496 = vsel %vm541, %v4229, 0.0
        %v4497 = vadd.f32 %v4495, %v4496
        %v4498 = vsel %vm541, %v4245, 0.0
        %v4499 = vadd.f32 %v4497, %v4498
        %v4500 = vsel %vm541, %v4261, 0.0
        %v4501 = vadd.f32 %v4499, %v4500
        %v4502 = vsel %vm541, %v4277, 0.0
        %v4503 = vadd.f32 %v4501, %v4502
        %v4504 = vsel %vm541, %v4166, 0.0
        %v4505 = vsel %vm541, %v4182, 0.0
        %v4506 = vadd.f32 %v4504, %v4505
        %v4507 = vsel %vm541, %v4198, 0.0
        %v4508 = vadd.f32 %v4506, %v4507
        %v4509 = vsel %vm541, %v4214, 0.0
        %v4510 = vadd.f32 %v4508, %v4509
        %v4511 = vsel %vm541, %v4230, 0.0
        %v4512 = vadd.f32 %v4510, %v4511
        %v4513 = vsel %vm541, %v4246, 0.0
        %v4514 = vadd.f32 %v4512, %v4513
        %v4515 = vsel %vm541, %v4262, 0.0
        %v4516 = vadd.f32 %v4514, %v4515
        %v4517 = vsel %vm541, %v4278, 0.0
        %v4518 = vadd.f32 %v4516, %v4517
        %v4519 = vpack.c.bf16 %v4308, %v4293
        %v4520 = vpack.c.bf16 %v4338, %v4323
        %v4521 = vpack.c.bf16 %v4368, %v4353
        %v4522 = vpack.c.bf16 %v4398, %v4383
        %v4523 = vpack.c.bf16 %v4428, %v4413
        %v4524 = vpack.c.bf16 %v4458, %v4443
        %v4525 = vpack.c.bf16 %v4488, %v4473
        %v4526 = vpack.c.bf16 %v4518, %v4503
        %v4527 = vld [vmem:[%s9] sm:$0xf]
        %v4528 = vld [vmem:[%s9 + $0x4] sm:$0xf]
        %v4529 = vld [vmem:[%s9 + $0x8] sm:$0xf]
        %v4530 = vld [vmem:[%s9 + $0xc] sm:$0xf]
        %v4531 = vld [vmem:[%s9 + $0x10] sm:$0xf]
        %v4532 = vld [vmem:[%s9 + $0x14] sm:$0xf]
        %v4533 = vld [vmem:[%s9 + $0x18] sm:$0xf]
        %v4534 = vld [vmem:[%s9 + $0x1c] sm:$0xf]
        %v4535 = vld [vmem:[%s10] sm:$0x1]
        %v4537 = vlaneseq
        %v4538 = vshrl.u32 %v4537, 7
        %v4539 = vsub.s32 0, %v4538
        %v4540 = vrot.slane %v4535, %v4539
        %v4550 = vunpack.c.l.b16 %v4527
        %v4551 = vunpack.c.l.b16 %v4528
        %v4552 = vunpack.c.l.b16 %v4529
        %v4553 = vunpack.c.l.b16 %v4530
        %v4554 = vunpack.c.l.b16 %v4531
        %v4555 = vunpack.c.l.b16 %v4532
        %v4556 = vunpack.c.l.b16 %v4533
        %v4557 = vunpack.c.l.b16 %v4534
        %v4558 = vpack.c.b16 %v4551, %v4550
        %v4559 = vpack.c.b16 %v4553, %v4552
        %v4560 = vpack.c.b16 %v4555, %v4554
        %v4561 = vpack.c.b16 %v4557, %v4556
        %v4567 = vsel %vm541, %v4519, 0
        %v4570 = vsel %vm541, %v4520, 0
        %v4573 = vsel %vm541, %v4521, 0
        %v4576 = vsel %vm541, %v4522, 0
        %v4579 = vsel %vm541, %v4523, 0
        %v4582 = vsel %vm541, %v4524, 0
        %v4585 = vsel %vm541, %v4525, 0
        %v4588 = vsel %vm541, %v4526, 0
        %4590 = vmatprep.subr.bf16.mxu0 0
        %4591 = vmatpush1.bf16.msra.mxu0 %v4558
        %4592 = vmatprep.subr.bf16.mxu0 0
        %4593 = vmatpush1.bf16.msra.mxu0 %v4559
        %4594 = vmatprep.subr.bf16.mxu0 0
        %4595 = vmatpush1.bf16.msra.mxu0 %v4560
        %4596 = vmatprep.subr.bf16.mxu0 0
        %4597 = vmatpush1.bf16.msra.mxu0 %v4561
        %4598 = vmatprep.subr.bf16.mxu0 0
        %4599 = vmatpush1.bf16.msra.mxu0 0
        %4600 = vmatprep.subr.bf16.mxu0 0
        %4601 = vmatpush1.bf16.msra.mxu0 0
        %4602 = vmatprep.subr.bf16.mxu0 0
        %4603 = vmatpush1.bf16.msra.mxu0 0
        %4604 = vmatprep.subr.bf16.mxu0 0
        %4605 = vmatpush1.bf16.msra.mxu0 0
        %4606 = vmatprep.subr.bf16.mxu0 0
        %4607 = vmatpush1.bf16.msra.mxu0 0
        %4608 = vmatprep.subr.bf16.mxu0 0
        %4609 = vmatpush1.bf16.msra.mxu0 0
        %4610 = vmatprep.subr.bf16.mxu0 0
        %4611 = vmatpush1.bf16.msra.mxu0 0
        %4612 = vmatprep.subr.bf16.mxu0 0
        %4613 = vmatpush1.bf16.msra.mxu0 0
        %4614 = vmatprep.subr.bf16.mxu0 0
        %4615 = vmatpush1.bf16.msra.mxu0 0
        %4616 = vmatprep.subr.bf16.mxu0 0
        %4617 = vmatpush1.bf16.msra.mxu0 0
        %4618 = vmatprep.subr.bf16.mxu0 0
        %4619 = vmatpush1.bf16.msra.mxu0 0
        %4620 = vmatprep.subr.bf16.mxu0 0
        %4621 = vmatpush1.bf16.msra.mxu0 0
        %4622 = vmatprep.mubr.bf16.mxu0 0
        %4623 = vmatmul.mubr.bf16.gmra.mrb[0].mxu0 %v4567
        %v4624 = vpop.f32.mrb[0].mxu0
        %v4625 = vadd.f32 %v4540, %v4624
        %v4626 = vpop.f32.mrb[0].mxu0
        %v4627 = vpop.f32.mrb[0].mxu0
        %v4628 = vadd.f32 %v4540, %v4627
        %v4629 = vpop.f32.mrb[0].mxu0
        %4630 = vmatprep.mubr.bf16.mxu0 0
        %4631 = vmatmul.mubr.bf16.gmra.mrb[0].mxu0 %v4570
        %v4632 = vpop.f32.mrb[0].mxu0
        %v4633 = vadd.f32 %v4540, %v4632
        %v4634 = vpop.f32.mrb[0].mxu0
        %v4635 = vpop.f32.mrb[0].mxu0
        %v4636 = vadd.f32 %v4540, %v4635
        %v4637 = vpop.f32.mrb[0].mxu0
        %4638 = vmatprep.mubr.bf16.mxu0 0
        %4639 = vmatmul.mubr.bf16.gmra.mrb[0].mxu0 %v4573
        %v4640 = vpop.f32.mrb[0].mxu0
        %v4641 = vadd.f32 %v4540, %v4640
        %v4642 = vpop.f32.mrb[0].mxu0
        %v4643 = vpop.f32.mrb[0].mxu0
        %v4644 = vadd.f32 %v4540, %v4643
        %v4645 = vpop.f32.mrb[0].mxu0
        %4646 = vmatprep.mubr.bf16.mxu0 0
        %4647 = vmatmul.mubr.bf16.gmra.mrb[0].mxu0 %v4576
        %v4648 = vpop.f32.mrb[0].mxu0
        %v4649 = vadd.f32 %v4540, %v4648
        %v4650 = vpop.f32.mrb[0].mxu0
        %v4651 = vpop.f32.mrb[0].mxu0
        %v4652 = vadd.f32 %v4540, %v4651
        %v4653 = vpop.f32.mrb[0].mxu0
        %4654 = vmatprep.mubr.bf16.mxu0 0
        %4655 = vmatmul.mubr.bf16.gmra.mrb[0].mxu0 %v4579
        %v4656 = vpop.f32.mrb[0].mxu0
        %v4657 = vadd.f32 %v4540, %v4656
        %v4658 = vpop.f32.mrb[0].mxu0
        %v4659 = vpop.f32.mrb[0].mxu0
        %v4660 = vadd.f32 %v4540, %v4659
        %v4661 = vpop.f32.mrb[0].mxu0
        %4662 = vmatprep.mubr.bf16.mxu0 0
        %4663 = vmatmul.mubr.bf16.gmra.mrb[0].mxu0 %v4582
        %v4664 = vpop.f32.mrb[0].mxu0
        %v4665 = vadd.f32 %v4540, %v4664
        %v4666 = vpop.f32.mrb[0].mxu0
        %v4667 = vpop.f32.mrb[0].mxu0
        %v4668 = vadd.f32 %v4540, %v4667
        %v4669 = vpop.f32.mrb[0].mxu0
        %4670 = vmatprep.mubr.bf16.mxu0 0
        %4671 = vmatmul.mubr.bf16.gmra.mrb[0].mxu0 %v4585
        %v4672 = vpop.f32.mrb[0].mxu0
        %v4673 = vadd.f32 %v4540, %v4672
        %v4674 = vpop.f32.mrb[0].mxu0
        %v4675 = vpop.f32.mrb[0].mxu0
        %v4676 = vadd.f32 %v4540, %v4675
        %v4677 = vpop.f32.mrb[0].mxu0
        %4678 = vmatprep.mubr.bf16.mxu0 0
        %4679 = vmatmul.mubr.bf16.gmra.mrb[0].mxu0 %v4588
        %v4680 = vpop.f32.mrb[0].mxu0
        %v4681 = vadd.f32 %v4540, %v4680
        %v4682 = vpop.f32.mrb[0].mxu0
        %v4683 = vpop.f32.mrb[0].mxu0
        %v4684 = vadd.f32 %v4540, %v4683
        %v4685 = vpop.f32.mrb[0].mxu0
        %4686 = vdwg.mxu0
        %v4687 = vadd.f32 %v493, %v4625
        %v4688 = vadd.f32 %v494, %v4628
        %v4689 = vadd.f32 %v495, %v4633
        %v4690 = vadd.f32 %v496, %v4636
        %v4691 = vadd.f32 %v497, %v4641
        %v4692 = vadd.f32 %v498, %v4644
        %v4693 = vadd.f32 %v499, %v4649
        %v4694 = vadd.f32 %v500, %v4652
        %v4695 = vadd.f32 %v525, %v4657
        %v4696 = vadd.f32 %v526, %v4660
        %v4697 = vadd.f32 %v527, %v4665
        %v4698 = vadd.f32 %v528, %v4668
        %v4699 = vadd.f32 %v529, %v4673
        %v4700 = vadd.f32 %v530, %v4676
        %v4701 = vadd.f32 %v531, %v4681
        %v4702 = vadd.f32 %v532, %v4684
        %4703 = vxpose.xlu0.b32.start [1/16] %v4687, 128
        %4704 = vxpose.xlu0.b32.cont [2/16] %v4688, 128
        %4705 = vxpose.xlu0.b32.cont [3/16] %v4689, 128
        %4706 = vxpose.xlu0.b32.cont [4/16] %v4690, 128
        %4707 = vxpose.xlu0.b32.cont [5/16] %v4691, 128
        %4708 = vxpose.xlu0.b32.cont [6/16] %v4692, 128
        %4709 = vxpose.xlu0.b32.cont [7/16] %v4693, 128
        %4710 = vxpose.xlu0.b32.cont [8/16] %v4694, 128
        %4711 = vxpose.xlu0.b32.cont [9/16] 0.0, 128
        %4712 = vxpose.xlu0.b32.cont [10/16] 0.0, 128
        %4713 = vxpose.xlu0.b32.cont [11/16] 0.0, 128
        %4714 = vxpose.xlu0.b32.cont [12/16] 0.0, 128
        %4715 = vxpose.xlu0.b32.cont [13/16] 0.0, 128
        %4716 = vxpose.xlu0.b32.cont [14/16] 0.0, 128
        %4717 = vxpose.xlu0.b32.cont [15/16] 0.0, 128
        %4718 = vxpose.xlu0.b32.end [16/16] 0.0, 128
        %v4719 = vpop.trf.xlu0
        %v4720 = vpop.trf.xlu0
        %v4721 = vpop.trf.xlu0
        %v4722 = vpop.trf.xlu0
        %v4723 = vpop.trf.xlu0
        %v4724 = vpop.trf.xlu0
        %v4725 = vpop.trf.xlu0
        %v4726 = vpop.trf.xlu0
        %v4727 = vpop.trf.xlu0
        %v4728 = vpop.trf.xlu0
        %v4729 = vpop.trf.xlu0
        %v4730 = vpop.trf.xlu0
        %v4731 = vpop.trf.xlu0
        %v4732 = vpop.trf.xlu0
        %v4733 = vpop.trf.xlu0
        %v4734 = vpop.trf.xlu0
        %4735 = vxpose.xlu0.b32.start [1/16] %v4695, 128
        %4736 = vxpose.xlu0.b32.cont [2/16] %v4696, 128
        %4737 = vxpose.xlu0.b32.cont [3/16] %v4697, 128
        %4738 = vxpose.xlu0.b32.cont [4/16] %v4698, 128
        %4739 = vxpose.xlu0.b32.cont [5/16] %v4699, 128
        %4740 = vxpose.xlu0.b32.cont [6/16] %v4700, 128
        %4741 = vxpose.xlu0.b32.cont [7/16] %v4701, 128
        %4742 = vxpose.xlu0.b32.cont [8/16] %v4702, 128
        %4743 = vxpose.xlu0.b32.cont [9/16] 0.0, 128
        %4744 = vxpose.xlu0.b32.cont [10/16] 0.0, 128
        %4745 = vxpose.xlu0.b32.cont [11/16] 0.0, 128
        %4746 = vxpose.xlu0.b32.cont [12/16] 0.0, 128
        %4747 = vxpose.xlu0.b32.cont [13/16] 0.0, 128
        %4748 = vxpose.xlu0.b32.cont [14/16] 0.0, 128
        %4749 = vxpose.xlu0.b32.cont [15/16] 0.0, 128
        %4750 = vxpose.xlu0.b32.end [16/16] 0.0, 128
        %v4751 = vpop.trf.xlu0
        %v4752 = vpop.trf.xlu0
        %v4753 = vpop.trf.xlu0
        %v4754 = vpop.trf.xlu0
        %v4755 = vpop.trf.xlu0
        %v4756 = vpop.trf.xlu0
        %v4757 = vpop.trf.xlu0
        %v4758 = vpop.trf.xlu0
        %v4759 = vpop.trf.xlu0
        %v4760 = vpop.trf.xlu0
        %v4761 = vpop.trf.xlu0
        %v4762 = vpop.trf.xlu0
        %v4763 = vpop.trf.xlu0
        %v4764 = vpop.trf.xlu0
        %v4765 = vpop.trf.xlu0
        %v4766 = vpop.trf.xlu0
        %4767 = vst.msk [vmem:[%s457] sm:$0xff] %vm541, %v4719
        %4768 = vst.msk [vmem:[%s457 + $0x8] sm:$0xff] %vm541, %v4720
        %4769 = vst.msk [vmem:[%s457 + $0x10] sm:$0xff] %vm541, %v4721
        %4770 = vst.msk [vmem:[%s457 + $0x18] sm:$0xff] %vm541, %v4722
        %4771 = vst.msk [vmem:[%s457 + $0x20] sm:$0xff] %vm541, %v4723
        %4772 = vst.msk [vmem:[%s457 + $0x28] sm:$0xff] %vm541, %v4724
        %4773 = vst.msk [vmem:[%s457 + $0x30] sm:$0xff] %vm541, %v4725
        %4774 = vst.msk [vmem:[%s457 + $0x38] sm:$0xff] %vm541, %v4726
        %4775 = vst.msk [vmem:[%s457 + $0x40] sm:$0xff] %vm541, %v4751
        %4776 = vst.msk [vmem:[%s457 + $0x48] sm:$0xff] %vm541, %v4752
        %4777 = vst.msk [vmem:[%s457 + $0x50] sm:$0xff] %vm541, %v4753
        %4778 = vst.msk [vmem:[%s457 + $0x58] sm:$0xff] %vm541, %v4754
        %4779 = vst.msk [vmem:[%s457 + $0x60] sm:$0xff] %vm541, %v4755
        %4780 = vst.msk [vmem:[%s457 + $0x68] sm:$0xff] %vm541, %v4756
        %4781 = vst.msk [vmem:[%s457 + $0x70] sm:$0xff] %vm541, %v4757
        %4782 = vst.msk [vmem:[%s457 + $0x78] sm:$0xff] %vm541, %v4758
        %s4783 = sand.u32 %s274, 1
        %s4784 = scalar_lea.sflag [#allocation4], %s4783
        %s4785 = sand.u32 %s274, 1
        %s4786 = smul.addr %s4785, 128
        %s4787 = scalar_lea.vmem [#allocation11], %s4786
        // Predicated region
        $region85: #{tpu_custom_call.1} parent=63 // pred_check
          %p4788 = pneg %p284
        $region86: #{tpu_custom_call.1} parent=63 // pred_check_branch
          %4790 = sbr.rel (%p4788) target = $region88
        $region87: #{tpu_custom_call.1} parent=63 // pred_region
          %s4791 = smul.u32 2, %s30
          %s4793 = ssub.s32 2048, 2048
          %4794 = vsyncadd %s4784, %s4793
          %s4795 = smul.addr %s4791, 8
          %s4796 = smul.addr %s4795, 128
          %s4797 = scalar_lea.hbm %s11, %s4796
          %s4798 = sshll.u32 %s4787, 4
          %s4799 = int_to_ptr.vmem [resolvable:$true] %s4798
          %4804 = dma.vmem_to_hbm [thread:$0]  %s4799, 2048, %s4797, %s4784, 128, 128, 8
        $region88: #{tpu_custom_call.1} parent=63 // pred_fallthru
          _
      $region64: #{tpu_custom_call.1} parent=5 // pred_fallthru
        _
      %p4805 = scmp.le.s32.totalorder 2, %s25
      // Predicated region
      $region89: #{tpu_custom_call.1} parent=5 // pred_check
        %p4806 = pneg %p4805
      $region90: #{tpu_custom_call.1} parent=5 // pred_check_branch
        %4808 = sbr.rel (%p4806) target = $region92
      $region91: #{tpu_custom_call.1} parent=5 // pred_region
        %s4809 = ssub.s32 %s25, 2
        // Predicated region
        $region93: #{tpu_custom_call.1} parent=91 // pred_check
          %p4810 = pneg %p290
        $region94: #{tpu_custom_call.1} parent=91 // pred_check_branch
          %4812 = sbr.rel (%p4810) target = $region96
        $region95: #{tpu_custom_call.1} parent=91 // pred_region
          %s4813 = sand.u32 %s275, 1
          %s4814 = scalar_lea.sflag [#allocation4], %s4813
          %s4815 = sand.u32 %s275, 1
          %s4816 = smul.addr %s4815, 128
          %s4817 = scalar_lea.vmem [#allocation11], %s4816
          %4818 = dma.done %s4814, 2048
        $region96: #{tpu_custom_call.1} parent=91 // pred_fallthru
          _
      $region92: #{tpu_custom_call.1} parent=5 // pred_fallthru
        _
    $region6: #{tpu_custom_call.1} parent=1 // loop_footer
      %s29 = sadd.s32 1, %s25
    $region7: #{tpu_custom_call.1} parent=1 // loop_footer_branch
      %24 = sbr.rel target = $region3
    $region8: #{tpu_custom_call.1} parent=1 // loop_exit
      _
    %4819 = vsyncpa [#allocation3], 1
    %s4820 = scalar_lea.sflag [#allocation3], 1
    %4821 = vsyncpa %s4820, 1
    %4822 = vsyncpa [#allocation6], 1
    %4823 = vsyncpa [#allocation9], 1
    %4824 = vsyncpa [#allocation4], 1
    %s4825 = scalar_lea.sflag [#allocation4], 1
    %4826 = vsyncpa %s4825, 1

// kernel: tpu_custom_call.1
$region0: #{tpu_custom_call.1}
  #allocation0 [shape = 'u32[]', space=smem, size = 0x4, offset = 0x4, fixed_abs, tag = 'smem constant byte address 0x4 - core index']
  #allocation1 [shape = 'u32[144,128]{1,0:T(1,128)}', space=vmem, size = 0x12000, scoped, tag = 'internal scratch']
  %s0 = inlined_call_operand.hbm [shape: f32[4,64,64], index: 0, kind: input, shape index: {}]
  %s1 = inlined_call_operand.vmem [shape: f32[128,64], index: 1, kind: input, shape index: {}]
  %s2 = inlined_call_operand.vmem [shape: f32[64,128], index: 2, kind: input, shape index: {}]
  %s3 = inlined_call_operand.hbm [shape: f32[8,64], index: 3, kind: input, shape index: {}]
  %s4 = inlined_call_operand.vmem [shape: f32[128,128], index: 4, kind: input, shape index: {}]
  %s5 = inlined_call_operand.hbm [shape: f32[1,64], index: 5, kind: input, shape index: {}]
  %s6 = inlined_call_operand.hbm [shape: f32[1,64], index: 6, kind: input, shape index: {}]
  %s7 = inlined_call_operand.hbm [shape: bf16[64,192], index: 7, kind: input, shape index: {}]
  %s8 = inlined_call_operand.vmem [shape: f32[1,192], index: 8, kind: input, shape index: {}]
  %s9 = inlined_call_operand.vmem [shape: bf16[64,64], index: 9, kind: input, shape index: {}]
  %s10 = inlined_call_operand.vmem [shape: f32[1,64], index: 10, kind: input, shape index: {}]
  %s11 = inlined_call_operand.hbm [shape: f32[4,64,64], index: 11, kind: output, shape index: {}]
  %s12 = sld [smem:[#allocation0]]
  $region97: #{tpu_custom_call.1} parent=0
    _
  %s14 = ssub.s32 1, %s12
  %s15 = scalar_select 0, %s14, %s12
  $region1: #{tpu_custom_call.1} parent=0
    #allocation2 [shape = 'u8[131072]{0}', space=vmem, size = 0x20000, scoped, tag = 'input window, operand 0']
    #allocation3 [shape = 's32[2]{0}', space=sflag, size = 0x8, scoped, tag = 'scoped memory for tpu_custom_call.1']
    #allocation4 [shape = 's32[2]{0}', space=sflag, size = 0x8, scoped, tag = 'scoped memory for tpu_custom_call.1']
    #allocation5 [shape = 'u8[4096]{0}', space=vmem, size = 0x1000, scoped, tag = 'input window, operand 3, single buffered']
    #allocation6 [shape = 's32[1]{0}', space=sflag, size = 0x4, scoped, tag = 'scoped memory for tpu_custom_call.1']
    #allocation7 [shape = 'u8[512]{0}', space=vmem, size = 0x400, scoped, tag = 'input window, operand 5, single buffered']
    #allocation8 [shape = 'u8[512]{0}', space=vmem, size = 0x400, scoped, tag = 'input window, operand 6, single buffered']
    #allocation9 [shape = 's32[1]{0}', space=sflag, size = 0x4, scoped, tag = 'scoped memory for tpu_custom_call.1']
    #allocation10 [shape = 'u8[32768]{0}', space=vmem, size = 0x8000, scoped, tag = 'input window, operand 7, single buffered']
    #allocation11 [shape = 'u8[131072]{0}', space=vmem, size = 0x20000, scoped, tag = 'output window, operand 0']
    %16 = vsyncpa [#allocation3], 0
    %s17 = scalar_lea.sflag [#allocation3], 1
    %18 = vsyncpa %s17, 0
    %19 = vsyncpa [#allocation6], 0
    %20 = vsyncpa [#allocation9], 0
    %21 = vsyncpa [#allocation4], 0
    %s22 = scalar_lea.sflag [#allocation4], 1
    %23 = vsyncpa %s22, 0
    loop: start=0, step=1, limit=4
    $region2: #{tpu_custom_call.1} parent=1 // loop_pre_header
      _
    $region3: #{tpu_custom_call.1} parent=1 // loop_header
      %s25 = sphi 0, %s29
      %p26 = scmp.ge.s32.totalorder %s25, 4
      %s35 = sphi 0, %s37
      %s38 = sphi 0, %s35
      %s39 = sphi 0, %s38
      %s55 = sphi 0, %s39
      %s59 = sphi 0, %s59
      %s61 = sphi 0, %s59
      %s62 = sphi 0, %s61
      %s76 = sphi 0, %s62
      %s80 = sphi 0, %s80
      %s82 = sphi 0, %s80
      %s83 = sphi 0, %s82
      %s97 = sphi 0, %s83
      %s101 = sphi 0, %s101
      %s103 = sphi 0, %s101
      %s104 = sphi 0, %s103
      %s118 = sphi 0, %s104
      %s122 = sphi 0, %s122
      %s124 = sphi 0, %s122
      %s125 = sphi 0, %s124
      %s139 = sphi 0, %s125
      %s143 = sphi 0, %s143
      %s145 = sphi 0, %s143
      %s146 = sphi 0, %s145
      %s160 = sphi 0, %s146
      %s164 = sphi 0, %s164
      %s166 = sphi 0, %s164
      %s167 = sphi 0, %s166
      %s181 = sphi 0, %s167
      %s185 = sphi 0, %s185
      %s187 = sphi 0, %s185
      %s188 = sphi 0, %s187
      %s202 = sphi 0, %s188
      %s206 = sphi 0, %s206
      %s208 = sphi 0, %s206
      %s209 = sphi 0, %s208
      %s223 = sphi 0, %s209
      %s227 = sphi 0, %s227
      %s229 = sphi 0, %s227
      %s230 = sphi 0, %s229
      %s244 = sphi 0, %s230
      %s248 = sphi 0, %s248
      %s250 = sphi 0, %s248
      %s251 = sphi 0, %s250
      %s265 = sphi 0, %s251
      %s271 = sphi 0, %s273
      %s274 = sphi 0, %s271
      %s275 = sphi 0, %s274
      %s291 = sphi 0, %s275
    $region4: #{tpu_custom_call.1} parent=1 // loop_header_branch
      %28 = sbr.rel (%p26) target = $region8
    $region5: #{tpu_custom_call.1} parent=1 // loop_body
      %s30 = ssub.s32 %s25, 1
      %s31 = ssub.s32 %s25, 2
      %s32 = sadd.s32 %s25, 1
      %s33 = ssub.s32 %s25, %s32
      %p34 = scmp.eq.s32.totalorder %s33, 0
      %s36 = sadd.s32 %s35, 1
      %s37 = scalar_select %p34, %s35, %s36
      %p40 = pneg %p34
      %p41 = scmp.eq.s32.totalorder %s25, 1
      %p42 = por %p40, %p41
      %p43 = scmp.ne.s32.totalorder %s35, %s38
      %p44 = scmp.eq.s32.totalorder %s25, 0
      %p45 = por %p43, %p44
      %p46 = scmp.ne.s32.totalorder %s35, %s38
      %p47 = scmp.eq.s32.totalorder %s30, 1
      %p48 = por %p46, %p47
      %p49 = scmp.ne.s32.totalorder %s38, %s39
      %p50 = scmp.eq.s32.totalorder %s30, 0
      %p51 = por %p49, %p50
      %p52 = scmp.ne.s32.totalorder %s38, %s39
      %p53 = scmp.eq.s32.totalorder %s31, 1
      %p54 = por %p52, %p53
      %p56 = scmp.ne.s32.totalorder %s39, %s55
      %p57 = scmp.eq.s32.totalorder %s31, 0
      %p58 = por %p56, %p57
      %s60 = sadd.s32 %s59, 1
      %p63 = scmp.eq.s32.totalorder %s25, 1
      %p64 = scmp.ne.s32.totalorder %s59, %s61
      %p65 = scmp.eq.s32.totalorder %s25, 0
      %p66 = por %p64, %p65
      %p67 = scmp.ne.s32.totalorder %s59, %s61
      %p68 = scmp.eq.s32.totalorder %s30, 1
      %p69 = por %p67, %p68
      %p70 = scmp.ne.s32.totalorder %s61, %s62
      %p71 = scmp.eq.s32.totalorder %s30, 0
      %p72 = por %p70, %p71
      %p73 = scmp.ne.s32.totalorder %s61, %s62
      %p74 = scmp.eq.s32.totalorder %s31, 1
      %p75 = por %p73, %p74
      %p77 = scmp.ne.s32.totalorder %s62, %s76
      %p78 = scmp.eq.s32.totalorder %s31, 0
      %p79 = por %p77, %p78
      %s81 = sadd.s32 %s80, 1
      %p84 = scmp.eq.s32.totalorder %s25, 1
      %p85 = scmp.ne.s32.totalorder %s80, %s82
      %p86 = scmp.eq.s32.totalorder %s25, 0
      %p87 = por %p85, %p86
      %p88 = scmp.ne.s32.totalorder %s80, %s82
      %p89 = scmp.eq.s32.totalorder %s30, 1
      %p90 = por %p88, %p89
      %p91 = scmp.ne.s32.totalorder %s82, %s83
      %p92 = scmp.eq.s32.totalorder %s30, 0
      %p93 = por %p91, %p92
      %p94 = scmp.ne.s32.totalorder %s82, %s83
      %p95 = scmp.eq.s32.totalorder %s31, 1
      %p96 = por %p94, %p95
      %p98 = scmp.ne.s32.totalorder %s83, %s97
      %p99 = scmp.eq.s32.totalorder %s31, 0
      %p100 = por %p98, %p99
      %s102 = sadd.s32 %s101, 1
      %p105 = scmp.eq.s32.totalorder %s25, 1
      %p106 = scmp.ne.s32.totalorder %s101, %s103
      %p107 = scmp.eq.s32.totalorder %s25, 0
      %p108 = por %p106, %p107
      %p109 = scmp.ne.s32.totalorder %s101, %s103
      %p110 = scmp.eq.s32.totalorder %s30, 1
      %p111 = por %p109, %p110
      %p112 = scmp.ne.s32.totalorder %s103, %s104
      %p113 = scmp.eq.s32.totalorder %s30, 0
      %p114 = por %p112, %p113
      %p115 = scmp.ne.s32.totalorder %s103, %s104
      %p116 = scmp.eq.s32.totalorder %s31, 1
      %p117 = por %p115, %p116
      %p119 = scmp.ne.s32.totalorder %s104, %s118
      %p120 = scmp.eq.s32.totalorder %s31, 0
      %p121 = por %p119, %p120
      %s123 = sadd.s32 %s122, 1
      %p126 = scmp.eq.s32.totalorder %s25, 1
      %p127 = scmp.ne.s32.totalorder %s122, %s124
      %p128 = scmp.eq.s32.totalorder %s25, 0
      %p129 = por %p127, %p128
      %p130 = scmp.ne.s32.totalorder %s122, %s124
      %p131 = scmp.eq.s32.totalorder %s30, 1
      %p132 = por %p130, %p131
      %p133 = scmp.ne.s32.totalorder %s124, %s125
      %p134 = scmp.eq.s32.totalorder %s30, 0
      %p135 = por %p133, %p134
      %p136 = scmp.ne.s32.totalorder %s124, %s125
      %p137 = scmp.eq.s32.totalorder %s31, 1
      %p138 = por %p136, %p137
      %p140 = scmp.ne.s32.totalorder %s125, %s139
      %p141 = scmp.eq.s32.totalorder %s31, 0
      %p142 = por %p140, %p141
      %s144 = sadd.s32 %s143, 1
      %p147 = scmp.eq.s32.totalorder %s25, 1
      %p148 = scmp.ne.s32.totalorder %s143, %s145
      %p149 = scmp.eq.s32.totalorder %s25, 0
      %p150 = por %p148, %p149
      %p151 = scmp.ne.s32.totalorder %s143, %s145
      %p152 = scmp.eq.s32.totalorder %s30, 1
      %p153 = por %p151, %p152
      %p154 = scmp.ne.s32.totalorder %s145, %s146
      %p155 = scmp.eq.s32.totalorder %s30, 0
      %p156 = por %p154, %p155
      %p157 = scmp.ne.s32.totalorder %s145, %s146
      %p158 = scmp.eq.s32.totalorder %s31, 1
      %p159 = por %p157, %p158
      %p161 = scmp.ne.s32.totalorder %s146, %s160
      %p162 = scmp.eq.s32.totalorder %s31, 0
      %p163 = por %p161, %p162
      %s165 = sadd.s32 %s164, 1
      %p168 = scmp.eq.s32.totalorder %s25, 1
      %p169 = scmp.ne.s32.totalorder %s164, %s166
      %p170 = scmp.eq.s32.totalorder %s25, 0
      %p171 = por %p169, %p170
      %p172 = scmp.ne.s32.totalorder %s164, %s166
      %p173 = scmp.eq.s32.totalorder %s30, 1
      %p174 = por %p172, %p173
      %p175 = scmp.ne.s32.totalorder %s166, %s167
      %p176 = scmp.eq.s32.totalorder %s30, 0
      %p177 = por %p175, %p176
      %p178 = scmp.ne.s32.totalorder %s166, %s167
      %p179 = scmp.eq.s32.totalorder %s31, 1
      %p180 = por %p178, %p179
      %p182 = scmp.ne.s32.totalorder %s167, %s181
      %p183 = scmp.eq.s32.totalorder %s31, 0
      %p184 = por %p182, %p183
      %s186 = sadd.s32 %s185, 1
      %p189 = scmp.eq.s32.totalorder %s25, 1
      %p190 = scmp.ne.s32.totalorder %s185, %s187
      %p191 = scmp.eq.s32.totalorder %s25, 0
      %p192 = por %p190, %p191
      %p193 = scmp.ne.s32.totalorder %s185, %s187
      %p194 = scmp.eq.s32.totalorder %s30, 1
      %p195 = por %p193, %p194
      %p196 = scmp.ne.s32.totalorder %s187, %s188
      %p197 = scmp.eq.s32.totalorder %s30, 0
      %p198 = por %p196, %p197
      %p199 = scmp.ne.s32.totalorder %s187, %s188
      %p200 = scmp.eq.s32.totalorder %s31, 1
      %p201 = por %p199, %p200
      %p203 = scmp.ne.s32.totalorder %s188, %s202
      %p204 = scmp.eq.s32.totalorder %s31, 0
      %p205 = por %p203, %p204
      %s207 = sadd.s32 %s206, 1
      %p210 = scmp.eq.s32.totalorder %s25, 1
      %p211 = scmp.ne.s32.totalorder %s206, %s208
      %p212 = scmp.eq.s32.totalorder %s25, 0
      %p213 = por %p211, %p212
      %p214 = scmp.ne.s32.totalorder %s206, %s208
      %p215 = scmp.eq.s32.totalorder %s30, 1
      %p216 = por %p214, %p215
      %p217 = scmp.ne.s32.totalorder %s208, %s209
      %p218 = scmp.eq.s32.totalorder %s30, 0
      %p219 = por %p217, %p218
      %p220 = scmp.ne.s32.totalorder %s208, %s209
      %p221 = scmp.eq.s32.totalorder %s31, 1
      %p222 = por %p220, %p221
      %p224 = scmp.ne.s32.totalorder %s209, %s223
      %p225 = scmp.eq.s32.totalorder %s31, 0
      %p226 = por %p224, %p225
      %s228 = sadd.s32 %s227, 1
      %p231 = scmp.eq.s32.totalorder %s25, 1
      %p232 = scmp.ne.s32.totalorder %s227, %s229
      %p233 = scmp.eq.s32.totalorder %s25, 0
      %p234 = por %p232, %p233
      %p235 = scmp.ne.s32.totalorder %s227, %s229
      %p236 = scmp.eq.s32.totalorder %s30, 1
      %p237 = por %p235, %p236
      %p238 = scmp.ne.s32.totalorder %s229, %s230
      %p239 = scmp.eq.s32.totalorder %s30, 0
      %p240 = por %p238, %p239
      %p241 = scmp.ne.s32.totalorder %s229, %s230
      %p242 = scmp.eq.s32.totalorder %s31, 1
      %p243 = por %p241, %p242
      %p245 = scmp.ne.s32.totalorder %s230, %s244
      %p246 = scmp.eq.s32.totalorder %s31, 0
      %p247 = por %p245, %p246
      %s249 = sadd.s32 %s248, 1
      %p252 = scmp.eq.s32.totalorder %s25, 1
      %p253 = scmp.ne.s32.totalorder %s248, %s250
      %p254 = scmp.eq.s32.totalorder %s25, 0
      %p255 = por %p253, %p254
      %p256 = scmp.ne.s32.totalorder %s248, %s250
      %p257 = scmp.eq.s32.totalorder %s30, 1
      %p258 = por %p256, %p257
      %p259 = scmp.ne.s32.totalorder %s250, %s251
      %p260 = scmp.eq.s32.totalorder %s30, 0
      %p261 = por %p259, %p260
      %p262 = scmp.ne.s32.totalorder %s250, %s251
      %p263 = scmp.eq.s32.totalorder %s31, 1
      %p264 = por %p262, %p263
      %p266 = scmp.ne.s32.totalorder %s251, %s265
      %p267 = scmp.eq.s32.totalorder %s31, 0
      %p268 = por %p266, %p267
      %s269 = ssub.s32 %s25, %s32
      %p270 = scmp.eq.s32.totalorder %s269, 0
      %s272 = sadd.s32 %s271, 1
      %s273 = scalar_select %p270, %s271, %s272
      %p276 = pneg %p270
      %p277 = scmp.eq.s32.totalorder %s25, 1
      %p278 = por %p276, %p277
      %p279 = scmp.ne.s32.totalorder %s271, %s274
      %p280 = scmp.eq.s32.totalorder %s25, 0
      %p281 = por %p279, %p280
      %p282 = scmp.ne.s32.totalorder %s271, %s274
      %p283 = scmp.eq.s32.totalorder %s30, 1
      %p284 = por %p282, %p283
      %p285 = scmp.ne.s32.totalorder %s274, %s275
      %p286 = scmp.eq.s32.totalorder %s30, 0
      %p287 = por %p285, %p286
      %p288 = scmp.ne.s32.totalorder %s274, %s275
      %p289 = scmp.eq.s32.totalorder %s31, 1
      %p290 = por %p288, %p289
      %p292 = scmp.ne.s32.totalorder %s275, %s291
      %p293 = scmp.eq.s32.totalorder %s31, 0
      %p294 = por %p292, %p293
      %p295 = scmp.le.s32.totalorder 1, %s25
      %p296 = scmp.lt.s32.totalorder %s25, 3
      %p297 = pnand %p295, %p296
      %p298 = pneg %p297
      // Predicated region
      $region9: #{tpu_custom_call.1} parent=5 // pred_check
        _
      $region10: #{tpu_custom_call.1} parent=5 // pred_check_branch
        %300 = sbr.rel (%p297) target = $region12
      $region11: #{tpu_custom_call.1} parent=5 // pred_region
        %s301 = ssub.s32 %s25, 1
        // Predicated region
        $region13: #{tpu_custom_call.1} parent=11 // pred_check
          %p302 = pneg %p72
        $region14: #{tpu_custom_call.1} parent=11 // pred_check_branch
          %304 = sbr.rel (%p302) target = $region16
        $region15: #{tpu_custom_call.1} parent=11 // pred_region
          _
        $region16: #{tpu_custom_call.1} parent=11 // pred_fallthru
          _
        // Predicated region
        $region17: #{tpu_custom_call.1} parent=11 // pred_check
          %p305 = pneg %p93
        $region18: #{tpu_custom_call.1} parent=11 // pred_check_branch
          %307 = sbr.rel (%p305) target = $region20
        $region19: #{tpu_custom_call.1} parent=11 // pred_region
          _
        $region20: #{tpu_custom_call.1} parent=11 // pred_fallthru
          _
        // Predicated region
        $region21: #{tpu_custom_call.1} parent=11 // pred_check
          %p308 = pneg %p114
        $region22: #{tpu_custom_call.1} parent=11 // pred_check_branch
          %310 = sbr.rel (%p308) target = $region24
        $region23: #{tpu_custom_call.1} parent=11 // pred_region
          %s312 = ssub.s32 128, 128
          %313 = vsyncadd [#allocation6], %s312
          %s315 = sshll.u32 [#allocation5], 4
          %s316 = int_to_ptr.vmem [resolvable:$true] %s315
          %318 = dma.hbm_to_vmem [thread:$0]  %s3, 128, %s316, [#allocation6]
        $region24: #{tpu_custom_call.1} parent=11 // pred_fallthru
          _
        // Predicated region
        $region25: #{tpu_custom_call.1} parent=11 // pred_check
          %p319 = pneg %p135
        $region26: #{tpu_custom_call.1} parent=11 // pred_check_branch
          %321 = sbr.rel (%p319) target = $region28
        $region27: #{tpu_custom_call.1} parent=11 // pred_region
          _
        $region28: #{tpu_custom_call.1} parent=11 // pred_fallthru
          _
        // Predicated region
        $region29: #{tpu_custom_call.1} parent=11 // pred_check
          %p322 = pneg %p156
        $region30: #{tpu_custom_call.1} parent=11 // pred_check_branch
          %324 = sbr.rel (%p322) target = $region32
        $region31: #{tpu_custom_call.1} parent=11 // pred_region
          %s326 = ssub.s32 16, 16
          %327 = vsyncadd [#allocation6], %s326
          %s329 = sshll.u32 [#allocation7], 4
          %s330 = int_to_ptr.vmem [resolvable:$true] %s329
          %332 = dma.hbm_to_vmem [thread:$0]  %s5, 16, %s330, [#allocation6]
        $region32: #{tpu_custom_call.1} parent=11 // pred_fallthru
          _
        // Predicated region
        $region33: #{tpu_custom_call.1} parent=11 // pred_check
          %p333 = pneg %p177
        $region34: #{tpu_custom_call.1} parent=11 // pred_check_branch
          %335 = sbr.rel (%p333) target = $region36
        $region35: #{tpu_custom_call.1} parent=11 // pred_region
          %s337 = ssub.s32 16, 16
          %338 = vsyncadd [#allocation9], %s337
          %s340 = sshll.u32 [#allocation8], 4
          %s341 = int_to_ptr.vmem [resolvable:$true] %s340
          %343 = dma.hbm_to_vmem [thread:$0]  %s6, 16, %s341, [#allocation9]
        $region36: #{tpu_custom_call.1} parent=11 // pred_fallthru
          _
        // Predicated region
        $region37: #{tpu_custom_call.1} parent=11 // pred_check
          %p344 = pneg %p198
        $region38: #{tpu_custom_call.1} parent=11 // pred_check_branch
          %346 = sbr.rel (%p344) target = $region40
        $region39: #{tpu_custom_call.1} parent=11 // pred_region
          %s348 = ssub.s32 1024, 1024
          %349 = vsyncadd [#allocation9], %s348
          %s350 = sshll.u32 [#allocation10], 4
          %s351 = int_to_ptr.vmem [resolvable:$true] %s350
          %356 = dma.hbm_to_vmem [thread:$0]  %s7, 1024, %s351, [#allocation9], 128, 128, 8
        $region40: #{tpu_custom_call.1} parent=11 // pred_fallthru
          _
        // Predicated region
        $region41: #{tpu_custom_call.1} parent=11 // pred_check
          %p357 = pneg %p219
        $region42: #{tpu_custom_call.1} parent=11 // pred_check_branch
          %359 = sbr.rel (%p357) target = $region44
        $region43: #{tpu_custom_call.1} parent=11 // pred_region
          _
        $region44: #{tpu_custom_call.1} parent=11 // pred_fallthru
          _
        // Predicated region
        $region45: #{tpu_custom_call.1} parent=11 // pred_check
          %p360 = pneg %p240
        $region46: #{tpu_custom_call.1} parent=11 // pred_check_branch
          %362 = sbr.rel (%p360) target = $region48
        $region47: #{tpu_custom_call.1} parent=11 // pred_region
          _
        $region48: #{tpu_custom_call.1} parent=11 // pred_fallthru
          _
        // Predicated region
        $region49: #{tpu_custom_call.1} parent=11 // pred_check
          %p363 = pneg %p261
        $region50: #{tpu_custom_call.1} parent=11 // pred_check_branch
          %365 = sbr.rel (%p363) target = $region52
        $region51: #{tpu_custom_call.1} parent=11 // pred_region
          _
        $region52: #{tpu_custom_call.1} parent=11 // pred_fallthru
          _
      $region12: #{tpu_custom_call.1} parent=5 // pred_fallthru
        _
      %p366 = scmp.lt.s32.totalorder %s25, 2
      // Predicated region
      $region53: #{tpu_custom_call.1} parent=5 // pred_check
        %p367 = pneg %p366
      $region54: #{tpu_custom_call.1} parent=5 // pred_check_branch
        %369 = sbr.rel (%p367) target = $region56
      $region55: #{tpu_custom_call.1} parent=5 // pred_region
        // Predicated region
        $region57: #{tpu_custom_call.1} parent=55 // pred_check
          %p370 = pneg %p45
        $region58: #{tpu_custom_call.1} parent=55 // pred_check_branch
          %372 = sbr.rel (%p370) target = $region60
        $region59: #{tpu_custom_call.1} parent=55 // pred_region
          %s373 = sand.u32 %s35, 1
          %s374 = scalar_lea.sflag [#allocation3], %s373
          %s375 = sand.u32 %s35, 1
          %s376 = smul.addr %s375, 128
          %s377 = scalar_lea.vmem [#allocation2], %s376
          %s378 = smul.u32 2, %s25
          %s380 = ssub.s32 2048, 2048
          %381 = vsyncadd %s374, %s380
          %s382 = smul.addr %s378, 8
          %s383 = smul.addr %s382, 128
          %s384 = scalar_lea.hbm %s0, %s383
          %s385 = sshll.u32 %s377, 4
          %s386 = int_to_ptr.vmem [resolvable:$true] %s385
          %391 = dma.hbm_to_vmem [thread:$0]  %s384, 2048, %s386, %s374, 128, 128, 8
        $region60: #{tpu_custom_call.1} parent=55 // pred_fallthru
          _
      $region56: #{tpu_custom_call.1} parent=5 // pred_fallthru
        _
      %p392 = scmp.le.s32.totalorder 1, %s25
      %p393 = scmp.lt.s32.totalorder %s25, 3
      %p394 = pnand %p392, %p393
      %p395 = pneg %p394
      // Predicated region
      $region61: #{tpu_custom_call.1} parent=5 // pred_check
        _
      $region62: #{tpu_custom_call.1} parent=5 // pred_check_branch
        %397 = sbr.rel (%p394) target = $region64
      $region63: #{tpu_custom_call.1} parent=5 // pred_region
        %s398 = ssub.s32 %s25, 1
        %s399 = sand.u32 %s38, 1
        %s400 = scalar_lea.sflag [#allocation3], %s399
        %s401 = sand.u32 %s38, 1
        %s402 = smul.addr %s401, 128
        %s403 = scalar_lea.vmem [#allocation2], %s402
        // Predicated region
        $region65: #{tpu_custom_call.1} parent=63 // pred_check
          %p404 = pneg %p51
        $region66: #{tpu_custom_call.1} parent=63 // pred_check_branch
          %406 = sbr.rel (%p404) target = $region68
        $region67: #{tpu_custom_call.1} parent=63 // pred_region
          %407 = dma.done %s400, 2048
        $region68: #{tpu_custom_call.1} parent=63 // pred_fallthru
          _
        // Predicated region
        $region69: #{tpu_custom_call.1} parent=63 // pred_check
          %p408 = pneg %p114
        $region70: #{tpu_custom_call.1} parent=63 // pred_check_branch
          %410 = sbr.rel (%p408) target = $region72
        $region71: #{tpu_custom_call.1} parent=63 // pred_region
          %411 = dma.done [#allocation6], 128
        $region72: #{tpu_custom_call.1} parent=63 // pred_fallthru
          _
        // Predicated region
        $region73: #{tpu_custom_call.1} parent=63 // pred_check
          %p412 = pneg %p156
        $region74: #{tpu_custom_call.1} parent=63 // pred_check_branch
          %414 = sbr.rel (%p412) target = $region76
        $region75: #{tpu_custom_call.1} parent=63 // pred_region
          %415 = dma.done [#allocation6], 16
        $region76: #{tpu_custom_call.1} parent=63 // pred_fallthru
          _
        // Predicated region
        $region77: #{tpu_custom_call.1} parent=63 // pred_check
          %p416 = pneg %p177
        $region78: #{tpu_custom_call.1} parent=63 // pred_check_branch
          %418 = sbr.rel (%p416) target = $region80
        $region79: #{tpu_custom_call.1} parent=63 // pred_region
          %419 = dma.done [#allocation9], 16
        $region80: #{tpu_custom_call.1} parent=63 // pred_fallthru
          _
        // Predicated region
        $region81: #{tpu_custom_call.1} parent=63 // pred_check
          %p420 = pneg %p198
        $region82: #{tpu_custom_call.1} parent=63 // pred_check_branch
          %422 = sbr.rel (%p420) target = $region84
        $region83: #{tpu_custom_call.1} parent=63 // pred_region
          %423 = dma.done [#allocation9], 1024
        $region84: #{tpu_custom_call.1} parent=63 // pred_fallthru
          _
        %s424 = sand.u32 %s38, 1
        %s425 = scalar_lea.sflag [#allocation3], %s424
        %s426 = sand.u32 %s38, 1
        %s427 = smul.addr %s426, 128
        %s428 = scalar_lea.vmem [#allocation2], %s427
        %p429 = pneg %p51
        %p430 = pneg %p48
        %p431 = pneg %p72
        %p432 = pneg %p69
        %p433 = pneg %p93
        %p434 = pneg %p90
        %p435 = pneg %p114
        %p436 = pneg %p111
        %p437 = pneg %p135
        %p438 = pneg %p132
        %p439 = pneg %p156
        %p440 = pneg %p153
        %p441 = pneg %p177
        %p442 = pneg %p174
        %p443 = pneg %p198
        %p444 = pneg %p195
        %p445 = pneg %p219
        %p446 = pneg %p216
        %p447 = pneg %p240
        %p448 = pneg %p237
        %p449 = pneg %p261
        %p450 = pneg %p258
        %p451 = pneg %p287
        %p452 = pneg %p284
        %s453 = sand.u32 %s274, 1
        %s454 = scalar_lea.sflag [#allocation4], %s453
        %s455 = sand.u32 %s274, 1
        %s456 = smul.addr %s455, 128
        %s457 = scalar_lea.vmem [#allocation11], %s456
        %s458 = smul.u32 2, %s30
        %s459 = smul.u32 2, %s30
        %v461 = vld [vmem:[%s403] sm:$0xff]
        %v462 = vld [vmem:[%s403 + $0x8] sm:$0xff]
        %v463 = vld [vmem:[%s403 + $0x10] sm:$0xff]
        %v464 = vld [vmem:[%s403 + $0x18] sm:$0xff]
        %v465 = vld [vmem:[%s403 + $0x20] sm:$0xff]
        %v466 = vld [vmem:[%s403 + $0x28] sm:$0xff]
        %v467 = vld [vmem:[%s403 + $0x30] sm:$0xff]
        %v468 = vld [vmem:[%s403 + $0x38] sm:$0xff]
        %v469 = vld [vmem:[%s403 + $0x40] sm:$0xff]
        %v470 = vld [vmem:[%s403 + $0x48] sm:$0xff]
        %v471 = vld [vmem:[%s403 + $0x50] sm:$0xff]
        %v472 = vld [vmem:[%s403 + $0x58] sm:$0xff]
        %v473 = vld [vmem:[%s403 + $0x60] sm:$0xff]
        %v474 = vld [vmem:[%s403 + $0x68] sm:$0xff]
        %v475 = vld [vmem:[%s403 + $0x70] sm:$0xff]
        %v476 = vld [vmem:[%s403 + $0x78] sm:$0xff]
        %477 = vxpose.xlu0.b32.start [1/16] %v461, 128
        %478 = vxpose.xlu0.b32.cont [2/16] %v462, 128
        %479 = vxpose.xlu0.b32.cont [3/16] %v463, 128
        %480 = vxpose.xlu0.b32.cont [4/16] %v464, 128
        %481 = vxpose.xlu0.b32.cont [5/16] %v465, 128
        %482 = vxpose.xlu0.b32.cont [6/16] %v466, 128
        %483 = vxpose.xlu0.b32.cont [7/16] %v467, 128
        %484 = vxpose.xlu0.b32.cont [8/16] %v468, 128
        %485 = vxpose.xlu0.b32.cont [9/16] 0.0, 128
        %486 = vxpose.xlu0.b32.cont [10/16] 0.0, 128
        %487 = vxpose.xlu0.b32.cont [11/16] 0.0, 128
        %488 = vxpose.xlu0.b32.cont [12/16] 0.0, 128
        %489 = vxpose.xlu0.b32.cont [13/16] 0.0, 128
        %490 = vxpose.xlu0.b32.cont [14/16] 0.0, 128
        %491 = vxpose.xlu0.b32.cont [15/16] 0.0, 128
        %492 = vxpose.xlu0.b32.end [16/16] 0.0, 128
        %v493 = vpop.trf.xlu0
        %v494 = vpop.trf.xlu0
        %v495 = vpop.trf.xlu0
        %v496 = vpop.trf.xlu0
        %v497 = vpop.trf.xlu0
        %v498 = vpop.trf.xlu0
        %v499 = vpop.trf.xlu0
        %v500 = vpop.trf.xlu0
        %v501 = vpop.trf.xlu0
        %v502 = vpop.trf.xlu0
        %v503 = vpop.trf.xlu0
        %v504 = vpop.trf.xlu0
        %v505 = vpop.trf.xlu0
        %v506 = vpop.trf.xlu0
        %v507 = vpop.trf.xlu0
        %v508 = vpop.trf.xlu0
        %509 = vxpose.xlu0.b32.start [1/16] %v469, 128
        %510 = vxpose.xlu0.b32.cont [2/16] %v470, 128
        %511 = vxpose.xlu0.b32.cont [3/16] %v471, 128
        %512 = vxpose.xlu0.b32.cont [4/16] %v472, 128
        %513 = vxpose.xlu0.b32.cont [5/16] %v473, 128
        %514 = vxpose.xlu0.b32.cont [6/16] %v474, 128
        %515 = vxpose.xlu0.b32.cont [7/16] %v475, 128
        %516 = vxpose.xlu0.b32.cont [8/16] %v476, 128
        %517 = vxpose.xlu0.b32.cont [9/16] 0.0, 128
        %518 = vxpose.xlu0.b32.cont [10/16] 0.0, 128
        %519 = vxpose.xlu0.b32.cont [11/16] 0.0, 128
        %520 = vxpose.xlu0.b32.cont [12/16] 0.0, 128
        %521 = vxpose.xlu0.b32.cont [13/16] 0.0, 128
        %522 = vxpose.xlu0.b32.cont [14/16] 0.0, 128
        %523 = vxpose.xlu0.b32.cont [15/16] 0.0, 128
        %524 = vxpose.xlu0.b32.end [16/16] 0.0, 128
        %v525 = vpop.trf.xlu0
        %v526 = vpop.trf.xlu0
        %v527 = vpop.trf.xlu0
        %v528 = vpop.trf.xlu0
        %v529 = vpop.trf.xlu0
        %v530 = vpop.trf.xlu0
        %v531 = vpop.trf.xlu0
        %v532 = vpop.trf.xlu0
        %v533 = vpop.trf.xlu0
        %v534 = vpop.trf.xlu0
        %v535 = vpop.trf.xlu0
        %v536 = vpop.trf.xlu0
        %v537 = vpop.trf.xlu0
        %v538 = vpop.trf.xlu0
        %v539 = vpop.trf.xlu0
        %v540 = vpop.trf.xlu0
        %vm541 = vcmask 523264
        %v542 = vsel %vm541, %v493, 0.0
        %v543 = vsel %vm541, %v494, 0.0
        %v544 = vadd.f32 %v542, %v543
        %v545 = vsel %vm541, %v495, 0.0
        %v546 = vadd.f32 %v544, %v545
        %v547 = vsel %vm541, %v496, 0.0
        %v548 = vadd.f32 %v546, %v547
        %v549 = vsel %vm541, %v497, 0.0
        %v550 = vadd.f32 %v548, %v549
        %v551 = vsel %vm541, %v498, 0.0
        %v552 = vadd.f32 %v550, %v551
        %v553 = vsel %vm541, %v499, 0.0
        %v554 = vadd.f32 %v552, %v553
        %v555 = vsel %vm541, %v500, 0.0
        %v556 = vadd.f32 %v554, %v555
        %v557 = vrot.slane %v556, 4
        %v558 = vadd.f32 %v556, %v557
        %v559 = vrot.slane %v558, 2
        %v560 = vadd.f32 %v558, %v559
        %v561 = vrot.slane %v560, 1
        %v562 = vadd.f32 %v560, %v561
        %v563 = vsel %vm541, %v525, 0.0
        %v564 = vsel %vm541, %v526, 0.0
        %v565 = vadd.f32 %v563, %v564
        %v566 = vsel %vm541, %v527, 0.0
        %v567 = vadd.f32 %v565, %v566
        %v568 = vsel %vm541, %v528, 0.0
        %v569 = vadd.f32 %v567, %v568
        %v570 = vsel %vm541, %v529, 0.0
        %v571 = vadd.f32 %v569, %v570
        %v572 = vsel %vm541, %v530, 0.0
        %v573 = vadd.f32 %v571, %v572
        %v574 = vsel %vm541, %v531, 0.0
        %v575 = vadd.f32 %v573, %v574
        %v576 = vsel %vm541, %v532, 0.0
        %v577 = vadd.f32 %v575, %v576
        %v578 = vrot.slane %v577, 4
        %v579 = vadd.f32 %v577, %v578
        %v580 = vrot.slane %v579, 2
        %v581 = vadd.f32 %v579, %v580
        %v582 = vrot.slane %v581, 1
        %v583 = vadd.f32 %v581, %v582
        %v584 = vmul.f32 %v493, %v493
        %v585 = vmul.f32 %v494, %v494
        %v586 = vmul.f32 %v495, %v495
        %v587 = vmul.f32 %v496, %v496
        %v588 = vmul.f32 %v497, %v497
        %v589 = vmul.f32 %v498, %v498
        %v590 = vmul.f32 %v499, %v499
        %v591 = vmul.f32 %v500, %v500
        %v592 = vmul.f32 %v525, %v525
        %v593 = vmul.f32 %v526, %v526
        %v594 = vmul.f32 %v527, %v527
        %v595 = vmul.f32 %v528, %v528
        %v596 = vmul.f32 %v529, %v529
        %v597 = vmul.f32 %v530, %v530
        %v598 = vmul.f32 %v531, %v531
        %v599 = vmul.f32 %v532, %v532
        %v600 = vsel %vm541, %v584, 0.0
        %v601 = vsel %vm541, %v585, 0.0
        %v602 = vadd.f32 %v600, %v601
        %v603 = vsel %vm541, %v586, 0.0
        %v604 = vadd.f32 %v602, %v603
        %v605 = vsel %vm541, %v587, 0.0
        %v606 = vadd.f32 %v604, %v605
        %v607 = vsel %vm541, %v588, 0.0
        %v608 = vadd.f32 %v606, %v607
        %v609 = vsel %vm541, %v589, 0.0
        %v610 = vadd.f32 %v608, %v609
        %v611 = vsel %vm541, %v590, 0.0
        %v612 = vadd.f32 %v610, %v611
        %v613 = vsel %vm541, %v591, 0.0
        %v614 = vadd.f32 %v612, %v613
        %v615 = vrot.slane %v614, 4
        %v616 = vadd.f32 %v614, %v615
        %v617 = vrot.slane %v616, 2
        %v618 = vadd.f32 %v616, %v617
        %v619 = vrot.slane %v618, 1
        %v620 = vadd.f32 %v618, %v619
        %v621 = vsel %vm541, %v592, 0.0
        %v622 = vsel %vm541, %v593, 0.0
        %v623 = vadd.f32 %v621, %v622
        %v624 = vsel %vm541, %v594, 0.0
        %v625 = vadd.f32 %v623, %v624
        %v626 = vsel %vm541, %v595, 0.0
        %v627 = vadd.f32 %v625, %v626
        %v628 = vsel %vm541, %v596, 0.0
        %v629 = vadd.f32 %v627, %v628
        %v630 = vsel %vm541, %v597, 0.0
        %v631 = vadd.f32 %v629, %v630
        %v632 = vsel %vm541, %v598, 0.0
        %v633 = vadd.f32 %v631, %v632
        %v634 = vsel %vm541, %v599, 0.0
        %v635 = vadd.f32 %v633, %v634
        %v636 = vrot.slane %v635, 4
        %v637 = vadd.f32 %v635, %v636
        %v638 = vrot.slane %v637, 2
        %v639 = vadd.f32 %v637, %v638
        %v640 = vrot.slane %v639, 1
        %v641 = vadd.f32 %v639, %v640
        %vm644 = vcmask 1041409
        %v645 = vsel %vm644, %v583, %v562
        %v649 = vsel %vm644, %v641, %v620
        %650 = vrot.lane.b32.xlu0 %v649, 64
        %v651 = vpop.permute.xlu0 %650
        %v653 = vsel %vm541, %v645, %v651
        %v654 = vld [vmem:[%s1] sm:$0xff]
        %v655 = vld [vmem:[%s1 + $0x8] sm:$0xff]
        %v656 = vld [vmem:[%s1 + $0x10] sm:$0xff]
        %v657 = vld [vmem:[%s1 + $0x18] sm:$0xff]
        %v658 = vld [vmem:[%s1 + $0x20] sm:$0xff]
        %v659 = vld [vmem:[%s1 + $0x28] sm:$0xff]
        %v660 = vld [vmem:[%s1 + $0x30] sm:$0xff]
        %v661 = vld [vmem:[%s1 + $0x38] sm:$0xff]
        %v662 = vld [vmem:[%s1 + $0x40] sm:$0xff]
        %v663 = vld [vmem:[%s1 + $0x48] sm:$0xff]
        %v664 = vld [vmem:[%s1 + $0x50] sm:$0xff]
        %v665 = vld [vmem:[%s1 + $0x58] sm:$0xff]
        %v666 = vld [vmem:[%s1 + $0x60] sm:$0xff]
        %v667 = vld [vmem:[%s1 + $0x68] sm:$0xff]
        %v668 = vld [vmem:[%s1 + $0x70] sm:$0xff]
        %v669 = vld [vmem:[%s1 + $0x78] sm:$0xff]
        %670 = vmatprep.subr.mxu0 0.0
        %671 = vmatpush1.msra.mxu0 %v654
        %672 = vmatprep.subr.mxu0 0.0
        %673 = vmatpush1.msra.mxu0 %v655
        %674 = vmatprep.subr.mxu0 0.0
        %675 = vmatpush1.msra.mxu0 %v656
        %676 = vmatprep.subr.mxu0 0.0
        %677 = vmatpush1.msra.mxu0 %v657
        %678 = vmatprep.subr.mxu0 0.0
        %679 = vmatpush1.msra.mxu0 %v658
        %680 = vmatprep.subr.mxu0 0.0
        %681 = vmatpush1.msra.mxu0 %v659
        %682 = vmatprep.subr.mxu0 0.0
        %683 = vmatpush1.msra.mxu0 %v660
        %684 = vmatprep.subr.mxu0 0.0
        %685 = vmatpush1.msra.mxu0 %v661
        %686 = vmatprep.subr.mxu0 0.0
        %687 = vmatpush1.msra.mxu0 %v662
        %688 = vmatprep.subr.mxu0 0.0
        %689 = vmatpush1.msra.mxu0 %v663
        %690 = vmatprep.subr.mxu0 0.0
        %691 = vmatpush1.msra.mxu0 %v664
        %692 = vmatprep.subr.mxu0 0.0
        %693 = vmatpush1.msra.mxu0 %v665
        %694 = vmatprep.subr.mxu0 0.0
        %695 = vmatpush1.msra.mxu0 %v666
        %696 = vmatprep.subr.mxu0 0.0
        %697 = vmatpush1.msra.mxu0 %v667
        %698 = vmatprep.subr.mxu0 0.0
        %699 = vmatpush1.msra.mxu0 %v668
        %700 = vmatprep.subr.mxu0 0.0
        %701 = vmatpush1.msra.mxu0 %v669
        %702 = vmatprep.subr.mxu0 0.0
        %703 = vmatpush1.msra.mxu0 0.0
        %704 = vmatprep.subr.mxu0 0.0
        %705 = vmatpush1.msra.mxu0 0.0
        %706 = vmatprep.subr.mxu0 0.0
        %707 = vmatpush1.msra.mxu0 0.0
        %708 = vmatprep.subr.mxu0 0.0
        %709 = vmatpush1.msra.mxu0 0.0
        %710 = vmatprep.subr.mxu0 0.0
        %711 = vmatpush1.msra.mxu0 0.0
        %712 = vmatprep.subr.mxu0 0.0
        %713 = vmatpush1.msra.mxu0 0.0
        %714 = vmatprep.subr.mxu0 0.0
        %715 = vmatpush1.msra.mxu0 0.0
        %716 = vmatprep.subr.mxu0 0.0
        %717 = vmatpush1.msra.mxu0 0.0
        %718 = vmatprep.subr.mxu0 0.0
        %719 = vmatpush1.msra.mxu0 0.0
        %720 = vmatprep.subr.mxu0 0.0
        %721 = vmatpush1.msra.mxu0 0.0
        %722 = vmatprep.subr.mxu0 0.0
        %723 = vmatpush1.msra.mxu0 0.0
        %724 = vmatprep.subr.mxu0 0.0
        %725 = vmatpush1.msra.mxu0 0.0
        %726 = vmatprep.subr.mxu0 0.0
        %727 = vmatpush1.msra.mxu0 0.0
        %728 = vmatprep.subr.mxu0 0.0
        %729 = vmatpush1.msra.mxu0 0.0
        %730 = vmatprep.subr.mxu0 0.0
        %731 = vmatpush1.msra.mxu0 0.0
        %732 = vmatprep.subr.mxu0 0.0
        %733 = vmatpush1.msra.mxu0 0.0
        %734 = vmatprep.mubr.f32.mxu0 0.0
        %735 = vmatmul.mubr.f32.gmra.mrb[0].mxu0 %v653
        %v736 = vpop.f32.mrb[0].mxu0
        %v737 = vadd.f32 0.0, %v736
        %v738 = vpop.f32.mrb[0].mxu0
        %739 = vdwg.mxu0
        %v740 = vmul.f32 %v737, 0.0078125
        %v741 = vmul.f32 %v740, %v740
        %743 = vrot.lane.b32.xlu0 %v741, 32
        %v744 = vpop.permute.xlu0 %743
        %v746 = vsub.f32 %v740, %v744
        %v747 = vmax.f32 %v746, 0.0
        %v748 = vadd.f32 %v747, 1e-05
        %v749 = vrsqrt.pop %v748
        %vm750 = vcmask 261120
        %v751 = vsel %vm750, %v740, %v749
        %v752 = vld [vmem:[%s2] sm:$0xff]
        %v753 = vld [vmem:[%s2 + $0x8] sm:$0xff]
        %v754 = vld [vmem:[%s2 + $0x10] sm:$0xff]
        %v755 = vld [vmem:[%s2 + $0x18] sm:$0xff]
        %v756 = vld [vmem:[%s2 + $0x20] sm:$0xff]
        %v757 = vld [vmem:[%s2 + $0x28] sm:$0xff]
        %v758 = vld [vmem:[%s2 + $0x30] sm:$0xff]
        %v759 = vld [vmem:[%s2 + $0x38] sm:$0xff]
        %v761 = vsel %vm541, %v751, 0
        %763 = vmatprep.subr.mxu0 0.0
        %764 = vmatpush1.msra.mxu0 %v752
        %765 = vmatprep.subr.mxu0 0.0
        %766 = vmatpush1.msra.mxu0 %v753
        %767 = vmatprep.subr.mxu0 0.0
        %768 = vmatpush1.msra.mxu0 %v754
        %769 = vmatprep.subr.mxu0 0.0
        %770 = vmatpush1.msra.mxu0 %v755
        %771 = vmatprep.subr.mxu0 0.0
        %772 = vmatpush1.msra.mxu0 %v756
        %773 = vmatprep.subr.mxu0 0.0
        %774 = vmatpush1.msra.mxu0 %v757
        %775 = vmatprep.subr.mxu0 0.0
        %776 = vmatpush1.msra.mxu0 %v758
        %777 = vmatprep.subr.mxu0 0.0
        %778 = vmatpush1.msra.mxu0 %v759
        %779 = vmatprep.subr.mxu0 0.0
        %780 = vmatpush1.msra.mxu0 0.0
        %781 = vmatprep.subr.mxu0 0.0
        %782 = vmatpush1.msra.mxu0 0.0
        %783 = vmatprep.subr.mxu0 0.0
        %784 = vmatpush1.msra.mxu0 0.0
        %785 = vmatprep.subr.mxu0 0.0
        %786 = vmatpush1.msra.mxu0 0.0
        %787 = vmatprep.subr.mxu0 0.0
        %788 = vmatpush1.msra.mxu0 0.0
        %789 = vmatprep.subr.mxu0 0.0
        %790 = vmatpush1.msra.mxu0 0.0
        %791 = vmatprep.subr.mxu0 0.0
        %792 = vmatpush1.msra.mxu0 0.0
        %793 = vmatprep.subr.mxu0 0.0
        %794 = vmatpush1.msra.mxu0 0.0
        %795 = vmatprep.subr.mxu0 0.0
        %796 = vmatpush1.msra.mxu0 0.0
        %797 = vmatprep.subr.mxu0 0.0
        %798 = vmatpush1.msra.mxu0 0.0
        %799 = vmatprep.subr.mxu0 0.0
        %800 = vmatpush1.msra.mxu0 0.0
        %801 = vmatprep.subr.mxu0 0.0
        %802 = vmatpush1.msra.mxu0 0.0
        %803 = vmatprep.subr.mxu0 0.0
        %804 = vmatpush1.msra.mxu0 0.0
        %805 = vmatprep.subr.mxu0 0.0
        %806 = vmatpush1.msra.mxu0 0.0
        %807 = vmatprep.subr.mxu0 0.0
        %808 = vmatpush1.msra.mxu0 0.0
        %809 = vmatprep.subr.mxu0 0.0
        %810 = vmatpush1.msra.mxu0 0.0
        %811 = vmatprep.subr.mxu0 0.0
        %812 = vmatpush1.msra.mxu0 0.0
        %813 = vmatprep.subr.mxu0 0.0
        %814 = vmatpush1.msra.mxu0 0.0
        %815 = vmatprep.subr.mxu0 0.0
        %816 = vmatpush1.msra.mxu0 0.0
        %817 = vmatprep.subr.mxu0 0.0
        %818 = vmatpush1.msra.mxu0 0.0
        %819 = vmatprep.subr.mxu0 0.0
        %820 = vmatpush1.msra.mxu0 0.0
        %821 = vmatprep.subr.mxu0 0.0
        %822 = vmatpush1.msra.mxu0 0.0
        %823 = vmatprep.subr.mxu0 0.0
        %824 = vmatpush1.msra.mxu0 0.0
        %825 = vmatprep.subr.mxu0 0.0
        %826 = vmatpush1.msra.mxu0 0.0
        %827 = vmatprep.mubr.f32.mxu0 0.0
        %828 = vmatmul.mubr.f32.gmra.mrb[0].mxu0 %v761
        %v829 = vpop.f32.mrb[0].mxu0
        %v830 = vadd.f32 0.0, %v829
        %v831 = vpop.f32.mrb[0].mxu0
        %832 = vdwg.mxu0
        %v833 = vld [vmem:[#allocation7] sm:$0x1]
        %v835 = vlaneseq
        %v836 = vshrl.u32 %v835, 7
        %v837 = vsub.s32 0, %v836
        %v838 = vrot.slane %v833, %v837
        %839 = vrot.lane.b32.xlu0 %v838, 64
        %v840 = vpop.permute.xlu0 %839
        %v842 = vmul.f32 %v830, %v840
        %v843 = vld [vmem:[#allocation8] sm:$0x1]
        %845 = vrot.lane.b32.xlu0 %v842, 64
        %v846 = vpop.permute.xlu0 %845
        %v848 = vmul.f32 %v830, %v846
        %v850 = vlaneseq
        %v851 = vshrl.u32 %v850, 7
        %v852 = vsub.s32 0, %v851
        %v853 = vrot.slane %v843, %v852
        %v855 = vsub.f32 %v853, %v848
        %v857 = vunpack.c.l.s4 1966171168
        %v858 = vunpack.c.0.s8 %v857
        %v859 = vlaneseq
        %v860 = vshrl.u32 %v859, 7
        %v861 = vsub.s32 %v858, %v860
        %v862 = vrot.slane %v842, %v861
        %v863 = vcombine.high %v862, %v862
        %v865 = vunpack.c.l.s4 1966171168
        %v866 = vunpack.c.0.s8 %v865
        %v867 = vlaneseq
        %v868 = vshrl.u32 %v867, 7
        %v869 = vsub.s32 %v866, %v868
        %v870 = vrot.slane %v862, %v869
        %v872 = vunpack.c.l.s4 1966171168
        %v873 = vunpack.c.0.s8 %v872
        %v874 = vlaneseq
        %v875 = vshrl.u32 %v874, 7
        %v876 = vsub.s32 %v873, %v875
        %v877 = vrot.slane %v863, %v876
        %v878 = vlaneseq
        %v879 = vshrl.u32 %v878, 7
        %v880 = vsub.s32 0, %v879
        %v881 = vrot.slane %v870, %v880
        %v882 = vlaneseq
        %v883 = vshrl.u32 %v882, 7
        %v884 = vsub.s32 0, %v883
        %v885 = vrot.slane %v877, %v884
        %886 = vrot.lane.b32.xlu0 %v881, 64
        %v887 = vpop.permute.xlu0 %886
        %888 = vrot.lane.b32.xlu0 %v885, 64
        %v889 = vpop.permute.xlu0 %888
        %v892 = vmul.f32 %v493, %v887
        %v893 = vmul.f32 %v494, %v887
        %v894 = vmul.f32 %v495, %v887
        %v895 = vmul.f32 %v496, %v887
        %v896 = vmul.f32 %v497, %v887
        %v897 = vmul.f32 %v498, %v887
        %v898 = vmul.f32 %v499, %v887
        %v899 = vmul.f32 %v500, %v887
        %v900 = vmul.f32 %v525, %v889
        %v901 = vmul.f32 %v526, %v889
        %v902 = vmul.f32 %v527, %v889
        %v903 = vmul.f32 %v528, %v889
        %v904 = vmul.f32 %v529, %v889
        %v905 = vmul.f32 %v530, %v889
        %v906 = vmul.f32 %v531, %v889
        %v907 = vmul.f32 %v532, %v889
        %v910 = vunpack.c.l.s4 1966171168
        %v911 = vunpack.c.0.s8 %v910
        %v912 = vlaneseq
        %v913 = vshrl.u32 %v912, 7
        %v914 = vsub.s32 %v911, %v913
        %v915 = vrot.slane %v855, %v914
        %v916 = vcombine.high %v915, %v915
        %v918 = vunpack.c.l.s4 1966171168
        %v919 = vunpack.c.0.s8 %v918
        %v920 = vlaneseq
        %v921 = vshrl.u32 %v920, 7
        %v922 = vsub.s32 %v919, %v921
        %v923 = vrot.slane %v915, %v922
        %v925 = vunpack.c.l.s4 1966171168
        %v926 = vunpack.c.0.s8 %v925
        %v927 = vlaneseq
        %v928 = vshrl.u32 %v927, 7
        %v929 = vsub.s32 %v926, %v928
        %v930 = vrot.slane %v916, %v929
        %v931 = vlaneseq
        %v932 = vshrl.u32 %v931, 7
        %v933 = vsub.s32 0, %v932
        %v934 = vrot.slane %v923, %v933
        %v935 = vlaneseq
        %v936 = vshrl.u32 %v935, 7
        %v937 = vsub.s32 0, %v936
        %v938 = vrot.slane %v930, %v937
        %v941 = vadd.f32 %v892, %v934
        %v942 = vadd.f32 %v893, %v934
        %v943 = vadd.f32 %v894, %v934
        %v944 = vadd.f32 %v895, %v934
        %v945 = vadd.f32 %v896, %v934
        %v946 = vadd.f32 %v897, %v934
        %v947 = vadd.f32 %v898, %v934
        %v948 = vadd.f32 %v899, %v934
        %v949 = vadd.f32 %v900, %v938
        %v950 = vadd.f32 %v901, %v938
        %v951 = vadd.f32 %v902, %v938
        %v952 = vadd.f32 %v903, %v938
        %v953 = vadd.f32 %v904, %v938
        %v954 = vadd.f32 %v905, %v938
        %v955 = vadd.f32 %v906, %v938
        %v956 = vadd.f32 %v907, %v938
        %v957 = vpack.c.bf16 %v942, %v941
        %v958 = vpack.c.bf16 %v944, %v943
        %v959 = vpack.c.bf16 %v946, %v945
        %v960 = vpack.c.bf16 %v948, %v947
        %v961 = vpack.c.bf16 %v950, %v949
        %v962 = vpack.c.bf16 %v952, %v951
        %v963 = vpack.c.bf16 %v954, %v953
        %v964 = vpack.c.bf16 %v956, %v955
        %v965 = vld [vmem:[#allocation10] sm:$0xff]
        %v966 = vld [vmem:[#allocation10 + $0x8] sm:$0xff]
        %v967 = vld [vmem:[#allocation10 + $0x10] sm:$0xff]
        %v968 = vld [vmem:[#allocation10 + $0x18] sm:$0xff]
        %v969 = vld [vmem:[#allocation10 + $0x20] sm:$0xff]
        %v970 = vld [vmem:[#allocation10 + $0x28] sm:$0xff]
        %v971 = vld [vmem:[#allocation10 + $0x30] sm:$0xff]
        %v972 = vld [vmem:[#allocation10 + $0x38] sm:$0xff]
        %v973 = vld [vmem:[%s8] sm:$0x3]
        %v975 = vlaneseq
        %v976 = vshrl.u32 %v975, 7
        %v977 = vsub.s32 0, %v976
        %v978 = vrot.slane %v973, %v977
        %v979 = vlaneseq
        %v980 = vshrl.u32 %v979, 7
        %v981 = vsub.s32 1, %v980
        %v982 = vrot.slane %v973, %v981
        %v993 = vunpack.c.l.b16 %v965
        %v994 = vunpack.c.h.b16 %v965
        %v995 = vunpack.c.l.b16 %v966
        %v996 = vunpack.c.h.b16 %v966
        %v997 = vunpack.c.l.b16 %v967
        %v998 = vunpack.c.h.b16 %v967
        %v999 = vunpack.c.l.b16 %v968
        %v1000 = vunpack.c.h.b16 %v968
        %v1001 = vunpack.c.l.b16 %v969
        %v1002 = vunpack.c.h.b16 %v969
        %v1003 = vunpack.c.l.b16 %v970
        %v1004 = vunpack.c.h.b16 %v970
        %v1005 = vunpack.c.l.b16 %v971
        %v1006 = vunpack.c.h.b16 %v971
        %v1007 = vunpack.c.l.b16 %v972
        %v1008 = vunpack.c.h.b16 %v972
        %v1009 = vpack.c.b16 %v995, %v993
        %v1010 = vpack.c.b16 %v996, %v994
        %v1011 = vpack.c.b16 %v999, %v997
        %v1012 = vpack.c.b16 %v1000, %v998
        %v1013 = vpack.c.b16 %v1003, %v1001
        %v1014 = vpack.c.b16 %v1004, %v1002
        %v1015 = vpack.c.b16 %v1007, %v1005
        %v1016 = vpack.c.b16 %v1008, %v1006
        %v1026 = vsel %vm541, %v957, 0
        %v1029 = vsel %vm541, %v958, 0
        %v1032 = vsel %vm541, %v959, 0
        %v1035 = vsel %vm541, %v960, 0
        %v1038 = vsel %vm541, %v961, 0
        %v1041 = vsel %vm541, %v962, 0
        %v1044 = vsel %vm541, %v963, 0
        %v1047 = vsel %vm541, %v964, 0
        %1049 = vmatprep.subr.bf16.mxu0 %v1010
        %1050 = vmatpush1.bf16.msra.mxu0 %v1009
        %1051 = vmatprep.subr.bf16.mxu0 %v1012
        %1052 = vmatpush1.bf16.msra.mxu0 %v1011
        %1053 = vmatprep.subr.bf16.mxu0 %v1014
        %1054 = vmatpush1.bf16.msra.mxu0 %v1013
        %1055 = vmatprep.subr.bf16.mxu0 %v1016
        %1056 = vmatpush1.bf16.msra.mxu0 %v1015
        %1057 = vmatprep.subr.bf16.mxu0 0
        %1058 = vmatpush1.bf16.msra.mxu0 0
        %1059 = vmatprep.subr.bf16.mxu0 0
        %1060 = vmatpush1.bf16.msra.mxu0 0
        %1061 = vmatprep.subr.bf16.mxu0 0
        %1062 = vmatpush1.bf16.msra.mxu0 0
        %1063 = vmatprep.subr.bf16.mxu0 0
        %1064 = vmatpush1.bf16.msra.mxu0 0
        %1065 = vmatprep.subr.bf16.mxu0 0
        %1066 = vmatpush1.bf16.msra.mxu0 0
        %1067 = vmatprep.subr.bf16.mxu0 0
        %1068 = vmatpush1.bf16.msra.mxu0 0
        %1069 = vmatprep.subr.bf16.mxu0 0
        %1070 = vmatpush1.bf16.msra.mxu0 0
        %1071 = vmatprep.subr.bf16.mxu0 0
        %1072 = vmatpush1.bf16.msra.mxu0 0
        %1073 = vmatprep.subr.bf16.mxu0 0
        %1074 = vmatpush1.bf16.msra.mxu0 0
        %1075 = vmatprep.subr.bf16.mxu0 0
        %1076 = vmatpush1.bf16.msra.mxu0 0
        %1077 = vmatprep.subr.bf16.mxu0 0
        %1078 = vmatpush1.bf16.msra.mxu0 0
        %1079 = vmatprep.subr.bf16.mxu0 0
        %1080 = vmatpush1.bf16.msra.mxu0 0
        %1081 = vmatprep.mubr.bf16.mxu0 0
        %1082 = vmatmul.mubr.bf16.gmra.mrb[0].mxu0 %v1026
        %v1083 = vpop.f32.mrb[0].mxu0
        %v1084 = vadd.f32 %v978, %v1083
        %v1085 = vpop.f32.mrb[0].mxu0
        %v1086 = vadd.f32 %v982, %v1085
        %v1087 = vpop.f32.mrb[0].mxu0
        %v1088 = vadd.f32 %v978, %v1087
        %v1089 = vpop.f32.mrb[0].mxu0
        %v1090 = vadd.f32 %v982, %v1089
        %1091 = vmatprep.mubr.bf16.mxu0 0
        %1092 = vmatmul.mubr.bf16.gmra.mrb[0].mxu0 %v1029
        %v1093 = vpop.f32.mrb[0].mxu0
        %v1094 = vadd.f32 %v978, %v1093
        %v1095 = vpop.f32.mrb[0].mxu0
        %v1096 = vadd.f32 %v982, %v1095
        %v1097 = vpop.f32.mrb[0].mxu0
        %v1098 = vadd.f32 %v978, %v1097
        %v1099 = vpop.f32.mrb[0].mxu0
        %v1100 = vadd.f32 %v982, %v1099
        %1101 = vmatprep.mubr.bf16.mxu0 0
        %1102 = vmatmul.mubr.bf16.gmra.mrb[0].mxu0 %v1032
        %v1103 = vpop.f32.mrb[0].mxu0
        %v1104 = vadd.f32 %v978, %v1103
        %v1105 = vpop.f32.mrb[0].mxu0
        %v1106 = vadd.f32 %v982, %v1105
        %v1107 = vpop.f32.mrb[0].mxu0
        %v1108 = vadd.f32 %v978, %v1107
        %v1109 = vpop.f32.mrb[0].mxu0
        %v1110 = vadd.f32 %v982, %v1109
        %1111 = vmatprep.mubr.bf16.mxu0 0
        %1112 = vmatmul.mubr.bf16.gmra.mrb[0].mxu0 %v1035
        %v1113 = vpop.f32.mrb[0].mxu0
        %v1114 = vadd.f32 %v978, %v1113
        %v1115 = vpop.f32.mrb[0].mxu0
        %v1116 = vadd.f32 %v982, %v1115
        %v1117 = vpop.f32.mrb[0].mxu0
        %v1118 = vadd.f32 %v978, %v1117
        %v1119 = vpop.f32.mrb[0].mxu0
        %v1120 = vadd.f32 %v982, %v1119
        %1121 = vmatprep.mubr.bf16.mxu0 0
        %1122 = vmatmul.mubr.bf16.gmra.mrb[0].mxu0 %v1038
        %v1123 = vpop.f32.mrb[0].mxu0
        %v1124 = vadd.f32 %v978, %v1123
        %v1125 = vpop.f32.mrb[0].mxu0
        %v1126 = vadd.f32 %v982, %v1125
        %v1127 = vpop.f32.mrb[0].mxu0
        %v1128 = vadd.f32 %v978, %v1127
        %v1129 = vpop.f32.mrb[0].mxu0
        %v1130 = vadd.f32 %v982, %v1129
        %1131 = vmatprep.mubr.bf16.mxu0 0
        %1132 = vmatmul.mubr.bf16.gmra.mrb[0].mxu0 %v1041
        %v1133 = vpop.f32.mrb[0].mxu0
        %v1134 = vadd.f32 %v978, %v1133
        %v1135 = vpop.f32.mrb[0].mxu0
        %v1136 = vadd.f32 %v982, %v1135
        %v1137 = vpop.f32.mrb[0].mxu0
        %v1138 = vadd.f32 %v978, %v1137
        %v1139 = vpop.f32.mrb[0].mxu0
        %v1140 = vadd.f32 %v982, %v1139
        %1141 = vmatprep.mubr.bf16.mxu0 0
        %1142 = vmatmul.mubr.bf16.gmra.mrb[0].mxu0 %v1044
        %v1143 = vpop.f32.mrb[0].mxu0
        %v1144 = vadd.f32 %v978, %v1143
        %v1145 = vpop.f32.mrb[0].mxu0
        %v1146 = vadd.f32 %v982, %v1145
        %v1147 = vpop.f32.mrb[0].mxu0
        %v1148 = vadd.f32 %v978, %v1147
        %v1149 = vpop.f32.mrb[0].mxu0
        %v1150 = vadd.f32 %v982, %v1149
        %1151 = vmatprep.mubr.bf16.mxu0 0
        %1152 = vmatmul.mubr.bf16.gmra.mrb[0].mxu0 %v1047
        %v1153 = vpop.f32.mrb[0].mxu0
        %v1154 = vadd.f32 %v978, %v1153
        %v1155 = vpop.f32.mrb[0].mxu0
        %v1156 = vadd.f32 %v982, %v1155
        %v1157 = vpop.f32.mrb[0].mxu0
        %v1158 = vadd.f32 %v978, %v1157
        %v1159 = vpop.f32.mrb[0].mxu0
        %v1160 = vadd.f32 %v982, %v1159
        %1161 = vdwg.mxu0
        %v1162 = vpack.c.bf16 %v1088, %v1084
        %v1163 = vpack.c.bf16 %v1098, %v1094
        %v1164 = vpack.c.bf16 %v1108, %v1104
        %v1165 = vpack.c.bf16 %v1118, %v1114
        %v1166 = vpack.c.bf16 %v1128, %v1124
        %v1167 = vpack.c.bf16 %v1138, %v1134
        %v1168 = vpack.c.bf16 %v1148, %v1144
        %v1169 = vpack.c.bf16 %v1158, %v1154
        %v1170 = vpack.c.bf16 %v1090, %v1086
        %v1171 = vpack.c.bf16 %v1100, %v1096
        %v1172 = vpack.c.bf16 %v1110, %v1106
        %v1173 = vpack.c.bf16 %v1120, %v1116
        %v1174 = vpack.c.bf16 %v1130, %v1126
        %v1175 = vpack.c.bf16 %v1140, %v1136
        %v1176 = vpack.c.bf16 %v1150, %v1146
        %v1177 = vpack.c.bf16 %v1160, %v1156
        %v1178 = vld [vmem:[#allocation5] sm:$0xff]
        %v1180 = vcombine.high %v1178, %v1178
        %v1182 = vunpack.c.l.s4 1966171168
        %v1183 = vunpack.c.0.s8 %v1182
        %v1184 = vlaneseq
        %v1185 = vshrl.u32 %v1184, 7
        %v1186 = vsub.s32 %v1183, %v1185
        %v1187 = vrot.slane %v1178, %v1186
        %v1189 = vunpack.c.l.s4 1966171168
        %v1190 = vunpack.c.0.s8 %v1189
        %v1191 = vlaneseq
        %v1192 = vshrl.u32 %v1191, 7
        %v1193 = vsub.s32 %v1190, %v1192
        %v1194 = vrot.slane %v1180, %v1193
        %v1195 = vcombine.high %v1187, %v1187
        %v1196 = vcombine.high %v1194, %v1194
        %v1198 = vunpack.c.l.s4 1966171168
        %v1199 = vunpack.c.0.s8 %v1198
        %v1200 = vlaneseq
        %v1201 = vshrl.u32 %v1200, 7
        %v1202 = vsub.s32 %v1199, %v1201
        %v1203 = vrot.slane %v1187, %v1202
        %v1205 = vunpack.c.l.s4 1966171168
        %v1206 = vunpack.c.0.s8 %v1205
        %v1207 = vlaneseq
        %v1208 = vshrl.u32 %v1207, 7
        %v1209 = vsub.s32 %v1206, %v1208
        %v1210 = vrot.slane %v1194, %v1209
        %v1212 = vunpack.c.l.s4 1966171168
        %v1213 = vunpack.c.0.s8 %v1212
        %v1214 = vlaneseq
        %v1215 = vshrl.u32 %v1214, 7
        %v1216 = vsub.s32 %v1213, %v1215
        %v1217 = vrot.slane %v1195, %v1216
        %v1219 = vunpack.c.l.s4 1966171168
        %v1220 = vunpack.c.0.s8 %v1219
        %v1221 = vlaneseq
        %v1222 = vshrl.u32 %v1221, 7
        %v1223 = vsub.s32 %v1220, %v1222
        %v1224 = vrot.slane %v1196, %v1223
        %v1225 = vcombine.high %v1203, %v1203
        %v1226 = vcombine.high %v1210, %v1210
        %v1227 = vcombine.high %v1217, %v1217
        %v1228 = vcombine.high %v1224, %v1224
        %v1229 = vlaneseq
        %v1230 = vshrl.u32 %v1229, 7
        %v1231 = vsub.s32 0, %v1230
        %v1232 = vrot.slane %v1203, %v1231
        %v1233 = vlaneseq
        %v1234 = vshrl.u32 %v1233, 7
        %v1235 = vsub.s32 0, %v1234
        %v1236 = vrot.slane %v1217, %v1235
        %v1237 = vlaneseq
        %v1238 = vshrl.u32 %v1237, 7
        %v1239 = vsub.s32 0, %v1238
        %v1240 = vrot.slane %v1225, %v1239
        %v1241 = vlaneseq
        %v1242 = vshrl.u32 %v1241, 7
        %v1243 = vsub.s32 0, %v1242
        %v1244 = vrot.slane %v1227, %v1243
        %v1245 = vlaneseq
        %v1246 = vshrl.u32 %v1245, 7
        %v1247 = vsub.s32 0, %v1246
        %v1248 = vrot.slane %v1210, %v1247
        %v1249 = vlaneseq
        %v1250 = vshrl.u32 %v1249, 7
        %v1251 = vsub.s32 0, %v1250
        %v1252 = vrot.slane %v1224, %v1251
        %v1253 = vlaneseq
        %v1254 = vshrl.u32 %v1253, 7
        %v1255 = vsub.s32 0, %v1254
        %v1256 = vrot.slane %v1226, %v1255
        %v1257 = vlaneseq
        %v1258 = vshrl.u32 %v1257, 7
        %v1259 = vsub.s32 0, %v1258
        %v1260 = vrot.slane %v1228, %v1259
        %v1269 = vmul.f32 %v1084, %v1232
        %v1270 = vmul.f32 %v1088, %v1232
        %v1271 = vmul.f32 %v1094, %v1232
        %v1272 = vmul.f32 %v1098, %v1232
        %v1273 = vmul.f32 %v1104, %v1232
        %v1274 = vmul.f32 %v1108, %v1232
        %v1275 = vmul.f32 %v1114, %v1232
        %v1276 = vmul.f32 %v1118, %v1232
        %v1277 = vmul.f32 %v1124, %v1232
        %v1278 = vmul.f32 %v1128, %v1232
        %v1279 = vmul.f32 %v1134, %v1232
        %v1280 = vmul.f32 %v1138, %v1232
        %v1281 = vmul.f32 %v1144, %v1232
        %v1282 = vmul.f32 %v1148, %v1232
        %v1283 = vmul.f32 %v1154, %v1232
        %v1284 = vmul.f32 %v1158, %v1232
        %v1285 = vmul.f32 %v1084, %v1236
        %v1286 = vmul.f32 %v1088, %v1236
        %v1287 = vmul.f32 %v1094, %v1236
        %v1288 = vmul.f32 %v1098, %v1236
        %v1289 = vmul.f32 %v1104, %v1236
        %v1290 = vmul.f32 %v1108, %v1236
        %v1291 = vmul.f32 %v1114, %v1236
        %v1292 = vmul.f32 %v1118, %v1236
        %v1293 = vmul.f32 %v1124, %v1236
        %v1294 = vmul.f32 %v1128, %v1236
        %v1295 = vmul.f32 %v1134, %v1236
        %v1296 = vmul.f32 %v1138, %v1236
        %v1297 = vmul.f32 %v1144, %v1236
        %v1298 = vmul.f32 %v1148, %v1236
        %v1299 = vmul.f32 %v1154, %v1236
        %v1300 = vmul.f32 %v1158, %v1236
        %v1301 = vmul.f32 %v1084, %v1240
        %v1302 = vmul.f32 %v1088, %v1240
        %v1303 = vmul.f32 %v1094, %v1240
        %v1304 = vmul.f32 %v1098, %v1240
        %v1305 = vmul.f32 %v1104, %v1240
        %v1306 = vmul.f32 %v1108, %v1240
        %v1307 = vmul.f32 %v1114, %v1240
        %v1308 = vmul.f32 %v1118, %v1240
        %v1309 = vmul.f32 %v1124, %v1240
        %v1310 = vmul.f32 %v1128, %v1240
        %v1311 = vmul.f32 %v1134, %v1240
        %v1312 = vmul.f32 %v1138, %v1240
        %v1313 = vmul.f32 %v1144, %v1240
        %v1314 = vmul.f32 %v1148, %v1240
        %v1315 = vmul.f32 %v1154, %v1240
        %v1316 = vmul.f32 %v1158, %v1240
        %v1317 = vmul.f32 %v1084, %v1244
        %v1318 = vmul.f32 %v1088, %v1244
        %v1319 = vmul.f32 %v1094, %v1244
        %v1320 = vmul.f32 %v1098, %v1244
        %v1321 = vmul.f32 %v1104, %v1244
        %v1322 = vmul.f32 %v1108, %v1244
        %v1323 = vmul.f32 %v1114, %v1244
        %v1324 = vmul.f32 %v1118, %v1244
        %v1325 = vmul.f32 %v1124, %v1244
        %v1326 = vmul.f32 %v1128, %v1244
        %v1327 = vmul.f32 %v1134, %v1244
        %v1328 = vmul.f32 %v1138, %v1244
        %v1329 = vmul.f32 %v1144, %v1244
        %v1330 = vmul.f32 %v1148, %v1244
        %v1331 = vmul.f32 %v1154, %v1244
        %v1332 = vmul.f32 %v1158, %v1244
        %v1333 = vmul.f32 %v1084, %v1248
        %v1334 = vmul.f32 %v1088, %v1248
        %v1335 = vmul.f32 %v1094, %v1248
        %v1336 = vmul.f32 %v1098, %v1248
        %v1337 = vmul.f32 %v1104, %v1248
        %v1338 = vmul.f32 %v1108, %v1248
        %v1339 = vmul.f32 %v1114, %v1248
        %v1340 = vmul.f32 %v1118, %v1248
        %v1341 = vmul.f32 %v1124, %v1248
        %v1342 = vmul.f32 %v1128, %v1248
        %v1343 = vmul.f32 %v1134, %v1248
        %v1344 = vmul.f32 %v1138, %v1248
        %v1345 = vmul.f32 %v1144, %v1248
        %v1346 = vmul.f32 %v1148, %v1248
        %v1347 = vmul.f32 %v1154, %v1248
        %v1348 = vmul.f32 %v1158, %v1248
        %v1349 = vmul.f32 %v1084, %v1252
        %v1350 = vmul.f32 %v1088, %v1252
        %v1351 = vmul.f32 %v1094, %v1252
        %v1352 = vmul.f32 %v1098, %v1252
        %v1353 = vmul.f32 %v1104, %v1252
        %v1354 = vmul.f32 %v1108, %v1252
        %v1355 = vmul.f32 %v1114, %v1252
        %v1356 = vmul.f32 %v1118, %v1252
        %v1357 = vmul.f32 %v1124, %v1252
        %v1358 = vmul.f32 %v1128, %v1252
        %v1359 = vmul.f32 %v1134, %v1252
        %v1360 = vmul.f32 %v1138, %v1252
        %v1361 = vmul.f32 %v1144, %v1252
        %v1362 = vmul.f32 %v1148, %v1252
        %v1363 = vmul.f32 %v1154, %v1252
        %v1364 = vmul.f32 %v1158, %v1252
        %v1365 = vmul.f32 %v1084, %v1256
        %v1366 = vmul.f32 %v1088, %v1256
        %v1367 = vmul.f32 %v1094, %v1256
        %v1368 = vmul.f32 %v1098, %v1256
        %v1369 = vmul.f32 %v1104, %v1256
        %v1370 = vmul.f32 %v1108, %v1256
        %v1371 = vmul.f32 %v1114, %v1256
        %v1372 = vmul.f32 %v1118, %v1256
        %v1373 = vmul.f32 %v1124, %v1256
        %v1374 = vmul.f32 %v1128, %v1256
        %v1375 = vmul.f32 %v1134, %v1256
        %v1376 = vmul.f32 %v1138, %v1256
        %v1377 = vmul.f32 %v1144, %v1256
        %v1378 = vmul.f32 %v1148, %v1256
        %v1379 = vmul.f32 %v1154, %v1256
        %v1380 = vmul.f32 %v1158, %v1256
        %v1381 = vmul.f32 %v1084, %v1260
        %v1382 = vmul.f32 %v1088, %v1260
        %v1383 = vmul.f32 %v1094, %v1260
        %v1384 = vmul.f32 %v1098, %v1260
        %v1385 = vmul.f32 %v1104, %v1260
        %v1386 = vmul.f32 %v1108, %v1260
        %v1387 = vmul.f32 %v1114, %v1260
        %v1388 = vmul.f32 %v1118, %v1260
        %v1389 = vmul.f32 %v1124, %v1260
        %v1390 = vmul.f32 %v1128, %v1260
        %v1391 = vmul.f32 %v1134, %v1260
        %v1392 = vmul.f32 %v1138, %v1260
        %v1393 = vmul.f32 %v1144, %v1260
        %v1394 = vmul.f32 %v1148, %v1260
        %v1395 = vmul.f32 %v1154, %v1260
        %v1396 = vmul.f32 %v1158, %v1260
        %v1397 = vpack.c.bf16 %v1270, %v1269
        %v1398 = vpack.c.bf16 %v1272, %v1271
        %v1399 = vpack.c.bf16 %v1274, %v1273
        %v1400 = vpack.c.bf16 %v1276, %v1275
        %v1401 = vpack.c.bf16 %v1278, %v1277
        %v1402 = vpack.c.bf16 %v1280, %v1279
        %v1403 = vpack.c.bf16 %v1282, %v1281
        %v1404 = vpack.c.bf16 %v1284, %v1283
        %v1405 = vpack.c.bf16 %v1286, %v1285
        %v1406 = vpack.c.bf16 %v1288, %v1287
        %v1407 = vpack.c.bf16 %v1290, %v1289
        %v1408 = vpack.c.bf16 %v1292, %v1291
        %v1409 = vpack.c.bf16 %v1294, %v1293
        %v1410 = vpack.c.bf16 %v1296, %v1295
        %v1411 = vpack.c.bf16 %v1298, %v1297
        %v1412 = vpack.c.bf16 %v1300, %v1299
        %v1413 = vpack.c.bf16 %v1302, %v1301
        %v1414 = vpack.c.bf16 %v1304, %v1303
        %v1415 = vpack.c.bf16 %v1306, %v1305
        %v1416 = vpack.c.bf16 %v1308, %v1307
        %v1417 = vpack.c.bf16 %v1310, %v1309
        %v1418 = vpack.c.bf16 %v1312, %v1311
        %v1419 = vpack.c.bf16 %v1314, %v1313
        %v1420 = vpack.c.bf16 %v1316, %v1315
        %v1421 = vpack.c.bf16 %v1318, %v1317
        %v1422 = vpack.c.bf16 %v1320, %v1319
        %v1423 = vpack.c.bf16 %v1322, %v1321
        %v1424 = vpack.c.bf16 %v1324, %v1323
        %v1425 = vpack.c.bf16 %v1326, %v1325
        %v1426 = vpack.c.bf16 %v1328, %v1327
        %v1427 = vpack.c.bf16 %v1330, %v1329
        %v1428 = vpack.c.bf16 %v1332, %v1331
        %v1429 = vpack.c.bf16 %v1334, %v1333
        %v1430 = vpack.c.bf16 %v1336, %v1335
        %v1431 = vpack.c.bf16 %v1338, %v1337
        %v1432 = vpack.c.bf16 %v1340, %v1339
        %v1433 = vpack.c.bf16 %v1342, %v1341
        %v1434 = vpack.c.bf16 %v1344, %v1343
        %v1435 = vpack.c.bf16 %v1346, %v1345
        %v1436 = vpack.c.bf16 %v1348, %v1347
        %v1437 = vpack.c.bf16 %v1350, %v1349
        %v1438 = vpack.c.bf16 %v1352, %v1351
        %v1439 = vpack.c.bf16 %v1354, %v1353
        %v1440 = vpack.c.bf16 %v1356, %v1355
        %v1441 = vpack.c.bf16 %v1358, %v1357
        %v1442 = vpack.c.bf16 %v1360, %v1359
        %v1443 = vpack.c.bf16 %v1362, %v1361
        %v1444 = vpack.c.bf16 %v1364, %v1363
        %v1445 = vpack.c.bf16 %v1366, %v1365
        %v1446 = vpack.c.bf16 %v1368, %v1367
        %v1447 = vpack.c.bf16 %v1370, %v1369
        %v1448 = vpack.c.bf16 %v1372, %v1371
        %v1449 = vpack.c.bf16 %v1374, %v1373
        %v1450 = vpack.c.bf16 %v1376, %v1375
        %v1451 = vpack.c.bf16 %v1378, %v1377
        %v1452 = vpack.c.bf16 %v1380, %v1379
        %v1453 = vpack.c.bf16 %v1382, %v1381
        %v1454 = vpack.c.bf16 %v1384, %v1383
        %v1455 = vpack.c.bf16 %v1386, %v1385
        %v1456 = vpack.c.bf16 %v1388, %v1387
        %v1457 = vpack.c.bf16 %v1390, %v1389
        %v1458 = vpack.c.bf16 %v1392, %v1391
        %v1459 = vpack.c.bf16 %v1394, %v1393
        %v1460 = vpack.c.bf16 %v1396, %v1395
        %1469 = vrot.lane.b32.xlu0 %v1162, 64
        %v1470 = vpop.permute.xlu0 %1469
        %1471 = vrot.lane.b32.xlu0 %v1163, 64
        %v1472 = vpop.permute.xlu0 %1471
        %1473 = vrot.lane.b32.xlu0 %v1164, 64
        %v1474 = vpop.permute.xlu0 %1473
        %1475 = vrot.lane.b32.xlu0 %v1165, 64
        %v1476 = vpop.permute.xlu0 %1475
        %1477 = vrot.lane.b32.xlu0 %v1166, 64
        %v1478 = vpop.permute.xlu0 %1477
        %1479 = vrot.lane.b32.xlu0 %v1167, 64
        %v1480 = vpop.permute.xlu0 %1479
        %1481 = vrot.lane.b32.xlu0 %v1168, 64
        %v1482 = vpop.permute.xlu0 %1481
        %1483 = vrot.lane.b32.xlu0 %v1169, 64
        %v1484 = vpop.permute.xlu0 %1483
        %v1486 = vsel %vm541, %v1397, 0
        %v1489 = vsel %vm541, %v1398, 0
        %v1492 = vsel %vm541, %v1399, 0
        %v1495 = vsel %vm541, %v1400, 0
        %v1498 = vsel %vm541, %v1401, 0
        %v1501 = vsel %vm541, %v1402, 0
        %v1504 = vsel %vm541, %v1403, 0
        %v1507 = vsel %vm541, %v1404, 0
        %v1510 = vsel %vm541, %v1405, 0
        %v1513 = vsel %vm541, %v1406, 0
        %v1516 = vsel %vm541, %v1407, 0
        %v1519 = vsel %vm541, %v1408, 0
        %v1522 = vsel %vm541, %v1409, 0
        %v1525 = vsel %vm541, %v1410, 0
        %v1528 = vsel %vm541, %v1411, 0
        %v1531 = vsel %vm541, %v1412, 0
        %v1534 = vsel %vm541, %v1413, 0
        %v1537 = vsel %vm541, %v1414, 0
        %v1540 = vsel %vm541, %v1415, 0
        %v1543 = vsel %vm541, %v1416, 0
        %v1546 = vsel %vm541, %v1417, 0
        %v1549 = vsel %vm541, %v1418, 0
        %v1552 = vsel %vm541, %v1419, 0
        %v1555 = vsel %vm541, %v1420, 0
        %v1558 = vsel %vm541, %v1421, 0
        %v1561 = vsel %vm541, %v1422, 0
        %v1564 = vsel %vm541, %v1423, 0
        %v1567 = vsel %vm541, %v1424, 0
        %v1570 = vsel %vm541, %v1425, 0
        %v1573 = vsel %vm541, %v1426, 0
        %v1576 = vsel %vm541, %v1427, 0
        %v1579 = vsel %vm541, %v1428, 0
        %v1582 = vsel %vm541, %v1429, 0
        %v1585 = vsel %vm541, %v1430, 0
        %v1588 = vsel %vm541, %v1431, 0
        %v1591 = vsel %vm541, %v1432, 0
        %v1594 = vsel %vm541, %v1433, 0
        %v1597 = vsel %vm541, %v1434, 0
        %v1600 = vsel %vm541, %v1435, 0
        %v1603 = vsel %vm541, %v1436, 0
        %v1606 = vsel %vm541, %v1437, 0
        %v1609 = vsel %vm541, %v1438, 0
        %v1612 = vsel %vm541, %v1439, 0
        %v1615 = vsel %vm541, %v1440, 0
        %v1618 = vsel %vm541, %v1441, 0
        %v1621 = vsel %vm541, %v1442, 0
        %v1624 = vsel %vm541, %v1443, 0
        %v1627 = vsel %vm541, %v1444, 0
        %v1630 = vsel %vm541, %v1445, 0
        %v1633 = vsel %vm541, %v1446, 0
        %v1636 = vsel %vm541, %v1447, 0
        %v1639 = vsel %vm541, %v1448, 0
        %v1642 = vsel %vm541, %v1449, 0
        %v1645 = vsel %vm541, %v1450, 0
        %v1648 = vsel %vm541, %v1451, 0
        %v1651 = vsel %vm541, %v1452, 0
        %v1654 = vsel %vm541, %v1453, 0
        %v1657 = vsel %vm541, %v1454, 0
        %v1660 = vsel %vm541, %v1455, 0
        %v1663 = vsel %vm541, %v1456, 0
        %v1666 = vsel %vm541, %v1457, 0
        %v1669 = vsel %vm541, %v1458, 0
        %v1672 = vsel %vm541, %v1459, 0
        %v1675 = vsel %vm541, %v1460, 0
        %v1678 = vsel %vm541, %v1470, 0
        %v1681 = vsel %vm541, %v1472, 0
        %v1684 = vsel %vm541, %v1474, 0
        %v1687 = vsel %vm541, %v1476, 0
        %v1690 = vsel %vm541, %v1478, 0
        %v1693 = vsel %vm541, %v1480, 0
        %v1696 = vsel %vm541, %v1482, 0
        %v1699 = vsel %vm541, %v1484, 0
        %1701 = vmatprep.subr.bf16.mxu0 0
        %1702 = vmatpush1.bf16.xpose.msra.mxu0 %v1678
        %1703 = vmatprep.subr.bf16.mxu0 0
        %1704 = vmatpush1.bf16.xpose.msra.mxu0 %v1681
        %1705 = vmatprep.subr.bf16.mxu0 0
        %1706 = vmatpush1.bf16.xpose.msra.mxu0 %v1684
        %1707 = vmatprep.subr.bf16.mxu0 0
        %1708 = vmatpush1.bf16.xpose.msra.mxu0 %v1687
        %1709 = vmatprep.subr.bf16.mxu0 0
        %1710 = vmatpush1.bf16.xpose.msra.mxu0 %v1690
        %1711 = vmatprep.subr.bf16.mxu0 0
        %1712 = vmatpush1.bf16.xpose.msra.mxu0 %v1693
        %1713 = vmatprep.subr.bf16.mxu0 0
        %1714 = vmatpush1.bf16.xpose.msra.mxu0 %v1696
        %1715 = vmatprep.subr.bf16.mxu0 0
        %1716 = vmatpush1.bf16.xpose.msra.mxu0 %v1699
        %1717 = vmatprep.subr.bf16.mxu0 0
        %1718 = vmatpush1.bf16.xpose.msra.mxu0 0
        %1719 = vmatprep.subr.bf16.mxu0 0
        %1720 = vmatpush1.bf16.xpose.msra.mxu0 0
        %1721 = vmatprep.subr.bf16.mxu0 0
        %1722 = vmatpush1.bf16.xpose.msra.mxu0 0
        %1723 = vmatprep.subr.bf16.mxu0 0
        %1724 = vmatpush1.bf16.xpose.msra.mxu0 0
        %1725 = vmatprep.subr.bf16.mxu0 0
        %1726 = vmatpush1.bf16.xpose.msra.mxu0 0
        %1727 = vmatprep.subr.bf16.mxu0 0
        %1728 = vmatpush1.bf16.xpose.msra.mxu0 0
        %1729 = vmatprep.subr.bf16.mxu0 0
        %1730 = vmatpush1.bf16.xpose.msra.mxu0 0
        %1731 = vmatprep.subr.bf16.mxu0 0
        %1732 = vmatpush1.bf16.xpose.msra.mxu0 0
        %1733 = vmatprep.mubr.bf16.mxu0 0
        %1734 = vmatmul.mubr.bf16.gmra.mrb[0].mxu0 %v1486
        %v1735 = vpop.f32.mrb[0].mxu0
        %v1736 = vadd.f32 0.0, %v1735
        %v1737 = vpop.f32.mrb[0].mxu0
        %v1738 = vpop.f32.mrb[0].mxu0
        %v1739 = vadd.f32 0.0, %v1738
        %v1740 = vpop.f32.mrb[0].mxu0
        %1741 = vmatprep.mubr.bf16.mxu0 0
        %1742 = vmatmul.mubr.bf16.gmra.mrb[0].mxu0 %v1489
        %v1743 = vpop.f32.mrb[0].mxu0
        %v1744 = vadd.f32 0.0, %v1743
        %v1745 = vpop.f32.mrb[0].mxu0
        %v1746 = vpop.f32.mrb[0].mxu0
        %v1747 = vadd.f32 0.0, %v1746
        %v1748 = vpop.f32.mrb[0].mxu0
        %1749 = vmatprep.mubr.bf16.mxu0 0
        %1750 = vmatmul.mubr.bf16.gmra.mrb[0].mxu0 %v1492
        %v1751 = vpop.f32.mrb[0].mxu0
        %v1752 = vadd.f32 0.0, %v1751
        %v1753 = vpop.f32.mrb[0].mxu0
        %v1754 = vpop.f32.mrb[0].mxu0
        %v1755 = vadd.f32 0.0, %v1754
        %v1756 = vpop.f32.mrb[0].mxu0
        %1757 = vmatprep.mubr.bf16.mxu0 0
        %1758 = vmatmul.mubr.bf16.gmra.mrb[0].mxu0 %v1495
        %v1759 = vpop.f32.mrb[0].mxu0
        %v1760 = vadd.f32 0.0, %v1759
        %v1761 = vpop.f32.mrb[0].mxu0
        %v1762 = vpop.f32.mrb[0].mxu0
        %v1763 = vadd.f32 0.0, %v1762
        %v1764 = vpop.f32.mrb[0].mxu0
        %1765 = vmatprep.mubr.bf16.mxu0 0
        %1766 = vmatmul.mubr.bf16.gmra.mrb[0].mxu0 %v1498
        %v1767 = vpop.f32.mrb[0].mxu0
        %v1768 = vadd.f32 0.0, %v1767
        %v1769 = vpop.f32.mrb[0].mxu0
        %v1770 = vpop.f32.mrb[0].mxu0
        %v1771 = vadd.f32 0.0, %v1770
        %v1772 = vpop.f32.mrb[0].mxu0
        %1773 = vmatprep.mubr.bf16.mxu0 0
        %1774 = vmatmul.mubr.bf16.gmra.mrb[0].mxu0 %v1501
        %v1775 = vpop.f32.mrb[0].mxu0
        %v1776 = vadd.f32 0.0, %v1775
        %v1777 = vpop.f32.mrb[0].mxu0
        %v1778 = vpop.f32.mrb[0].mxu0
        %v1779 = vadd.f32 0.0, %v1778
        %v1780 = vpop.f32.mrb[0].mxu0
        %1781 = vmatprep.mubr.bf16.mxu0 0
        %1782 = vmatmul.mubr.bf16.gmra.mrb[0].mxu0 %v1504
        %v1783 = vpop.f32.mrb[0].mxu0
        %v1784 = vadd.f32 0.0, %v1783
        %v1785 = vpop.f32.mrb[0].mxu0
        %v1786 = vpop.f32.mrb[0].mxu0
        %v1787 = vadd.f32 0.0, %v1786
        %v1788 = vpop.f32.mrb[0].mxu0
        %1789 = vmatprep.mubr.bf16.mxu0 0
        %1790 = vmatmul.mubr.bf16.gmra.mrb[0].mxu0 %v1507
        %v1791 = vpop.f32.mrb[0].mxu0
        %v1792 = vadd.f32 0.0, %v1791
        %v1793 = vpop.f32.mrb[0].mxu0
        %v1794 = vpop.f32.mrb[0].mxu0
        %v1795 = vadd.f32 0.0, %v1794
        %v1796 = vpop.f32.mrb[0].mxu0
        %1797 = vmatprep.mubr.bf16.mxu0 0
        %1798 = vmatmul.mubr.bf16.gmra.mrb[0].mxu0 %v1510
        %v1799 = vpop.f32.mrb[0].mxu0
        %v1800 = vadd.f32 0.0, %v1799
        %v1801 = vpop.f32.mrb[0].mxu0
        %v1802 = vpop.f32.mrb[0].mxu0
        %v1803 = vadd.f32 0.0, %v1802
        %v1804 = vpop.f32.mrb[0].mxu0
        %1805 = vmatprep.mubr.bf16.mxu0 0
        %1806 = vmatmul.mubr.bf16.gmra.mrb[0].mxu0 %v1513
        %v1807 = vpop.f32.mrb[0].mxu0
        %v1808 = vadd.f32 0.0, %v1807
        %v1809 = vpop.f32.mrb[0].mxu0
        %v1810 = vpop.f32.mrb[0].mxu0
        %v1811 = vadd.f32 0.0, %v1810
        %v1812 = vpop.f32.mrb[0].mxu0
        %1813 = vmatprep.mubr.bf16.mxu0 0
        %1814 = vmatmul.mubr.bf16.gmra.mrb[0].mxu0 %v1516
        %v1815 = vpop.f32.mrb[0].mxu0
        %v1816 = vadd.f32 0.0, %v1815
        %v1817 = vpop.f32.mrb[0].mxu0
        %v1818 = vpop.f32.mrb[0].mxu0
        %v1819 = vadd.f32 0.0, %v1818
        %v1820 = vpop.f32.mrb[0].mxu0
        %1821 = vmatprep.mubr.bf16.mxu0 0
        %1822 = vmatmul.mubr.bf16.gmra.mrb[0].mxu0 %v1519
        %v1823 = vpop.f32.mrb[0].mxu0
        %v1824 = vadd.f32 0.0, %v1823
        %v1825 = vpop.f32.mrb[0].mxu0
        %v1826 = vpop.f32.mrb[0].mxu0
        %v1827 = vadd.f32 0.0, %v1826
        %v1828 = vpop.f32.mrb[0].mxu0
        %1829 = vmatprep.mubr.bf16.mxu0 0
        %1830 = vmatmul.mubr.bf16.gmra.mrb[0].mxu0 %v1522
        %v1831 = vpop.f32.mrb[0].mxu0
        %v1832 = vadd.f32 0.0, %v1831
        %v1833 = vpop.f32.mrb[0].mxu0
        %v1834 = vpop.f32.mrb[0].mxu0
        %v1835 = vadd.f32 0.0, %v1834
        %v1836 = vpop.f32.mrb[0].mxu0
        %1837 = vmatprep.mubr.bf16.mxu0 0
        %1838 = vmatmul.mubr.bf16.gmra.mrb[0].mxu0 %v1525
        %v1839 = vpop.f32.mrb[0].mxu0
        %v1840 = vadd.f32 0.0, %v1839
        %v1841 = vpop.f32.mrb[0].mxu0
        %v1842 = vpop.f32.mrb[0].mxu0
        %v1843 = vadd.f32 0.0, %v1842
        %v1844 = vpop.f32.mrb[0].mxu0
        %1845 = vmatprep.mubr.bf16.mxu0 0
        %1846 = vmatmul.mubr.bf16.gmra.mrb[0].mxu0 %v1528
        %v1847 = vpop.f32.mrb[0].mxu0
        %v1848 = vadd.f32 0.0, %v1847
        %v1849 = vpop.f32.mrb[0].mxu0
        %v1850 = vpop.f32.mrb[0].mxu0
        %v1851 = vadd.f32 0.0, %v1850
        %v1852 = vpop.f32.mrb[0].mxu0
        %1853 = vmatprep.mubr.bf16.mxu0 0
        %1854 = vmatmul.mubr.bf16.gmra.mrb[0].mxu0 %v1531
        %v1855 = vpop.f32.mrb[0].mxu0
        %v1856 = vadd.f32 0.0, %v1855
        %v1857 = vpop.f32.mrb[0].mxu0
        %v1858 = vpop.f32.mrb[0].mxu0
        %v1859 = vadd.f32 0.0, %v1858
        %v1860 = vpop.f32.mrb[0].mxu0
        %1861 = vmatprep.mubr.bf16.mxu0 0
        %1862 = vmatmul.mubr.bf16.gmra.mrb[0].mxu0 %v1534
        %v1863 = vpop.f32.mrb[0].mxu0
        %v1864 = vadd.f32 0.0, %v1863
        %v1865 = vpop.f32.mrb[0].mxu0
        %v1866 = vpop.f32.mrb[0].mxu0
        %v1867 = vadd.f32 0.0, %v1866
        %v1868 = vpop.f32.mrb[0].mxu0
        %1869 = vmatprep.mubr.bf16.mxu0 0
        %1870 = vmatmul.mubr.bf16.gmra.mrb[0].mxu0 %v1537
        %v1871 = vpop.f32.mrb[0].mxu0
        %v1872 = vadd.f32 0.0, %v1871
        %v1873 = vpop.f32.mrb[0].mxu0
        %v1874 = vpop.f32.mrb[0].mxu0
        %v1875 = vadd.f32 0.0, %v1874
        %v1876 = vpop.f32.mrb[0].mxu0
        %1877 = vmatprep.mubr.bf16.mxu0 0
        %1878 = vmatmul.mubr.bf16.gmra.mrb[0].mxu0 %v1540
        %v1879 = vpop.f32.mrb[0].mxu0
        %v1880 = vadd.f32 0.0, %v1879
        %v1881 = vpop.f32.mrb[0].mxu0
        %v1882 = vpop.f32.mrb[0].mxu0
        %v1883 = vadd.f32 0.0, %v1882
        %v1884 = vpop.f32.mrb[0].mxu0
        %1885 = vmatprep.mubr.bf16.mxu0 0
        %1886 = vmatmul.mubr.bf16.gmra.mrb[0].mxu0 %v1543
        %v1887 = vpop.f32.mrb[0].mxu0
        %v1888 = vadd.f32 0.0, %v1887
        %v1889 = vpop.f32.mrb[0].mxu0
        %v1890 = vpop.f32.mrb[0].mxu0
        %v1891 = vadd.f32 0.0, %v1890
        %v1892 = vpop.f32.mrb[0].mxu0
        %1893 = vmatprep.mubr.bf16.mxu0 0
        %1894 = vmatmul.mubr.bf16.gmra.mrb[0].mxu0 %v1546
        %v1895 = vpop.f32.mrb[0].mxu0
        %v1896 = vadd.f32 0.0, %v1895
        %v1897 = vpop.f32.mrb[0].mxu0
        %v1898 = vpop.f32.mrb[0].mxu0
        %v1899 = vadd.f32 0.0, %v1898
        %v1900 = vpop.f32.mrb[0].mxu0
        %1901 = vmatprep.mubr.bf16.mxu0 0
        %1902 = vmatmul.mubr.bf16.gmra.mrb[0].mxu0 %v1549
        %v1903 = vpop.f32.mrb[0].mxu0
        %v1904 = vadd.f32 0.0, %v1903
        %v1905 = vpop.f32.mrb[0].mxu0
        %v1906 = vpop.f32.mrb[0].mxu0
        %v1907 = vadd.f32 0.0, %v1906
        %v1908 = vpop.f32.mrb[0].mxu0
        %1909 = vmatprep.mubr.bf16.mxu0 0
        %1910 = vmatmul.mubr.bf16.gmra.mrb[0].mxu0 %v1552
        %v1911 = vpop.f32.mrb[0].mxu0
        %v1912 = vadd.f32 0.0, %v1911
        %v1913 = vpop.f32.mrb[0].mxu0
        %v1914 = vpop.f32.mrb[0].mxu0
        %v1915 = vadd.f32 0.0, %v1914
        %v1916 = vpop.f32.mrb[0].mxu0
        %1917 = vmatprep.mubr.bf16.mxu0 0
        %1918 = vmatmul.mubr.bf16.gmra.mrb[0].mxu0 %v1555
        %v1919 = vpop.f32.mrb[0].mxu0
        %v1920 = vadd.f32 0.0, %v1919
        %v1921 = vpop.f32.mrb[0].mxu0
        %v1922 = vpop.f32.mrb[0].mxu0
        %v1923 = vadd.f32 0.0, %v1922
        %v1924 = vpop.f32.mrb[0].mxu0
        %1925 = vmatprep.mubr.bf16.mxu0 0
        %1926 = vmatmul.mubr.bf16.gmra.mrb[0].mxu0 %v1558
        %v1927 = vpop.f32.mrb[0].mxu0
        %v1928 = vadd.f32 0.0, %v1927
        %v1929 = vpop.f32.mrb[0].mxu0
        %v1930 = vpop.f32.mrb[0].mxu0
        %v1931 = vadd.f32 0.0, %v1930
        %v1932 = vpop.f32.mrb[0].mxu0
        %1933 = vmatprep.mubr.bf16.mxu0 0
        %1934 = vmatmul.mubr.bf16.gmra.mrb[0].mxu0 %v1561
        %v1935 = vpop.f32.mrb[0].mxu0
        %v1936 = vadd.f32 0.0, %v1935
        %v1937 = vpop.f32.mrb[0].mxu0
        %v1938 = vpop.f32.mrb[0].mxu0
        %v1939 = vadd.f32 0.0, %v1938
        %v1940 = vpop.f32.mrb[0].mxu0
        %1941 = vmatprep.mubr.bf16.mxu0 0
        %1942 = vmatmul.mubr.bf16.gmra.mrb[0].mxu0 %v1564
        %v1943 = vpop.f32.mrb[0].mxu0
        %v1944 = vadd.f32 0.0, %v1943
        %v1945 = vpop.f32.mrb[0].mxu0
        %v1946 = vpop.f32.mrb[0].mxu0
        %v1947 = vadd.f32 0.0, %v1946
        %v1948 = vpop.f32.mrb[0].mxu0
        %1949 = vmatprep.mubr.bf16.mxu0 0
        %1950 = vmatmul.mubr.bf16.gmra.mrb[0].mxu0 %v1567
        %v1951 = vpop.f32.mrb[0].mxu0
        %v1952 = vadd.f32 0.0, %v1951
        %v1953 = vpop.f32.mrb[0].mxu0
        %v1954 = vpop.f32.mrb[0].mxu0
        %v1955 = vadd.f32 0.0, %v1954
        %v1956 = vpop.f32.mrb[0].mxu0
        %1957 = vmatprep.mubr.bf16.mxu0 0
        %1958 = vmatmul.mubr.bf16.gmra.mrb[0].mxu0 %v1570
        %v1959 = vpop.f32.mrb[0].mxu0
        %v1960 = vadd.f32 0.0, %v1959
        %v1961 = vpop.f32.mrb[0].mxu0
        %v1962 = vpop.f32.mrb[0].mxu0
        %v1963 = vadd.f32 0.0, %v1962
        %v1964 = vpop.f32.mrb[0].mxu0
        %1965 = vmatprep.mubr.bf16.mxu0 0
        %1966 = vmatmul.mubr.bf16.gmra.mrb[0].mxu0 %v1573
        %v1967 = vpop.f32.mrb[0].mxu0
        %v1968 = vadd.f32 0.0, %v1967
        %v1969 = vpop.f32.mrb[0].mxu0
        %v1970 = vpop.f32.mrb[0].mxu0
        %v1971 = vadd.f32 0.0, %v1970
        %v1972 = vpop.f32.mrb[0].mxu0
        %1973 = vmatprep.mubr.bf16.mxu0 0
        %1974 = vmatmul.mubr.bf16.gmra.mrb[0].mxu0 %v1576
        %v1975 = vpop.f32.mrb[0].mxu0
        %v1976 = vadd.f32 0.0, %v1975
        %v1977 = vpop.f32.mrb[0].mxu0
        %v1978 = vpop.f32.mrb[0].mxu0
        %v1979 = vadd.f32 0.0, %v1978
        %v1980 = vpop.f32.mrb[0].mxu0
        %1981 = vmatprep.mubr.bf16.mxu0 0
        %1982 = vmatmul.mubr.bf16.gmra.mrb[0].mxu0 %v1579
        %v1983 = vpop.f32.mrb[0].mxu0
        %v1984 = vadd.f32 0.0, %v1983
        %v1985 = vpop.f32.mrb[0].mxu0
        %v1986 = vpop.f32.mrb[0].mxu0
        %v1987 = vadd.f32 0.0, %v1986
        %v1988 = vpop.f32.mrb[0].mxu0
        %1989 = vmatprep.mubr.bf16.mxu0 0
        %1990 = vmatmul.mubr.bf16.gmra.mrb[0].mxu0 %v1582
        %v1991 = vpop.f32.mrb[0].mxu0
        %v1992 = vadd.f32 0.0, %v1991
        %v1993 = vpop.f32.mrb[0].mxu0
        %v1994 = vpop.f32.mrb[0].mxu0
        %v1995 = vadd.f32 0.0, %v1994
        %v1996 = vpop.f32.mrb[0].mxu0
        %1997 = vmatprep.mubr.bf16.mxu0 0
        %1998 = vmatmul.mubr.bf16.gmra.mrb[0].mxu0 %v1585
        %v1999 = vpop.f32.mrb[0].mxu0
        %v2000 = vadd.f32 0.0, %v1999
        %v2001 = vpop.f32.mrb[0].mxu0
        %v2002 = vpop.f32.mrb[0].mxu0
        %v2003 = vadd.f32 0.0, %v2002
        %v2004 = vpop.f32.mrb[0].mxu0
        %2005 = vmatprep.mubr.bf16.mxu0 0
        %2006 = vmatmul.mubr.bf16.gmra.mrb[0].mxu0 %v1588
        %v2007 = vpop.f32.mrb[0].mxu0
        %v2008 = vadd.f32 0.0, %v2007
        %v2009 = vpop.f32.mrb[0].mxu0
        %v2010 = vpop.f32.mrb[0].mxu0
        %v2011 = vadd.f32 0.0, %v2010
        %v2012 = vpop.f32.mrb[0].mxu0
        %2013 = vmatprep.mubr.bf16.mxu0 0
        %2014 = vmatmul.mubr.bf16.gmra.mrb[0].mxu0 %v1591
        %v2015 = vpop.f32.mrb[0].mxu0
        %v2016 = vadd.f32 0.0, %v2015
        %v2017 = vpop.f32.mrb[0].mxu0
        %v2018 = vpop.f32.mrb[0].mxu0
        %v2019 = vadd.f32 0.0, %v2018
        %v2020 = vpop.f32.mrb[0].mxu0
        %2021 = vmatprep.mubr.bf16.mxu0 0
        %2022 = vmatmul.mubr.bf16.gmra.mrb[0].mxu0 %v1594
        %v2023 = vpop.f32.mrb[0].mxu0
        %v2024 = vadd.f32 0.0, %v2023
        %v2025 = vpop.f32.mrb[0].mxu0
        %v2026 = vpop.f32.mrb[0].mxu0
        %v2027 = vadd.f32 0.0, %v2026
        %v2028 = vpop.f32.mrb[0].mxu0
        %2029 = vmatprep.mubr.bf16.mxu0 0
        %2030 = vmatmul.mubr.bf16.gmra.mrb[0].mxu0 %v1597
        %v2031 = vpop.f32.mrb[0].mxu0
        %v2032 = vadd.f32 0.0, %v2031
        %v2033 = vpop.f32.mrb[0].mxu0
        %v2034 = vpop.f32.mrb[0].mxu0
        %v2035 = vadd.f32 0.0, %v2034
        %v2036 = vpop.f32.mrb[0].mxu0
        %2037 = vmatprep.mubr.bf16.mxu0 0
        %2038 = vmatmul.mubr.bf16.gmra.mrb[0].mxu0 %v1600
        %v2039 = vpop.f32.mrb[0].mxu0
        %v2040 = vadd.f32 0.0, %v2039
        %v2041 = vpop.f32.mrb[0].mxu0
        %v2042 = vpop.f32.mrb[0].mxu0
        %v2043 = vadd.f32 0.0, %v2042
        %v2044 = vpop.f32.mrb[0].mxu0
        %2045 = vmatprep.mubr.bf16.mxu0 0
        %2046 = vmatmul.mubr.bf16.gmra.mrb[0].mxu0 %v1603
        %v2047 = vpop.f32.mrb[0].mxu0
        %v2048 = vadd.f32 0.0, %v2047
        %v2049 = vpop.f32.mrb[0].mxu0
        %v2050 = vpop.f32.mrb[0].mxu0
        %v2051 = vadd.f32 0.0, %v2050
        %v2052 = vpop.f32.mrb[0].mxu0
        %2053 = vmatprep.mubr.bf16.mxu0 0
        %2054 = vmatmul.mubr.bf16.gmra.mrb[0].mxu0 %v1606
        %v2055 = vpop.f32.mrb[0].mxu0
        %v2056 = vadd.f32 0.0, %v2055
        %v2057 = vpop.f32.mrb[0].mxu0
        %v2058 = vpop.f32.mrb[0].mxu0
        %v2059 = vadd.f32 0.0, %v2058
        %v2060 = vpop.f32.mrb[0].mxu0
        %2061 = vmatprep.mubr.bf16.mxu0 0
        %2062 = vmatmul.mubr.bf16.gmra.mrb[0].mxu0 %v1609
        %v2063 = vpop.f32.mrb[0].mxu0
        %v2064 = vadd.f32 0.0, %v2063
        %v2065 = vpop.f32.mrb[0].mxu0
        %v2066 = vpop.f32.mrb[0].mxu0
        %v2067 = vadd.f32 0.0, %v2066
        %v2068 = vpop.f32.mrb[0].mxu0
        %2069 = vmatprep.mubr.bf16.mxu0 0
        %2070 = vmatmul.mubr.bf16.gmra.mrb[0].mxu0 %v1612
        %v2071 = vpop.f32.mrb[0].mxu0
        %v2072 = vadd.f32 0.0, %v2071
        %v2073 = vpop.f32.mrb[0].mxu0
        %v2074 = vpop.f32.mrb[0].mxu0
        %v2075 = vadd.f32 0.0, %v2074
        %v2076 = vpop.f32.mrb[0].mxu0
        %2077 = vmatprep.mubr.bf16.mxu0 0
        %2078 = vmatmul.mubr.bf16.gmra.mrb[0].mxu0 %v1615
        %v2079 = vpop.f32.mrb[0].mxu0
        %v2080 = vadd.f32 0.0, %v2079
        %v2081 = vpop.f32.mrb[0].mxu0
        %v2082 = vpop.f32.mrb[0].mxu0
        %v2083 = vadd.f32 0.0, %v2082
        %v2084 = vpop.f32.mrb[0].mxu0
        %2085 = vmatprep.mubr.bf16.mxu0 0
        %2086 = vmatmul.mubr.bf16.gmra.mrb[0].mxu0 %v1618
        %v2087 = vpop.f32.mrb[0].mxu0
        %v2088 = vadd.f32 0.0, %v2087
        %v2089 = vpop.f32.mrb[0].mxu0
        %v2090 = vpop.f32.mrb[0].mxu0
        %v2091 = vadd.f32 0.0, %v2090
        %v2092 = vpop.f32.mrb[0].mxu0
        %2093 = vmatprep.mubr.bf16.mxu0 0
        %2094 = vmatmul.mubr.bf16.gmra.mrb[0].mxu0 %v1621
        %v2095 = vpop.f32.mrb[0].mxu0
        %v2096 = vadd.f32 0.0, %v2095
        %v2097 = vpop.f32.mrb[0].mxu0
        %v2098 = vpop.f32.mrb[0].mxu0
        %v2099 = vadd.f32 0.0, %v2098
        %v2100 = vpop.f32.mrb[0].mxu0
        %2101 = vmatprep.mubr.bf16.mxu0 0
        %2102 = vmatmul.mubr.bf16.gmra.mrb[0].mxu0 %v1624
        %v2103 = vpop.f32.mrb[0].mxu0
        %v2104 = vadd.f32 0.0, %v2103
        %v2105 = vpop.f32.mrb[0].mxu0
        %v2106 = vpop.f32.mrb[0].mxu0
        %v2107 = vadd.f32 0.0, %v2106
        %v2108 = vpop.f32.mrb[0].mxu0
        %2109 = vmatprep.mubr.bf16.mxu0 0
        %2110 = vmatmul.mubr.bf16.gmra.mrb[0].mxu0 %v1627
        %v2111 = vpop.f32.mrb[0].mxu0
        %v2112 = vadd.f32 0.0, %v2111
        %v2113 = vpop.f32.mrb[0].mxu0
        %v2114 = vpop.f32.mrb[0].mxu0
        %v2115 = vadd.f32 0.0, %v2114
        %v2116 = vpop.f32.mrb[0].mxu0
        %2117 = vmatprep.mubr.bf16.mxu0 0
        %2118 = vmatmul.mubr.bf16.gmra.mrb[0].mxu0 %v1630
        %v2119 = vpop.f32.mrb[0].mxu0
        %v2120 = vadd.f32 0.0, %v2119
        %v2121 = vpop.f32.mrb[0].mxu0
        %v2122 = vpop.f32.mrb[0].mxu0
        %v2123 = vadd.f32 0.0, %v2122
        %v2124 = vpop.f32.mrb[0].mxu0
        %2125 = vmatprep.mubr.bf16.mxu0 0
        %2126 = vmatmul.mubr.bf16.gmra.mrb[0].mxu0 %v1633
        %v2127 = vpop.f32.mrb[0].mxu0
        %v2128 = vadd.f32 0.0, %v2127
        %v2129 = vpop.f32.mrb[0].mxu0
        %v2130 = vpop.f32.mrb[0].mxu0
        %v2131 = vadd.f32 0.0, %v2130
        %v2132 = vpop.f32.mrb[0].mxu0
        %2133 = vmatprep.mubr.bf16.mxu0 0
        %2134 = vmatmul.mubr.bf16.gmra.mrb[0].mxu0 %v1636
        %v2135 = vpop.f32.mrb[0].mxu0
        %v2136 = vadd.f32 0.0, %v2135
        %v2137 = vpop.f32.mrb[0].mxu0
        %v2138 = vpop.f32.mrb[0].mxu0
        %v2139 = vadd.f32 0.0, %v2138
        %v2140 = vpop.f32.mrb[0].mxu0
        %2141 = vmatprep.mubr.bf16.mxu0 0
        %2142 = vmatmul.mubr.bf16.gmra.mrb[0].mxu0 %v1639
        %v2143 = vpop.f32.mrb[0].mxu0
        %v2144 = vadd.f32 0.0, %v2143
        %v2145 = vpop.f32.mrb[0].mxu0
        %v2146 = vpop.f32.mrb[0].mxu0
        %v2147 = vadd.f32 0.0, %v2146
        %v2148 = vpop.f32.mrb[0].mxu0
        %2149 = vmatprep.mubr.bf16.mxu0 0
        %2150 = vmatmul.mubr.bf16.gmra.mrb[0].mxu0 %v1642
        %v2151 = vpop.f32.mrb[0].mxu0
        %v2152 = vadd.f32 0.0, %v2151
        %v2153 = vpop.f32.mrb[0].mxu0
        %v2154 = vpop.f32.mrb[0].mxu0
        %v2155 = vadd.f32 0.0, %v2154
        %v2156 = vpop.f32.mrb[0].mxu0
        %2157 = vmatprep.mubr.bf16.mxu0 0
        %2158 = vmatmul.mubr.bf16.gmra.mrb[0].mxu0 %v1645
        %v2159 = vpop.f32.mrb[0].mxu0
        %v2160 = vadd.f32 0.0, %v2159
        %v2161 = vpop.f32.mrb[0].mxu0
        %v2162 = vpop.f32.mrb[0].mxu0
        %v2163 = vadd.f32 0.0, %v2162
        %v2164 = vpop.f32.mrb[0].mxu0
        %2165 = vmatprep.mubr.bf16.mxu0 0
        %2166 = vmatmul.mubr.bf16.gmra.mrb[0].mxu0 %v1648
        %v2167 = vpop.f32.mrb[0].mxu0
        %v2168 = vadd.f32 0.0, %v2167
        %v2169 = vpop.f32.mrb[0].mxu0
        %v2170 = vpop.f32.mrb[0].mxu0
        %v2171 = vadd.f32 0.0, %v2170
        %v2172 = vpop.f32.mrb[0].mxu0
        %2173 = vmatprep.mubr.bf16.mxu0 0
        %2174 = vmatmul.mubr.bf16.gmra.mrb[0].mxu0 %v1651
        %v2175 = vpop.f32.mrb[0].mxu0
        %v2176 = vadd.f32 0.0, %v2175
        %v2177 = vpop.f32.mrb[0].mxu0
        %v2178 = vpop.f32.mrb[0].mxu0
        %v2179 = vadd.f32 0.0, %v2178
        %v2180 = vpop.f32.mrb[0].mxu0
        %2181 = vmatprep.mubr.bf16.mxu0 0
        %2182 = vmatmul.mubr.bf16.gmra.mrb[0].mxu0 %v1654
        %v2183 = vpop.f32.mrb[0].mxu0
        %v2184 = vadd.f32 0.0, %v2183
        %v2185 = vpop.f32.mrb[0].mxu0
        %v2186 = vpop.f32.mrb[0].mxu0
        %v2187 = vadd.f32 0.0, %v2186
        %v2188 = vpop.f32.mrb[0].mxu0
        %2189 = vmatprep.mubr.bf16.mxu0 0
        %2190 = vmatmul.mubr.bf16.gmra.mrb[0].mxu0 %v1657
        %v2191 = vpop.f32.mrb[0].mxu0
        %v2192 = vadd.f32 0.0, %v2191
        %v2193 = vpop.f32.mrb[0].mxu0
        %v2194 = vpop.f32.mrb[0].mxu0
        %v2195 = vadd.f32 0.0, %v2194
        %v2196 = vpop.f32.mrb[0].mxu0
        %2197 = vmatprep.mubr.bf16.mxu0 0
        %2198 = vmatmul.mubr.bf16.gmra.mrb[0].mxu0 %v1660
        %v2199 = vpop.f32.mrb[0].mxu0
        %v2200 = vadd.f32 0.0, %v2199
        %v2201 = vpop.f32.mrb[0].mxu0
        %v2202 = vpop.f32.mrb[0].mxu0
        %v2203 = vadd.f32 0.0, %v2202
        %v2204 = vpop.f32.mrb[0].mxu0
        %2205 = vmatprep.mubr.bf16.mxu0 0
        %2206 = vmatmul.mubr.bf16.gmra.mrb[0].mxu0 %v1663
        %v2207 = vpop.f32.mrb[0].mxu0
        %v2208 = vadd.f32 0.0, %v2207
        %v2209 = vpop.f32.mrb[0].mxu0
        %v2210 = vpop.f32.mrb[0].mxu0
        %v2211 = vadd.f32 0.0, %v2210
        %v2212 = vpop.f32.mrb[0].mxu0
        %2213 = vmatprep.mubr.bf16.mxu0 0
        %2214 = vmatmul.mubr.bf16.gmra.mrb[0].mxu0 %v1666
        %v2215 = vpop.f32.mrb[0].mxu0
        %v2216 = vadd.f32 0.0, %v2215
        %v2217 = vpop.f32.mrb[0].mxu0
        %v2218 = vpop.f32.mrb[0].mxu0
        %v2219 = vadd.f32 0.0, %v2218
        %v2220 = vpop.f32.mrb[0].mxu0
        %2221 = vmatprep.mubr.bf16.mxu0 0
        %2222 = vmatmul.mubr.bf16.gmra.mrb[0].mxu0 %v1669
        %v2223 = vpop.f32.mrb[0].mxu0
        %v2224 = vadd.f32 0.0, %v2223
        %v2225 = vpop.f32.mrb[0].mxu0
        %v2226 = vpop.f32.mrb[0].mxu0
        %v2227 = vadd.f32 0.0, %v2226
        %v2228 = vpop.f32.mrb[0].mxu0
        %2229 = vmatprep.mubr.bf16.mxu0 0
        %2230 = vmatmul.mubr.bf16.gmra.mrb[0].mxu0 %v1672
        %v2231 = vpop.f32.mrb[0].mxu0
        %v2232 = vadd.f32 0.0, %v2231
        %v2233 = vpop.f32.mrb[0].mxu0
        %v2234 = vpop.f32.mrb[0].mxu0
        %v2235 = vadd.f32 0.0, %v2234
        %v2236 = vpop.f32.mrb[0].mxu0
        %2237 = vmatprep.mubr.bf16.mxu0 0
        %2238 = vmatmul.mubr.bf16.gmra.mrb[0].mxu0 %v1675
        %v2239 = vpop.f32.mrb[0].mxu0
        %v2240 = vadd.f32 0.0, %v2239
        %v2241 = vpop.f32.mrb[0].mxu0
        %v2242 = vpop.f32.mrb[0].mxu0
        %v2243 = vadd.f32 0.0, %v2242
        %v2244 = vpop.f32.mrb[0].mxu0
        %2245 = vdwg.mxu0
        %v2246 = vld [vmem:[%s4] sm:$0xff]
        %v2247 = vld [vmem:[%s4 + $0x8] sm:$0xff]
        %v2248 = vld [vmem:[%s4 + $0x10] sm:$0xff]
        %v2249 = vld [vmem:[%s4 + $0x18] sm:$0xff]
        %v2250 = vld [vmem:[%s4 + $0x20] sm:$0xff]
        %v2251 = vld [vmem:[%s4 + $0x28] sm:$0xff]
        %v2252 = vld [vmem:[%s4 + $0x30] sm:$0xff]
        %v2253 = vld [vmem:[%s4 + $0x38] sm:$0xff]
        %v2254 = vld [vmem:[%s4 + $0x40] sm:$0xff]
        %v2255 = vld [vmem:[%s4 + $0x48] sm:$0xff]
        %v2256 = vld [vmem:[%s4 + $0x50] sm:$0xff]
        %v2257 = vld [vmem:[%s4 + $0x58] sm:$0xff]
        %v2258 = vld [vmem:[%s4 + $0x60] sm:$0xff]
        %v2259 = vld [vmem:[%s4 + $0x68] sm:$0xff]
        %v2260 = vld [vmem:[%s4 + $0x70] sm:$0xff]
        %v2261 = vld [vmem:[%s4 + $0x78] sm:$0xff]
        %v2262 = vadd.f32 %v1736, %v2246
        %v2263 = vadd.f32 %v1739, %v2247
        %v2264 = vadd.f32 %v1744, %v2248
        %v2265 = vadd.f32 %v1747, %v2249
        %v2266 = vadd.f32 %v1752, %v2250
        %v2267 = vadd.f32 %v1755, %v2251
        %v2268 = vadd.f32 %v1760, %v2252
        %v2269 = vadd.f32 %v1763, %v2253
        %v2270 = vadd.f32 %v1768, %v2254
        %v2271 = vadd.f32 %v1771, %v2255
        %v2272 = vadd.f32 %v1776, %v2256
        %v2273 = vadd.f32 %v1779, %v2257
        %v2274 = vadd.f32 %v1784, %v2258
        %v2275 = vadd.f32 %v1787, %v2259
        %v2276 = vadd.f32 %v1792, %v2260
        %v2277 = vadd.f32 %v1795, %v2261
        %v2278 = vadd.f32 %v1800, %v2246
        %v2279 = vadd.f32 %v1803, %v2247
        %v2280 = vadd.f32 %v1808, %v2248
        %v2281 = vadd.f32 %v1811, %v2249
        %v2282 = vadd.f32 %v1816, %v2250
        %v2283 = vadd.f32 %v1819, %v2251
        %v2284 = vadd.f32 %v1824, %v2252
        %v2285 = vadd.f32 %v1827, %v2253
        %v2286 = vadd.f32 %v1832, %v2254
        %v2287 = vadd.f32 %v1835, %v2255
        %v2288 = vadd.f32 %v1840, %v2256
        %v2289 = vadd.f32 %v1843, %v2257
        %v2290 = vadd.f32 %v1848, %v2258
        %v2291 = vadd.f32 %v1851, %v2259
        %v2292 = vadd.f32 %v1856, %v2260
        %v2293 = vadd.f32 %v1859, %v2261
        %v2294 = vadd.f32 %v1864, %v2246
        %v2295 = vadd.f32 %v1867, %v2247
        %v2296 = vadd.f32 %v1872, %v2248
        %v2297 = vadd.f32 %v1875, %v2249
        %v2298 = vadd.f32 %v1880, %v2250
        %v2299 = vadd.f32 %v1883, %v2251
        %v2300 = vadd.f32 %v1888, %v2252
        %v2301 = vadd.f32 %v1891, %v2253
        %v2302 = vadd.f32 %v1896, %v2254
        %v2303 = vadd.f32 %v1899, %v2255
        %v2304 = vadd.f32 %v1904, %v2256
        %v2305 = vadd.f32 %v1907, %v2257
        %v2306 = vadd.f32 %v1912, %v2258
        %v2307 = vadd.f32 %v1915, %v2259
        %v2308 = vadd.f32 %v1920, %v2260
        %v2309 = vadd.f32 %v1923, %v2261
        %v2310 = vadd.f32 %v1928, %v2246
        %v2311 = vadd.f32 %v1931, %v2247
        %v2312 = vadd.f32 %v1936, %v2248
        %v2313 = vadd.f32 %v1939, %v2249
        %v2314 = vadd.f32 %v1944, %v2250
        %v2315 = vadd.f32 %v1947, %v2251
        %v2316 = vadd.f32 %v1952, %v2252
        %v2317 = vadd.f32 %v1955, %v2253
        %v2318 = vadd.f32 %v1960, %v2254
        %v2319 = vadd.f32 %v1963, %v2255
        %v2320 = vadd.f32 %v1968, %v2256
        %v2321 = vadd.f32 %v1971, %v2257
        %v2322 = vadd.f32 %v1976, %v2258
        %v2323 = vadd.f32 %v1979, %v2259
        %v2324 = vadd.f32 %v1984, %v2260
        %v2325 = vadd.f32 %v1987, %v2261
        %v2326 = vadd.f32 %v1992, %v2246
        %v2327 = vadd.f32 %v1995, %v2247
        %v2328 = vadd.f32 %v2000, %v2248
        %v2329 = vadd.f32 %v2003, %v2249
        %v2330 = vadd.f32 %v2008, %v2250
        %v2331 = vadd.f32 %v2011, %v2251
        %v2332 = vadd.f32 %v2016, %v2252
        %v2333 = vadd.f32 %v2019, %v2253
        %v2334 = vadd.f32 %v2024, %v2254
        %v2335 = vadd.f32 %v2027, %v2255
        %v2336 = vadd.f32 %v2032, %v2256
        %v2337 = vadd.f32 %v2035, %v2257
        %v2338 = vadd.f32 %v2040, %v2258
        %v2339 = vadd.f32 %v2043, %v2259
        %v2340 = vadd.f32 %v2048, %v2260
        %v2341 = vadd.f32 %v2051, %v2261
        %v2342 = vadd.f32 %v2056, %v2246
        %v2343 = vadd.f32 %v2059, %v2247
        %v2344 = vadd.f32 %v2064, %v2248
        %v2345 = vadd.f32 %v2067, %v2249
        %v2346 = vadd.f32 %v2072, %v2250
        %v2347 = vadd.f32 %v2075, %v2251
        %v2348 = vadd.f32 %v2080, %v2252
        %v2349 = vadd.f32 %v2083, %v2253
        %v2350 = vadd.f32 %v2088, %v2254
        %v2351 = vadd.f32 %v2091, %v2255
        %v2352 = vadd.f32 %v2096, %v2256
        %v2353 = vadd.f32 %v2099, %v2257
        %v2354 = vadd.f32 %v2104, %v2258
        %v2355 = vadd.f32 %v2107, %v2259
        %v2356 = vadd.f32 %v2112, %v2260
        %v2357 = vadd.f32 %v2115, %v2261
        %v2358 = vadd.f32 %v2120, %v2246
        %v2359 = vadd.f32 %v2123, %v2247
        %v2360 = vadd.f32 %v2128, %v2248
        %v2361 = vadd.f32 %v2131, %v2249
        %v2362 = vadd.f32 %v2136, %v2250
        %v2363 = vadd.f32 %v2139, %v2251
        %v2364 = vadd.f32 %v2144, %v2252
        %v2365 = vadd.f32 %v2147, %v2253
        %v2366 = vadd.f32 %v2152, %v2254
        %v2367 = vadd.f32 %v2155, %v2255
        %v2368 = vadd.f32 %v2160, %v2256
        %v2369 = vadd.f32 %v2163, %v2257
        %v2370 = vadd.f32 %v2168, %v2258
        %v2371 = vadd.f32 %v2171, %v2259
        %v2372 = vadd.f32 %v2176, %v2260
        %v2373 = vadd.f32 %v2179, %v2261
        %v2374 = vadd.f32 %v2184, %v2246
        %v2375 = vadd.f32 %v2187, %v2247
        %v2376 = vadd.f32 %v2192, %v2248
        %v2377 = vadd.f32 %v2195, %v2249
        %v2378 = vadd.f32 %v2200, %v2250
        %v2379 = vadd.f32 %v2203, %v2251
        %v2380 = vadd.f32 %v2208, %v2252
        %v2381 = vadd.f32 %v2211, %v2253
        %v2382 = vadd.f32 %v2216, %v2254
        %v2383 = vadd.f32 %v2219, %v2255
        %v2384 = vadd.f32 %v2224, %v2256
        %v2385 = vadd.f32 %v2227, %v2257
        %v2386 = vadd.f32 %v2232, %v2258
        %v2387 = vadd.f32 %v2235, %v2259
        %v2388 = vadd.f32 %v2240, %v2260
        %v2389 = vadd.f32 %v2243, %v2261
        %2390 = vmax.xlane.f32.xlu0 %v2262
        %v2391 = vpop.xlane.xlu0 %2390
        %2392 = vmax.xlane.f32.xlu0 %v2263
        %v2393 = vpop.xlane.xlu0 %2392
        %2394 = vmax.xlane.f32.xlu0 %v2264
        %v2395 = vpop.xlane.xlu0 %2394
        %2396 = vmax.xlane.f32.xlu0 %v2265
        %v2397 = vpop.xlane.xlu0 %2396
        %2398 = vmax.xlane.f32.xlu0 %v2266
        %v2399 = vpop.xlane.xlu0 %2398
        %2400 = vmax.xlane.f32.xlu0 %v2267
        %v2401 = vpop.xlane.xlu0 %2400
        %2402 = vmax.xlane.f32.xlu0 %v2268
        %v2403 = vpop.xlane.xlu0 %2402
        %2404 = vmax.xlane.f32.xlu0 %v2269
        %v2405 = vpop.xlane.xlu0 %2404
        %2406 = vmax.xlane.f32.xlu0 %v2270
        %v2407 = vpop.xlane.xlu0 %2406
        %2408 = vmax.xlane.f32.xlu0 %v2271
        %v2409 = vpop.xlane.xlu0 %2408
        %2410 = vmax.xlane.f32.xlu0 %v2272
        %v2411 = vpop.xlane.xlu0 %2410
        %2412 = vmax.xlane.f32.xlu0 %v2273
        %v2413 = vpop.xlane.xlu0 %2412
        %2414 = vmax.xlane.f32.xlu0 %v2274
        %v2415 = vpop.xlane.xlu0 %2414
        %2416 = vmax.xlane.f32.xlu0 %v2275
        %v2417 = vpop.xlane.xlu0 %2416
        %2418 = vmax.xlane.f32.xlu0 %v2276
        %v2419 = vpop.xlane.xlu0 %2418
        %2420 = vmax.xlane.f32.xlu0 %v2277
        %v2421 = vpop.xlane.xlu0 %2420
        %2422 = vmax.xlane.f32.xlu0 %v2278
        %v2423 = vpop.xlane.xlu0 %2422
        %2424 = vmax.xlane.f32.xlu0 %v2279
        %v2425 = vpop.xlane.xlu0 %2424
        %2426 = vmax.xlane.f32.xlu0 %v2280
        %v2427 = vpop.xlane.xlu0 %2426
        %2428 = vmax.xlane.f32.xlu0 %v2281
        %v2429 = vpop.xlane.xlu0 %2428
        %2430 = vmax.xlane.f32.xlu0 %v2282
        %v2431 = vpop.xlane.xlu0 %2430
        %2432 = vmax.xlane.f32.xlu0 %v2283
        %v2433 = vpop.xlane.xlu0 %2432
        %2434 = vmax.xlane.f32.xlu0 %v2284
        %v2435 = vpop.xlane.xlu0 %2434
        %2436 = vmax.xlane.f32.xlu0 %v2285
        %v2437 = vpop.xlane.xlu0 %2436
        %2438 = vmax.xlane.f32.xlu0 %v2286
        %v2439 = vpop.xlane.xlu0 %2438
        %2440 = vmax.xlane.f32.xlu0 %v2287
        %v2441 = vpop.xlane.xlu0 %2440
        %2442 = vmax.xlane.f32.xlu0 %v2288
        %v2443 = vpop.xlane.xlu0 %2442
        %2444 = vmax.xlane.f32.xlu0 %v2289
        %v2445 = vpop.xlane.xlu0 %2444
        %2446 = vmax.xlane.f32.xlu0 %v2290
        %v2447 = vpop.xlane.xlu0 %2446
        %2448 = vmax.xlane.f32.xlu0 %v2291
        %v2449 = vpop.xlane.xlu0 %2448
        %2450 = vmax.xlane.f32.xlu0 %v2292
        %v2451 = vpop.xlane.xlu0 %2450
        %2452 = vmax.xlane.f32.xlu0 %v2293
        %v2453 = vpop.xlane.xlu0 %2452
        %2454 = vmax.xlane.f32.xlu0 %v2294
        %v2455 = vpop.xlane.xlu0 %2454
        %2456 = vmax.xlane.f32.xlu0 %v2295
        %v2457 = vpop.xlane.xlu0 %2456
        %2458 = vmax.xlane.f32.xlu0 %v2296
        %v2459 = vpop.xlane.xlu0 %2458
        %2460 = vmax.xlane.f32.xlu0 %v2297
        %v2461 = vpop.xlane.xlu0 %2460
        %2462 = vmax.xlane.f32.xlu0 %v2298
        %v2463 = vpop.xlane.xlu0 %2462
        %2464 = vmax.xlane.f32.xlu0 %v2299
        %v2465 = vpop.xlane.xlu0 %2464
        %2466 = vmax.xlane.f32.xlu0 %v2300
        %v2467 = vpop.xlane.xlu0 %2466
        %2468 = vmax.xlane.f32.xlu0 %v2301
        %v2469 = vpop.xlane.xlu0 %2468
        %2470 = vmax.xlane.f32.xlu0 %v2302
        %v2471 = vpop.xlane.xlu0 %2470
        %2472 = vmax.xlane.f32.xlu0 %v2303
        %v2473 = vpop.xlane.xlu0 %2472
        %2474 = vmax.xlane.f32.xlu0 %v2304
        %v2475 = vpop.xlane.xlu0 %2474
        %2476 = vmax.xlane.f32.xlu0 %v2305
        %v2477 = vpop.xlane.xlu0 %2476
        %2478 = vmax.xlane.f32.xlu0 %v2306
        %v2479 = vpop.xlane.xlu0 %2478
        %2480 = vmax.xlane.f32.xlu0 %v2307
        %v2481 = vpop.xlane.xlu0 %2480
        %2482 = vmax.xlane.f32.xlu0 %v2308
        %v2483 = vpop.xlane.xlu0 %2482
        %2484 = vmax.xlane.f32.xlu0 %v2309
        %v2485 = vpop.xlane.xlu0 %2484
        %2486 = vmax.xlane.f32.xlu0 %v2310
        %v2487 = vpop.xlane.xlu0 %2486
        %2488 = vmax.xlane.f32.xlu0 %v2311
        %v2489 = vpop.xlane.xlu0 %2488
        %2490 = vmax.xlane.f32.xlu0 %v2312
        %v2491 = vpop.xlane.xlu0 %2490
        %2492 = vmax.xlane.f32.xlu0 %v2313
        %v2493 = vpop.xlane.xlu0 %2492
        %2494 = vmax.xlane.f32.xlu0 %v2314
        %v2495 = vpop.xlane.xlu0 %2494
        %2496 = vmax.xlane.f32.xlu0 %v2315
        %v2497 = vpop.xlane.xlu0 %2496
        %2498 = vmax.xlane.f32.xlu0 %v2316
        %v2499 = vpop.xlane.xlu0 %2498
        %2500 = vmax.xlane.f32.xlu0 %v2317
        %v2501 = vpop.xlane.xlu0 %2500
        %2502 = vmax.xlane.f32.xlu0 %v2318
        %v2503 = vpop.xlane.xlu0 %2502
        %2504 = vmax.xlane.f32.xlu0 %v2319
        %v2505 = vpop.xlane.xlu0 %2504
        %2506 = vmax.xlane.f32.xlu0 %v2320
        %v2507 = vpop.xlane.xlu0 %2506
        %2508 = vmax.xlane.f32.xlu0 %v2321
        %v2509 = vpop.xlane.xlu0 %2508
        %2510 = vmax.xlane.f32.xlu0 %v2322
        %v2511 = vpop.xlane.xlu0 %2510
        %2512 = vmax.xlane.f32.xlu0 %v2323
        %v2513 = vpop.xlane.xlu0 %2512
        %2514 = vmax.xlane.f32.xlu0 %v2324
        %v2515 = vpop.xlane.xlu0 %2514
        %2516 = vmax.xlane.f32.xlu0 %v2325
        %v2517 = vpop.xlane.xlu0 %2516
        %2518 = vmax.xlane.f32.xlu0 %v2326
        %v2519 = vpop.xlane.xlu0 %2518
        %2520 = vmax.xlane.f32.xlu0 %v2327
        %v2521 = vpop.xlane.xlu0 %2520
        %2522 = vmax.xlane.f32.xlu0 %v2328
        %v2523 = vpop.xlane.xlu0 %2522
        %2524 = vmax.xlane.f32.xlu0 %v2329
        %v2525 = vpop.xlane.xlu0 %2524
        %2526 = vmax.xlane.f32.xlu0 %v2330
        %v2527 = vpop.xlane.xlu0 %2526
        %2528 = vmax.xlane.f32.xlu0 %v2331
        %v2529 = vpop.xlane.xlu0 %2528
        %2530 = vmax.xlane.f32.xlu0 %v2332
        %v2531 = vpop.xlane.xlu0 %2530
        %2532 = vmax.xlane.f32.xlu0 %v2333
        %v2533 = vpop.xlane.xlu0 %2532
        %2534 = vmax.xlane.f32.xlu0 %v2334
        %v2535 = vpop.xlane.xlu0 %2534
        %2536 = vmax.xlane.f32.xlu0 %v2335
        %v2537 = vpop.xlane.xlu0 %2536
        %2538 = vmax.xlane.f32.xlu0 %v2336
        %v2539 = vpop.xlane.xlu0 %2538
        %2540 = vmax.xlane.f32.xlu0 %v2337
        %v2541 = vpop.xlane.xlu0 %2540
        %2542 = vmax.xlane.f32.xlu0 %v2338
        %v2543 = vpop.xlane.xlu0 %2542
        %2544 = vmax.xlane.f32.xlu0 %v2339
        %v2545 = vpop.xlane.xlu0 %2544
        %2546 = vmax.xlane.f32.xlu0 %v2340
        %v2547 = vpop.xlane.xlu0 %2546
        %2548 = vmax.xlane.f32.xlu0 %v2341
        %v2549 = vpop.xlane.xlu0 %2548
        %2550 = vmax.xlane.f32.xlu0 %v2342
        %v2551 = vpop.xlane.xlu0 %2550
        %2552 = vmax.xlane.f32.xlu0 %v2343
        %v2553 = vpop.xlane.xlu0 %2552
        %2554 = vmax.xlane.f32.xlu0 %v2344
        %v2555 = vpop.xlane.xlu0 %2554
        %2556 = vmax.xlane.f32.xlu0 %v2345
        %v2557 = vpop.xlane.xlu0 %2556
        %2558 = vmax.xlane.f32.xlu0 %v2346
        %v2559 = vpop.xlane.xlu0 %2558
        %2560 = vmax.xlane.f32.xlu0 %v2347
        %v2561 = vpop.xlane.xlu0 %2560
        %2562 = vmax.xlane.f32.xlu0 %v2348
        %v2563 = vpop.xlane.xlu0 %2562
        %2564 = vmax.xlane.f32.xlu0 %v2349
        %v2565 = vpop.xlane.xlu0 %2564
        %2566 = vmax.xlane.f32.xlu0 %v2350
        %v2567 = vpop.xlane.xlu0 %2566
        %2568 = vmax.xlane.f32.xlu0 %v2351
        %v2569 = vpop.xlane.xlu0 %2568
        %2570 = vmax.xlane.f32.xlu0 %v2352
        %v2571 = vpop.xlane.xlu0 %2570
        %2572 = vmax.xlane.f32.xlu0 %v2353
        %v2573 = vpop.xlane.xlu0 %2572
        %2574 = vmax.xlane.f32.xlu0 %v2354
        %v2575 = vpop.xlane.xlu0 %2574
        %2576 = vmax.xlane.f32.xlu0 %v2355
        %v2577 = vpop.xlane.xlu0 %2576
        %2578 = vmax.xlane.f32.xlu0 %v2356
        %v2579 = vpop.xlane.xlu0 %2578
        %2580 = vmax.xlane.f32.xlu0 %v2357
        %v2581 = vpop.xlane.xlu0 %2580
        %2582 = vmax.xlane.f32.xlu0 %v2358
        %v2583 = vpop.xlane.xlu0 %2582
        %2584 = vmax.xlane.f32.xlu0 %v2359
        %v2585 = vpop.xlane.xlu0 %2584
        %2586 = vmax.xlane.f32.xlu0 %v2360
        %v2587 = vpop.xlane.xlu0 %2586
        %2588 = vmax.xlane.f32.xlu0 %v2361
        %v2589 = vpop.xlane.xlu0 %2588
        %2590 = vmax.xlane.f32.xlu0 %v2362
        %v2591 = vpop.xlane.xlu0 %2590
        %2592 = vmax.xlane.f32.xlu0 %v2363
        %v2593 = vpop.xlane.xlu0 %2592
        %2594 = vmax.xlane.f32.xlu0 %v2364
        %v2595 = vpop.xlane.xlu0 %2594
        %2596 = vmax.xlane.f32.xlu0 %v2365
        %v2597 = vpop.xlane.xlu0 %2596
        %2598 = vmax.xlane.f32.xlu0 %v2366
        %v2599 = vpop.xlane.xlu0 %2598
        %2600 = vmax.xlane.f32.xlu0 %v2367
        %v2601 = vpop.xlane.xlu0 %2600
        %2602 = vmax.xlane.f32.xlu0 %v2368
        %v2603 = vpop.xlane.xlu0 %2602
        %2604 = vmax.xlane.f32.xlu0 %v2369
        %v2605 = vpop.xlane.xlu0 %2604
        %2606 = vmax.xlane.f32.xlu0 %v2370
        %v2607 = vpop.xlane.xlu0 %2606
        %2608 = vmax.xlane.f32.xlu0 %v2371
        %v2609 = vpop.xlane.xlu0 %2608
        %2610 = vmax.xlane.f32.xlu0 %v2372
        %v2611 = vpop.xlane.xlu0 %2610
        %2612 = vmax.xlane.f32.xlu0 %v2373
        %v2613 = vpop.xlane.xlu0 %2612
        %2614 = vmax.xlane.f32.xlu0 %v2374
        %v2615 = vpop.xlane.xlu0 %2614
        %2616 = vmax.xlane.f32.xlu0 %v2375
        %v2617 = vpop.xlane.xlu0 %2616
        %2618 = vmax.xlane.f32.xlu0 %v2376
        %v2619 = vpop.xlane.xlu0 %2618
        %2620 = vmax.xlane.f32.xlu0 %v2377
        %v2621 = vpop.xlane.xlu0 %2620
        %2622 = vmax.xlane.f32.xlu0 %v2378
        %v2623 = vpop.xlane.xlu0 %2622
        %2624 = vmax.xlane.f32.xlu0 %v2379
        %v2625 = vpop.xlane.xlu0 %2624
        %2626 = vmax.xlane.f32.xlu0 %v2380
        %v2627 = vpop.xlane.xlu0 %2626
        %2628 = vmax.xlane.f32.xlu0 %v2381
        %v2629 = vpop.xlane.xlu0 %2628
        %2630 = vmax.xlane.f32.xlu0 %v2382
        %v2631 = vpop.xlane.xlu0 %2630
        %2632 = vmax.xlane.f32.xlu0 %v2383
        %v2633 = vpop.xlane.xlu0 %2632
        %2634 = vmax.xlane.f32.xlu0 %v2384
        %v2635 = vpop.xlane.xlu0 %2634
        %2636 = vmax.xlane.f32.xlu0 %v2385
        %v2637 = vpop.xlane.xlu0 %2636
        %2638 = vmax.xlane.f32.xlu0 %v2386
        %v2639 = vpop.xlane.xlu0 %2638
        %2640 = vmax.xlane.f32.xlu0 %v2387
        %v2641 = vpop.xlane.xlu0 %2640
        %2642 = vmax.xlane.f32.xlu0 %v2388
        %v2643 = vpop.xlane.xlu0 %2642
        %2644 = vmax.xlane.f32.xlu0 %v2389
        %v2645 = vpop.xlane.xlu0 %2644
        %v2646 = vsub.f32 %v2262, %v2391
        %v2647 = vsub.f32 %v2263, %v2393
        %v2648 = vsub.f32 %v2264, %v2395
        %v2649 = vsub.f32 %v2265, %v2397
        %v2650 = vsub.f32 %v2266, %v2399
        %v2651 = vsub.f32 %v2267, %v2401
        %v2652 = vsub.f32 %v2268, %v2403
        %v2653 = vsub.f32 %v2269, %v2405
        %v2654 = vsub.f32 %v2270, %v2407
        %v2655 = vsub.f32 %v2271, %v2409
        %v2656 = vsub.f32 %v2272, %v2411
        %v2657 = vsub.f32 %v2273, %v2413
        %v2658 = vsub.f32 %v2274, %v2415
        %v2659 = vsub.f32 %v2275, %v2417
        %v2660 = vsub.f32 %v2276, %v2419
        %v2661 = vsub.f32 %v2277, %v2421
        %v2662 = vsub.f32 %v2278, %v2423
        %v2663 = vsub.f32 %v2279, %v2425
        %v2664 = vsub.f32 %v2280, %v2427
        %v2665 = vsub.f32 %v2281, %v2429
        %v2666 = vsub.f32 %v2282, %v2431
        %v2667 = vsub.f32 %v2283, %v2433
        %v2668 = vsub.f32 %v2284, %v2435
        %v2669 = vsub.f32 %v2285, %v2437
        %v2670 = vsub.f32 %v2286, %v2439
        %v2671 = vsub.f32 %v2287, %v2441
        %v2672 = vsub.f32 %v2288, %v2443
        %v2673 = vsub.f32 %v2289, %v2445
        %v2674 = vsub.f32 %v2290, %v2447
        %v2675 = vsub.f32 %v2291, %v2449
        %v2676 = vsub.f32 %v2292, %v2451
        %v2677 = vsub.f32 %v2293, %v2453
        %v2678 = vsub.f32 %v2294, %v2455
        %v2679 = vsub.f32 %v2295, %v2457
        %v2680 = vsub.f32 %v2296, %v2459
        %v2681 = vsub.f32 %v2297, %v2461
        %v2682 = vsub.f32 %v2298, %v2463
        %v2683 = vsub.f32 %v2299, %v2465
        %v2684 = vsub.f32 %v2300, %v2467
        %v2685 = vsub.f32 %v2301, %v2469
        %v2686 = vsub.f32 %v2302, %v2471
        %v2687 = vsub.f32 %v2303, %v2473
        %v2688 = vsub.f32 %v2304, %v2475
        %v2689 = vsub.f32 %v2305, %v2477
        %v2690 = vsub.f32 %v2306, %v2479
        %v2691 = vsub.f32 %v2307, %v2481
        %v2692 = vsub.f32 %v2308, %v2483
        %v2693 = vsub.f32 %v2309, %v2485
        %v2694 = vsub.f32 %v2310, %v2487
        %v2695 = vsub.f32 %v2311, %v2489
        %v2696 = vsub.f32 %v2312, %v2491
        %v2697 = vsub.f32 %v2313, %v2493
        %v2698 = vsub.f32 %v2314, %v2495
        %v2699 = vsub.f32 %v2315, %v2497
        %v2700 = vsub.f32 %v2316, %v2499
        %v2701 = vsub.f32 %v2317, %v2501
        %v2702 = vsub.f32 %v2318, %v2503
        %v2703 = vsub.f32 %v2319, %v2505
        %v2704 = vsub.f32 %v2320, %v2507
        %v2705 = vsub.f32 %v2321, %v2509
        %v2706 = vsub.f32 %v2322, %v2511
        %v2707 = vsub.f32 %v2323, %v2513
        %v2708 = vsub.f32 %v2324, %v2515
        %v2709 = vsub.f32 %v2325, %v2517
        %v2710 = vsub.f32 %v2326, %v2519
        %v2711 = vsub.f32 %v2327, %v2521
        %v2712 = vsub.f32 %v2328, %v2523
        %v2713 = vsub.f32 %v2329, %v2525
        %v2714 = vsub.f32 %v2330, %v2527
        %v2715 = vsub.f32 %v2331, %v2529
        %v2716 = vsub.f32 %v2332, %v2531
        %v2717 = vsub.f32 %v2333, %v2533
        %v2718 = vsub.f32 %v2334, %v2535
        %v2719 = vsub.f32 %v2335, %v2537
        %v2720 = vsub.f32 %v2336, %v2539
        %v2721 = vsub.f32 %v2337, %v2541
        %v2722 = vsub.f32 %v2338, %v2543
        %v2723 = vsub.f32 %v2339, %v2545
        %v2724 = vsub.f32 %v2340, %v2547
        %v2725 = vsub.f32 %v2341, %v2549
        %v2726 = vsub.f32 %v2342, %v2551
        %v2727 = vsub.f32 %v2343, %v2553
        %v2728 = vsub.f32 %v2344, %v2555
        %v2729 = vsub.f32 %v2345, %v2557
        %v2730 = vsub.f32 %v2346, %v2559
        %v2731 = vsub.f32 %v2347, %v2561
        %v2732 = vsub.f32 %v2348, %v2563
        %v2733 = vsub.f32 %v2349, %v2565
        %v2734 = vsub.f32 %v2350, %v2567
        %v2735 = vsub.f32 %v2351, %v2569
        %v2736 = vsub.f32 %v2352, %v2571
        %v2737 = vsub.f32 %v2353, %v2573
        %v2738 = vsub.f32 %v2354, %v2575
        %v2739 = vsub.f32 %v2355, %v2577
        %v2740 = vsub.f32 %v2356, %v2579
        %v2741 = vsub.f32 %v2357, %v2581
        %v2742 = vsub.f32 %v2358, %v2583
        %v2743 = vsub.f32 %v2359, %v2585
        %v2744 = vsub.f32 %v2360, %v2587
        %v2745 = vsub.f32 %v2361, %v2589
        %v2746 = vsub.f32 %v2362, %v2591
        %v2747 = vsub.f32 %v2363, %v2593
        %v2748 = vsub.f32 %v2364, %v2595
        %v2749 = vsub.f32 %v2365, %v2597
        %v2750 = vsub.f32 %v2366, %v2599
        %v2751 = vsub.f32 %v2367, %v2601
        %v2752 = vsub.f32 %v2368, %v2603
        %v2753 = vsub.f32 %v2369, %v2605
        %v2754 = vsub.f32 %v2370, %v2607
        %v2755 = vsub.f32 %v2371, %v2609
        %v2756 = vsub.f32 %v2372, %v2611
        %v2757 = vsub.f32 %v2373, %v2613
        %v2758 = vsub.f32 %v2374, %v2615
        %v2759 = vsub.f32 %v2375, %v2617
        %v2760 = vsub.f32 %v2376, %v2619
        %v2761 = vsub.f32 %v2377, %v2621
        %v2762 = vsub.f32 %v2378, %v2623
        %v2763 = vsub.f32 %v2379, %v2625
        %v2764 = vsub.f32 %v2380, %v2627
        %v2765 = vsub.f32 %v2381, %v2629
        %v2766 = vsub.f32 %v2382, %v2631
        %v2767 = vsub.f32 %v2383, %v2633
        %v2768 = vsub.f32 %v2384, %v2635
        %v2769 = vsub.f32 %v2385, %v2637
        %v2770 = vsub.f32 %v2386, %v2639
        %v2771 = vsub.f32 %v2387, %v2641
        %v2772 = vsub.f32 %v2388, %v2643
        %v2773 = vsub.f32 %v2389, %v2645
        %v2774 = vmul.f32 %v2646, 1.442695
        %v2775 = vpow.pop %v2774
        %v2776 = vmul.f32 %v2647, 1.442695
        %v2777 = vpow.pop %v2776
        %v2778 = vmul.f32 %v2648, 1.442695
        %v2779 = vpow.pop %v2778
        %v2780 = vmul.f32 %v2649, 1.442695
        %v2781 = vpow.pop %v2780
        %v2782 = vmul.f32 %v2650, 1.442695
        %v2783 = vpow.pop %v2782
        %v2784 = vmul.f32 %v2651, 1.442695
        %v2785 = vpow.pop %v2784
        %v2786 = vmul.f32 %v2652, 1.442695
        %v2787 = vpow.pop %v2786
        %v2788 = vmul.f32 %v2653, 1.442695
        %v2789 = vpow.pop %v2788
        %v2790 = vmul.f32 %v2654, 1.442695
        %v2791 = vpow.pop %v2790
        %v2792 = vmul.f32 %v2655, 1.442695
        %v2793 = vpow.pop %v2792
        %v2794 = vmul.f32 %v2656, 1.442695
        %v2795 = vpow.pop %v2794
        %v2796 = vmul.f32 %v2657, 1.442695
        %v2797 = vpow.pop %v2796
        %v2798 = vmul.f32 %v2658, 1.442695
        %v2799 = vpow.pop %v2798
        %v2800 = vmul.f32 %v2659, 1.442695
        %v2801 = vpow.pop %v2800
        %v2802 = vmul.f32 %v2660, 1.442695
        %v2803 = vpow.pop %v2802
        %v2804 = vmul.f32 %v2661, 1.442695
        %v2805 = vpow.pop %v2804
        %v2806 = vmul.f32 %v2662, 1.442695
        %v2807 = vpow.pop %v2806
        %v2808 = vmul.f32 %v2663, 1.442695
        %v2809 = vpow.pop %v2808
        %v2810 = vmul.f32 %v2664, 1.442695
        %v2811 = vpow.pop %v2810
        %v2812 = vmul.f32 %v2665, 1.442695
        %v2813 = vpow.pop %v2812
        %v2814 = vmul.f32 %v2666, 1.442695
        %v2815 = vpow.pop %v2814
        %v2816 = vmul.f32 %v2667, 1.442695
        %v2817 = vpow.pop %v2816
        %v2818 = vmul.f32 %v2668, 1.442695
        %v2819 = vpow.pop %v2818
        %v2820 = vmul.f32 %v2669, 1.442695
        %v2821 = vpow.pop %v2820
        %v2822 = vmul.f32 %v2670, 1.442695
        %v2823 = vpow.pop %v2822
        %v2824 = vmul.f32 %v2671, 1.442695
        %v2825 = vpow.pop %v2824
        %v2826 = vmul.f32 %v2672, 1.442695
        %v2827 = vpow.pop %v2826
        %v2828 = vmul.f32 %v2673, 1.442695
        %v2829 = vpow.pop %v2828
        %v2830 = vmul.f32 %v2674, 1.442695
        %v2831 = vpow.pop %v2830
        %v2832 = vmul.f32 %v2675, 1.442695
        %v2833 = vpow.pop %v2832
        %v2834 = vmul.f32 %v2676, 1.442695
        %v2835 = vpow.pop %v2834
        %v2836 = vmul.f32 %v2677, 1.442695
        %v2837 = vpow.pop %v2836
        %v2838 = vmul.f32 %v2678, 1.442695
        %v2839 = vpow.pop %v2838
        %v2840 = vmul.f32 %v2679, 1.442695
        %v2841 = vpow.pop %v2840
        %v2842 = vmul.f32 %v2680, 1.442695
        %v2843 = vpow.pop %v2842
        %v2844 = vmul.f32 %v2681, 1.442695
        %v2845 = vpow.pop %v2844
        %v2846 = vmul.f32 %v2682, 1.442695
        %v2847 = vpow.pop %v2846
        %v2848 = vmul.f32 %v2683, 1.442695
        %v2849 = vpow.pop %v2848
        %v2850 = vmul.f32 %v2684, 1.442695
        %v2851 = vpow.pop %v2850
        %v2852 = vmul.f32 %v2685, 1.442695
        %v2853 = vpow.pop %v2852
        %v2854 = vmul.f32 %v2686, 1.442695
        %v2855 = vpow.pop %v2854
        %v2856 = vmul.f32 %v2687, 1.442695
        %v2857 = vpow.pop %v2856
        %v2858 = vmul.f32 %v2688, 1.442695
        %v2859 = vpow.pop %v2858
        %v2860 = vmul.f32 %v2689, 1.442695
        %v2861 = vpow.pop %v2860
        %v2862 = vmul.f32 %v2690, 1.442695
        %v2863 = vpow.pop %v2862
        %v2864 = vmul.f32 %v2691, 1.442695
        %v2865 = vpow.pop %v2864
        %v2866 = vmul.f32 %v2692, 1.442695
        %v2867 = vpow.pop %v2866
        %v2868 = vmul.f32 %v2693, 1.442695
        %v2869 = vpow.pop %v2868
        %v2870 = vmul.f32 %v2694, 1.442695
        %v2871 = vpow.pop %v2870
        %v2872 = vmul.f32 %v2695, 1.442695
        %v2873 = vpow.pop %v2872
        %v2874 = vmul.f32 %v2696, 1.442695
        %v2875 = vpow.pop %v2874
        %v2876 = vmul.f32 %v2697, 1.442695
        %v2877 = vpow.pop %v2876
        %v2878 = vmul.f32 %v2698, 1.442695
        %v2879 = vpow.pop %v2878
        %v2880 = vmul.f32 %v2699, 1.442695
        %v2881 = vpow.pop %v2880
        %v2882 = vmul.f32 %v2700, 1.442695
        %v2883 = vpow.pop %v2882
        %v2884 = vmul.f32 %v2701, 1.442695
        %v2885 = vpow.pop %v2884
        %v2886 = vmul.f32 %v2702, 1.442695
        %v2887 = vpow.pop %v2886
        %v2888 = vmul.f32 %v2703, 1.442695
        %v2889 = vpow.pop %v2888
        %v2890 = vmul.f32 %v2704, 1.442695
        %v2891 = vpow.pop %v2890
        %v2892 = vmul.f32 %v2705, 1.442695
        %v2893 = vpow.pop %v2892
        %v2894 = vmul.f32 %v2706, 1.442695
        %v2895 = vpow.pop %v2894
        %v2896 = vmul.f32 %v2707, 1.442695
        %v2897 = vpow.pop %v2896
        %v2898 = vmul.f32 %v2708, 1.442695
        %v2899 = vpow.pop %v2898
        %v2900 = vmul.f32 %v2709, 1.442695
        %v2901 = vpow.pop %v2900
        %v2902 = vmul.f32 %v2710, 1.442695
        %v2903 = vpow.pop %v2902
        %v2904 = vmul.f32 %v2711, 1.442695
        %v2905 = vpow.pop %v2904
        %v2906 = vmul.f32 %v2712, 1.442695
        %v2907 = vpow.pop %v2906
        %v2908 = vmul.f32 %v2713, 1.442695
        %v2909 = vpow.pop %v2908
        %v2910 = vmul.f32 %v2714, 1.442695
        %v2911 = vpow.pop %v2910
        %v2912 = vmul.f32 %v2715, 1.442695
        %v2913 = vpow.pop %v2912
        %v2914 = vmul.f32 %v2716, 1.442695
        %v2915 = vpow.pop %v2914
        %v2916 = vmul.f32 %v2717, 1.442695
        %v2917 = vpow.pop %v2916
        %v2918 = vmul.f32 %v2718, 1.442695
        %v2919 = vpow.pop %v2918
        %v2920 = vmul.f32 %v2719, 1.442695
        %v2921 = vpow.pop %v2920
        %v2922 = vmul.f32 %v2720, 1.442695
        %v2923 = vpow.pop %v2922
        %v2924 = vmul.f32 %v2721, 1.442695
        %v2925 = vpow.pop %v2924
        %v2926 = vmul.f32 %v2722, 1.442695
        %v2927 = vpow.pop %v2926
        %v2928 = vmul.f32 %v2723, 1.442695
        %v2929 = vpow.pop %v2928
        %v2930 = vmul.f32 %v2724, 1.442695
        %v2931 = vpow.pop %v2930
        %v2932 = vmul.f32 %v2725, 1.442695
        %v2933 = vpow.pop %v2932
        %v2934 = vmul.f32 %v2726, 1.442695
        %v2935 = vpow.pop %v2934
        %v2936 = vmul.f32 %v2727, 1.442695
        %v2937 = vpow.pop %v2936
        %v2938 = vmul.f32 %v2728, 1.442695
        %v2939 = vpow.pop %v2938
        %v2940 = vmul.f32 %v2729, 1.442695
        %v2941 = vpow.pop %v2940
        %v2942 = vmul.f32 %v2730, 1.442695
        %v2943 = vpow.pop %v2942
        %v2944 = vmul.f32 %v2731, 1.442695
        %v2945 = vpow.pop %v2944
        %v2946 = vmul.f32 %v2732, 1.442695
        %v2947 = vpow.pop %v2946
        %v2948 = vmul.f32 %v2733, 1.442695
        %v2949 = vpow.pop %v2948
        %v2950 = vmul.f32 %v2734, 1.442695
        %v2951 = vpow.pop %v2950
        %v2952 = vmul.f32 %v2735, 1.442695
        %v2953 = vpow.pop %v2952
        %v2954 = vmul.f32 %v2736, 1.442695
        %v2955 = vpow.pop %v2954
        %v2956 = vmul.f32 %v2737, 1.442695
        %v2957 = vpow.pop %v2956
        %v2958 = vmul.f32 %v2738, 1.442695
        %v2959 = vpow.pop %v2958
        %v2960 = vmul.f32 %v2739, 1.442695
        %v2961 = vpow.pop %v2960
        %v2962 = vmul.f32 %v2740, 1.442695
        %v2963 = vpow.pop %v2962
        %v2964 = vmul.f32 %v2741, 1.442695
        %v2965 = vpow.pop %v2964
        %v2966 = vmul.f32 %v2742, 1.442695
        %v2967 = vpow.pop %v2966
        %v2968 = vmul.f32 %v2743, 1.442695
        %v2969 = vpow.pop %v2968
        %v2970 = vmul.f32 %v2744, 1.442695
        %v2971 = vpow.pop %v2970
        %v2972 = vmul.f32 %v2745, 1.442695
        %v2973 = vpow.pop %v2972
        %v2974 = vmul.f32 %v2746, 1.442695
        %v2975 = vpow.pop %v2974
        %v2976 = vmul.f32 %v2747, 1.442695
        %v2977 = vpow.pop %v2976
        %v2978 = vmul.f32 %v2748, 1.442695
        %v2979 = vpow.pop %v2978
        %v2980 = vmul.f32 %v2749, 1.442695
        %v2981 = vpow.pop %v2980
        %v2982 = vmul.f32 %v2750, 1.442695
        %v2983 = vpow.pop %v2982
        %v2984 = vmul.f32 %v2751, 1.442695
        %v2985 = vpow.pop %v2984
        %v2986 = vmul.f32 %v2752, 1.442695
        %v2987 = vpow.pop %v2986
        %v2988 = vmul.f32 %v2753, 1.442695
        %v2989 = vpow.pop %v2988
        %v2990 = vmul.f32 %v2754, 1.442695
        %v2991 = vpow.pop %v2990
        %v2992 = vmul.f32 %v2755, 1.442695
        %v2993 = vpow.pop %v2992
        %v2994 = vmul.f32 %v2756, 1.442695
        %v2995 = vpow.pop %v2994
        %v2996 = vmul.f32 %v2757, 1.442695
        %v2997 = vpow.pop %v2996
        %v2998 = vmul.f32 %v2758, 1.442695
        %v2999 = vpow.pop %v2998
        %v3000 = vmul.f32 %v2759, 1.442695
        %v3001 = vpow.pop %v3000
        %v3002 = vmul.f32 %v2760, 1.442695
        %v3003 = vpow.pop %v3002
        %v3004 = vmul.f32 %v2761, 1.442695
        %v3005 = vpow.pop %v3004
        %v3006 = vmul.f32 %v2762, 1.442695
        %v3007 = vpow.pop %v3006
        %v3008 = vmul.f32 %v2763, 1.442695
        %v3009 = vpow.pop %v3008
        %v3010 = vmul.f32 %v2764, 1.442695
        %v3011 = vpow.pop %v3010
        %v3012 = vmul.f32 %v2765, 1.442695
        %v3013 = vpow.pop %v3012
        %v3014 = vmul.f32 %v2766, 1.442695
        %v3015 = vpow.pop %v3014
        %v3016 = vmul.f32 %v2767, 1.442695
        %v3017 = vpow.pop %v3016
        %v3018 = vmul.f32 %v2768, 1.442695
        %v3019 = vpow.pop %v3018
        %v3020 = vmul.f32 %v2769, 1.442695
        %v3021 = vpow.pop %v3020
        %v3022 = vmul.f32 %v2770, 1.442695
        %v3023 = vpow.pop %v3022
        %v3024 = vmul.f32 %v2771, 1.442695
        %v3025 = vpow.pop %v3024
        %v3026 = vmul.f32 %v2772, 1.442695
        %v3027 = vpow.pop %v3026
        %v3028 = vmul.f32 %v2773, 1.442695
        %v3029 = vpow.pop %v3028
        %3030 = vadd.xlane.f32.xlu0 %v2775
        %v3031 = vpop.xlane.xlu0 %3030
        %3032 = vadd.xlane.f32.xlu0 %v2777
        %v3033 = vpop.xlane.xlu0 %3032
        %3034 = vadd.xlane.f32.xlu0 %v2779
        %v3035 = vpop.xlane.xlu0 %3034
        %3036 = vadd.xlane.f32.xlu0 %v2781
        %v3037 = vpop.xlane.xlu0 %3036
        %3038 = vadd.xlane.f32.xlu0 %v2783
        %v3039 = vpop.xlane.xlu0 %3038
        %3040 = vadd.xlane.f32.xlu0 %v2785
        %v3041 = vpop.xlane.xlu0 %3040
        %3042 = vadd.xlane.f32.xlu0 %v2787
        %v3043 = vpop.xlane.xlu0 %3042
        %3044 = vadd.xlane.f32.xlu0 %v2789
        %v3045 = vpop.xlane.xlu0 %3044
        %3046 = vadd.xlane.f32.xlu0 %v2791
        %v3047 = vpop.xlane.xlu0 %3046
        %3048 = vadd.xlane.f32.xlu0 %v2793
        %v3049 = vpop.xlane.xlu0 %3048
        %3050 = vadd.xlane.f32.xlu0 %v2795
        %v3051 = vpop.xlane.xlu0 %3050
        %3052 = vadd.xlane.f32.xlu0 %v2797
        %v3053 = vpop.xlane.xlu0 %3052
        %3054 = vadd.xlane.f32.xlu0 %v2799
        %v3055 = vpop.xlane.xlu0 %3054
        %3056 = vadd.xlane.f32.xlu0 %v2801
        %v3057 = vpop.xlane.xlu0 %3056
        %3058 = vadd.xlane.f32.xlu0 %v2803
        %v3059 = vpop.xlane.xlu0 %3058
        %3060 = vadd.xlane.f32.xlu0 %v2805
        %v3061 = vpop.xlane.xlu0 %3060
        %3062 = vadd.xlane.f32.xlu0 %v2807
        %v3063 = vpop.xlane.xlu0 %3062
        %3064 = vadd.xlane.f32.xlu0 %v2809
        %v3065 = vpop.xlane.xlu0 %3064
        %3066 = vadd.xlane.f32.xlu0 %v2811
        %v3067 = vpop.xlane.xlu0 %3066
        %3068 = vadd.xlane.f32.xlu0 %v2813
        %v3069 = vpop.xlane.xlu0 %3068
        %3070 = vadd.xlane.f32.xlu0 %v2815
        %v3071 = vpop.xlane.xlu0 %3070
        %3072 = vadd.xlane.f32.xlu0 %v2817
        %v3073 = vpop.xlane.xlu0 %3072
        %3074 = vadd.xlane.f32.xlu0 %v2819
        %v3075 = vpop.xlane.xlu0 %3074
        %3076 = vadd.xlane.f32.xlu0 %v2821
        %v3077 = vpop.xlane.xlu0 %3076
        %3078 = vadd.xlane.f32.xlu0 %v2823
        %v3079 = vpop.xlane.xlu0 %3078
        %3080 = vadd.xlane.f32.xlu0 %v2825
        %v3081 = vpop.xlane.xlu0 %3080
        %3082 = vadd.xlane.f32.xlu0 %v2827
        %v3083 = vpop.xlane.xlu0 %3082
        %3084 = vadd.xlane.f32.xlu0 %v2829
        %v3085 = vpop.xlane.xlu0 %3084
        %3086 = vadd.xlane.f32.xlu0 %v2831
        %v3087 = vpop.xlane.xlu0 %3086
        %3088 = vadd.xlane.f32.xlu0 %v2833
        %v3089 = vpop.xlane.xlu0 %3088
        %3090 = vadd.xlane.f32.xlu0 %v2835
        %v3091 = vpop.xlane.xlu0 %3090
        %3092 = vadd.xlane.f32.xlu0 %v2837
        %v3093 = vpop.xlane.xlu0 %3092
        %3094 = vadd.xlane.f32.xlu0 %v2839
        %v3095 = vpop.xlane.xlu0 %3094
        %3096 = vadd.xlane.f32.xlu0 %v2841
        %v3097 = vpop.xlane.xlu0 %3096
        %3098 = vadd.xlane.f32.xlu0 %v2843
        %v3099 = vpop.xlane.xlu0 %3098
        %3100 = vadd.xlane.f32.xlu0 %v2845
        %v3101 = vpop.xlane.xlu0 %3100
        %3102 = vadd.xlane.f32.xlu0 %v2847
        %v3103 = vpop.xlane.xlu0 %3102
        %3104 = vadd.xlane.f32.xlu0 %v2849
        %v3105 = vpop.xlane.xlu0 %3104
        %3106 = vadd.xlane.f32.xlu0 %v2851
        %v3107 = vpop.xlane.xlu0 %3106
        %3108 = vadd.xlane.f32.xlu0 %v2853
        %v3109 = vpop.xlane.xlu0 %3108
        %3110 = vadd.xlane.f32.xlu0 %v2855
        %v3111 = vpop.xlane.xlu0 %3110
        %3112 = vadd.xlane.f32.xlu0 %v2857
        %v3113 = vpop.xlane.xlu0 %3112
        %3114 = vadd.xlane.f32.xlu0 %v2859
        %v3115 = vpop.xlane.xlu0 %3114
        %3116 = vadd.xlane.f32.xlu0 %v2861
        %v3117 = vpop.xlane.xlu0 %3116
        %3118 = vadd.xlane.f32.xlu0 %v2863
        %v3119 = vpop.xlane.xlu0 %3118
        %3120 = vadd.xlane.f32.xlu0 %v2865
        %v3121 = vpop.xlane.xlu0 %3120
        %3122 = vadd.xlane.f32.xlu0 %v2867
        %v3123 = vpop.xlane.xlu0 %3122
        %3124 = vadd.xlane.f32.xlu0 %v2869
        %v3125 = vpop.xlane.xlu0 %3124
        %3126 = vadd.xlane.f32.xlu0 %v2871
        %v3127 = vpop.xlane.xlu0 %3126
        %3128 = vadd.xlane.f32.xlu0 %v2873
        %v3129 = vpop.xlane.xlu0 %3128
        %3130 = vadd.xlane.f32.xlu0 %v2875
        %v3131 = vpop.xlane.xlu0 %3130
        %3132 = vadd.xlane.f32.xlu0 %v2877
        %v3133 = vpop.xlane.xlu0 %3132
        %3134 = vadd.xlane.f32.xlu0 %v2879
        %v3135 = vpop.xlane.xlu0 %3134
        %3136 = vadd.xlane.f32.xlu0 %v2881
        %v3137 = vpop.xlane.xlu0 %3136
        %3138 = vadd.xlane.f32.xlu0 %v2883
        %v3139 = vpop.xlane.xlu0 %3138
        %3140 = vadd.xlane.f32.xlu0 %v2885
        %v3141 = vpop.xlane.xlu0 %3140
        %3142 = vadd.xlane.f32.xlu0 %v2887
        %v3143 = vpop.xlane.xlu0 %3142
        %3144 = vadd.xlane.f32.xlu0 %v2889
        %v3145 = vpop.xlane.xlu0 %3144
        %3146 = vadd.xlane.f32.xlu0 %v2891
        %v3147 = vpop.xlane.xlu0 %3146
        %3148 = vadd.xlane.f32.xlu0 %v2893
        %v3149 = vpop.xlane.xlu0 %3148
        %3150 = vadd.xlane.f32.xlu0 %v2895
        %v3151 = vpop.xlane.xlu0 %3150
        %3152 = vadd.xlane.f32.xlu0 %v2897
        %v3153 = vpop.xlane.xlu0 %3152
        %3154 = vadd.xlane.f32.xlu0 %v2899
        %v3155 = vpop.xlane.xlu0 %3154
        %3156 = vadd.xlane.f32.xlu0 %v2901
        %v3157 = vpop.xlane.xlu0 %3156
        %3158 = vadd.xlane.f32.xlu0 %v2903
        %v3159 = vpop.xlane.xlu0 %3158
        %3160 = vadd.xlane.f32.xlu0 %v2905
        %v3161 = vpop.xlane.xlu0 %3160
        %3162 = vadd.xlane.f32.xlu0 %v2907
        %v3163 = vpop.xlane.xlu0 %3162
        %3164 = vadd.xlane.f32.xlu0 %v2909
        %v3165 = vpop.xlane.xlu0 %3164
        %3166 = vadd.xlane.f32.xlu0 %v2911
        %v3167 = vpop.xlane.xlu0 %3166
        %3168 = vadd.xlane.f32.xlu0 %v2913
        %v3169 = vpop.xlane.xlu0 %3168
        %3170 = vadd.xlane.f32.xlu0 %v2915
        %v3171 = vpop.xlane.xlu0 %3170
        %3172 = vadd.xlane.f32.xlu0 %v2917
        %v3173 = vpop.xlane.xlu0 %3172
        %3174 = vadd.xlane.f32.xlu0 %v2919
        %v3175 = vpop.xlane.xlu0 %3174
        %3176 = vadd.xlane.f32.xlu0 %v2921
        %v3177 = vpop.xlane.xlu0 %3176
        %3178 = vadd.xlane.f32.xlu0 %v2923
        %v3179 = vpop.xlane.xlu0 %3178
        %3180 = vadd.xlane.f32.xlu0 %v2925
        %v3181 = vpop.xlane.xlu0 %3180
        %3182 = vadd.xlane.f32.xlu0 %v2927
        %v3183 = vpop.xlane.xlu0 %3182
        %3184 = vadd.xlane.f32.xlu0 %v2929
        %v3185 = vpop.xlane.xlu0 %3184
        %3186 = vadd.xlane.f32.xlu0 %v2931
        %v3187 = vpop.xlane.xlu0 %3186
        %3188 = vadd.xlane.f32.xlu0 %v2933
        %v3189 = vpop.xlane.xlu0 %3188
        %3190 = vadd.xlane.f32.xlu0 %v2935
        %v3191 = vpop.xlane.xlu0 %3190
        %3192 = vadd.xlane.f32.xlu0 %v2937
        %v3193 = vpop.xlane.xlu0 %3192
        %3194 = vadd.xlane.f32.xlu0 %v2939
        %v3195 = vpop.xlane.xlu0 %3194
        %3196 = vadd.xlane.f32.xlu0 %v2941
        %v3197 = vpop.xlane.xlu0 %3196
        %3198 = vadd.xlane.f32.xlu0 %v2943
        %v3199 = vpop.xlane.xlu0 %3198
        %3200 = vadd.xlane.f32.xlu0 %v2945
        %v3201 = vpop.xlane.xlu0 %3200
        %3202 = vadd.xlane.f32.xlu0 %v2947
        %v3203 = vpop.xlane.xlu0 %3202
        %3204 = vadd.xlane.f32.xlu0 %v2949
        %v3205 = vpop.xlane.xlu0 %3204
        %3206 = vadd.xlane.f32.xlu0 %v2951
        %v3207 = vpop.xlane.xlu0 %3206
        %3208 = vadd.xlane.f32.xlu0 %v2953
        %v3209 = vpop.xlane.xlu0 %3208
        %3210 = vadd.xlane.f32.xlu0 %v2955
        %v3211 = vpop.xlane.xlu0 %3210
        %3212 = vadd.xlane.f32.xlu0 %v2957
        %v3213 = vpop.xlane.xlu0 %3212
        %3214 = vadd.xlane.f32.xlu0 %v2959
        %v3215 = vpop.xlane.xlu0 %3214
        %3216 = vadd.xlane.f32.xlu0 %v2961
        %v3217 = vpop.xlane.xlu0 %3216
        %3218 = vadd.xlane.f32.xlu0 %v2963
        %v3219 = vpop.xlane.xlu0 %3218
        %3220 = vadd.xlane.f32.xlu0 %v2965
        %v3221 = vpop.xlane.xlu0 %3220
        %3222 = vadd.xlane.f32.xlu0 %v2967
        %v3223 = vpop.xlane.xlu0 %3222
        %3224 = vadd.xlane.f32.xlu0 %v2969
        %v3225 = vpop.xlane.xlu0 %3224
        %3226 = vadd.xlane.f32.xlu0 %v2971
        %v3227 = vpop.xlane.xlu0 %3226
        %3228 = vadd.xlane.f32.xlu0 %v2973
        %v3229 = vpop.xlane.xlu0 %3228
        %3230 = vadd.xlane.f32.xlu0 %v2975
        %v3231 = vpop.xlane.xlu0 %3230
        %3232 = vadd.xlane.f32.xlu0 %v2977
        %v3233 = vpop.xlane.xlu0 %3232
        %3234 = vadd.xlane.f32.xlu0 %v2979
        %v3235 = vpop.xlane.xlu0 %3234
        %3236 = vadd.xlane.f32.xlu0 %v2981
        %v3237 = vpop.xlane.xlu0 %3236
        %3238 = vadd.xlane.f32.xlu0 %v2983
        %v3239 = vpop.xlane.xlu0 %3238
        %3240 = vadd.xlane.f32.xlu0 %v2985
        %v3241 = vpop.xlane.xlu0 %3240
        %3242 = vadd.xlane.f32.xlu0 %v2987
        %v3243 = vpop.xlane.xlu0 %3242
        %3244 = vadd.xlane.f32.xlu0 %v2989
        %v3245 = vpop.xlane.xlu0 %3244
        %3246 = vadd.xlane.f32.xlu0 %v2991
        %v3247 = vpop.xlane.xlu0 %3246
        %3248 = vadd.xlane.f32.xlu0 %v2993
        %v3249 = vpop.xlane.xlu0 %3248
        %3250 = vadd.xlane.f32.xlu0 %v2995
        %v3251 = vpop.xlane.xlu0 %3250
        %3252 = vadd.xlane.f32.xlu0 %v2997
        %v3253 = vpop.xlane.xlu0 %3252
        %3254 = vadd.xlane.f32.xlu0 %v2999
        %v3255 = vpop.xlane.xlu0 %3254
        %3256 = vadd.xlane.f32.xlu0 %v3001
        %v3257 = vpop.xlane.xlu0 %3256
        %3258 = vadd.xlane.f32.xlu0 %v3003
        %v3259 = vpop.xlane.xlu0 %3258
        %3260 = vadd.xlane.f32.xlu0 %v3005
        %v3261 = vpop.xlane.xlu0 %3260
        %3262 = vadd.xlane.f32.xlu0 %v3007
        %v3263 = vpop.xlane.xlu0 %3262
        %3264 = vadd.xlane.f32.xlu0 %v3009
        %v3265 = vpop.xlane.xlu0 %3264
        %3266 = vadd.xlane.f32.xlu0 %v3011
        %v3267 = vpop.xlane.xlu0 %3266
        %3268 = vadd.xlane.f32.xlu0 %v3013
        %v3269 = vpop.xlane.xlu0 %3268
        %3270 = vadd.xlane.f32.xlu0 %v3015
        %v3271 = vpop.xlane.xlu0 %3270
        %3272 = vadd.xlane.f32.xlu0 %v3017
        %v3273 = vpop.xlane.xlu0 %3272
        %3274 = vadd.xlane.f32.xlu0 %v3019
        %v3275 = vpop.xlane.xlu0 %3274
        %3276 = vadd.xlane.f32.xlu0 %v3021
        %v3277 = vpop.xlane.xlu0 %3276
        %3278 = vadd.xlane.f32.xlu0 %v3023
        %v3279 = vpop.xlane.xlu0 %3278
        %3280 = vadd.xlane.f32.xlu0 %v3025
        %v3281 = vpop.xlane.xlu0 %3280
        %3282 = vadd.xlane.f32.xlu0 %v3027
        %v3283 = vpop.xlane.xlu0 %3282
        %3284 = vadd.xlane.f32.xlu0 %v3029
        %v3285 = vpop.xlane.xlu0 %3284
        %v3286 = vrcp.pop %v3031
        %v3287 = vrcp.pop %v3033
        %v3288 = vrcp.pop %v3035
        %v3289 = vrcp.pop %v3037
        %v3290 = vrcp.pop %v3039
        %v3291 = vrcp.pop %v3041
        %v3292 = vrcp.pop %v3043
        %v3293 = vrcp.pop %v3045
        %v3294 = vrcp.pop %v3047
        %v3295 = vrcp.pop %v3049
        %v3296 = vrcp.pop %v3051
        %v3297 = vrcp.pop %v3053
        %v3298 = vrcp.pop %v3055
        %v3299 = vrcp.pop %v3057
        %v3300 = vrcp.pop %v3059
        %v3301 = vrcp.pop %v3061
        %v3302 = vrcp.pop %v3063
        %v3303 = vrcp.pop %v3065
        %v3304 = vrcp.pop %v3067
        %v3305 = vrcp.pop %v3069
        %v3306 = vrcp.pop %v3071
        %v3307 = vrcp.pop %v3073
        %v3308 = vrcp.pop %v3075
        %v3309 = vrcp.pop %v3077
        %v3310 = vrcp.pop %v3079
        %v3311 = vrcp.pop %v3081
        %v3312 = vrcp.pop %v3083
        %v3313 = vrcp.pop %v3085
        %v3314 = vrcp.pop %v3087
        %v3315 = vrcp.pop %v3089
        %v3316 = vrcp.pop %v3091
        %v3317 = vrcp.pop %v3093
        %v3318 = vrcp.pop %v3095
        %v3319 = vrcp.pop %v3097
        %v3320 = vrcp.pop %v3099
        %v3321 = vrcp.pop %v3101
        %v3322 = vrcp.pop %v3103
        %v3323 = vrcp.pop %v3105
        %v3324 = vrcp.pop %v3107
        %v3325 = vrcp.pop %v3109
        %v3326 = vrcp.pop %v3111
        %v3327 = vrcp.pop %v3113
        %v3328 = vrcp.pop %v3115
        %v3329 = vrcp.pop %v3117
        %v3330 = vrcp.pop %v3119
        %v3331 = vrcp.pop %v3121
        %v3332 = vrcp.pop %v3123
        %v3333 = vrcp.pop %v3125
        %v3334 = vrcp.pop %v3127
        %v3335 = vrcp.pop %v3129
        %v3336 = vrcp.pop %v3131
        %v3337 = vrcp.pop %v3133
        %v3338 = vrcp.pop %v3135
        %v3339 = vrcp.pop %v3137
        %v3340 = vrcp.pop %v3139
        %v3341 = vrcp.pop %v3141
        %v3342 = vrcp.pop %v3143
        %v3343 = vrcp.pop %v3145
        %v3344 = vrcp.pop %v3147
        %v3345 = vrcp.pop %v3149
        %v3346 = vrcp.pop %v3151
        %v3347 = vrcp.pop %v3153
        %v3348 = vrcp.pop %v3155
        %v3349 = vrcp.pop %v3157
        %v3350 = vrcp.pop %v3159
        %v3351 = vrcp.pop %v3161
        %v3352 = vrcp.pop %v3163
        %v3353 = vrcp.pop %v3165
        %v3354 = vrcp.pop %v3167
        %v3355 = vrcp.pop %v3169
        %v3356 = vrcp.pop %v3171
        %v3357 = vrcp.pop %v3173
        %v3358 = vrcp.pop %v3175
        %v3359 = vrcp.pop %v3177
        %v3360 = vrcp.pop %v3179
        %v3361 = vrcp.pop %v3181
        %v3362 = vrcp.pop %v3183
        %v3363 = vrcp.pop %v3185
        %v3364 = vrcp.pop %v3187
        %v3365 = vrcp.pop %v3189
        %v3366 = vrcp.pop %v3191
        %v3367 = vrcp.pop %v3193
        %v3368 = vrcp.pop %v3195
        %v3369 = vrcp.pop %v3197
        %v3370 = vrcp.pop %v3199
        %v3371 = vrcp.pop %v3201
        %v3372 = vrcp.pop %v3203
        %v3373 = vrcp.pop %v3205
        %v3374 = vrcp.pop %v3207
        %v3375 = vrcp.pop %v3209
        %v3376 = vrcp.pop %v3211
        %v3377 = vrcp.pop %v3213
        %v3378 = vrcp.pop %v3215
        %v3379 = vrcp.pop %v3217
        %v3380 = vrcp.pop %v3219
        %v3381 = vrcp.pop %v3221
        %v3382 = vrcp.pop %v3223
        %v3383 = vrcp.pop %v3225
        %v3384 = vrcp.pop %v3227
        %v3385 = vrcp.pop %v3229
        %v3386 = vrcp.pop %v3231
        %v3387 = vrcp.pop %v3233
        %v3388 = vrcp.pop %v3235
        %v3389 = vrcp.pop %v3237
        %v3390 = vrcp.pop %v3239
        %v3391 = vrcp.pop %v3241
        %v3392 = vrcp.pop %v3243
        %v3393 = vrcp.pop %v3245
        %v3394 = vrcp.pop %v3247
        %v3395 = vrcp.pop %v3249
        %v3396 = vrcp.pop %v3251
        %v3397 = vrcp.pop %v3253
        %v3398 = vrcp.pop %v3255
        %v3399 = vrcp.pop %v3257
        %v3400 = vrcp.pop %v3259
        %v3401 = vrcp.pop %v3261
        %v3402 = vrcp.pop %v3263
        %v3403 = vrcp.pop %v3265
        %v3404 = vrcp.pop %v3267
        %v3405 = vrcp.pop %v3269
        %v3406 = vrcp.pop %v3271
        %v3407 = vrcp.pop %v3273
        %v3408 = vrcp.pop %v3275
        %v3409 = vrcp.pop %v3277
        %v3410 = vrcp.pop %v3279
        %v3411 = vrcp.pop %v3281
        %v3412 = vrcp.pop %v3283
        %v3413 = vrcp.pop %v3285
        %v3414 = vmul.f32 %v2775, %v3286
        %v3415 = vmul.f32 %v2777, %v3287
        %v3416 = vmul.f32 %v2779, %v3288
        %v3417 = vmul.f32 %v2781, %v3289
        %v3418 = vmul.f32 %v2783, %v3290
        %v3419 = vmul.f32 %v2785, %v3291
        %v3420 = vmul.f32 %v2787, %v3292
        %v3421 = vmul.f32 %v2789, %v3293
        %v3422 = vmul.f32 %v2791, %v3294
        %v3423 = vmul.f32 %v2793, %v3295
        %v3424 = vmul.f32 %v2795, %v3296
        %v3425 = vmul.f32 %v2797, %v3297
        %v3426 = vmul.f32 %v2799, %v3298
        %v3427 = vmul.f32 %v2801, %v3299
        %v3428 = vmul.f32 %v2803, %v3300
        %v3429 = vmul.f32 %v2805, %v3301
        %v3430 = vmul.f32 %v2807, %v3302
        %v3431 = vmul.f32 %v2809, %v3303
        %v3432 = vmul.f32 %v2811, %v3304
        %v3433 = vmul.f32 %v2813, %v3305
        %v3434 = vmul.f32 %v2815, %v3306
        %v3435 = vmul.f32 %v2817, %v3307
        %v3436 = vmul.f32 %v2819, %v3308
        %v3437 = vmul.f32 %v2821, %v3309
        %v3438 = vmul.f32 %v2823, %v3310
        %v3439 = vmul.f32 %v2825, %v3311
        %v3440 = vmul.f32 %v2827, %v3312
        %v3441 = vmul.f32 %v2829, %v3313
        %v3442 = vmul.f32 %v2831, %v3314
        %v3443 = vmul.f32 %v2833, %v3315
        %v3444 = vmul.f32 %v2835, %v3316
        %v3445 = vmul.f32 %v2837, %v3317
        %v3446 = vmul.f32 %v2839, %v3318
        %v3447 = vmul.f32 %v2841, %v3319
        %v3448 = vmul.f32 %v2843, %v3320
        %v3449 = vmul.f32 %v2845, %v3321
        %v3450 = vmul.f32 %v2847, %v3322
        %v3451 = vmul.f32 %v2849, %v3323
        %v3452 = vmul.f32 %v2851, %v3324
        %v3453 = vmul.f32 %v2853, %v3325
        %v3454 = vmul.f32 %v2855, %v3326
        %v3455 = vmul.f32 %v2857, %v3327
        %v3456 = vmul.f32 %v2859, %v3328
        %v3457 = vmul.f32 %v2861, %v3329
        %v3458 = vmul.f32 %v2863, %v3330
        %v3459 = vmul.f32 %v2865, %v3331
        %v3460 = vmul.f32 %v2867, %v3332
        %v3461 = vmul.f32 %v2869, %v3333
        %v3462 = vmul.f32 %v2871, %v3334
        %v3463 = vmul.f32 %v2873, %v3335
        %v3464 = vmul.f32 %v2875, %v3336
        %v3465 = vmul.f32 %v2877, %v3337
        %v3466 = vmul.f32 %v2879, %v3338
        %v3467 = vmul.f32 %v2881, %v3339
        %v3468 = vmul.f32 %v2883, %v3340
        %v3469 = vmul.f32 %v2885, %v3341
        %v3470 = vmul.f32 %v2887, %v3342
        %v3471 = vmul.f32 %v2889, %v3343
        %v3472 = vmul.f32 %v2891, %v3344
        %v3473 = vmul.f32 %v2893, %v3345
        %v3474 = vmul.f32 %v2895, %v3346
        %v3475 = vmul.f32 %v2897, %v3347
        %v3476 = vmul.f32 %v2899, %v3348
        %v3477 = vmul.f32 %v2901, %v3349
        %v3478 = vmul.f32 %v2903, %v3350
        %v3479 = vmul.f32 %v2905, %v3351
        %v3480 = vmul.f32 %v2907, %v3352
        %v3481 = vmul.f32 %v2909, %v3353
        %v3482 = vmul.f32 %v2911, %v3354
        %v3483 = vmul.f32 %v2913, %v3355
        %v3484 = vmul.f32 %v2915, %v3356
        %v3485 = vmul.f32 %v2917, %v3357
        %v3486 = vmul.f32 %v2919, %v3358
        %v3487 = vmul.f32 %v2921, %v3359
        %v3488 = vmul.f32 %v2923, %v3360
        %v3489 = vmul.f32 %v2925, %v3361
        %v3490 = vmul.f32 %v2927, %v3362
        %v3491 = vmul.f32 %v2929, %v3363
        %v3492 = vmul.f32 %v2931, %v3364
        %v3493 = vmul.f32 %v2933, %v3365
        %v3494 = vmul.f32 %v2935, %v3366
        %v3495 = vmul.f32 %v2937, %v3367
        %v3496 = vmul.f32 %v2939, %v3368
        %v3497 = vmul.f32 %v2941, %v3369
        %v3498 = vmul.f32 %v2943, %v3370
        %v3499 = vmul.f32 %v2945, %v3371
        %v3500 = vmul.f32 %v2947, %v3372
        %v3501 = vmul.f32 %v2949, %v3373
        %v3502 = vmul.f32 %v2951, %v3374
        %v3503 = vmul.f32 %v2953, %v3375
        %v3504 = vmul.f32 %v2955, %v3376
        %v3505 = vmul.f32 %v2957, %v3377
        %v3506 = vmul.f32 %v2959, %v3378
        %v3507 = vmul.f32 %v2961, %v3379
        %v3508 = vmul.f32 %v2963, %v3380
        %v3509 = vmul.f32 %v2965, %v3381
        %v3510 = vmul.f32 %v2967, %v3382
        %v3511 = vmul.f32 %v2969, %v3383
        %v3512 = vmul.f32 %v2971, %v3384
        %v3513 = vmul.f32 %v2973, %v3385
        %v3514 = vmul.f32 %v2975, %v3386
        %v3515 = vmul.f32 %v2977, %v3387
        %v3516 = vmul.f32 %v2979, %v3388
        %v3517 = vmul.f32 %v2981, %v3389
        %v3518 = vmul.f32 %v2983, %v3390
        %v3519 = vmul.f32 %v2985, %v3391
        %v3520 = vmul.f32 %v2987, %v3392
        %v3521 = vmul.f32 %v2989, %v3393
        %v3522 = vmul.f32 %v2991, %v3394
        %v3523 = vmul.f32 %v2993, %v3395
        %v3524 = vmul.f32 %v2995, %v3396
        %v3525 = vmul.f32 %v2997, %v3397
        %v3526 = vmul.f32 %v2999, %v3398
        %v3527 = vmul.f32 %v3001, %v3399
        %v3528 = vmul.f32 %v3003, %v3400
        %v3529 = vmul.f32 %v3005, %v3401
        %v3530 = vmul.f32 %v3007, %v3402
        %v3531 = vmul.f32 %v3009, %v3403
        %v3532 = vmul.f32 %v3011, %v3404
        %v3533 = vmul.f32 %v3013, %v3405
        %v3534 = vmul.f32 %v3015, %v3406
        %v3535 = vmul.f32 %v3017, %v3407
        %v3536 = vmul.f32 %v3019, %v3408
        %v3537 = vmul.f32 %v3021, %v3409
        %v3538 = vmul.f32 %v3023, %v3410
        %v3539 = vmul.f32 %v3025, %v3411
        %v3540 = vmul.f32 %v3027, %v3412
        %v3541 = vmul.f32 %v3029, %v3413
        %v3542 = vpack.c.bf16 %v3415, %v3414
        %v3543 = vpack.c.bf16 %v3417, %v3416
        %v3544 = vpack.c.bf16 %v3419, %v3418
        %v3545 = vpack.c.bf16 %v3421, %v3420
        %v3546 = vpack.c.bf16 %v3423, %v3422
        %v3547 = vpack.c.bf16 %v3425, %v3424
        %v3548 = vpack.c.bf16 %v3427, %v3426
        %v3549 = vpack.c.bf16 %v3429, %v3428
        %v3550 = vpack.c.bf16 %v3431, %v3430
        %v3551 = vpack.c.bf16 %v3433, %v3432
        %v3552 = vpack.c.bf16 %v3435, %v3434
        %v3553 = vpack.c.bf16 %v3437, %v3436
        %v3554 = vpack.c.bf16 %v3439, %v3438
        %v3555 = vpack.c.bf16 %v3441, %v3440
        %v3556 = vpack.c.bf16 %v3443, %v3442
        %v3557 = vpack.c.bf16 %v3445, %v3444
        %v3558 = vpack.c.bf16 %v3447, %v3446
        %v3559 = vpack.c.bf16 %v3449, %v3448
        %v3560 = vpack.c.bf16 %v3451, %v3450
        %v3561 = vpack.c.bf16 %v3453, %v3452
        %v3562 = vpack.c.bf16 %v3455, %v3454
        %v3563 = vpack.c.bf16 %v3457, %v3456
        %v3564 = vpack.c.bf16 %v3459, %v3458
        %v3565 = vpack.c.bf16 %v3461, %v3460
        %v3566 = vpack.c.bf16 %v3463, %v3462
        %v3567 = vpack.c.bf16 %v3465, %v3464
        %v3568 = vpack.c.bf16 %v3467, %v3466
        %v3569 = vpack.c.bf16 %v3469, %v3468
        %v3570 = vpack.c.bf16 %v3471, %v3470
        %v3571 = vpack.c.bf16 %v3473, %v3472
        %v3572 = vpack.c.bf16 %v3475, %v3474
        %v3573 = vpack.c.bf16 %v3477, %v3476
        %v3574 = vpack.c.bf16 %v3479, %v3478
        %v3575 = vpack.c.bf16 %v3481, %v3480
        %v3576 = vpack.c.bf16 %v3483, %v3482
        %v3577 = vpack.c.bf16 %v3485, %v3484
        %v3578 = vpack.c.bf16 %v3487, %v3486
        %v3579 = vpack.c.bf16 %v3489, %v3488
        %v3580 = vpack.c.bf16 %v3491, %v3490
        %v3581 = vpack.c.bf16 %v3493, %v3492
        %v3582 = vpack.c.bf16 %v3495, %v3494
        %v3583 = vpack.c.bf16 %v3497, %v3496
        %v3584 = vpack.c.bf16 %v3499, %v3498
        %v3585 = vpack.c.bf16 %v3501, %v3500
        %v3586 = vpack.c.bf16 %v3503, %v3502
        %v3587 = vpack.c.bf16 %v3505, %v3504
        %v3588 = vpack.c.bf16 %v3507, %v3506
        %v3589 = vpack.c.bf16 %v3509, %v3508
        %v3590 = vpack.c.bf16 %v3511, %v3510
        %v3591 = vpack.c.bf16 %v3513, %v3512
        %v3592 = vpack.c.bf16 %v3515, %v3514
        %v3593 = vpack.c.bf16 %v3517, %v3516
        %v3594 = vpack.c.bf16 %v3519, %v3518
        %v3595 = vpack.c.bf16 %v3521, %v3520
        %v3596 = vpack.c.bf16 %v3523, %v3522
        %v3597 = vpack.c.bf16 %v3525, %v3524
        %v3598 = vpack.c.bf16 %v3527, %v3526
        %v3599 = vpack.c.bf16 %v3529, %v3528
        %v3600 = vpack.c.bf16 %v3531, %v3530
        %v3601 = vpack.c.bf16 %v3533, %v3532
        %v3602 = vpack.c.bf16 %v3535, %v3534
        %v3603 = vpack.c.bf16 %v3537, %v3536
        %v3604 = vpack.c.bf16 %v3539, %v3538
        %v3605 = vpack.c.bf16 %v3541, %v3540
        %3606 = vmatprep.subr.bf16.mxu0 0
        %3607 = vmatpush1.bf16.msra.mxu0 %v1170
        %3608 = vmatprep.subr.bf16.mxu0 0
        %3609 = vmatpush1.bf16.msra.mxu0 %v1171
        %3610 = vmatprep.subr.bf16.mxu0 0
        %3611 = vmatpush1.bf16.msra.mxu0 %v1172
        %3612 = vmatprep.subr.bf16.mxu0 0
        %3613 = vmatpush1.bf16.msra.mxu0 %v1173
        %3614 = vmatprep.subr.bf16.mxu0 0
        %3615 = vmatpush1.bf16.msra.mxu0 %v1174
        %3616 = vmatprep.subr.bf16.mxu0 0
        %3617 = vmatpush1.bf16.msra.mxu0 %v1175
        %3618 = vmatprep.subr.bf16.mxu0 0
        %3619 = vmatpush1.bf16.msra.mxu0 %v1176
        %3620 = vmatprep.subr.bf16.mxu0 0
        %3621 = vmatpush1.bf16.msra.mxu0 %v1177
        %3622 = vmatprep.subr.bf16.mxu0 0
        %3623 = vmatpush1.bf16.msra.mxu0 0
        %3624 = vmatprep.subr.bf16.mxu0 0
        %3625 = vmatpush1.bf16.msra.mxu0 0
        %3626 = vmatprep.subr.bf16.mxu0 0
        %3627 = vmatpush1.bf16.msra.mxu0 0
        %3628 = vmatprep.subr.bf16.mxu0 0
        %3629 = vmatpush1.bf16.msra.mxu0 0
        %3630 = vmatprep.subr.bf16.mxu0 0
        %3631 = vmatpush1.bf16.msra.mxu0 0
        %3632 = vmatprep.subr.bf16.mxu0 0
        %3633 = vmatpush1.bf16.msra.mxu0 0
        %3634 = vmatprep.subr.bf16.mxu0 0
        %3635 = vmatpush1.bf16.msra.mxu0 0
        %3636 = vmatprep.subr.bf16.mxu0 0
        %3637 = vmatpush1.bf16.msra.mxu0 0
        %3638 = vmatprep.mubr.bf16.mxu0 0
        %3639 = vmatmul.mubr.bf16.gmra.mrb[0].mxu0 %v3542
        %v3640 = vpop.f32.mrb[0].mxu0
        %v3641 = vadd.f32 0.0, %v3640
        %v3642 = vpop.f32.mrb[0].mxu0
        %v3643 = vpop.f32.mrb[0].mxu0
        %v3644 = vadd.f32 0.0, %v3643
        %v3645 = vpop.f32.mrb[0].mxu0
        %3646 = vmatprep.mubr.bf16.mxu0 0
        %3647 = vmatmul.mubr.bf16.gmra.mrb[0].mxu0 %v3543
        %v3648 = vpop.f32.mrb[0].mxu0
        %v3649 = vadd.f32 0.0, %v3648
        %v3650 = vpop.f32.mrb[0].mxu0
        %v3651 = vpop.f32.mrb[0].mxu0
        %v3652 = vadd.f32 0.0, %v3651
        %v3653 = vpop.f32.mrb[0].mxu0
        %3654 = vmatprep.mubr.bf16.mxu0 0
        %3655 = vmatmul.mubr.bf16.gmra.mrb[0].mxu0 %v3544
        %v3656 = vpop.f32.mrb[0].mxu0
        %v3657 = vadd.f32 0.0, %v3656
        %v3658 = vpop.f32.mrb[0].mxu0
        %v3659 = vpop.f32.mrb[0].mxu0
        %v3660 = vadd.f32 0.0, %v3659
        %v3661 = vpop.f32.mrb[0].mxu0
        %3662 = vmatprep.mubr.bf16.mxu0 0
        %3663 = vmatmul.mubr.bf16.gmra.mrb[0].mxu0 %v3545
        %v3664 = vpop.f32.mrb[0].mxu0
        %v3665 = vadd.f32 0.0, %v3664
        %v3666 = vpop.f32.mrb[0].mxu0
        %v3667 = vpop.f32.mrb[0].mxu0
        %v3668 = vadd.f32 0.0, %v3667
        %v3669 = vpop.f32.mrb[0].mxu0
        %3670 = vmatprep.mubr.bf16.mxu0 0
        %3671 = vmatmul.mubr.bf16.gmra.mrb[0].mxu0 %v3546
        %v3672 = vpop.f32.mrb[0].mxu0
        %v3673 = vadd.f32 0.0, %v3672
        %v3674 = vpop.f32.mrb[0].mxu0
        %v3675 = vpop.f32.mrb[0].mxu0
        %v3676 = vadd.f32 0.0, %v3675
        %v3677 = vpop.f32.mrb[0].mxu0
        %3678 = vmatprep.mubr.bf16.mxu0 0
        %3679 = vmatmul.mubr.bf16.gmra.mrb[0].mxu0 %v3547
        %v3680 = vpop.f32.mrb[0].mxu0
        %v3681 = vadd.f32 0.0, %v3680
        %v3682 = vpop.f32.mrb[0].mxu0
        %v3683 = vpop.f32.mrb[0].mxu0
        %v3684 = vadd.f32 0.0, %v3683
        %v3685 = vpop.f32.mrb[0].mxu0
        %3686 = vmatprep.mubr.bf16.mxu0 0
        %3687 = vmatmul.mubr.bf16.gmra.mrb[0].mxu0 %v3548
        %v3688 = vpop.f32.mrb[0].mxu0
        %v3689 = vadd.f32 0.0, %v3688
        %v3690 = vpop.f32.mrb[0].mxu0
        %v3691 = vpop.f32.mrb[0].mxu0
        %v3692 = vadd.f32 0.0, %v3691
        %v3693 = vpop.f32.mrb[0].mxu0
        %3694 = vmatprep.mubr.bf16.mxu0 0
        %3695 = vmatmul.mubr.bf16.gmra.mrb[0].mxu0 %v3549
        %v3696 = vpop.f32.mrb[0].mxu0
        %v3697 = vadd.f32 0.0, %v3696
        %v3698 = vpop.f32.mrb[0].mxu0
        %v3699 = vpop.f32.mrb[0].mxu0
        %v3700 = vadd.f32 0.0, %v3699
        %v3701 = vpop.f32.mrb[0].mxu0
        %3702 = vmatprep.mubr.bf16.mxu0 0
        %3703 = vmatmul.mubr.bf16.gmra.mrb[0].mxu0 %v3550
        %v3704 = vpop.f32.mrb[0].mxu0
        %v3705 = vadd.f32 0.0, %v3704
        %v3706 = vpop.f32.mrb[0].mxu0
        %v3707 = vpop.f32.mrb[0].mxu0
        %v3708 = vadd.f32 0.0, %v3707
        %v3709 = vpop.f32.mrb[0].mxu0
        %3710 = vmatprep.mubr.bf16.mxu0 0
        %3711 = vmatmul.mubr.bf16.gmra.mrb[0].mxu0 %v3551
        %v3712 = vpop.f32.mrb[0].mxu0
        %v3713 = vadd.f32 0.0, %v3712
        %v3714 = vpop.f32.mrb[0].mxu0
        %v3715 = vpop.f32.mrb[0].mxu0
        %v3716 = vadd.f32 0.0, %v3715
        %v3717 = vpop.f32.mrb[0].mxu0
        %3718 = vmatprep.mubr.bf16.mxu0 0
        %3719 = vmatmul.mubr.bf16.gmra.mrb[0].mxu0 %v3552
        %v3720 = vpop.f32.mrb[0].mxu0
        %v3721 = vadd.f32 0.0, %v3720
        %v3722 = vpop.f32.mrb[0].mxu0
        %v3723 = vpop.f32.mrb[0].mxu0
        %v3724 = vadd.f32 0.0, %v3723
        %v3725 = vpop.f32.mrb[0].mxu0
        %3726 = vmatprep.mubr.bf16.mxu0 0
        %3727 = vmatmul.mubr.bf16.gmra.mrb[0].mxu0 %v3553
        %v3728 = vpop.f32.mrb[0].mxu0
        %v3729 = vadd.f32 0.0, %v3728
        %v3730 = vpop.f32.mrb[0].mxu0
        %v3731 = vpop.f32.mrb[0].mxu0
        %v3732 = vadd.f32 0.0, %v3731
        %v3733 = vpop.f32.mrb[0].mxu0
        %3734 = vmatprep.mubr.bf16.mxu0 0
        %3735 = vmatmul.mubr.bf16.gmra.mrb[0].mxu0 %v3554
        %v3736 = vpop.f32.mrb[0].mxu0
        %v3737 = vadd.f32 0.0, %v3736
        %v3738 = vpop.f32.mrb[0].mxu0
        %v3739 = vpop.f32.mrb[0].mxu0
        %v3740 = vadd.f32 0.0, %v3739
        %v3741 = vpop.f32.mrb[0].mxu0
        %3742 = vmatprep.mubr.bf16.mxu0 0
        %3743 = vmatmul.mubr.bf16.gmra.mrb[0].mxu0 %v3555
        %v3744 = vpop.f32.mrb[0].mxu0
        %v3745 = vadd.f32 0.0, %v3744
        %v3746 = vpop.f32.mrb[0].mxu0
        %v3747 = vpop.f32.mrb[0].mxu0
        %v3748 = vadd.f32 0.0, %v3747
        %v3749 = vpop.f32.mrb[0].mxu0
        %3750 = vmatprep.mubr.bf16.mxu0 0
        %3751 = vmatmul.mubr.bf16.gmra.mrb[0].mxu0 %v3556
        %v3752 = vpop.f32.mrb[0].mxu0
        %v3753 = vadd.f32 0.0, %v3752
        %v3754 = vpop.f32.mrb[0].mxu0
        %v3755 = vpop.f32.mrb[0].mxu0
        %v3756 = vadd.f32 0.0, %v3755
        %v3757 = vpop.f32.mrb[0].mxu0
        %3758 = vmatprep.mubr.bf16.mxu0 0
        %3759 = vmatmul.mubr.bf16.gmra.mrb[0].mxu0 %v3557
        %v3760 = vpop.f32.mrb[0].mxu0
        %v3761 = vadd.f32 0.0, %v3760
        %v3762 = vpop.f32.mrb[0].mxu0
        %v3763 = vpop.f32.mrb[0].mxu0
        %v3764 = vadd.f32 0.0, %v3763
        %v3765 = vpop.f32.mrb[0].mxu0
        %3766 = vmatprep.mubr.bf16.mxu0 0
        %3767 = vmatmul.mubr.bf16.gmra.mrb[0].mxu0 %v3558
        %v3768 = vpop.f32.mrb[0].mxu0
        %v3769 = vadd.f32 0.0, %v3768
        %v3770 = vpop.f32.mrb[0].mxu0
        %v3771 = vpop.f32.mrb[0].mxu0
        %v3772 = vadd.f32 0.0, %v3771
        %v3773 = vpop.f32.mrb[0].mxu0
        %3774 = vmatprep.mubr.bf16.mxu0 0
        %3775 = vmatmul.mubr.bf16.gmra.mrb[0].mxu0 %v3559
        %v3776 = vpop.f32.mrb[0].mxu0
        %v3777 = vadd.f32 0.0, %v3776
        %v3778 = vpop.f32.mrb[0].mxu0
        %v3779 = vpop.f32.mrb[0].mxu0
        %v3780 = vadd.f32 0.0, %v3779
        %v3781 = vpop.f32.mrb[0].mxu0
        %3782 = vmatprep.mubr.bf16.mxu0 0
        %3783 = vmatmul.mubr.bf16.gmra.mrb[0].mxu0 %v3560
        %v3784 = vpop.f32.mrb[0].mxu0
        %v3785 = vadd.f32 0.0, %v3784
        %v3786 = vpop.f32.mrb[0].mxu0
        %v3787 = vpop.f32.mrb[0].mxu0
        %v3788 = vadd.f32 0.0, %v3787
        %v3789 = vpop.f32.mrb[0].mxu0
        %3790 = vmatprep.mubr.bf16.mxu0 0
        %3791 = vmatmul.mubr.bf16.gmra.mrb[0].mxu0 %v3561
        %v3792 = vpop.f32.mrb[0].mxu0
        %v3793 = vadd.f32 0.0, %v3792
        %v3794 = vpop.f32.mrb[0].mxu0
        %v3795 = vpop.f32.mrb[0].mxu0
        %v3796 = vadd.f32 0.0, %v3795
        %v3797 = vpop.f32.mrb[0].mxu0
        %3798 = vmatprep.mubr.bf16.mxu0 0
        %3799 = vmatmul.mubr.bf16.gmra.mrb[0].mxu0 %v3562
        %v3800 = vpop.f32.mrb[0].mxu0
        %v3801 = vadd.f32 0.0, %v3800
        %v3802 = vpop.f32.mrb[0].mxu0
        %v3803 = vpop.f32.mrb[0].mxu0
        %v3804 = vadd.f32 0.0, %v3803
        %v3805 = vpop.f32.mrb[0].mxu0
        %3806 = vmatprep.mubr.bf16.mxu0 0
        %3807 = vmatmul.mubr.bf16.gmra.mrb[0].mxu0 %v3563
        %v3808 = vpop.f32.mrb[0].mxu0
        %v3809 = vadd.f32 0.0, %v3808
        %v3810 = vpop.f32.mrb[0].mxu0
        %v3811 = vpop.f32.mrb[0].mxu0
        %v3812 = vadd.f32 0.0, %v3811
        %v3813 = vpop.f32.mrb[0].mxu0
        %3814 = vmatprep.mubr.bf16.mxu0 0
        %3815 = vmatmul.mubr.bf16.gmra.mrb[0].mxu0 %v3564
        %v3816 = vpop.f32.mrb[0].mxu0
        %v3817 = vadd.f32 0.0, %v3816
        %v3818 = vpop.f32.mrb[0].mxu0
        %v3819 = vpop.f32.mrb[0].mxu0
        %v3820 = vadd.f32 0.0, %v3819
        %v3821 = vpop.f32.mrb[0].mxu0
        %3822 = vmatprep.mubr.bf16.mxu0 0
        %3823 = vmatmul.mubr.bf16.gmra.mrb[0].mxu0 %v3565
        %v3824 = vpop.f32.mrb[0].mxu0
        %v3825 = vadd.f32 0.0, %v3824
        %v3826 = vpop.f32.mrb[0].mxu0
        %v3827 = vpop.f32.mrb[0].mxu0
        %v3828 = vadd.f32 0.0, %v3827
        %v3829 = vpop.f32.mrb[0].mxu0
        %3830 = vmatprep.mubr.bf16.mxu0 0
        %3831 = vmatmul.mubr.bf16.gmra.mrb[0].mxu0 %v3566
        %v3832 = vpop.f32.mrb[0].mxu0
        %v3833 = vadd.f32 0.0, %v3832
        %v3834 = vpop.f32.mrb[0].mxu0
        %v3835 = vpop.f32.mrb[0].mxu0
        %v3836 = vadd.f32 0.0, %v3835
        %v3837 = vpop.f32.mrb[0].mxu0
        %3838 = vmatprep.mubr.bf16.mxu0 0
        %3839 = vmatmul.mubr.bf16.gmra.mrb[0].mxu0 %v3567
        %v3840 = vpop.f32.mrb[0].mxu0
        %v3841 = vadd.f32 0.0, %v3840
        %v3842 = vpop.f32.mrb[0].mxu0
        %v3843 = vpop.f32.mrb[0].mxu0
        %v3844 = vadd.f32 0.0, %v3843
        %v3845 = vpop.f32.mrb[0].mxu0
        %3846 = vmatprep.mubr.bf16.mxu0 0
        %3847 = vmatmul.mubr.bf16.gmra.mrb[0].mxu0 %v3568
        %v3848 = vpop.f32.mrb[0].mxu0
        %v3849 = vadd.f32 0.0, %v3848
        %v3850 = vpop.f32.mrb[0].mxu0
        %v3851 = vpop.f32.mrb[0].mxu0
        %v3852 = vadd.f32 0.0, %v3851
        %v3853 = vpop.f32.mrb[0].mxu0
        %3854 = vmatprep.mubr.bf16.mxu0 0
        %3855 = vmatmul.mubr.bf16.gmra.mrb[0].mxu0 %v3569
        %v3856 = vpop.f32.mrb[0].mxu0
        %v3857 = vadd.f32 0.0, %v3856
        %v3858 = vpop.f32.mrb[0].mxu0
        %v3859 = vpop.f32.mrb[0].mxu0
        %v3860 = vadd.f32 0.0, %v3859
        %v3861 = vpop.f32.mrb[0].mxu0
        %3862 = vmatprep.mubr.bf16.mxu0 0
        %3863 = vmatmul.mubr.bf16.gmra.mrb[0].mxu0 %v3570
        %v3864 = vpop.f32.mrb[0].mxu0
        %v3865 = vadd.f32 0.0, %v3864
        %v3866 = vpop.f32.mrb[0].mxu0
        %v3867 = vpop.f32.mrb[0].mxu0
        %v3868 = vadd.f32 0.0, %v3867
        %v3869 = vpop.f32.mrb[0].mxu0
        %3870 = vmatprep.mubr.bf16.mxu0 0
        %3871 = vmatmul.mubr.bf16.gmra.mrb[0].mxu0 %v3571
        %v3872 = vpop.f32.mrb[0].mxu0
        %v3873 = vadd.f32 0.0, %v3872
        %v3874 = vpop.f32.mrb[0].mxu0
        %v3875 = vpop.f32.mrb[0].mxu0
        %v3876 = vadd.f32 0.0, %v3875
        %v3877 = vpop.f32.mrb[0].mxu0
        %3878 = vmatprep.mubr.bf16.mxu0 0
        %3879 = vmatmul.mubr.bf16.gmra.mrb[0].mxu0 %v3572
        %v3880 = vpop.f32.mrb[0].mxu0
        %v3881 = vadd.f32 0.0, %v3880
        %v3882 = vpop.f32.mrb[0].mxu0
        %v3883 = vpop.f32.mrb[0].mxu0
        %v3884 = vadd.f32 0.0, %v3883
        %v3885 = vpop.f32.mrb[0].mxu0
        %3886 = vmatprep.mubr.bf16.mxu0 0
        %3887 = vmatmul.mubr.bf16.gmra.mrb[0].mxu0 %v3573
        %v3888 = vpop.f32.mrb[0].mxu0
        %v3889 = vadd.f32 0.0, %v3888
        %v3890 = vpop.f32.mrb[0].mxu0
        %v3891 = vpop.f32.mrb[0].mxu0
        %v3892 = vadd.f32 0.0, %v3891
        %v3893 = vpop.f32.mrb[0].mxu0
        %3894 = vmatprep.mubr.bf16.mxu0 0
        %3895 = vmatmul.mubr.bf16.gmra.mrb[0].mxu0 %v3574
        %v3896 = vpop.f32.mrb[0].mxu0
        %v3897 = vadd.f32 0.0, %v3896
        %v3898 = vpop.f32.mrb[0].mxu0
        %v3899 = vpop.f32.mrb[0].mxu0
        %v3900 = vadd.f32 0.0, %v3899
        %v3901 = vpop.f32.mrb[0].mxu0
        %3902 = vmatprep.mubr.bf16.mxu0 0
        %3903 = vmatmul.mubr.bf16.gmra.mrb[0].mxu0 %v3575
        %v3904 = vpop.f32.mrb[0].mxu0
        %v3905 = vadd.f32 0.0, %v3904
        %v3906 = vpop.f32.mrb[0].mxu0
        %v3907 = vpop.f32.mrb[0].mxu0
        %v3908 = vadd.f32 0.0, %v3907
        %v3909 = vpop.f32.mrb[0].mxu0
        %3910 = vmatprep.mubr.bf16.mxu0 0
        %3911 = vmatmul.mubr.bf16.gmra.mrb[0].mxu0 %v3576
        %v3912 = vpop.f32.mrb[0].mxu0
        %v3913 = vadd.f32 0.0, %v3912
        %v3914 = vpop.f32.mrb[0].mxu0
        %v3915 = vpop.f32.mrb[0].mxu0
        %v3916 = vadd.f32 0.0, %v3915
        %v3917 = vpop.f32.mrb[0].mxu0
        %3918 = vmatprep.mubr.bf16.mxu0 0
        %3919 = vmatmul.mubr.bf16.gmra.mrb[0].mxu0 %v3577
        %v3920 = vpop.f32.mrb[0].mxu0
        %v3921 = vadd.f32 0.0, %v3920
        %v3922 = vpop.f32.mrb[0].mxu0
        %v3923 = vpop.f32.mrb[0].mxu0
        %v3924 = vadd.f32 0.0, %v3923
        %v3925 = vpop.f32.mrb[0].mxu0
        %3926 = vmatprep.mubr.bf16.mxu0 0
        %3927 = vmatmul.mubr.bf16.gmra.mrb[0].mxu0 %v3578
        %v3928 = vpop.f32.mrb[0].mxu0
        %v3929 = vadd.f32 0.0, %v3928
        %v3930 = vpop.f32.mrb[0].mxu0
        %v3931 = vpop.f32.mrb[0].mxu0
        %v3932 = vadd.f32 0.0, %v3931
        %v3933 = vpop.f32.mrb[0].mxu0
        %3934 = vmatprep.mubr.bf16.mxu0 0
        %3935 = vmatmul.mubr.bf16.gmra.mrb[0].mxu0 %v3579
        %v3936 = vpop.f32.mrb[0].mxu0
        %v3937 = vadd.f32 0.0, %v3936
        %v3938 = vpop.f32.mrb[0].mxu0
        %v3939 = vpop.f32.mrb[0].mxu0
        %v3940 = vadd.f32 0.0, %v3939
        %v3941 = vpop.f32.mrb[0].mxu0
        %3942 = vmatprep.mubr.bf16.mxu0 0
        %3943 = vmatmul.mubr.bf16.gmra.mrb[0].mxu0 %v3580
        %v3944 = vpop.f32.mrb[0].mxu0
        %v3945 = vadd.f32 0.0, %v3944
        %v3946 = vpop.f32.mrb[0].mxu0
        %v3947 = vpop.f32.mrb[0].mxu0
        %v3948 = vadd.f32 0.0, %v3947
        %v3949 = vpop.f32.mrb[0].mxu0
        %3950 = vmatprep.mubr.bf16.mxu0 0
        %3951 = vmatmul.mubr.bf16.gmra.mrb[0].mxu0 %v3581
        %v3952 = vpop.f32.mrb[0].mxu0
        %v3953 = vadd.f32 0.0, %v3952
        %v3954 = vpop.f32.mrb[0].mxu0
        %v3955 = vpop.f32.mrb[0].mxu0
        %v3956 = vadd.f32 0.0, %v3955
        %v3957 = vpop.f32.mrb[0].mxu0
        %3958 = vmatprep.mubr.bf16.mxu0 0
        %3959 = vmatmul.mubr.bf16.gmra.mrb[0].mxu0 %v3582
        %v3960 = vpop.f32.mrb[0].mxu0
        %v3961 = vadd.f32 0.0, %v3960
        %v3962 = vpop.f32.mrb[0].mxu0
        %v3963 = vpop.f32.mrb[0].mxu0
        %v3964 = vadd.f32 0.0, %v3963
        %v3965 = vpop.f32.mrb[0].mxu0
        %3966 = vmatprep.mubr.bf16.mxu0 0
        %3967 = vmatmul.mubr.bf16.gmra.mrb[0].mxu0 %v3583
        %v3968 = vpop.f32.mrb[0].mxu0
        %v3969 = vadd.f32 0.0, %v3968
        %v3970 = vpop.f32.mrb[0].mxu0
        %v3971 = vpop.f32.mrb[0].mxu0
        %v3972 = vadd.f32 0.0, %v3971
        %v3973 = vpop.f32.mrb[0].mxu0
        %3974 = vmatprep.mubr.bf16.mxu0 0
        %3975 = vmatmul.mubr.bf16.gmra.mrb[0].mxu0 %v3584
        %v3976 = vpop.f32.mrb[0].mxu0
        %v3977 = vadd.f32 0.0, %v3976
        %v3978 = vpop.f32.mrb[0].mxu0
        %v3979 = vpop.f32.mrb[0].mxu0
        %v3980 = vadd.f32 0.0, %v3979
        %v3981 = vpop.f32.mrb[0].mxu0
        %3982 = vmatprep.mubr.bf16.mxu0 0
        %3983 = vmatmul.mubr.bf16.gmra.mrb[0].mxu0 %v3585
        %v3984 = vpop.f32.mrb[0].mxu0
        %v3985 = vadd.f32 0.0, %v3984
        %v3986 = vpop.f32.mrb[0].mxu0
        %v3987 = vpop.f32.mrb[0].mxu0
        %v3988 = vadd.f32 0.0, %v3987
        %v3989 = vpop.f32.mrb[0].mxu0
        %3990 = vmatprep.mubr.bf16.mxu0 0
        %3991 = vmatmul.mubr.bf16.gmra.mrb[0].mxu0 %v3586
        %v3992 = vpop.f32.mrb[0].mxu0
        %v3993 = vadd.f32 0.0, %v3992
        %v3994 = vpop.f32.mrb[0].mxu0
        %v3995 = vpop.f32.mrb[0].mxu0
        %v3996 = vadd.f32 0.0, %v3995
        %v3997 = vpop.f32.mrb[0].mxu0
        %3998 = vmatprep.mubr.bf16.mxu0 0
        %3999 = vmatmul.mubr.bf16.gmra.mrb[0].mxu0 %v3587
        %v4000 = vpop.f32.mrb[0].mxu0
        %v4001 = vadd.f32 0.0, %v4000
        %v4002 = vpop.f32.mrb[0].mxu0
        %v4003 = vpop.f32.mrb[0].mxu0
        %v4004 = vadd.f32 0.0, %v4003
        %v4005 = vpop.f32.mrb[0].mxu0
        %4006 = vmatprep.mubr.bf16.mxu0 0
        %4007 = vmatmul.mubr.bf16.gmra.mrb[0].mxu0 %v3588
        %v4008 = vpop.f32.mrb[0].mxu0
        %v4009 = vadd.f32 0.0, %v4008
        %v4010 = vpop.f32.mrb[0].mxu0
        %v4011 = vpop.f32.mrb[0].mxu0
        %v4012 = vadd.f32 0.0, %v4011
        %v4013 = vpop.f32.mrb[0].mxu0
        %4014 = vmatprep.mubr.bf16.mxu0 0
        %4015 = vmatmul.mubr.bf16.gmra.mrb[0].mxu0 %v3589
        %v4016 = vpop.f32.mrb[0].mxu0
        %v4017 = vadd.f32 0.0, %v4016
        %v4018 = vpop.f32.mrb[0].mxu0
        %v4019 = vpop.f32.mrb[0].mxu0
        %v4020 = vadd.f32 0.0, %v4019
        %v4021 = vpop.f32.mrb[0].mxu0
        %4022 = vmatprep.mubr.bf16.mxu0 0
        %4023 = vmatmul.mubr.bf16.gmra.mrb[0].mxu0 %v3590
        %v4024 = vpop.f32.mrb[0].mxu0
        %v4025 = vadd.f32 0.0, %v4024
        %v4026 = vpop.f32.mrb[0].mxu0
        %v4027 = vpop.f32.mrb[0].mxu0
        %v4028 = vadd.f32 0.0, %v4027
        %v4029 = vpop.f32.mrb[0].mxu0
        %4030 = vmatprep.mubr.bf16.mxu0 0
        %4031 = vmatmul.mubr.bf16.gmra.mrb[0].mxu0 %v3591
        %v4032 = vpop.f32.mrb[0].mxu0
        %v4033 = vadd.f32 0.0, %v4032
        %v4034 = vpop.f32.mrb[0].mxu0
        %v4035 = vpop.f32.mrb[0].mxu0
        %v4036 = vadd.f32 0.0, %v4035
        %v4037 = vpop.f32.mrb[0].mxu0
        %4038 = vmatprep.mubr.bf16.mxu0 0
        %4039 = vmatmul.mubr.bf16.gmra.mrb[0].mxu0 %v3592
        %v4040 = vpop.f32.mrb[0].mxu0
        %v4041 = vadd.f32 0.0, %v4040
        %v4042 = vpop.f32.mrb[0].mxu0
        %v4043 = vpop.f32.mrb[0].mxu0
        %v4044 = vadd.f32 0.0, %v4043
        %v4045 = vpop.f32.mrb[0].mxu0
        %4046 = vmatprep.mubr.bf16.mxu0 0
        %4047 = vmatmul.mubr.bf16.gmra.mrb[0].mxu0 %v3593
        %v4048 = vpop.f32.mrb[0].mxu0
        %v4049 = vadd.f32 0.0, %v4048
        %v4050 = vpop.f32.mrb[0].mxu0
        %v4051 = vpop.f32.mrb[0].mxu0
        %v4052 = vadd.f32 0.0, %v4051
        %v4053 = vpop.f32.mrb[0].mxu0
        %4054 = vmatprep.mubr.bf16.mxu0 0
        %4055 = vmatmul.mubr.bf16.gmra.mrb[0].mxu0 %v3594
        %v4056 = vpop.f32.mrb[0].mxu0
        %v4057 = vadd.f32 0.0, %v4056
        %v4058 = vpop.f32.mrb[0].mxu0
        %v4059 = vpop.f32.mrb[0].mxu0
        %v4060 = vadd.f32 0.0, %v4059
        %v4061 = vpop.f32.mrb[0].mxu0
        %4062 = vmatprep.mubr.bf16.mxu0 0
        %4063 = vmatmul.mubr.bf16.gmra.mrb[0].mxu0 %v3595
        %v4064 = vpop.f32.mrb[0].mxu0
        %v4065 = vadd.f32 0.0, %v4064
        %v4066 = vpop.f32.mrb[0].mxu0
        %v4067 = vpop.f32.mrb[0].mxu0
        %v4068 = vadd.f32 0.0, %v4067
        %v4069 = vpop.f32.mrb[0].mxu0
        %4070 = vmatprep.mubr.bf16.mxu0 0
        %4071 = vmatmul.mubr.bf16.gmra.mrb[0].mxu0 %v3596
        %v4072 = vpop.f32.mrb[0].mxu0
        %v4073 = vadd.f32 0.0, %v4072
        %v4074 = vpop.f32.mrb[0].mxu0
        %v4075 = vpop.f32.mrb[0].mxu0
        %v4076 = vadd.f32 0.0, %v4075
        %v4077 = vpop.f32.mrb[0].mxu0
        %4078 = vmatprep.mubr.bf16.mxu0 0
        %4079 = vmatmul.mubr.bf16.gmra.mrb[0].mxu0 %v3597
        %v4080 = vpop.f32.mrb[0].mxu0
        %v4081 = vadd.f32 0.0, %v4080
        %v4082 = vpop.f32.mrb[0].mxu0
        %v4083 = vpop.f32.mrb[0].mxu0
        %v4084 = vadd.f32 0.0, %v4083
        %v4085 = vpop.f32.mrb[0].mxu0
        %4086 = vmatprep.mubr.bf16.mxu0 0
        %4087 = vmatmul.mubr.bf16.gmra.mrb[0].mxu0 %v3598
        %v4088 = vpop.f32.mrb[0].mxu0
        %v4089 = vadd.f32 0.0, %v4088
        %v4090 = vpop.f32.mrb[0].mxu0
        %v4091 = vpop.f32.mrb[0].mxu0
        %v4092 = vadd.f32 0.0, %v4091
        %v4093 = vpop.f32.mrb[0].mxu0
        %4094 = vmatprep.mubr.bf16.mxu0 0
        %4095 = vmatmul.mubr.bf16.gmra.mrb[0].mxu0 %v3599
        %v4096 = vpop.f32.mrb[0].mxu0
        %v4097 = vadd.f32 0.0, %v4096
        %v4098 = vpop.f32.mrb[0].mxu0
        %v4099 = vpop.f32.mrb[0].mxu0
        %v4100 = vadd.f32 0.0, %v4099
        %v4101 = vpop.f32.mrb[0].mxu0
        %4102 = vmatprep.mubr.bf16.mxu0 0
        %4103 = vmatmul.mubr.bf16.gmra.mrb[0].mxu0 %v3600
        %v4104 = vpop.f32.mrb[0].mxu0
        %v4105 = vadd.f32 0.0, %v4104
        %v4106 = vpop.f32.mrb[0].mxu0
        %v4107 = vpop.f32.mrb[0].mxu0
        %v4108 = vadd.f32 0.0, %v4107
        %v4109 = vpop.f32.mrb[0].mxu0
        %4110 = vmatprep.mubr.bf16.mxu0 0
        %4111 = vmatmul.mubr.bf16.gmra.mrb[0].mxu0 %v3601
        %v4112 = vpop.f32.mrb[0].mxu0
        %v4113 = vadd.f32 0.0, %v4112
        %v4114 = vpop.f32.mrb[0].mxu0
        %v4115 = vpop.f32.mrb[0].mxu0
        %v4116 = vadd.f32 0.0, %v4115
        %v4117 = vpop.f32.mrb[0].mxu0
        %4118 = vmatprep.mubr.bf16.mxu0 0
        %4119 = vmatmul.mubr.bf16.gmra.mrb[0].mxu0 %v3602
        %v4120 = vpop.f32.mrb[0].mxu0
        %v4121 = vadd.f32 0.0, %v4120
        %v4122 = vpop.f32.mrb[0].mxu0
        %v4123 = vpop.f32.mrb[0].mxu0
        %v4124 = vadd.f32 0.0, %v4123
        %v4125 = vpop.f32.mrb[0].mxu0
        %4126 = vmatprep.mubr.bf16.mxu0 0
        %4127 = vmatmul.mubr.bf16.gmra.mrb[0].mxu0 %v3603
        %v4128 = vpop.f32.mrb[0].mxu0
        %v4129 = vadd.f32 0.0, %v4128
        %v4130 = vpop.f32.mrb[0].mxu0
        %v4131 = vpop.f32.mrb[0].mxu0
        %v4132 = vadd.f32 0.0, %v4131
        %v4133 = vpop.f32.mrb[0].mxu0
        %4134 = vmatprep.mubr.bf16.mxu0 0
        %4135 = vmatmul.mubr.bf16.gmra.mrb[0].mxu0 %v3604
        %v4136 = vpop.f32.mrb[0].mxu0
        %v4137 = vadd.f32 0.0, %v4136
        %v4138 = vpop.f32.mrb[0].mxu0
        %v4139 = vpop.f32.mrb[0].mxu0
        %v4140 = vadd.f32 0.0, %v4139
        %v4141 = vpop.f32.mrb[0].mxu0
        %4142 = vmatprep.mubr.bf16.mxu0 0
        %4143 = vmatmul.mubr.bf16.gmra.mrb[0].mxu0 %v3605
        %v4144 = vpop.f32.mrb[0].mxu0
        %v4145 = vadd.f32 0.0, %v4144
        %v4146 = vpop.f32.mrb[0].mxu0
        %v4147 = vpop.f32.mrb[0].mxu0
        %v4148 = vadd.f32 0.0, %v4147
        %v4149 = vpop.f32.mrb[0].mxu0
        %4150 = vdwg.mxu0
        %v4151 = vmul.f32 %v3641, %v1232
        %v4152 = vmul.f32 %v3644, %v1232
        %v4153 = vmul.f32 %v3649, %v1232
        %v4154 = vmul.f32 %v3652, %v1232
        %v4155 = vmul.f32 %v3657, %v1232
        %v4156 = vmul.f32 %v3660, %v1232
        %v4157 = vmul.f32 %v3665, %v1232
        %v4158 = vmul.f32 %v3668, %v1232
        %v4159 = vmul.f32 %v3673, %v1232
        %v4160 = vmul.f32 %v3676, %v1232
        %v4161 = vmul.f32 %v3681, %v1232
        %v4162 = vmul.f32 %v3684, %v1232
        %v4163 = vmul.f32 %v3689, %v1232
        %v4164 = vmul.f32 %v3692, %v1232
        %v4165 = vmul.f32 %v3697, %v1232
        %v4166 = vmul.f32 %v3700, %v1232
        %v4167 = vmul.f32 %v3705, %v1236
        %v4168 = vmul.f32 %v3708, %v1236
        %v4169 = vmul.f32 %v3713, %v1236
        %v4170 = vmul.f32 %v3716, %v1236
        %v4171 = vmul.f32 %v3721, %v1236
        %v4172 = vmul.f32 %v3724, %v1236
        %v4173 = vmul.f32 %v3729, %v1236
        %v4174 = vmul.f32 %v3732, %v1236
        %v4175 = vmul.f32 %v3737, %v1236
        %v4176 = vmul.f32 %v3740, %v1236
        %v4177 = vmul.f32 %v3745, %v1236
        %v4178 = vmul.f32 %v3748, %v1236
        %v4179 = vmul.f32 %v3753, %v1236
        %v4180 = vmul.f32 %v3756, %v1236
        %v4181 = vmul.f32 %v3761, %v1236
        %v4182 = vmul.f32 %v3764, %v1236
        %v4183 = vmul.f32 %v3769, %v1240
        %v4184 = vmul.f32 %v3772, %v1240
        %v4185 = vmul.f32 %v3777, %v1240
        %v4186 = vmul.f32 %v3780, %v1240
        %v4187 = vmul.f32 %v3785, %v1240
        %v4188 = vmul.f32 %v3788, %v1240
        %v4189 = vmul.f32 %v3793, %v1240
        %v4190 = vmul.f32 %v3796, %v1240
        %v4191 = vmul.f32 %v3801, %v1240
        %v4192 = vmul.f32 %v3804, %v1240
        %v4193 = vmul.f32 %v3809, %v1240
        %v4194 = vmul.f32 %v3812, %v1240
        %v4195 = vmul.f32 %v3817, %v1240
        %v4196 = vmul.f32 %v3820, %v1240
        %v4197 = vmul.f32 %v3825, %v1240
        %v4198 = vmul.f32 %v3828, %v1240
        %v4199 = vmul.f32 %v3833, %v1244
        %v4200 = vmul.f32 %v3836, %v1244
        %v4201 = vmul.f32 %v3841, %v1244
        %v4202 = vmul.f32 %v3844, %v1244
        %v4203 = vmul.f32 %v3849, %v1244
        %v4204 = vmul.f32 %v3852, %v1244
        %v4205 = vmul.f32 %v3857, %v1244
        %v4206 = vmul.f32 %v3860, %v1244
        %v4207 = vmul.f32 %v3865, %v1244
        %v4208 = vmul.f32 %v3868, %v1244
        %v4209 = vmul.f32 %v3873, %v1244
        %v4210 = vmul.f32 %v3876, %v1244
        %v4211 = vmul.f32 %v3881, %v1244
        %v4212 = vmul.f32 %v3884, %v1244
        %v4213 = vmul.f32 %v3889, %v1244
        %v4214 = vmul.f32 %v3892, %v1244
        %v4215 = vmul.f32 %v3897, %v1248
        %v4216 = vmul.f32 %v3900, %v1248
        %v4217 = vmul.f32 %v3905, %v1248
        %v4218 = vmul.f32 %v3908, %v1248
        %v4219 = vmul.f32 %v3913, %v1248
        %v4220 = vmul.f32 %v3916, %v1248
        %v4221 = vmul.f32 %v3921, %v1248
        %v4222 = vmul.f32 %v3924, %v1248
        %v4223 = vmul.f32 %v3929, %v1248
        %v4224 = vmul.f32 %v3932, %v1248
        %v4225 = vmul.f32 %v3937, %v1248
        %v4226 = vmul.f32 %v3940, %v1248
        %v4227 = vmul.f32 %v3945, %v1248
        %v4228 = vmul.f32 %v3948, %v1248
        %v4229 = vmul.f32 %v3953, %v1248
        %v4230 = vmul.f32 %v3956, %v1248
        %v4231 = vmul.f32 %v3961, %v1252
        %v4232 = vmul.f32 %v3964, %v1252
        %v4233 = vmul.f32 %v3969, %v1252
        %v4234 = vmul.f32 %v3972, %v1252
        %v4235 = vmul.f32 %v3977, %v1252
        %v4236 = vmul.f32 %v3980, %v1252
        %v4237 = vmul.f32 %v3985, %v1252
        %v4238 = vmul.f32 %v3988, %v1252
        %v4239 = vmul.f32 %v3993, %v1252
        %v4240 = vmul.f32 %v3996, %v1252
        %v4241 = vmul.f32 %v4001, %v1252
        %v4242 = vmul.f32 %v4004, %v1252
        %v4243 = vmul.f32 %v4009, %v1252
        %v4244 = vmul.f32 %v4012, %v1252
        %v4245 = vmul.f32 %v4017, %v1252
        %v4246 = vmul.f32 %v4020, %v1252
        %v4247 = vmul.f32 %v4025, %v1256
        %v4248 = vmul.f32 %v4028, %v1256
        %v4249 = vmul.f32 %v4033, %v1256
        %v4250 = vmul.f32 %v4036, %v1256
        %v4251 = vmul.f32 %v4041, %v1256
        %v4252 = vmul.f32 %v4044, %v1256
        %v4253 = vmul.f32 %v4049, %v1256
        %v4254 = vmul.f32 %v4052, %v1256
        %v4255 = vmul.f32 %v4057, %v1256
        %v4256 = vmul.f32 %v4060, %v1256
        %v4257 = vmul.f32 %v4065, %v1256
        %v4258 = vmul.f32 %v4068, %v1256
        %v4259 = vmul.f32 %v4073, %v1256
        %v4260 = vmul.f32 %v4076, %v1256
        %v4261 = vmul.f32 %v4081, %v1256
        %v4262 = vmul.f32 %v4084, %v1256
        %v4263 = vmul.f32 %v4089, %v1260
        %v4264 = vmul.f32 %v4092, %v1260
        %v4265 = vmul.f32 %v4097, %v1260
        %v4266 = vmul.f32 %v4100, %v1260
        %v4267 = vmul.f32 %v4105, %v1260
        %v4268 = vmul.f32 %v4108, %v1260
        %v4269 = vmul.f32 %v4113, %v1260
        %v4270 = vmul.f32 %v4116, %v1260
        %v4271 = vmul.f32 %v4121, %v1260
        %v4272 = vmul.f32 %v4124, %v1260
        %v4273 = vmul.f32 %v4129, %v1260
        %v4274 = vmul.f32 %v4132, %v1260
        %v4275 = vmul.f32 %v4137, %v1260
        %v4276 = vmul.f32 %v4140, %v1260
        %v4277 = vmul.f32 %v4145, %v1260
        %v4278 = vmul.f32 %v4148, %v1260
        %v4279 = vsel %vm541, %v4151, 0.0
        %v4280 = vsel %vm541, %v4167, 0.0
        %v4281 = vadd.f32 %v4279, %v4280
        %v4282 = vsel %vm541, %v4183, 0.0
        %v4283 = vadd.f32 %v4281, %v4282
        %v4284 = vsel %vm541, %v4199, 0.0
        %v4285 = vadd.f32 %v4283, %v4284
        %v4286 = vsel %vm541, %v4215, 0.0
        %v4287 = vadd.f32 %v4285, %v4286
        %v4288 = vsel %vm541, %v4231, 0.0
        %v4289 = vadd.f32 %v4287, %v4288
        %v4290 = vsel %vm541, %v4247, 0.0
        %v4291 = vadd.f32 %v4289, %v4290
        %v4292 = vsel %vm541, %v4263, 0.0
        %v4293 = vadd.f32 %v4291, %v4292
        %v4294 = vsel %vm541, %v4152, 0.0
        %v4295 = vsel %vm541, %v4168, 0.0
        %v4296 = vadd.f32 %v4294, %v4295
        %v4297 = vsel %vm541, %v4184, 0.0
        %v4298 = vadd.f32 %v4296, %v4297
        %v4299 = vsel %vm541, %v4200, 0.0
        %v4300 = vadd.f32 %v4298, %v4299
        %v4301 = vsel %vm541, %v4216, 0.0
        %v4302 = vadd.f32 %v4300, %v4301
        %v4303 = vsel %vm541, %v4232, 0.0
        %v4304 = vadd.f32 %v4302, %v4303
        %v4305 = vsel %vm541, %v4248, 0.0
        %v4306 = vadd.f32 %v4304, %v4305
        %v4307 = vsel %vm541, %v4264, 0.0
        %v4308 = vadd.f32 %v4306, %v4307
        %v4309 = vsel %vm541, %v4153, 0.0
        %v4310 = vsel %vm541, %v4169, 0.0
        %v4311 = vadd.f32 %v4309, %v4310
        %v4312 = vsel %vm541, %v4185, 0.0
        %v4313 = vadd.f32 %v4311, %v4312
        %v4314 = vsel %vm541, %v4201, 0.0
        %v4315 = vadd.f32 %v4313, %v4314
        %v4316 = vsel %vm541, %v4217, 0.0
        %v4317 = vadd.f32 %v4315, %v4316
        %v4318 = vsel %vm541, %v4233, 0.0
        %v4319 = vadd.f32 %v4317, %v4318
        %v4320 = vsel %vm541, %v4249, 0.0
        %v4321 = vadd.f32 %v4319, %v4320
        %v4322 = vsel %vm541, %v4265, 0.0
        %v4323 = vadd.f32 %v4321, %v4322
        %v4324 = vsel %vm541, %v4154, 0.0
        %v4325 = vsel %vm541, %v4170, 0.0
        %v4326 = vadd.f32 %v4324, %v4325
        %v4327 = vsel %vm541, %v4186, 0.0
        %v4328 = vadd.f32 %v4326, %v4327
        %v4329 = vsel %vm541, %v4202, 0.0
        %v4330 = vadd.f32 %v4328, %v4329
        %v4331 = vsel %vm541, %v4218, 0.0
        %v4332 = vadd.f32 %v4330, %v4331
        %v4333 = vsel %vm541, %v4234, 0.0
        %v4334 = vadd.f32 %v4332, %v4333
        %v4335 = vsel %vm541, %v4250, 0.0
        %v4336 = vadd.f32 %v4334, %v4335
        %v4337 = vsel %vm541, %v4266, 0.0
        %v4338 = vadd.f32 %v4336, %v4337
        %v4339 = vsel %vm541, %v4155, 0.0
        %v4340 = vsel %vm541, %v4171, 0.0
        %v4341 = vadd.f32 %v4339, %v4340
        %v4342 = vsel %vm541, %v4187, 0.0
        %v4343 = vadd.f32 %v4341, %v4342
        %v4344 = vsel %vm541, %v4203, 0.0
        %v4345 = vadd.f32 %v4343, %v4344
        %v4346 = vsel %vm541, %v4219, 0.0
        %v4347 = vadd.f32 %v4345, %v4346
        %v4348 = vsel %vm541, %v4235, 0.0
        %v4349 = vadd.f32 %v4347, %v4348
        %v4350 = vsel %vm541, %v4251, 0.0
        %v4351 = vadd.f32 %v4349, %v4350
        %v4352 = vsel %vm541, %v4267, 0.0
        %v4353 = vadd.f32 %v4351, %v4352
        %v4354 = vsel %vm541, %v4156, 0.0
        %v4355 = vsel %vm541, %v4172, 0.0
        %v4356 = vadd.f32 %v4354, %v4355
        %v4357 = vsel %vm541, %v4188, 0.0
        %v4358 = vadd.f32 %v4356, %v4357
        %v4359 = vsel %vm541, %v4204, 0.0
        %v4360 = vadd.f32 %v4358, %v4359
        %v4361 = vsel %vm541, %v4220, 0.0
        %v4362 = vadd.f32 %v4360, %v4361
        %v4363 = vsel %vm541, %v4236, 0.0
        %v4364 = vadd.f32 %v4362, %v4363
        %v4365 = vsel %vm541, %v4252, 0.0
        %v4366 = vadd.f32 %v4364, %v4365
        %v4367 = vsel %vm541, %v4268, 0.0
        %v4368 = vadd.f32 %v4366, %v4367
        %v4369 = vsel %vm541, %v4157, 0.0
        %v4370 = vsel %vm541, %v4173, 0.0
        %v4371 = vadd.f32 %v4369, %v4370
        %v4372 = vsel %vm541, %v4189, 0.0
        %v4373 = vadd.f32 %v4371, %v4372
        %v4374 = vsel %vm541, %v4205, 0.0
        %v4375 = vadd.f32 %v4373, %v4374
        %v4376 = vsel %vm541, %v4221, 0.0
        %v4377 = vadd.f32 %v4375, %v4376
        %v4378 = vsel %vm541, %v4237, 0.0
        %v4379 = vadd.f32 %v4377, %v4378
        %v4380 = vsel %vm541, %v4253, 0.0
        %v4381 = vadd.f32 %v4379, %v4380
        %v4382 = vsel %vm541, %v4269, 0.0
        %v4383 = vadd.f32 %v4381, %v4382
        %v4384 = vsel %vm541, %v4158, 0.0
        %v4385 = vsel %vm541, %v4174, 0.0
        %v4386 = vadd.f32 %v4384, %v4385
        %v4387 = vsel %vm541, %v4190, 0.0
        %v4388 = vadd.f32 %v4386, %v4387
        %v4389 = vsel %vm541, %v4206, 0.0
        %v4390 = vadd.f32 %v4388, %v4389
        %v4391 = vsel %vm541, %v4222, 0.0
        %v4392 = vadd.f32 %v4390, %v4391
        %v4393 = vsel %vm541, %v4238, 0.0
        %v4394 = vadd.f32 %v4392, %v4393
        %v4395 = vsel %vm541, %v4254, 0.0
        %v4396 = vadd.f32 %v4394, %v4395
        %v4397 = vsel %vm541, %v4270, 0.0
        %v4398 = vadd.f32 %v4396, %v4397
        %v4399 = vsel %vm541, %v4159, 0.0
        %v4400 = vsel %vm541, %v4175, 0.0
        %v4401 = vadd.f32 %v4399, %v4400
        %v4402 = vsel %vm541, %v4191, 0.0
        %v4403 = vadd.f32 %v4401, %v4402
        %v4404 = vsel %vm541, %v4207, 0.0
        %v4405 = vadd.f32 %v4403, %v4404
        %v4406 = vsel %vm541, %v4223, 0.0
        %v4407 = vadd.f32 %v4405, %v4406
        %v4408 = vsel %vm541, %v4239, 0.0
        %v4409 = vadd.f32 %v4407, %v4408
        %v4410 = vsel %vm541, %v4255, 0.0
        %v4411 = vadd.f32 %v4409, %v4410
        %v4412 = vsel %vm541, %v4271, 0.0
        %v4413 = vadd.f32 %v4411, %v4412
        %v4414 = vsel %vm541, %v4160, 0.0
        %v4415 = vsel %vm541, %v4176, 0.0
        %v4416 = vadd.f32 %v4414, %v4415
        %v4417 = vsel %vm541, %v4192, 0.0
        %v4418 = vadd.f32 %v4416, %v4417
        %v4419 = vsel %vm541, %v4208, 0.0
        %v4420 = vadd.f32 %v4418, %v4419
        %v4421 = vsel %vm541, %v4224, 0.0
        %v4422 = vadd.f32 %v4420, %v4421
        %v4423 = vsel %vm541, %v4240, 0.0
        %v4424 = vadd.f32 %v4422, %v4423
        %v4425 = vsel %vm541, %v4256, 0.0
        %v4426 = vadd.f32 %v4424, %v4425
        %v4427 = vsel %vm541, %v4272, 0.0
        %v4428 = vadd.f32 %v4426, %v4427
        %v4429 = vsel %vm541, %v4161, 0.0
        %v4430 = vsel %vm541, %v4177, 0.0
        %v4431 = vadd.f32 %v4429, %v4430
        %v4432 = vsel %vm541, %v4193, 0.0
        %v4433 = vadd.f32 %v4431, %v4432
        %v4434 = vsel %vm541, %v4209, 0.0
        %v4435 = vadd.f32 %v4433, %v4434
        %v4436 = vsel %vm541, %v4225, 0.0
        %v4437 = vadd.f32 %v4435, %v4436
        %v4438 = vsel %vm541, %v4241, 0.0
        %v4439 = vadd.f32 %v4437, %v4438
        %v4440 = vsel %vm541, %v4257, 0.0
        %v4441 = vadd.f32 %v4439, %v4440
        %v4442 = vsel %vm541, %v4273, 0.0
        %v4443 = vadd.f32 %v4441, %v4442
        %v4444 = vsel %vm541, %v4162, 0.0
        %v4445 = vsel %vm541, %v4178, 0.0
        %v4446 = vadd.f32 %v4444, %v4445
        %v4447 = vsel %vm541, %v4194, 0.0
        %v4448 = vadd.f32 %v4446, %v4447
        %v4449 = vsel %vm541, %v4210, 0.0
        %v4450 = vadd.f32 %v4448, %v4449
        %v4451 = vsel %vm541, %v4226, 0.0
        %v4452 = vadd.f32 %v4450, %v4451
        %v4453 = vsel %vm541, %v4242, 0.0
        %v4454 = vadd.f32 %v4452, %v4453
        %v4455 = vsel %vm541, %v4258, 0.0
        %v4456 = vadd.f32 %v4454, %v4455
        %v4457 = vsel %vm541, %v4274, 0.0
        %v4458 = vadd.f32 %v4456, %v4457
        %v4459 = vsel %vm541, %v4163, 0.0
        %v4460 = vsel %vm541, %v4179, 0.0
        %v4461 = vadd.f32 %v4459, %v4460
        %v4462 = vsel %vm541, %v4195, 0.0
        %v4463 = vadd.f32 %v4461, %v4462
        %v4464 = vsel %vm541, %v4211, 0.0
        %v4465 = vadd.f32 %v4463, %v4464
        %v4466 = vsel %vm541, %v4227, 0.0
        %v4467 = vadd.f32 %v4465, %v4466
        %v4468 = vsel %vm541, %v4243, 0.0
        %v4469 = vadd.f32 %v4467, %v4468
        %v4470 = vsel %vm541, %v4259, 0.0
        %v4471 = vadd.f32 %v4469, %v4470
        %v4472 = vsel %vm541, %v4275, 0.0
        %v4473 = vadd.f32 %v4471, %v4472
        %v4474 = vsel %vm541, %v4164, 0.0
        %v4475 = vsel %vm541, %v4180, 0.0
        %v4476 = vadd.f32 %v4474, %v4475
        %v4477 = vsel %vm541, %v4196, 0.0
        %v4478 = vadd.f32 %v4476, %v4477
        %v4479 = vsel %vm541, %v4212, 0.0
        %v4480 = vadd.f32 %v4478, %v4479
        %v4481 = vsel %vm541, %v4228, 0.0
        %v4482 = vadd.f32 %v4480, %v4481
        %v4483 = vsel %vm541, %v4244, 0.0
        %v4484 = vadd.f32 %v4482, %v4483
        %v4485 = vsel %vm541, %v4260, 0.0
        %v4486 = vadd.f32 %v4484, %v4485
        %v4487 = vsel %vm541, %v4276, 0.0
        %v4488 = vadd.f32 %v4486, %v4487
        %v4489 = vsel %vm541, %v4165, 0.0
        %v4490 = vsel %vm541, %v4181, 0.0
        %v4491 = vadd.f32 %v4489, %v4490
        %v4492 = vsel %vm541, %v4197, 0.0
        %v4493 = vadd.f32 %v4491, %v4492
        %v4494 = vsel %vm541, %v4213, 0.0
        %v4495 = vadd.f32 %v4493, %v4494
        %v4496 = vsel %vm541, %v4229, 0.0
        %v4497 = vadd.f32 %v4495, %v4496
        %v4498 = vsel %vm541, %v4245, 0.0
        %v4499 = vadd.f32 %v4497, %v4498
        %v4500 = vsel %vm541, %v4261, 0.0
        %v4501 = vadd.f32 %v4499, %v4500
        %v4502 = vsel %vm541, %v4277, 0.0
        %v4503 = vadd.f32 %v4501, %v4502
        %v4504 = vsel %vm541, %v4166, 0.0
        %v4505 = vsel %vm541, %v4182, 0.0
        %v4506 = vadd.f32 %v4504, %v4505
        %v4507 = vsel %vm541, %v4198, 0.0
        %v4508 = vadd.f32 %v4506, %v4507
        %v4509 = vsel %vm541, %v4214, 0.0
        %v4510 = vadd.f32 %v4508, %v4509
        %v4511 = vsel %vm541, %v4230, 0.0
        %v4512 = vadd.f32 %v4510, %v4511
        %v4513 = vsel %vm541, %v4246, 0.0
        %v4514 = vadd.f32 %v4512, %v4513
        %v4515 = vsel %vm541, %v4262, 0.0
        %v4516 = vadd.f32 %v4514, %v4515
        %v4517 = vsel %vm541, %v4278, 0.0
        %v4518 = vadd.f32 %v4516, %v4517
        %v4519 = vpack.c.bf16 %v4308, %v4293
        %v4520 = vpack.c.bf16 %v4338, %v4323
        %v4521 = vpack.c.bf16 %v4368, %v4353
        %v4522 = vpack.c.bf16 %v4398, %v4383
        %v4523 = vpack.c.bf16 %v4428, %v4413
        %v4524 = vpack.c.bf16 %v4458, %v4443
        %v4525 = vpack.c.bf16 %v4488, %v4473
        %v4526 = vpack.c.bf16 %v4518, %v4503
        %v4527 = vld [vmem:[%s9] sm:$0xf]
        %v4528 = vld [vmem:[%s9 + $0x4] sm:$0xf]
        %v4529 = vld [vmem:[%s9 + $0x8] sm:$0xf]
        %v4530 = vld [vmem:[%s9 + $0xc] sm:$0xf]
        %v4531 = vld [vmem:[%s9 + $0x10] sm:$0xf]
        %v4532 = vld [vmem:[%s9 + $0x14] sm:$0xf]
        %v4533 = vld [vmem:[%s9 + $0x18] sm:$0xf]
        %v4534 = vld [vmem:[%s9 + $0x1c] sm:$0xf]
        %v4535 = vld [vmem:[%s10] sm:$0x1]
        %v4537 = vlaneseq
        %v4538 = vshrl.u32 %v4537, 7
        %v4539 = vsub.s32 0, %v4538
        %v4540 = vrot.slane %v4535, %v4539
        %v4550 = vunpack.c.l.b16 %v4527
        %v4551 = vunpack.c.l.b16 %v4528
        %v4552 = vunpack.c.l.b16 %v4529
        %v4553 = vunpack.c.l.b16 %v4530
        %v4554 = vunpack.c.l.b16 %v4531
        %v4555 = vunpack.c.l.b16 %v4532
        %v4556 = vunpack.c.l.b16 %v4533
        %v4557 = vunpack.c.l.b16 %v4534
        %v4558 = vpack.c.b16 %v4551, %v4550
        %v4559 = vpack.c.b16 %v4553, %v4552
        %v4560 = vpack.c.b16 %v4555, %v4554
        %v4561 = vpack.c.b16 %v4557, %v4556
        %v4567 = vsel %vm541, %v4519, 0
        %v4570 = vsel %vm541, %v4520, 0
        %v4573 = vsel %vm541, %v4521, 0
        %v4576 = vsel %vm541, %v4522, 0
        %v4579 = vsel %vm541, %v4523, 0
        %v4582 = vsel %vm541, %v4524, 0
        %v4585 = vsel %vm541, %v4525, 0
        %v4588 = vsel %vm541, %v4526, 0
        %4590 = vmatprep.subr.bf16.mxu0 0
        %4591 = vmatpush1.bf16.msra.mxu0 %v4558
        %4592 = vmatprep.subr.bf16.mxu0 0
        %4593 = vmatpush1.bf16.msra.mxu0 %v4559
        %4594 = vmatprep.subr.bf16.mxu0 0
        %4595 = vmatpush1.bf16.msra.mxu0 %v4560
        %4596 = vmatprep.subr.bf16.mxu0 0
        %4597 = vmatpush1.bf16.msra.mxu0 %v4561
        %4598 = vmatprep.subr.bf16.mxu0 0
        %4599 = vmatpush1.bf16.msra.mxu0 0
        %4600 = vmatprep.subr.bf16.mxu0 0
        %4601 = vmatpush1.bf16.msra.mxu0 0
        %4602 = vmatprep.subr.bf16.mxu0 0
        %4603 = vmatpush1.bf16.msra.mxu0 0
        %4604 = vmatprep.subr.bf16.mxu0 0
        %4605 = vmatpush1.bf16.msra.mxu0 0
        %4606 = vmatprep.subr.bf16.mxu0 0
        %4607 = vmatpush1.bf16.msra.mxu0 0
        %4608 = vmatprep.subr.bf16.mxu0 0
        %4609 = vmatpush1.bf16.msra.mxu0 0
        %4610 = vmatprep.subr.bf16.mxu0 0
        %4611 = vmatpush1.bf16.msra.mxu0 0
        %4612 = vmatprep.subr.bf16.mxu0 0
        %4613 = vmatpush1.bf16.msra.mxu0 0
        %4614 = vmatprep.subr.bf16.mxu0 0
        %4615 = vmatpush1.bf16.msra.mxu0 0
        %4616 = vmatprep.subr.bf16.mxu0 0
        %4617 = vmatpush1.bf16.msra.mxu0 0
        %4618 = vmatprep.subr.bf16.mxu0 0
        %4619 = vmatpush1.bf16.msra.mxu0 0
        %4620 = vmatprep.subr.bf16.mxu0 0
        %4621 = vmatpush1.bf16.msra.mxu0 0
        %4622 = vmatprep.mubr.bf16.mxu0 0
        %4623 = vmatmul.mubr.bf16.gmra.mrb[0].mxu0 %v4567
        %v4624 = vpop.f32.mrb[0].mxu0
        %v4625 = vadd.f32 %v4540, %v4624
        %v4626 = vpop.f32.mrb[0].mxu0
        %v4627 = vpop.f32.mrb[0].mxu0
        %v4628 = vadd.f32 %v4540, %v4627
        %v4629 = vpop.f32.mrb[0].mxu0
        %4630 = vmatprep.mubr.bf16.mxu0 0
        %4631 = vmatmul.mubr.bf16.gmra.mrb[0].mxu0 %v4570
        %v4632 = vpop.f32.mrb[0].mxu0
        %v4633 = vadd.f32 %v4540, %v4632
        %v4634 = vpop.f32.mrb[0].mxu0
        %v4635 = vpop.f32.mrb[0].mxu0
        %v4636 = vadd.f32 %v4540, %v4635
        %v4637 = vpop.f32.mrb[0].mxu0
        %4638 = vmatprep.mubr.bf16.mxu0 0
        %4639 = vmatmul.mubr.bf16.gmra.mrb[0].mxu0 %v4573
        %v4640 = vpop.f32.mrb[0].mxu0
        %v4641 = vadd.f32 %v4540, %v4640
        %v4642 = vpop.f32.mrb[0].mxu0
        %v4643 = vpop.f32.mrb[0].mxu0
        %v4644 = vadd.f32 %v4540, %v4643
        %v4645 = vpop.f32.mrb[0].mxu0
        %4646 = vmatprep.mubr.bf16.mxu0 0
        %4647 = vmatmul.mubr.bf16.gmra.mrb[0].mxu0 %v4576
        %v4648 = vpop.f32.mrb[0].mxu0
        %v4649 = vadd.f32 %v4540, %v4648
        %v4650 = vpop.f32.mrb[0].mxu0
        %v4651 = vpop.f32.mrb[0].mxu0
        %v4652 = vadd.f32 %v4540, %v4651
        %v4653 = vpop.f32.mrb[0].mxu0
        %4654 = vmatprep.mubr.bf16.mxu0 0
        %4655 = vmatmul.mubr.bf16.gmra.mrb[0].mxu0 %v4579
        %v4656 = vpop.f32.mrb[0].mxu0
        %v4657 = vadd.f32 %v4540, %v4656
        %v4658 = vpop.f32.mrb[0].mxu0
        %v4659 = vpop.f32.mrb[0].mxu0
        %v4660 = vadd.f32 %v4540, %v4659
        %v4661 = vpop.f32.mrb[0].mxu0
        %4662 = vmatprep.mubr.bf16.mxu0 0
        %4663 = vmatmul.mubr.bf16.gmra.mrb[0].mxu0 %v4582
        %v4664 = vpop.f32.mrb[0].mxu0
        %v4665 = vadd.f32 %v4540, %v4664
        %v4666 = vpop.f32.mrb[0].mxu0
        %v4667 = vpop.f32.mrb[0].mxu0
        %v4668 = vadd.f32 %v4540, %v4667
        %v4669 = vpop.f32.mrb[0].mxu0
        %4670 = vmatprep.mubr.bf16.mxu0 0
        %4671 = vmatmul.mubr.bf16.gmra.mrb[0].mxu0 %v4585
        %v4672 = vpop.f32.mrb[0].mxu0
        %v4673 = vadd.f32 %v4540, %v4672
        %v4674 = vpop.f32.mrb[0].mxu0
        %v4675 = vpop.f32.mrb[0].mxu0
        %v4676 = vadd.f32 %v4540, %v4675
        %v4677 = vpop.f32.mrb[0].mxu0
        %4678 = vmatprep.mubr.bf16.mxu0 0
        %4679 = vmatmul.mubr.bf16.gmra.mrb[0].mxu0 %v4588
        %v4680 = vpop.f32.mrb[0].mxu0
        %v4681 = vadd.f32 %v4540, %v4680
        %v4682 = vpop.f32.mrb[0].mxu0
        %v4683 = vpop.f32.mrb[0].mxu0
        %v4684 = vadd.f32 %v4540, %v4683
        %v4685 = vpop.f32.mrb[0].mxu0
        %4686 = vdwg.mxu0
        %v4687 = vadd.f32 %v493, %v4625
        %v4688 = vadd.f32 %v494, %v4628
        %v4689 = vadd.f32 %v495, %v4633
        %v4690 = vadd.f32 %v496, %v4636
        %v4691 = vadd.f32 %v497, %v4641
        %v4692 = vadd.f32 %v498, %v4644
        %v4693 = vadd.f32 %v499, %v4649
        %v4694 = vadd.f32 %v500, %v4652
        %v4695 = vadd.f32 %v525, %v4657
        %v4696 = vadd.f32 %v526, %v4660
        %v4697 = vadd.f32 %v527, %v4665
        %v4698 = vadd.f32 %v528, %v4668
        %v4699 = vadd.f32 %v529, %v4673
        %v4700 = vadd.f32 %v530, %v4676
        %v4701 = vadd.f32 %v531, %v4681
        %v4702 = vadd.f32 %v532, %v4684
        %4703 = vxpose.xlu0.b32.start [1/16] %v4687, 128
        %4704 = vxpose.xlu0.b32.cont [2/16] %v4688, 128
        %4705 = vxpose.xlu0.b32.cont [3/16] %v4689, 128
        %4706 = vxpose.xlu0.b32.cont [4/16] %v4690, 128
        %4707 = vxpose.xlu0.b32.cont [5/16] %v4691, 128
        %4708 = vxpose.xlu0.b32.cont [6/16] %v4692, 128
        %4709 = vxpose.xlu0.b32.cont [7/16] %v4693, 128
        %4710 = vxpose.xlu0.b32.cont [8/16] %v4694, 128
        %4711 = vxpose.xlu0.b32.cont [9/16] 0.0, 128
        %4712 = vxpose.xlu0.b32.cont [10/16] 0.0, 128
        %4713 = vxpose.xlu0.b32.cont [11/16] 0.0, 128
        %4714 = vxpose.xlu0.b32.cont [12/16] 0.0, 128
        %4715 = vxpose.xlu0.b32.cont [13/16] 0.0, 128
        %4716 = vxpose.xlu0.b32.cont [14/16] 0.0, 128
        %4717 = vxpose.xlu0.b32.cont [15/16] 0.0, 128
        %4718 = vxpose.xlu0.b32.end [16/16] 0.0, 128
        %v4719 = vpop.trf.xlu0
        %v4720 = vpop.trf.xlu0
        %v4721 = vpop.trf.xlu0
        %v4722 = vpop.trf.xlu0
        %v4723 = vpop.trf.xlu0
        %v4724 = vpop.trf.xlu0
        %v4725 = vpop.trf.xlu0
        %v4726 = vpop.trf.xlu0
        %v4727 = vpop.trf.xlu0
        %v4728 = vpop.trf.xlu0
        %v4729 = vpop.trf.xlu0
        %v4730 = vpop.trf.xlu0
        %v4731 = vpop.trf.xlu0
        %v4732 = vpop.trf.xlu0
        %v4733 = vpop.trf.xlu0
        %v4734 = vpop.trf.xlu0
        %4735 = vxpose.xlu0.b32.start [1/16] %v4695, 128
        %4736 = vxpose.xlu0.b32.cont [2/16] %v4696, 128
        %4737 = vxpose.xlu0.b32.cont [3/16] %v4697, 128
        %4738 = vxpose.xlu0.b32.cont [4/16] %v4698, 128
        %4739 = vxpose.xlu0.b32.cont [5/16] %v4699, 128
        %4740 = vxpose.xlu0.b32.cont [6/16] %v4700, 128
        %4741 = vxpose.xlu0.b32.cont [7/16] %v4701, 128
        %4742 = vxpose.xlu0.b32.cont [8/16] %v4702, 128
        %4743 = vxpose.xlu0.b32.cont [9/16] 0.0, 128
        %4744 = vxpose.xlu0.b32.cont [10/16] 0.0, 128
        %4745 = vxpose.xlu0.b32.cont [11/16] 0.0, 128
        %4746 = vxpose.xlu0.b32.cont [12/16] 0.0, 128
        %4747 = vxpose.xlu0.b32.cont [13/16] 0.0, 128
        %4748 = vxpose.xlu0.b32.cont [14/16] 0.0, 128
        %4749 = vxpose.xlu0.b32.cont [15/16] 0.0, 128
        %4750 = vxpose.xlu0.b32.end [16/16] 0.0, 128
        %v4751 = vpop.trf.xlu0
        %v4752 = vpop.trf.xlu0
        %v4753 = vpop.trf.xlu0
        %v4754 = vpop.trf.xlu0
        %v4755 = vpop.trf.xlu0
        %v4756 = vpop.trf.xlu0
        %v4757 = vpop.trf.xlu0
        %v4758 = vpop.trf.xlu0
        %v4759 = vpop.trf.xlu0
        %v4760 = vpop.trf.xlu0
        %v4761 = vpop.trf.xlu0
        %v4762 = vpop.trf.xlu0
        %v4763 = vpop.trf.xlu0
        %v4764 = vpop.trf.xlu0
        %v4765 = vpop.trf.xlu0
        %v4766 = vpop.trf.xlu0
        %4767 = vst.msk [vmem:[%s457] sm:$0xff] %vm541, %v4719
        %4768 = vst.msk [vmem:[%s457 + $0x8] sm:$0xff] %vm541, %v4720
        %4769 = vst.msk [vmem:[%s457 + $0x10] sm:$0xff] %vm541, %v4721
        %4770 = vst.msk [vmem:[%s457 + $0x18] sm:$0xff] %vm541, %v4722
        %4771 = vst.msk [vmem:[%s457 + $0x20] sm:$0xff] %vm541, %v4723
        %4772 = vst.msk [vmem:[%s457 + $0x28] sm:$0xff] %vm541, %v4724
        %4773 = vst.msk [vmem:[%s457 + $0x30] sm:$0xff] %vm541, %v4725
        %4774 = vst.msk [vmem:[%s457 + $0x38] sm:$0xff] %vm541, %v4726
        %4775 = vst.msk [vmem:[%s457 + $0x40] sm:$0xff] %vm541, %v4751
        %4776 = vst.msk [vmem:[%s457 + $0x48] sm:$0xff] %vm541, %v4752
        %4777 = vst.msk [vmem:[%s457 + $0x50] sm:$0xff] %vm541, %v4753
        %4778 = vst.msk [vmem:[%s457 + $0x58] sm:$0xff] %vm541, %v4754
        %4779 = vst.msk [vmem:[%s457 + $0x60] sm:$0xff] %vm541, %v4755
        %4780 = vst.msk [vmem:[%s457 + $0x68] sm:$0xff] %vm541, %v4756
        %4781 = vst.msk [vmem:[%s457 + $0x70] sm:$0xff] %vm541, %v4757
        %4782 = vst.msk [vmem:[%s457 + $0x78] sm:$0xff] %vm541, %v4758
        %s4783 = sand.u32 %s274, 1
        %s4784 = scalar_lea.sflag [#allocation4], %s4783
        %s4785 = sand.u32 %s274, 1
        %s4786 = smul.addr %s4785, 128
        %s4787 = scalar_lea.vmem [#allocation11], %s4786
        // Predicated region
        $region85: #{tpu_custom_call.1} parent=63 // pred_check
          %p4788 = pneg %p284
        $region86: #{tpu_custom_call.1} parent=63 // pred_check_branch
          %4790 = sbr.rel (%p4788) target = $region88
        $region87: #{tpu_custom_call.1} parent=63 // pred_region
          %s4791 = smul.u32 2, %s30
          %s4793 = ssub.s32 2048, 2048
          %4794 = vsyncadd %s4784, %s4793
          %s4795 = smul.addr %s4791, 8
          %s4796 = smul.addr %s4795, 128
          %s4797 = scalar_lea.hbm %s11, %s4796
          %s4798 = sshll.u32 %s4787, 4
          %s4799 = int_to_ptr.vmem [resolvable:$true] %s4798
          %4804 = dma.vmem_to_hbm [thread:$0]  %s4799, 2048, %s4797, %s4784, 128, 128, 8
        $region88: #{tpu_custom_call.1} parent=63 // pred_fallthru
          _
      $region64: #{tpu_custom_call.1} parent=5 // pred_fallthru
        _
      %p4805 = scmp.le.s32.totalorder 2, %s25
      // Predicated region
      $region89: #{tpu_custom_call.1} parent=5 // pred_check
        %p4806 = pneg %p4805
      $region90: #{tpu_custom_call.1} parent=5 // pred_check_branch
        %4808 = sbr.rel (%p4806) target = $region92
      $region91: #{tpu_custom_call.1} parent=5 // pred_region
        %s4809 = ssub.s32 %s25, 2
        // Predicated region
        $region93: #{tpu_custom_call.1} parent=91 // pred_check
          %p4810 = pneg %p290
        $region94: #{tpu_custom_call.1} parent=91 // pred_check_branch
          %4812 = sbr.rel (%p4810) target = $region96
        $region95: #{tpu_custom_call.1} parent=91 // pred_region
          %s4813 = sand.u32 %s275, 1
          %s4814 = scalar_lea.sflag [#allocation4], %s4813
          %s4815 = sand.u32 %s275, 1
          %s4816 = smul.addr %s4815, 128
          %s4817 = scalar_lea.vmem [#allocation11], %s4816
          %4818 = dma.done %s4814, 2048
        $region96: #{tpu_custom_call.1} parent=91 // pred_fallthru
          _
      $region92: #{tpu_custom_call.1} parent=5 // pred_fallthru
        _
    $region6: #{tpu_custom_call.1} parent=1 // loop_footer
      %s29 = sadd.s32 1, %s25
    $region7: #{tpu_custom_call.1} parent=1 // loop_footer_branch
      %24 = sbr.rel target = $region3
    $region8: #{tpu_custom_call.1} parent=1 // loop_exit
      _
    %4819 = vsyncpa [#allocation3], 1
    %s4820 = scalar_lea.sflag [#allocation3], 1
    %4821 = vsyncpa %s4820, 1
    %4822 = vsyncpa [#allocation6], 1
    %4823 = vsyncpa [#allocation9], 1
    %4824 = vsyncpa [#allocation4], 1
    %s4825 = scalar_lea.sflag [#allocation4], 1
    %4826 = vsyncpa %s4825, 1

</llo_original>
